<compile_context>
chip_gen: v7x
topology: tpu7x:2x2x1
jax: 0.10.0
libtpu: 0.0.40
codegen_flags: <defaults>
</compile_context>

<pallas_src>
import functools

import jax
import jax.numpy as jnp
from jax.experimental import pallas as pl
from jax.experimental.pallas import tpu as pltpu

GRID_SIZE = 5
SPLINE_ORDER = 3
NUM_BASES = GRID_SIZE + SPLINE_ORDER          # 8 cubic B-spline bases
NUM_FEATS = NUM_BASES + 1                     # + SiLU base branch
_H = 2.0 / GRID_SIZE                          # knot spacing on [-1, 1]
_KNOT0 = -1.0 - SPLINE_ORDER * _H             # leftmost extended knot (-2.2)
_INV_H = 1.0 / _H

# Tap counts padded to a multiple of 8 (sublane tile) per layer.
F1, F2, F3 = 1 * 3 * 3, 5 * 5 * 5, 5 * 3 * 3
F1_PAD, F2_PAD, F3_PAD = 16, 128, 48


# ---------------------------------------------------------------------------
# In-kernel feature expansion: SiLU base + 8 uniform cubic B-spline bases.
# ---------------------------------------------------------------------------
def _expand_features(x):
    """x: (F_pad, N) -> (NUM_FEATS*F_pad, N) = [SiLU(x); B_0(x); ...; B_7(x)]."""
    # SiLU base: x * sigmoid(x); exp + approx reciprocal both go to the EUP.
    silu = x * pl.reciprocal(1.0 + jnp.exp(-x), approx=True)

    # Uniform-knot cubic B-splines in matrix/Horner form: segment index +
    # local coordinate, 4 nonzero segment polynomials placed by index.
    pos = (x - _KNOT0) * _INV_H               # knot-interval coordinate
    seg = jnp.floor(pos)                      # interval j: x in [t_j, t_{j+1})
    u = pos - seg                             # local coordinate in [0, 1)
    u2 = u * u
    u3 = u2 * u
    sixth = 1.0 / 6.0
    s0 = u3 * sixth                                            # rising segment
    s1 = (((-3.0 * u + 3.0) * u + 3.0) * u + 1.0) * sixth
    s2 = ((3.0 * u - 6.0) * u2 + 4.0) * sixth
    omu = 1.0 - u
    s3 = omu * omu * omu * sixth                               # falling segment

    feats = [silu]
    for i in range(NUM_BASES):
        fi = float(i)
        b = jnp.where(seg == fi, s0, 0.0)
        b = b + jnp.where(seg == fi + 1.0, s1, 0.0)
        b = b + jnp.where(seg == fi + 2.0, s2, 0.0)
        b = b + jnp.where(seg == fi + 3.0, s3, 0.0)
        feats.append(b)
    # F_pad is a multiple of 8 -> sublane-aligned concat (no relayout).
    return jnp.concatenate(feats, axis=0)


# ---------------------------------------------------------------------------
# Pallas kernels
# ---------------------------------------------------------------------------
def _conv1_pool_kernel(p_ref, w_ref, o_ref):
    """conv1 evaluated per 2x2 pooling phase; elementwise max == maxpool2x2."""
    w = w_ref[...]                                          # (5, 9*F1_PAD)
    pooled = None
    for ph in range(4):                                     # 4 pooling phases
        feats = _expand_features(p_ref[ph])                 # (9*F1_PAD, N1)
        y = jnp.dot(w, feats, preferred_element_type=jnp.float32)   # (5, N1)
        pooled = y if pooled is None else jnp.maximum(pooled, y)
    o_ref[...] = pooled


def _conv_kernel(p_ref, w_ref, o_ref):
    """One KAN conv layer as a single fused MXU matmul over expanded feats."""
    feats = _expand_features(p_ref[...])                    # (9*F_pad, N)
    o_ref[...] = jnp.dot(w_ref[...], feats, preferred_element_type=jnp.float32)


def _conv3_linear_kernel(p_ref, w_ref, wl_ref, bl_ref, o_ref, *, batch, c_out):
    """conv3 + flatten + Linear(98,200) + ReLU, fused (per-batch column blocks)."""
    w = w_ref[...]                                          # (2, 9*F3_PAD)
    for b in range(batch):
        feats = _expand_features(p_ref[b])                  # (9*F3_PAD, 49)
        y3 = jnp.dot(w, feats, preferred_element_type=jnp.float32)  # (2, 49)
        acc = bl_ref[...]                                   # (1, 200)
        for c in range(c_out):                              # flatten order (c,h,w)
            acc = acc + jnp.dot(y3[c:c + 1, :], wl_ref[c],
                                preferred_element_type=jnp.float32)
        o_ref[b:b + 1, :] = jnp.maximum(acc, 0.0)


# ---------------------------------------------------------------------------
# pallas_call wrappers
# ---------------------------------------------------------------------------
def _kan_conv1_pool(patches, w):
    nph, f_pad, n = patches.shape
    c = w.shape[0]
    return pl.pallas_call(
        _conv1_pool_kernel,
        out_shape=jax.ShapeDtypeStruct((c, n), jnp.float32),
        grid=(1,),
        in_specs=[pl.BlockSpec((nph, f_pad, n), lambda i: (0, 0, 0)),
                  pl.BlockSpec(w.shape, lambda i: (0, 0))],
        out_specs=pl.BlockSpec((c, n), lambda i: (0, 0)),
        compiler_params=pltpu.CompilerParams(
            dimension_semantics=("arbitrary",)),
    )(patches, w)


def _kan_conv(patches, w):
    f_pad, n = patches.shape
    c = w.shape[0]
    return pl.pallas_call(
        _conv_kernel,
        out_shape=jax.ShapeDtypeStruct((c, n), jnp.float32),
        grid=(1,),
        in_specs=[pl.BlockSpec((f_pad, n), lambda i: (0, 0)),
                  pl.BlockSpec(w.shape, lambda i: (0, 0))],
        out_specs=pl.BlockSpec((c, n), lambda i: (0, 0)),
        compiler_params=pltpu.CompilerParams(
            dimension_semantics=("arbitrary",)),
    )(patches, w)


def _kan_conv3_linear(patches, w, wl, bl, *, batch):
    _, f_pad, n = patches.shape
    c = w.shape[0]
    out_dim = wl.shape[-1]
    kernel = functools.partial(_conv3_linear_kernel, batch=batch, c_out=c)
    return pl.pallas_call(
        kernel,
        out_shape=jax.ShapeDtypeStruct((batch, out_dim), jnp.float32),
        grid=(1,),
        in_specs=[pl.BlockSpec((batch, f_pad, n), lambda i: (0, 0, 0)),
                  pl.BlockSpec(w.shape, lambda i: (0, 0)),
                  pl.BlockSpec(wl.shape, lambda i: (0, 0, 0)),
                  pl.BlockSpec(bl.shape, lambda i: (0, 0))],
        out_specs=pl.BlockSpec((batch, out_dim), lambda i: (0, 0)),
        compiler_params=pltpu.CompilerParams(
            dimension_semantics=("arbitrary",)),
    )(patches, w, wl, bl)


# ---------------------------------------------------------------------------
# XLA-side glue: transposed (F, N) im2col (tiny tensors; fused by XLA)
# ---------------------------------------------------------------------------
def _im2col(x, kh, kw, f_pad, batched=False):
    """x: (B,C,H,W) -> (f_pad, B*Ho*Wo) [or (B, f_pad, Ho*Wo) if batched].

    Feature (row) order is (c, ki, kj); column order is (b, i, j) [or (i, j)].
    Rows >= C*kh*kw are zero padding (corresponding weight rows are zero)."""
    B, C, H, W = x.shape
    Ho, Wo = H - kh + 1, W - kw + 1
    taps = []
    for ki in range(kh):
        for kj in range(kw):
            taps.append(x[:, :, ki:ki + Ho, kj:kj + Wo])     # (B, C, Ho, Wo)
    p = jnp.stack(taps, axis=2)                              # (B, C, kh*kw, Ho, Wo)
    if batched:
        p = p.reshape(B, C * kh * kw, Ho * Wo)
        return jnp.pad(p, ((0, 0), (0, f_pad - C * kh * kw), (0, 0)))
    p = p.transpose(1, 2, 0, 3, 4).reshape(C * kh * kw, B * Ho * Wo)
    return jnp.pad(p, ((0, f_pad - C * kh * kw), (0, 0)))


def _im2col_conv1_phases(x, f_pad):
    """x: (B,1,28,28) -> (4, f_pad, B*13*13): 3x3 conv1 patches with columns
    grouped by 2x2 pooling phase, so maxpool becomes an in-kernel max."""
    B, _, H, W = x.shape
    Hp, Wp = (H - 2) // 2, (W - 2) // 2                      # 13, 13
    phases = []
    for ph in range(2):
        for pw in range(2):
            taps = []
            for ki in range(3):
                for kj in range(3):
                    r0, c0 = ph + ki, pw + kj
                    taps.append(x[:, 0, r0:r0 + 2 * Hp:2, c0:c0 + 2 * Wp:2])
            t = jnp.stack(taps, axis=0).reshape(9, B * Hp * Wp)
            phases.append(jnp.pad(t, ((0, f_pad - 9), (0, 0))))
    return jnp.stack(phases, axis=0)                         # (4, f_pad, B*169)


# ---------------------------------------------------------------------------
# Deterministic synthetic parameters (shapes from KANC_HDC.__init__)
# ---------------------------------------------------------------------------
def init_params(key):
    ks = jax.random.split(key, 8)

    def kan_weights(kb, ksp, fan_in, c_out, f_pad):
        wb = jax.random.normal(kb, (fan_in, c_out), jnp.float32) / jnp.sqrt(
            jnp.float32(fan_in))
        ws = 0.1 * jax.random.normal(ksp, (NUM_BASES, fan_in, c_out),
                                     jnp.float32) / jnp.sqrt(jnp.float32(fan_in))
        # Pack base + 8 spline weights into one (c_out, 9*f_pad) matrix
        # (feature-major rows, zero rows for the tap padding) so each layer is
        # a single MXU matmul against the concatenated feature slab.
        wb_p = jnp.zeros((f_pad, c_out), jnp.float32).at[:fan_in].set(wb)
        ws_p = jnp.zeros((NUM_BASES, f_pad, c_out),
                         jnp.float32).at[:, :fan_in].set(ws)
        wc = jnp.concatenate([wb_p[None], ws_p], axis=0)     # (9, f_pad, c_out)
        return wc.reshape(NUM_FEATS * f_pad, c_out).T        # (c_out, 9*f_pad)

    lin_w = jax.random.normal(ks[6], (98, 200), jnp.float32) / jnp.sqrt(
        jnp.float32(98.0))
    params = {
        "conv1_w": kan_weights(ks[0], ks[1], F1, 5, F1_PAD),
        "conv2_w": kan_weights(ks[2], ks[3], F2, 5, F2_PAD),
        "conv3_w": kan_weights(ks[4], ks[5], F3, 2, F3_PAD),
        # Linear(98,200) weight reshaped to (2, 49, 200) so the fused
        # conv3+flatten+linear kernel indexes it per conv3 output channel.
        "lin1_w": lin_w.reshape(2, 49, 200),
        "lin1_b": 0.01 * jax.random.normal(ks[7], (1, 200), jnp.float32),
    }
    # NOTE: linearlayer2 (200->10) exists in __init__ but is never used in
    # forward(), so it is intentionally not instantiated here.
    return params


def kanc_hdc_forward(params, x):
    B = x.shape[0]
    # conv1 (1->5, 3x3) + maxpool 2x2, fused via pooling phases.
    p1 = _im2col_conv1_phases(x, F1_PAD)                    # (4, 16, B*169)
    pooled = _kan_conv1_pool(p1, params["conv1_w"])         # (5, B*169)

    # conv2 (5->5, 5x5)
    y1 = pooled.reshape(5, B, 13, 13).transpose(1, 0, 2, 3)  # (B, 5, 13, 13)
    p2 = _im2col(y1, 5, 5, F2_PAD)                           # (128, B*81)
    y2 = _kan_conv(p2, params["conv2_w"])                    # (5, B*81)

    # conv3 (5->2, 3x3) + flatten + Linear(98,200) + ReLU, fused.
    y2 = y2.reshape(5, B, 9, 9).transpose(1, 0, 2, 3)        # (B, 5, 9, 9)
    p3 = _im2col(y2, 3, 3, F3_PAD, batched=True)             # (B, 48, 49)
    out = _kan_conv3_linear(p3, params["conv3_w"], params["lin1_w"],
                            params["lin1_b"], batch=B)       # (B, 200)
    # TODO(synk): hdc_clf.feed_forward (torchhd LeHDC trained from a CSV file)
    # has no Pallas equivalent and returns None in the original module; we
    # return the ReLU(linearlayer1) activations, the last tensor computed.
    return out


if __name__ == "__main__":
    key = jax.random.PRNGKey(0)
    pkey, xkey = jax.random.split(key)
    params = init_params(pkey)
    x = jax.random.normal(xkey, (2, 1, 28, 28), jnp.float32)  # NCHW, MNIST-sized
    out = jax.jit(functools.partial(kanc_hdc_forward, params))(x)
    out = jax.block_until_ready(out)
    assert out.shape == (2, 200) and out.dtype == jnp.float32
    print("KERNEL_OK")
</pallas_src>

<mosaic_0001>
module attributes {stable_mosaic.version = 11 : i64} {
  func.func @_conv1_pool_kernel(%arg0: i32, %arg1: memref<4x16x338xf32, #tpu.memory_space<vmem>>, %arg2: memref<5x144xf32, #tpu.memory_space<vmem>>, %arg3: memref<5x338xf32, #tpu.memory_space<vmem>>) attributes {dimension_semantics = [#tpu.dimension_semantics<arbitrary>], iteration_bounds = array<i64: 1>, scalar_prefetch = 0 : i64, scratch_operands = 0 : i64, tpu.core_type = #tpu.core_type<tc>, window_params = [{pipeline_mode = #tpu.pipeline_mode<synchronous>, transform_indices = @transform_0, window_bounds = array<i64: 4, 16, 338>}, {pipeline_mode = #tpu.pipeline_mode<synchronous>, transform_indices = @transform_1, window_bounds = array<i64: 5, 144>}, {pipeline_mode = #tpu.pipeline_mode<synchronous>, transform_indices = @transform_2, window_bounds = array<i64: 5, 338>}]} {
    %c0 = arith.constant 0 : index
    %c0_0 = arith.constant 0 : index
    %0 = vector.load %arg2[%c0, %c0_0] : memref<5x144xf32, #tpu.memory_space<vmem>>, vector<5x144xf32>
    %c0_1 = arith.constant 0 : index
    %c0_2 = arith.constant 0 : index
    %c0_3 = arith.constant 0 : index
    %1 = vector.load %arg1[%c0_1, %c0_2, %c0_3] : memref<4x16x338xf32, #tpu.memory_space<vmem>>, vector<1x16x338xf32>
    %2 = vector.shape_cast %1 : vector<1x16x338xf32> to vector<16x338xf32>
    %cst = arith.constant 0.000000e+00 : f32
    %3 = vector.broadcast %cst : f32 to vector<16x338xf32>
    %4 = arith.subf %3, %2 : vector<16x338xf32>
    %5 = math.exp %4 : vector<16x338xf32>
    %cst_4 = arith.constant 1.000000e+00 : f32
    %6 = vector.broadcast %cst_4 : f32 to vector<16x338xf32>
    %7 = arith.addf %6, %5 : vector<16x338xf32>
    %8 = tpu.reciprocal %7 {approx = true} : vector<16x338xf32> -> vector<16x338xf32>
    %9 = arith.mulf %2, %8 : vector<16x338xf32>
    %cst_5 = arith.constant -2.200000e+00 : f32
    %10 = vector.broadcast %cst_5 : f32 to vector<16x338xf32>
    %11 = arith.subf %2, %10 : vector<16x338xf32>
    %cst_6 = arith.constant 2.500000e+00 : f32
    %12 = vector.broadcast %cst_6 : f32 to vector<16x338xf32>
    %13 = arith.mulf %11, %12 : vector<16x338xf32>
    %14 = math.floor %13 : vector<16x338xf32>
    %15 = arith.subf %13, %14 : vector<16x338xf32>
    %16 = arith.mulf %15, %15 : vector<16x338xf32>
    %17 = arith.mulf %16, %15 : vector<16x338xf32>
    %cst_7 = arith.constant 0.166666672 : f32
    %18 = vector.broadcast %cst_7 : f32 to vector<16x338xf32>
    %19 = arith.mulf %17, %18 : vector<16x338xf32>
    %cst_8 = arith.constant -3.000000e+00 : f32
    %20 = vector.broadcast %cst_8 : f32 to vector<16x338xf32>
    %21 = arith.mulf %20, %15 : vector<16x338xf32>
    %cst_9 = arith.constant 3.000000e+00 : f32
    %22 = vector.broadcast %cst_9 : f32 to vector<16x338xf32>
    %23 = arith.addf %21, %22 : vector<16x338xf32>
    %24 = arith.mulf %23, %15 : vector<16x338xf32>
    %cst_10 = arith.constant 3.000000e+00 : f32
    %25 = vector.broadcast %cst_10 : f32 to vector<16x338xf32>
    %26 = arith.addf %24, %25 : vector<16x338xf32>
    %27 = arith.mulf %26, %15 : vector<16x338xf32>
    %cst_11 = arith.constant 1.000000e+00 : f32
    %28 = vector.broadcast %cst_11 : f32 to vector<16x338xf32>
    %29 = arith.addf %27, %28 : vector<16x338xf32>
    %cst_12 = arith.constant 0.166666672 : f32
    %30 = vector.broadcast %cst_12 : f32 to vector<16x338xf32>
    %31 = arith.mulf %29, %30 : vector<16x338xf32>
    %cst_13 = arith.constant 3.000000e+00 : f32
    %32 = vector.broadcast %cst_13 : f32 to vector<16x338xf32>
    %33 = arith.mulf %32, %15 : vector<16x338xf32>
    %cst_14 = arith.constant 6.000000e+00 : f32
    %34 = vector.broadcast %cst_14 : f32 to vector<16x338xf32>
    %35 = arith.subf %33, %34 : vector<16x338xf32>
    %36 = arith.mulf %35, %16 : vector<16x338xf32>
    %cst_15 = arith.constant 4.000000e+00 : f32
    %37 = vector.broadcast %cst_15 : f32 to vector<16x338xf32>
    %38 = arith.addf %36, %37 : vector<16x338xf32>
    %cst_16 = arith.constant 0.166666672 : f32
    %39 = vector.broadcast %cst_16 : f32 to vector<16x338xf32>
    %40 = arith.mulf %38, %39 : vector<16x338xf32>
    %cst_17 = arith.constant 1.000000e+00 : f32
    %41 = vector.broadcast %cst_17 : f32 to vector<16x338xf32>
    %42 = arith.subf %41, %15 : vector<16x338xf32>
    %43 = arith.mulf %42, %42 : vector<16x338xf32>
    %44 = arith.mulf %43, %42 : vector<16x338xf32>
    %cst_18 = arith.constant 0.166666672 : f32
    %45 = vector.broadcast %cst_18 : f32 to vector<16x338xf32>
    %46 = arith.mulf %44, %45 : vector<16x338xf32>
    %cst_19 = arith.constant 0.000000e+00 : f32
    %47 = vector.broadcast %cst_19 : f32 to vector<16x338xf32>
    %48 = arith.cmpf oeq, %14, %47 : vector<16x338xf32>
    %cst_20 = arith.constant 0.000000e+00 : f32
    %49 = vector.broadcast %cst_20 : f32 to vector<16x338xf32>
    %50 = arith.select %48, %19, %49 : vector<16x338xi1>, vector<16x338xf32>
    %cst_21 = arith.constant 1.000000e+00 : f32
    %51 = vector.broadcast %cst_21 : f32 to vector<16x338xf32>
    %52 = arith.cmpf oeq, %14, %51 : vector<16x338xf32>
    %cst_22 = arith.constant 0.000000e+00 : f32
    %53 = vector.broadcast %cst_22 : f32 to vector<16x338xf32>
    %54 = arith.select %52, %31, %53 : vector<16x338xi1>, vector<16x338xf32>
    %55 = arith.addf %50, %54 : vector<16x338xf32>
    %cst_23 = arith.constant 2.000000e+00 : f32
    %56 = vector.broadcast %cst_23 : f32 to vector<16x338xf32>
    %57 = arith.cmpf oeq, %14, %56 : vector<16x338xf32>
    %cst_24 = arith.constant 0.000000e+00 : f32
    %58 = vector.broadcast %cst_24 : f32 to vector<16x338xf32>
    %59 = arith.select %57, %40, %58 : vector<16x338xi1>, vector<16x338xf32>
    %60 = arith.addf %55, %59 : vector<16x338xf32>
    %cst_25 = arith.constant 3.000000e+00 : f32
    %61 = vector.broadcast %cst_25 : f32 to vector<16x338xf32>
    %62 = arith.cmpf oeq, %14, %61 : vector<16x338xf32>
    %cst_26 = arith.constant 0.000000e+00 : f32
    %63 = vector.broadcast %cst_26 : f32 to vector<16x338xf32>
    %64 = arith.select %62, %46, %63 : vector<16x338xi1>, vector<16x338xf32>
    %65 = arith.addf %60, %64 : vector<16x338xf32>
    %cst_27 = arith.constant 1.000000e+00 : f32
    %66 = vector.broadcast %cst_27 : f32 to vector<16x338xf32>
    %67 = arith.cmpf oeq, %14, %66 : vector<16x338xf32>
    %cst_28 = arith.constant 0.000000e+00 : f32
    %68 = vector.broadcast %cst_28 : f32 to vector<16x338xf32>
    %69 = arith.select %67, %19, %68 : vector<16x338xi1>, vector<16x338xf32>
    %cst_29 = arith.constant 2.000000e+00 : f32
    %70 = vector.broadcast %cst_29 : f32 to vector<16x338xf32>
    %71 = arith.cmpf oeq, %14, %70 : vector<16x338xf32>
    %cst_30 = arith.constant 0.000000e+00 : f32
    %72 = vector.broadcast %cst_30 : f32 to vector<16x338xf32>
    %73 = arith.select %71, %31, %72 : vector<16x338xi1>, vector<16x338xf32>
    %74 = arith.addf %69, %73 : vector<16x338xf32>
    %cst_31 = arith.constant 3.000000e+00 : f32
    %75 = vector.broadcast %cst_31 : f32 to vector<16x338xf32>
    %76 = arith.cmpf oeq, %14, %75 : vector<16x338xf32>
    %cst_32 = arith.constant 0.000000e+00 : f32
    %77 = vector.broadcast %cst_32 : f32 to vector<16x338xf32>
    %78 = arith.select %76, %40, %77 : vector<16x338xi1>, vector<16x338xf32>
    %79 = arith.addf %74, %78 : vector<16x338xf32>
    %cst_33 = arith.constant 4.000000e+00 : f32
    %80 = vector.broadcast %cst_33 : f32 to vector<16x338xf32>
    %81 = arith.cmpf oeq, %14, %80 : vector<16x338xf32>
    %cst_34 = arith.constant 0.000000e+00 : f32
    %82 = vector.broadcast %cst_34 : f32 to vector<16x338xf32>
    %83 = arith.select %81, %46, %82 : vector<16x338xi1>, vector<16x338xf32>
    %84 = arith.addf %79, %83 : vector<16x338xf32>
    %cst_35 = arith.constant 2.000000e+00 : f32
    %85 = vector.broadcast %cst_35 : f32 to vector<16x338xf32>
    %86 = arith.cmpf oeq, %14, %85 : vector<16x338xf32>
    %cst_36 = arith.constant 0.000000e+00 : f32
    %87 = vector.broadcast %cst_36 : f32 to vector<16x338xf32>
    %88 = arith.select %86, %19, %87 : vector<16x338xi1>, vector<16x338xf32>
    %cst_37 = arith.constant 3.000000e+00 : f32
    %89 = vector.broadcast %cst_37 : f32 to vector<16x338xf32>
    %90 = arith.cmpf oeq, %14, %89 : vector<16x338xf32>
    %cst_38 = arith.constant 0.000000e+00 : f32
    %91 = vector.broadcast %cst_38 : f32 to vector<16x338xf32>
    %92 = arith.select %90, %31, %91 : vector<16x338xi1>, vector<16x338xf32>
    %93 = arith.addf %88, %92 : vector<16x338xf32>
    %cst_39 = arith.constant 4.000000e+00 : f32
    %94 = vector.broadcast %cst_39 : f32 to vector<16x338xf32>
    %95 = arith.cmpf oeq, %14, %94 : vector<16x338xf32>
    %cst_40 = arith.constant 0.000000e+00 : f32
    %96 = vector.broadcast %cst_40 : f32 to vector<16x338xf32>
    %97 = arith.select %95, %40, %96 : vector<16x338xi1>, vector<16x338xf32>
    %98 = arith.addf %93, %97 : vector<16x338xf32>
    %cst_41 = arith.constant 5.000000e+00 : f32
    %99 = vector.broadcast %cst_41 : f32 to vector<16x338xf32>
    %100 = arith.cmpf oeq, %14, %99 : vector<16x338xf32>
    %cst_42 = arith.constant 0.000000e+00 : f32
    %101 = vector.broadcast %cst_42 : f32 to vector<16x338xf32>
    %102 = arith.select %100, %46, %101 : vector<16x338xi1>, vector<16x338xf32>
    %103 = arith.addf %98, %102 : vector<16x338xf32>
    %cst_43 = arith.constant 3.000000e+00 : f32
    %104 = vector.broadcast %cst_43 : f32 to vector<16x338xf32>
    %105 = arith.cmpf oeq, %14, %104 : vector<16x338xf32>
    %cst_44 = arith.constant 0.000000e+00 : f32
    %106 = vector.broadcast %cst_44 : f32 to vector<16x338xf32>
    %107 = arith.select %105, %19, %106 : vector<16x338xi1>, vector<16x338xf32>
    %cst_45 = arith.constant 4.000000e+00 : f32
    %108 = vector.broadcast %cst_45 : f32 to vector<16x338xf32>
    %109 = arith.cmpf oeq, %14, %108 : vector<16x338xf32>
    %cst_46 = arith.constant 0.000000e+00 : f32
    %110 = vector.broadcast %cst_46 : f32 to vector<16x338xf32>
    %111 = arith.select %109, %31, %110 : vector<16x338xi1>, vector<16x338xf32>
    %112 = arith.addf %107, %111 : vector<16x338xf32>
    %cst_47 = arith.constant 5.000000e+00 : f32
    %113 = vector.broadcast %cst_47 : f32 to vector<16x338xf32>
    %114 = arith.cmpf oeq, %14, %113 : vector<16x338xf32>
    %cst_48 = arith.constant 0.000000e+00 : f32
    %115 = vector.broadcast %cst_48 : f32 to vector<16x338xf32>
    %116 = arith.select %114, %40, %115 : vector<16x338xi1>, vector<16x338xf32>
    %117 = arith.addf %112, %116 : vector<16x338xf32>
    %cst_49 = arith.constant 6.000000e+00 : f32
    %118 = vector.broadcast %cst_49 : f32 to vector<16x338xf32>
    %119 = arith.cmpf oeq, %14, %118 : vector<16x338xf32>
    %cst_50 = arith.constant 0.000000e+00 : f32
    %120 = vector.broadcast %cst_50 : f32 to vector<16x338xf32>
    %121 = arith.select %119, %46, %120 : vector<16x338xi1>, vector<16x338xf32>
    %122 = arith.addf %117, %121 : vector<16x338xf32>
    %cst_51 = arith.constant 4.000000e+00 : f32
    %123 = vector.broadcast %cst_51 : f32 to vector<16x338xf32>
    %124 = arith.cmpf oeq, %14, %123 : vector<16x338xf32>
    %cst_52 = arith.constant 0.000000e+00 : f32
    %125 = vector.broadcast %cst_52 : f32 to vector<16x338xf32>
    %126 = arith.select %124, %19, %125 : vector<16x338xi1>, vector<16x338xf32>
    %cst_53 = arith.constant 5.000000e+00 : f32
    %127 = vector.broadcast %cst_53 : f32 to vector<16x338xf32>
    %128 = arith.cmpf oeq, %14, %127 : vector<16x338xf32>
    %cst_54 = arith.constant 0.000000e+00 : f32
    %129 = vector.broadcast %cst_54 : f32 to vector<16x338xf32>
    %130 = arith.select %128, %31, %129 : vector<16x338xi1>, vector<16x338xf32>
    %131 = arith.addf %126, %130 : vector<16x338xf32>
    %cst_55 = arith.constant 6.000000e+00 : f32
    %132 = vector.broadcast %cst_55 : f32 to vector<16x338xf32>
    %133 = arith.cmpf oeq, %14, %132 : vector<16x338xf32>
    %cst_56 = arith.constant 0.000000e+00 : f32
    %134 = vector.broadcast %cst_56 : f32 to vector<16x338xf32>
    %135 = arith.select %133, %40, %134 : vector<16x338xi1>, vector<16x338xf32>
    %136 = arith.addf %131, %135 : vector<16x338xf32>
    %cst_57 = arith.constant 7.000000e+00 : f32
    %137 = vector.broadcast %cst_57 : f32 to vector<16x338xf32>
    %138 = arith.cmpf oeq, %14, %137 : vector<16x338xf32>
    %cst_58 = arith.constant 0.000000e+00 : f32
    %139 = vector.broadcast %cst_58 : f32 to vector<16x338xf32>
    %140 = arith.select %138, %46, %139 : vector<16x338xi1>, vector<16x338xf32>
    %141 = arith.addf %136, %140 : vector<16x338xf32>
    %cst_59 = arith.constant 5.000000e+00 : f32
    %142 = vector.broadcast %cst_59 : f32 to vector<16x338xf32>
    %143 = arith.cmpf oeq, %14, %142 : vector<16x338xf32>
    %cst_60 = arith.constant 0.000000e+00 : f32
    %144 = vector.broadcast %cst_60 : f32 to vector<16x338xf32>
    %145 = arith.select %143, %19, %144 : vector<16x338xi1>, vector<16x338xf32>
    %cst_61 = arith.constant 6.000000e+00 : f32
    %146 = vector.broadcast %cst_61 : f32 to vector<16x338xf32>
    %147 = arith.cmpf oeq, %14, %146 : vector<16x338xf32>
    %cst_62 = arith.constant 0.000000e+00 : f32
    %148 = vector.broadcast %cst_62 : f32 to vector<16x338xf32>
    %149 = arith.select %147, %31, %148 : vector<16x338xi1>, vector<16x338xf32>
    %150 = arith.addf %145, %149 : vector<16x338xf32>
    %cst_63 = arith.constant 7.000000e+00 : f32
    %151 = vector.broadcast %cst_63 : f32 to vector<16x338xf32>
    %152 = arith.cmpf oeq, %14, %151 : vector<16x338xf32>
    %cst_64 = arith.constant 0.000000e+00 : f32
    %153 = vector.broadcast %cst_64 : f32 to vector<16x338xf32>
    %154 = arith.select %152, %40, %153 : vector<16x338xi1>, vector<16x338xf32>
    %155 = arith.addf %150, %154 : vector<16x338xf32>
    %cst_65 = arith.constant 8.000000e+00 : f32
    %156 = vector.broadcast %cst_65 : f32 to vector<16x338xf32>
    %157 = arith.cmpf oeq, %14, %156 : vector<16x338xf32>
    %cst_66 = arith.constant 0.000000e+00 : f32
    %158 = vector.broadcast %cst_66 : f32 to vector<16x338xf32>
    %159 = arith.select %157, %46, %158 : vector<16x338xi1>, vector<16x338xf32>
    %160 = arith.addf %155, %159 : vector<16x338xf32>
    %cst_67 = arith.constant 6.000000e+00 : f32
    %161 = vector.broadcast %cst_67 : f32 to vector<16x338xf32>
    %162 = arith.cmpf oeq, %14, %161 : vector<16x338xf32>
    %cst_68 = arith.constant 0.000000e+00 : f32
    %163 = vector.broadcast %cst_68 : f32 to vector<16x338xf32>
    %164 = arith.select %162, %19, %163 : vector<16x338xi1>, vector<16x338xf32>
    %cst_69 = arith.constant 7.000000e+00 : f32
    %165 = vector.broadcast %cst_69 : f32 to vector<16x338xf32>
    %166 = arith.cmpf oeq, %14, %165 : vector<16x338xf32>
    %cst_70 = arith.constant 0.000000e+00 : f32
    %167 = vector.broadcast %cst_70 : f32 to vector<16x338xf32>
    %168 = arith.select %166, %31, %167 : vector<16x338xi1>, vector<16x338xf32>
    %169 = arith.addf %164, %168 : vector<16x338xf32>
    %cst_71 = arith.constant 8.000000e+00 : f32
    %170 = vector.broadcast %cst_71 : f32 to vector<16x338xf32>
    %171 = arith.cmpf oeq, %14, %170 : vector<16x338xf32>
    %cst_72 = arith.constant 0.000000e+00 : f32
    %172 = vector.broadcast %cst_72 : f32 to vector<16x338xf32>
    %173 = arith.select %171, %40, %172 : vector<16x338xi1>, vector<16x338xf32>
    %174 = arith.addf %169, %173 : vector<16x338xf32>
    %cst_73 = arith.constant 9.000000e+00 : f32
    %175 = vector.broadcast %cst_73 : f32 to vector<16x338xf32>
    %176 = arith.cmpf oeq, %14, %175 : vector<16x338xf32>
    %cst_74 = arith.constant 0.000000e+00 : f32
    %177 = vector.broadcast %cst_74 : f32 to vector<16x338xf32>
    %178 = arith.select %176, %46, %177 : vector<16x338xi1>, vector<16x338xf32>
    %179 = arith.addf %174, %178 : vector<16x338xf32>
    %cst_75 = arith.constant 7.000000e+00 : f32
    %180 = vector.broadcast %cst_75 : f32 to vector<16x338xf32>
    %181 = arith.cmpf oeq, %14, %180 : vector<16x338xf32>
    %cst_76 = arith.constant 0.000000e+00 : f32
    %182 = vector.broadcast %cst_76 : f32 to vector<16x338xf32>
    %183 = arith.select %181, %19, %182 : vector<16x338xi1>, vector<16x338xf32>
    %cst_77 = arith.constant 8.000000e+00 : f32
    %184 = vector.broadcast %cst_77 : f32 to vector<16x338xf32>
    %185 = arith.cmpf oeq, %14, %184 : vector<16x338xf32>
    %cst_78 = arith.constant 0.000000e+00 : f32
    %186 = vector.broadcast %cst_78 : f32 to vector<16x338xf32>
    %187 = arith.select %185, %31, %186 : vector<16x338xi1>, vector<16x338xf32>
    %188 = arith.addf %183, %187 : vector<16x338xf32>
    %cst_79 = arith.constant 9.000000e+00 : f32
    %189 = vector.broadcast %cst_79 : f32 to vector<16x338xf32>
    %190 = arith.cmpf oeq, %14, %189 : vector<16x338xf32>
    %cst_80 = arith.constant 0.000000e+00 : f32
    %191 = vector.broadcast %cst_80 : f32 to vector<16x338xf32>
    %192 = arith.select %190, %40, %191 : vector<16x338xi1>, vector<16x338xf32>
    %193 = arith.addf %188, %192 : vector<16x338xf32>
    %cst_81 = arith.constant 1.000000e+01 : f32
    %194 = vector.broadcast %cst_81 : f32 to vector<16x338xf32>
    %195 = arith.cmpf oeq, %14, %194 : vector<16x338xf32>
    %cst_82 = arith.constant 0.000000e+00 : f32
    %196 = vector.broadcast %cst_82 : f32 to vector<16x338xf32>
    %197 = arith.select %195, %46, %196 : vector<16x338xi1>, vector<16x338xf32>
    %198 = arith.addf %193, %197 : vector<16x338xf32>
    %199 = tpu.concatenate %9, %65, %84, %103, %122, %141, %160, %179, %198 in 0 : vector<16x338xf32>, vector<16x338xf32>, vector<16x338xf32>, vector<16x338xf32>, vector<16x338xf32>, vector<16x338xf32>, vector<16x338xf32>, vector<16x338xf32>, vector<16x338xf32> -> vector<144x338xf32>
    %cst_83 = arith.constant dense<0.000000e+00> : vector<5x338xf32>
    %200 = tpu.matmul %0, %199, %cst_83 {dimension_numbers = #tpu.dot_dimension_numbers<[1], [0], [0], [1], [0, 0, 1, 1], [], []>} : vector<5x144xf32>, vector<144x338xf32>, vector<5x338xf32> -> vector<5x338xf32>
    %c1 = arith.constant 1 : index
    %c0_84 = arith.constant 0 : index
    %c0_85 = arith.constant 0 : index
    %201 = vector.load %arg1[%c1, %c0_84, %c0_85] : memref<4x16x338xf32, #tpu.memory_space<vmem>>, vector<1x16x338xf32>
    %202 = vector.shape_cast %201 : vector<1x16x338xf32> to vector<16x338xf32>
    %cst_86 = arith.constant 0.000000e+00 : f32
    %203 = vector.broadcast %cst_86 : f32 to vector<16x338xf32>
    %204 = arith.subf %203, %202 : vector<16x338xf32>
    %205 = math.exp %204 : vector<16x338xf32>
    %cst_87 = arith.constant 1.000000e+00 : f32
    %206 = vector.broadcast %cst_87 : f32 to vector<16x338xf32>
    %207 = arith.addf %206, %205 : vector<16x338xf32>
    %208 = tpu.reciprocal %207 {approx = true} : vector<16x338xf32> -> vector<16x338xf32>
    %209 = arith.mulf %202, %208 : vector<16x338xf32>
    %cst_88 = arith.constant -2.200000e+00 : f32
    %210 = vector.broadcast %cst_88 : f32 to vector<16x338xf32>
    %211 = arith.subf %202, %210 : vector<16x338xf32>
    %cst_89 = arith.constant 2.500000e+00 : f32
    %212 = vector.broadcast %cst_89 : f32 to vector<16x338xf32>
    %213 = arith.mulf %211, %212 : vector<16x338xf32>
    %214 = math.floor %213 : vector<16x338xf32>
    %215 = arith.subf %213, %214 : vector<16x338xf32>
    %216 = arith.mulf %215, %215 : vector<16x338xf32>
    %217 = arith.mulf %216, %215 : vector<16x338xf32>
    %cst_90 = arith.constant 0.166666672 : f32
    %218 = vector.broadcast %cst_90 : f32 to vector<16x338xf32>
    %219 = arith.mulf %217, %218 : vector<16x338xf32>
    %cst_91 = arith.constant -3.000000e+00 : f32
    %220 = vector.broadcast %cst_91 : f32 to vector<16x338xf32>
    %221 = arith.mulf %220, %215 : vector<16x338xf32>
    %cst_92 = arith.constant 3.000000e+00 : f32
    %222 = vector.broadcast %cst_92 : f32 to vector<16x338xf32>
    %223 = arith.addf %221, %222 : vector<16x338xf32>
    %224 = arith.mulf %223, %215 : vector<16x338xf32>
    %cst_93 = arith.constant 3.000000e+00 : f32
    %225 = vector.broadcast %cst_93 : f32 to vector<16x338xf32>
    %226 = arith.addf %224, %225 : vector<16x338xf32>
    %227 = arith.mulf %226, %215 : vector<16x338xf32>
    %cst_94 = arith.constant 1.000000e+00 : f32
    %228 = vector.broadcast %cst_94 : f32 to vector<16x338xf32>
    %229 = arith.addf %227, %228 : vector<16x338xf32>
    %cst_95 = arith.constant 0.166666672 : f32
    %230 = vector.broadcast %cst_95 : f32 to vector<16x338xf32>
    %231 = arith.mulf %229, %230 : vector<16x338xf32>
    %cst_96 = arith.constant 3.000000e+00 : f32
    %232 = vector.broadcast %cst_96 : f32 to vector<16x338xf32>
    %233 = arith.mulf %232, %215 : vector<16x338xf32>
    %cst_97 = arith.constant 6.000000e+00 : f32
    %234 = vector.broadcast %cst_97 : f32 to vector<16x338xf32>
    %235 = arith.subf %233, %234 : vector<16x338xf32>
    %236 = arith.mulf %235, %216 : vector<16x338xf32>
    %cst_98 = arith.constant 4.000000e+00 : f32
    %237 = vector.broadcast %cst_98 : f32 to vector<16x338xf32>
    %238 = arith.addf %236, %237 : vector<16x338xf32>
    %cst_99 = arith.constant 0.166666672 : f32
    %239 = vector.broadcast %cst_99 : f32 to vector<16x338xf32>
    %240 = arith.mulf %238, %239 : vector<16x338xf32>
    %cst_100 = arith.constant 1.000000e+00 : f32
    %241 = vector.broadcast %cst_100 : f32 to vector<16x338xf32>
    %242 = arith.subf %241, %215 : vector<16x338xf32>
    %243 = arith.mulf %242, %242 : vector<16x338xf32>
    %244 = arith.mulf %243, %242 : vector<16x338xf32>
    %cst_101 = arith.constant 0.166666672 : f32
    %245 = vector.broadcast %cst_101 : f32 to vector<16x338xf32>
    %246 = arith.mulf %244, %245 : vector<16x338xf32>
    %cst_102 = arith.constant 0.000000e+00 : f32
    %247 = vector.broadcast %cst_102 : f32 to vector<16x338xf32>
    %248 = arith.cmpf oeq, %214, %247 : vector<16x338xf32>
    %cst_103 = arith.constant 0.000000e+00 : f32
    %249 = vector.broadcast %cst_103 : f32 to vector<16x338xf32>
    %250 = arith.select %248, %219, %249 : vector<16x338xi1>, vector<16x338xf32>
    %cst_104 = arith.constant 1.000000e+00 : f32
    %251 = vector.broadcast %cst_104 : f32 to vector<16x338xf32>
    %252 = arith.cmpf oeq, %214, %251 : vector<16x338xf32>
    %cst_105 = arith.constant 0.000000e+00 : f32
    %253 = vector.broadcast %cst_105 : f32 to vector<16x338xf32>
    %254 = arith.select %252, %231, %253 : vector<16x338xi1>, vector<16x338xf32>
    %255 = arith.addf %250, %254 : vector<16x338xf32>
    %cst_106 = arith.constant 2.000000e+00 : f32
    %256 = vector.broadcast %cst_106 : f32 to vector<16x338xf32>
    %257 = arith.cmpf oeq, %214, %256 : vector<16x338xf32>
    %cst_107 = arith.constant 0.000000e+00 : f32
    %258 = vector.broadcast %cst_107 : f32 to vector<16x338xf32>
    %259 = arith.select %257, %240, %258 : vector<16x338xi1>, vector<16x338xf32>
    %260 = arith.addf %255, %259 : vector<16x338xf32>
    %cst_108 = arith.constant 3.000000e+00 : f32
    %261 = vector.broadcast %cst_108 : f32 to vector<16x338xf32>
    %262 = arith.cmpf oeq, %214, %261 : vector<16x338xf32>
    %cst_109 = arith.constant 0.000000e+00 : f32
    %263 = vector.broadcast %cst_109 : f32 to vector<16x338xf32>
    %264 = arith.select %262, %246, %263 : vector<16x338xi1>, vector<16x338xf32>
    %265 = arith.addf %260, %264 : vector<16x338xf32>
    %cst_110 = arith.constant 1.000000e+00 : f32
    %266 = vector.broadcast %cst_110 : f32 to vector<16x338xf32>
    %267 = arith.cmpf oeq, %214, %266 : vector<16x338xf32>
    %cst_111 = arith.constant 0.000000e+00 : f32
    %268 = vector.broadcast %cst_111 : f32 to vector<16x338xf32>
    %269 = arith.select %267, %219, %268 : vector<16x338xi1>, vector<16x338xf32>
    %cst_112 = arith.constant 2.000000e+00 : f32
    %270 = vector.broadcast %cst_112 : f32 to vector<16x338xf32>
    %271 = arith.cmpf oeq, %214, %270 : vector<16x338xf32>
    %cst_113 = arith.constant 0.000000e+00 : f32
    %272 = vector.broadcast %cst_113 : f32 to vector<16x338xf32>
    %273 = arith.select %271, %231, %272 : vector<16x338xi1>, vector<16x338xf32>
    %274 = arith.addf %269, %273 : vector<16x338xf32>
    %cst_114 = arith.constant 3.000000e+00 : f32
    %275 = vector.broadcast %cst_114 : f32 to vector<16x338xf32>
    %276 = arith.cmpf oeq, %214, %275 : vector<16x338xf32>
    %cst_115 = arith.constant 0.000000e+00 : f32
    %277 = vector.broadcast %cst_115 : f32 to vector<16x338xf32>
    %278 = arith.select %276, %240, %277 : vector<16x338xi1>, vector<16x338xf32>
    %279 = arith.addf %274, %278 : vector<16x338xf32>
    %cst_116 = arith.constant 4.000000e+00 : f32
    %280 = vector.broadcast %cst_116 : f32 to vector<16x338xf32>
    %281 = arith.cmpf oeq, %214, %280 : vector<16x338xf32>
    %cst_117 = arith.constant 0.000000e+00 : f32
    %282 = vector.broadcast %cst_117 : f32 to vector<16x338xf32>
    %283 = arith.select %281, %246, %282 : vector<16x338xi1>, vector<16x338xf32>
    %284 = arith.addf %279, %283 : vector<16x338xf32>
    %cst_118 = arith.constant 2.000000e+00 : f32
    %285 = vector.broadcast %cst_118 : f32 to vector<16x338xf32>
    %286 = arith.cmpf oeq, %214, %285 : vector<16x338xf32>
    %cst_119 = arith.constant 0.000000e+00 : f32
    %287 = vector.broadcast %cst_119 : f32 to vector<16x338xf32>
    %288 = arith.select %286, %219, %287 : vector<16x338xi1>, vector<16x338xf32>
    %cst_120 = arith.constant 3.000000e+00 : f32
    %289 = vector.broadcast %cst_120 : f32 to vector<16x338xf32>
    %290 = arith.cmpf oeq, %214, %289 : vector<16x338xf32>
    %cst_121 = arith.constant 0.000000e+00 : f32
    %291 = vector.broadcast %cst_121 : f32 to vector<16x338xf32>
    %292 = arith.select %290, %231, %291 : vector<16x338xi1>, vector<16x338xf32>
    %293 = arith.addf %288, %292 : vector<16x338xf32>
    %cst_122 = arith.constant 4.000000e+00 : f32
    %294 = vector.broadcast %cst_122 : f32 to vector<16x338xf32>
    %295 = arith.cmpf oeq, %214, %294 : vector<16x338xf32>
    %cst_123 = arith.constant 0.000000e+00 : f32
    %296 = vector.broadcast %cst_123 : f32 to vector<16x338xf32>
    %297 = arith.select %295, %240, %296 : vector<16x338xi1>, vector<16x338xf32>
    %298 = arith.addf %293, %297 : vector<16x338xf32>
    %cst_124 = arith.constant 5.000000e+00 : f32
    %299 = vector.broadcast %cst_124 : f32 to vector<16x338xf32>
    %300 = arith.cmpf oeq, %214, %299 : vector<16x338xf32>
    %cst_125 = arith.constant 0.000000e+00 : f32
    %301 = vector.broadcast %cst_125 : f32 to vector<16x338xf32>
    %302 = arith.select %300, %246, %301 : vector<16x338xi1>, vector<16x338xf32>
    %303 = arith.addf %298, %302 : vector<16x338xf32>
    %cst_126 = arith.constant 3.000000e+00 : f32
    %304 = vector.broadcast %cst_126 : f32 to vector<16x338xf32>
    %305 = arith.cmpf oeq, %214, %304 : vector<16x338xf32>
    %cst_127 = arith.constant 0.000000e+00 : f32
    %306 = vector.broadcast %cst_127 : f32 to vector<16x338xf32>
    %307 = arith.select %305, %219, %306 : vector<16x338xi1>, vector<16x338xf32>
    %cst_128 = arith.constant 4.000000e+00 : f32
    %308 = vector.broadcast %cst_128 : f32 to vector<16x338xf32>
    %309 = arith.cmpf oeq, %214, %308 : vector<16x338xf32>
    %cst_129 = arith.constant 0.000000e+00 : f32
    %310 = vector.broadcast %cst_129 : f32 to vector<16x338xf32>
    %311 = arith.select %309, %231, %310 : vector<16x338xi1>, vector<16x338xf32>
    %312 = arith.addf %307, %311 : vector<16x338xf32>
    %cst_130 = arith.constant 5.000000e+00 : f32
    %313 = vector.broadcast %cst_130 : f32 to vector<16x338xf32>
    %314 = arith.cmpf oeq, %214, %313 : vector<16x338xf32>
    %cst_131 = arith.constant 0.000000e+00 : f32
    %315 = vector.broadcast %cst_131 : f32 to vector<16x338xf32>
    %316 = arith.select %314, %240, %315 : vector<16x338xi1>, vector<16x338xf32>
    %317 = arith.addf %312, %316 : vector<16x338xf32>
    %cst_132 = arith.constant 6.000000e+00 : f32
    %318 = vector.broadcast %cst_132 : f32 to vector<16x338xf32>
    %319 = arith.cmpf oeq, %214, %318 : vector<16x338xf32>
    %cst_133 = arith.constant 0.000000e+00 : f32
    %320 = vector.broadcast %cst_133 : f32 to vector<16x338xf32>
    %321 = arith.select %319, %246, %320 : vector<16x338xi1>, vector<16x338xf32>
    %322 = arith.addf %317, %321 : vector<16x338xf32>
    %cst_134 = arith.constant 4.000000e+00 : f32
    %323 = vector.broadcast %cst_134 : f32 to vector<16x338xf32>
    %324 = arith.cmpf oeq, %214, %323 : vector<16x338xf32>
    %cst_135 = arith.constant 0.000000e+00 : f32
    %325 = vector.broadcast %cst_135 : f32 to vector<16x338xf32>
    %326 = arith.select %324, %219, %325 : vector<16x338xi1>, vector<16x338xf32>
    %cst_136 = arith.constant 5.000000e+00 : f32
    %327 = vector.broadcast %cst_136 : f32 to vector<16x338xf32>
    %328 = arith.cmpf oeq, %214, %327 : vector<16x338xf32>
    %cst_137 = arith.constant 0.000000e+00 : f32
    %329 = vector.broadcast %cst_137 : f32 to vector<16x338xf32>
    %330 = arith.select %328, %231, %329 : vector<16x338xi1>, vector<16x338xf32>
    %331 = arith.addf %326, %330 : vector<16x338xf32>
    %cst_138 = arith.constant 6.000000e+00 : f32
    %332 = vector.broadcast %cst_138 : f32 to vector<16x338xf32>
    %333 = arith.cmpf oeq, %214, %332 : vector<16x338xf32>
    %cst_139 = arith.constant 0.000000e+00 : f32
    %334 = vector.broadcast %cst_139 : f32 to vector<16x338xf32>
    %335 = arith.select %333, %240, %334 : vector<16x338xi1>, vector<16x338xf32>
    %336 = arith.addf %331, %335 : vector<16x338xf32>
    %cst_140 = arith.constant 7.000000e+00 : f32
    %337 = vector.broadcast %cst_140 : f32 to vector<16x338xf32>
    %338 = arith.cmpf oeq, %214, %337 : vector<16x338xf32>
    %cst_141 = arith.constant 0.000000e+00 : f32
    %339 = vector.broadcast %cst_141 : f32 to vector<16x338xf32>
    %340 = arith.select %338, %246, %339 : vector<16x338xi1>, vector<16x338xf32>
    %341 = arith.addf %336, %340 : vector<16x338xf32>
    %cst_142 = arith.constant 5.000000e+00 : f32
    %342 = vector.broadcast %cst_142 : f32 to vector<16x338xf32>
    %343 = arith.cmpf oeq, %214, %342 : vector<16x338xf32>
    %cst_143 = arith.constant 0.000000e+00 : f32
    %344 = vector.broadcast %cst_143 : f32 to vector<16x338xf32>
    %345 = arith.select %343, %219, %344 : vector<16x338xi1>, vector<16x338xf32>
    %cst_144 = arith.constant 6.000000e+00 : f32
    %346 = vector.broadcast %cst_144 : f32 to vector<16x338xf32>
    %347 = arith.cmpf oeq, %214, %346 : vector<16x338xf32>
    %cst_145 = arith.constant 0.000000e+00 : f32
    %348 = vector.broadcast %cst_145 : f32 to vector<16x338xf32>
    %349 = arith.select %347, %231, %348 : vector<16x338xi1>, vector<16x338xf32>
    %350 = arith.addf %345, %349 : vector<16x338xf32>
    %cst_146 = arith.constant 7.000000e+00 : f32
    %351 = vector.broadcast %cst_146 : f32 to vector<16x338xf32>
    %352 = arith.cmpf oeq, %214, %351 : vector<16x338xf32>
    %cst_147 = arith.constant 0.000000e+00 : f32
    %353 = vector.broadcast %cst_147 : f32 to vector<16x338xf32>
    %354 = arith.select %352, %240, %353 : vector<16x338xi1>, vector<16x338xf32>
    %355 = arith.addf %350, %354 : vector<16x338xf32>
    %cst_148 = arith.constant 8.000000e+00 : f32
    %356 = vector.broadcast %cst_148 : f32 to vector<16x338xf32>
    %357 = arith.cmpf oeq, %214, %356 : vector<16x338xf32>
    %cst_149 = arith.constant 0.000000e+00 : f32
    %358 = vector.broadcast %cst_149 : f32 to vector<16x338xf32>
    %359 = arith.select %357, %246, %358 : vector<16x338xi1>, vector<16x338xf32>
    %360 = arith.addf %355, %359 : vector<16x338xf32>
    %cst_150 = arith.constant 6.000000e+00 : f32
    %361 = vector.broadcast %cst_150 : f32 to vector<16x338xf32>
    %362 = arith.cmpf oeq, %214, %361 : vector<16x338xf32>
    %cst_151 = arith.constant 0.000000e+00 : f32
    %363 = vector.broadcast %cst_151 : f32 to vector<16x338xf32>
    %364 = arith.select %362, %219, %363 : vector<16x338xi1>, vector<16x338xf32>
    %cst_152 = arith.constant 7.000000e+00 : f32
    %365 = vector.broadcast %cst_152 : f32 to vector<16x338xf32>
    %366 = arith.cmpf oeq, %214, %365 : vector<16x338xf32>
    %cst_153 = arith.constant 0.000000e+00 : f32
    %367 = vector.broadcast %cst_153 : f32 to vector<16x338xf32>
    %368 = arith.select %366, %231, %367 : vector<16x338xi1>, vector<16x338xf32>
    %369 = arith.addf %364, %368 : vector<16x338xf32>
    %cst_154 = arith.constant 8.000000e+00 : f32
    %370 = vector.broadcast %cst_154 : f32 to vector<16x338xf32>
    %371 = arith.cmpf oeq, %214, %370 : vector<16x338xf32>
    %cst_155 = arith.constant 0.000000e+00 : f32
    %372 = vector.broadcast %cst_155 : f32 to vector<16x338xf32>
    %373 = arith.select %371, %240, %372 : vector<16x338xi1>, vector<16x338xf32>
    %374 = arith.addf %369, %373 : vector<16x338xf32>
    %cst_156 = arith.constant 9.000000e+00 : f32
    %375 = vector.broadcast %cst_156 : f32 to vector<16x338xf32>
    %376 = arith.cmpf oeq, %214, %375 : vector<16x338xf32>
    %cst_157 = arith.constant 0.000000e+00 : f32
    %377 = vector.broadcast %cst_157 : f32 to vector<16x338xf32>
    %378 = arith.select %376, %246, %377 : vector<16x338xi1>, vector<16x338xf32>
    %379 = arith.addf %374, %378 : vector<16x338xf32>
    %cst_158 = arith.constant 7.000000e+00 : f32
    %380 = vector.broadcast %cst_158 : f32 to vector<16x338xf32>
    %381 = arith.cmpf oeq, %214, %380 : vector<16x338xf32>
    %cst_159 = arith.constant 0.000000e+00 : f32
    %382 = vector.broadcast %cst_159 : f32 to vector<16x338xf32>
    %383 = arith.select %381, %219, %382 : vector<16x338xi1>, vector<16x338xf32>
    %cst_160 = arith.constant 8.000000e+00 : f32
    %384 = vector.broadcast %cst_160 : f32 to vector<16x338xf32>
    %385 = arith.cmpf oeq, %214, %384 : vector<16x338xf32>
    %cst_161 = arith.constant 0.000000e+00 : f32
    %386 = vector.broadcast %cst_161 : f32 to vector<16x338xf32>
    %387 = arith.select %385, %231, %386 : vector<16x338xi1>, vector<16x338xf32>
    %388 = arith.addf %383, %387 : vector<16x338xf32>
    %cst_162 = arith.constant 9.000000e+00 : f32
    %389 = vector.broadcast %cst_162 : f32 to vector<16x338xf32>
    %390 = arith.cmpf oeq, %214, %389 : vector<16x338xf32>
    %cst_163 = arith.constant 0.000000e+00 : f32
    %391 = vector.broadcast %cst_163 : f32 to vector<16x338xf32>
    %392 = arith.select %390, %240, %391 : vector<16x338xi1>, vector<16x338xf32>
    %393 = arith.addf %388, %392 : vector<16x338xf32>
    %cst_164 = arith.constant 1.000000e+01 : f32
    %394 = vector.broadcast %cst_164 : f32 to vector<16x338xf32>
    %395 = arith.cmpf oeq, %214, %394 : vector<16x338xf32>
    %cst_165 = arith.constant 0.000000e+00 : f32
    %396 = vector.broadcast %cst_165 : f32 to vector<16x338xf32>
    %397 = arith.select %395, %246, %396 : vector<16x338xi1>, vector<16x338xf32>
    %398 = arith.addf %393, %397 : vector<16x338xf32>
    %399 = tpu.concatenate %209, %265, %284, %303, %322, %341, %360, %379, %398 in 0 : vector<16x338xf32>, vector<16x338xf32>, vector<16x338xf32>, vector<16x338xf32>, vector<16x338xf32>, vector<16x338xf32>, vector<16x338xf32>, vector<16x338xf32>, vector<16x338xf32> -> vector<144x338xf32>
    %cst_166 = arith.constant dense<0.000000e+00> : vector<5x338xf32>
    %400 = tpu.matmul %0, %399, %cst_166 {dimension_numbers = #tpu.dot_dimension_numbers<[1], [0], [0], [1], [0, 0, 1, 1], [], []>} : vector<5x144xf32>, vector<144x338xf32>, vector<5x338xf32> -> vector<5x338xf32>
    %401 = arith.maximumf %200, %400 : vector<5x338xf32>
    %c2 = arith.constant 2 : index
    %c0_167 = arith.constant 0 : index
    %c0_168 = arith.constant 0 : index
    %402 = vector.load %arg1[%c2, %c0_167, %c0_168] : memref<4x16x338xf32, #tpu.memory_space<vmem>>, vector<1x16x338xf32>
    %403 = vector.shape_cast %402 : vector<1x16x338xf32> to vector<16x338xf32>
    %cst_169 = arith.constant 0.000000e+00 : f32
    %404 = vector.broadcast %cst_169 : f32 to vector<16x338xf32>
    %405 = arith.subf %404, %403 : vector<16x338xf32>
    %406 = math.exp %405 : vector<16x338xf32>
    %cst_170 = arith.constant 1.000000e+00 : f32
    %407 = vector.broadcast %cst_170 : f32 to vector<16x338xf32>
    %408 = arith.addf %407, %406 : vector<16x338xf32>
    %409 = tpu.reciprocal %408 {approx = true} : vector<16x338xf32> -> vector<16x338xf32>
    %410 = arith.mulf %403, %409 : vector<16x338xf32>
    %cst_171 = arith.constant -2.200000e+00 : f32
    %411 = vector.broadcast %cst_171 : f32 to vector<16x338xf32>
    %412 = arith.subf %403, %411 : vector<16x338xf32>
    %cst_172 = arith.constant 2.500000e+00 : f32
    %413 = vector.broadcast %cst_172 : f32 to vector<16x338xf32>
    %414 = arith.mulf %412, %413 : vector<16x338xf32>
    %415 = math.floor %414 : vector<16x338xf32>
    %416 = arith.subf %414, %415 : vector<16x338xf32>
    %417 = arith.mulf %416, %416 : vector<16x338xf32>
    %418 = arith.mulf %417, %416 : vector<16x338xf32>
    %cst_173 = arith.constant 0.166666672 : f32
    %419 = vector.broadcast %cst_173 : f32 to vector<16x338xf32>
    %420 = arith.mulf %418, %419 : vector<16x338xf32>
    %cst_174 = arith.constant -3.000000e+00 : f32
    %421 = vector.broadcast %cst_174 : f32 to vector<16x338xf32>
    %422 = arith.mulf %421, %416 : vector<16x338xf32>
    %cst_175 = arith.constant 3.000000e+00 : f32
    %423 = vector.broadcast %cst_175 : f32 to vector<16x338xf32>
    %424 = arith.addf %422, %423 : vector<16x338xf32>
    %425 = arith.mulf %424, %416 : vector<16x338xf32>
    %cst_176 = arith.constant 3.000000e+00 : f32
    %426 = vector.broadcast %cst_176 : f32 to vector<16x338xf32>
    %427 = arith.addf %425, %426 : vector<16x338xf32>
    %428 = arith.mulf %427, %416 : vector<16x338xf32>
    %cst_177 = arith.constant 1.000000e+00 : f32
    %429 = vector.broadcast %cst_177 : f32 to vector<16x338xf32>
    %430 = arith.addf %428, %429 : vector<16x338xf32>
    %cst_178 = arith.constant 0.166666672 : f32
    %431 = vector.broadcast %cst_178 : f32 to vector<16x338xf32>
    %432 = arith.mulf %430, %431 : vector<16x338xf32>
    %cst_179 = arith.constant 3.000000e+00 : f32
    %433 = vector.broadcast %cst_179 : f32 to vector<16x338xf32>
    %434 = arith.mulf %433, %416 : vector<16x338xf32>
    %cst_180 = arith.constant 6.000000e+00 : f32
    %435 = vector.broadcast %cst_180 : f32 to vector<16x338xf32>
    %436 = arith.subf %434, %435 : vector<16x338xf32>
    %437 = arith.mulf %436, %417 : vector<16x338xf32>
    %cst_181 = arith.constant 4.000000e+00 : f32
    %438 = vector.broadcast %cst_181 : f32 to vector<16x338xf32>
    %439 = arith.addf %437, %438 : vector<16x338xf32>
    %cst_182 = arith.constant 0.166666672 : f32
    %440 = vector.broadcast %cst_182 : f32 to vector<16x338xf32>
    %441 = arith.mulf %439, %440 : vector<16x338xf32>
    %cst_183 = arith.constant 1.000000e+00 : f32
    %442 = vector.broadcast %cst_183 : f32 to vector<16x338xf32>
    %443 = arith.subf %442, %416 : vector<16x338xf32>
    %444 = arith.mulf %443, %443 : vector<16x338xf32>
    %445 = arith.mulf %444, %443 : vector<16x338xf32>
    %cst_184 = arith.constant 0.166666672 : f32
    %446 = vector.broadcast %cst_184 : f32 to vector<16x338xf32>
    %447 = arith.mulf %445, %446 : vector<16x338xf32>
    %cst_185 = arith.constant 0.000000e+00 : f32
    %448 = vector.broadcast %cst_185 : f32 to vector<16x338xf32>
    %449 = arith.cmpf oeq, %415, %448 : vector<16x338xf32>
    %cst_186 = arith.constant 0.000000e+00 : f32
    %450 = vector.broadcast %cst_186 : f32 to vector<16x338xf32>
    %451 = arith.select %449, %420, %450 : vector<16x338xi1>, vector<16x338xf32>
    %cst_187 = arith.constant 1.000000e+00 : f32
    %452 = vector.broadcast %cst_187 : f32 to vector<16x338xf32>
    %453 = arith.cmpf oeq, %415, %452 : vector<16x338xf32>
    %cst_188 = arith.constant 0.000000e+00 : f32
    %454 = vector.broadcast %cst_188 : f32 to vector<16x338xf32>
    %455 = arith.select %453, %432, %454 : vector<16x338xi1>, vector<16x338xf32>
    %456 = arith.addf %451, %455 : vector<16x338xf32>
    %cst_189 = arith.constant 2.000000e+00 : f32
    %457 = vector.broadcast %cst_189 : f32 to vector<16x338xf32>
    %458 = arith.cmpf oeq, %415, %457 : vector<16x338xf32>
    %cst_190 = arith.constant 0.000000e+00 : f32
    %459 = vector.broadcast %cst_190 : f32 to vector<16x338xf32>
    %460 = arith.select %458, %441, %459 : vector<16x338xi1>, vector<16x338xf32>
    %461 = arith.addf %456, %460 : vector<16x338xf32>
    %cst_191 = arith.constant 3.000000e+00 : f32
    %462 = vector.broadcast %cst_191 : f32 to vector<16x338xf32>
    %463 = arith.cmpf oeq, %415, %462 : vector<16x338xf32>
    %cst_192 = arith.constant 0.000000e+00 : f32
    %464 = vector.broadcast %cst_192 : f32 to vector<16x338xf32>
    %465 = arith.select %463, %447, %464 : vector<16x338xi1>, vector<16x338xf32>
    %466 = arith.addf %461, %465 : vector<16x338xf32>
    %cst_193 = arith.constant 1.000000e+00 : f32
    %467 = vector.broadcast %cst_193 : f32 to vector<16x338xf32>
    %468 = arith.cmpf oeq, %415, %467 : vector<16x338xf32>
    %cst_194 = arith.constant 0.000000e+00 : f32
    %469 = vector.broadcast %cst_194 : f32 to vector<16x338xf32>
    %470 = arith.select %468, %420, %469 : vector<16x338xi1>, vector<16x338xf32>
    %cst_195 = arith.constant 2.000000e+00 : f32
    %471 = vector.broadcast %cst_195 : f32 to vector<16x338xf32>
    %472 = arith.cmpf oeq, %415, %471 : vector<16x338xf32>
    %cst_196 = arith.constant 0.000000e+00 : f32
    %473 = vector.broadcast %cst_196 : f32 to vector<16x338xf32>
    %474 = arith.select %472, %432, %473 : vector<16x338xi1>, vector<16x338xf32>
    %475 = arith.addf %470, %474 : vector<16x338xf32>
    %cst_197 = arith.constant 3.000000e+00 : f32
    %476 = vector.broadcast %cst_197 : f32 to vector<16x338xf32>
    %477 = arith.cmpf oeq, %415, %476 : vector<16x338xf32>
    %cst_198 = arith.constant 0.000000e+00 : f32
    %478 = vector.broadcast %cst_198 : f32 to vector<16x338xf32>
    %479 = arith.select %477, %441, %478 : vector<16x338xi1>, vector<16x338xf32>
    %480 = arith.addf %475, %479 : vector<16x338xf32>
    %cst_199 = arith.constant 4.000000e+00 : f32
    %481 = vector.broadcast %cst_199 : f32 to vector<16x338xf32>
    %482 = arith.cmpf oeq, %415, %481 : vector<16x338xf32>
    %cst_200 = arith.constant 0.000000e+00 : f32
    %483 = vector.broadcast %cst_200 : f32 to vector<16x338xf32>
    %484 = arith.select %482, %447, %483 : vector<16x338xi1>, vector<16x338xf32>
    %485 = arith.addf %480, %484 : vector<16x338xf32>
    %cst_201 = arith.constant 2.000000e+00 : f32
    %486 = vector.broadcast %cst_201 : f32 to vector<16x338xf32>
    %487 = arith.cmpf oeq, %415, %486 : vector<16x338xf32>
    %cst_202 = arith.constant 0.000000e+00 : f32
    %488 = vector.broadcast %cst_202 : f32 to vector<16x338xf32>
    %489 = arith.select %487, %420, %488 : vector<16x338xi1>, vector<16x338xf32>
    %cst_203 = arith.constant 3.000000e+00 : f32
    %490 = vector.broadcast %cst_203 : f32 to vector<16x338xf32>
    %491 = arith.cmpf oeq, %415, %490 : vector<16x338xf32>
    %cst_204 = arith.constant 0.000000e+00 : f32
    %492 = vector.broadcast %cst_204 : f32 to vector<16x338xf32>
    %493 = arith.select %491, %432, %492 : vector<16x338xi1>, vector<16x338xf32>
    %494 = arith.addf %489, %493 : vector<16x338xf32>
    %cst_205 = arith.constant 4.000000e+00 : f32
    %495 = vector.broadcast %cst_205 : f32 to vector<16x338xf32>
    %496 = arith.cmpf oeq, %415, %495 : vector<16x338xf32>
    %cst_206 = arith.constant 0.000000e+00 : f32
    %497 = vector.broadcast %cst_206 : f32 to vector<16x338xf32>
    %498 = arith.select %496, %441, %497 : vector<16x338xi1>, vector<16x338xf32>
    %499 = arith.addf %494, %498 : vector<16x338xf32>
    %cst_207 = arith.constant 5.000000e+00 : f32
    %500 = vector.broadcast %cst_207 : f32 to vector<16x338xf32>
    %501 = arith.cmpf oeq, %415, %500 : vector<16x338xf32>
    %cst_208 = arith.constant 0.000000e+00 : f32
    %502 = vector.broadcast %cst_208 : f32 to vector<16x338xf32>
    %503 = arith.select %501, %447, %502 : vector<16x338xi1>, vector<16x338xf32>
    %504 = arith.addf %499, %503 : vector<16x338xf32>
    %cst_209 = arith.constant 3.000000e+00 : f32
    %505 = vector.broadcast %cst_209 : f32 to vector<16x338xf32>
    %506 = arith.cmpf oeq, %415, %505 : vector<16x338xf32>
    %cst_210 = arith.constant 0.000000e+00 : f32
    %507 = vector.broadcast %cst_210 : f32 to vector<16x338xf32>
    %508 = arith.select %506, %420, %507 : vector<16x338xi1>, vector<16x338xf32>
    %cst_211 = arith.constant 4.000000e+00 : f32
    %509 = vector.broadcast %cst_211 : f32 to vector<16x338xf32>
    %510 = arith.cmpf oeq, %415, %509 : vector<16x338xf32>
    %cst_212 = arith.constant 0.000000e+00 : f32
    %511 = vector.broadcast %cst_212 : f32 to vector<16x338xf32>
    %512 = arith.select %510, %432, %511 : vector<16x338xi1>, vector<16x338xf32>
    %513 = arith.addf %508, %512 : vector<16x338xf32>
    %cst_213 = arith.constant 5.000000e+00 : f32
    %514 = vector.broadcast %cst_213 : f32 to vector<16x338xf32>
    %515 = arith.cmpf oeq, %415, %514 : vector<16x338xf32>
    %cst_214 = arith.constant 0.000000e+00 : f32
    %516 = vector.broadcast %cst_214 : f32 to vector<16x338xf32>
    %517 = arith.select %515, %441, %516 : vector<16x338xi1>, vector<16x338xf32>
    %518 = arith.addf %513, %517 : vector<16x338xf32>
    %cst_215 = arith.constant 6.000000e+00 : f32
    %519 = vector.broadcast %cst_215 : f32 to vector<16x338xf32>
    %520 = arith.cmpf oeq, %415, %519 : vector<16x338xf32>
    %cst_216 = arith.constant 0.000000e+00 : f32
    %521 = vector.broadcast %cst_216 : f32 to vector<16x338xf32>
    %522 = arith.select %520, %447, %521 : vector<16x338xi1>, vector<16x338xf32>
    %523 = arith.addf %518, %522 : vector<16x338xf32>
    %cst_217 = arith.constant 4.000000e+00 : f32
    %524 = vector.broadcast %cst_217 : f32 to vector<16x338xf32>
    %525 = arith.cmpf oeq, %415, %524 : vector<16x338xf32>
    %cst_218 = arith.constant 0.000000e+00 : f32
    %526 = vector.broadcast %cst_218 : f32 to vector<16x338xf32>
    %527 = arith.select %525, %420, %526 : vector<16x338xi1>, vector<16x338xf32>
    %cst_219 = arith.constant 5.000000e+00 : f32
    %528 = vector.broadcast %cst_219 : f32 to vector<16x338xf32>
    %529 = arith.cmpf oeq, %415, %528 : vector<16x338xf32>
    %cst_220 = arith.constant 0.000000e+00 : f32
    %530 = vector.broadcast %cst_220 : f32 to vector<16x338xf32>
    %531 = arith.select %529, %432, %530 : vector<16x338xi1>, vector<16x338xf32>
    %532 = arith.addf %527, %531 : vector<16x338xf32>
    %cst_221 = arith.constant 6.000000e+00 : f32
    %533 = vector.broadcast %cst_221 : f32 to vector<16x338xf32>
    %534 = arith.cmpf oeq, %415, %533 : vector<16x338xf32>
    %cst_222 = arith.constant 0.000000e+00 : f32
    %535 = vector.broadcast %cst_222 : f32 to vector<16x338xf32>
    %536 = arith.select %534, %441, %535 : vector<16x338xi1>, vector<16x338xf32>
    %537 = arith.addf %532, %536 : vector<16x338xf32>
    %cst_223 = arith.constant 7.000000e+00 : f32
    %538 = vector.broadcast %cst_223 : f32 to vector<16x338xf32>
    %539 = arith.cmpf oeq, %415, %538 : vector<16x338xf32>
    %cst_224 = arith.constant 0.000000e+00 : f32
    %540 = vector.broadcast %cst_224 : f32 to vector<16x338xf32>
    %541 = arith.select %539, %447, %540 : vector<16x338xi1>, vector<16x338xf32>
    %542 = arith.addf %537, %541 : vector<16x338xf32>
    %cst_225 = arith.constant 5.000000e+00 : f32
    %543 = vector.broadcast %cst_225 : f32 to vector<16x338xf32>
    %544 = arith.cmpf oeq, %415, %543 : vector<16x338xf32>
    %cst_226 = arith.constant 0.000000e+00 : f32
    %545 = vector.broadcast %cst_226 : f32 to vector<16x338xf32>
    %546 = arith.select %544, %420, %545 : vector<16x338xi1>, vector<16x338xf32>
    %cst_227 = arith.constant 6.000000e+00 : f32
    %547 = vector.broadcast %cst_227 : f32 to vector<16x338xf32>
    %548 = arith.cmpf oeq, %415, %547 : vector<16x338xf32>
    %cst_228 = arith.constant 0.000000e+00 : f32
    %549 = vector.broadcast %cst_228 : f32 to vector<16x338xf32>
    %550 = arith.select %548, %432, %549 : vector<16x338xi1>, vector<16x338xf32>
    %551 = arith.addf %546, %550 : vector<16x338xf32>
    %cst_229 = arith.constant 7.000000e+00 : f32
    %552 = vector.broadcast %cst_229 : f32 to vector<16x338xf32>
    %553 = arith.cmpf oeq, %415, %552 : vector<16x338xf32>
    %cst_230 = arith.constant 0.000000e+00 : f32
    %554 = vector.broadcast %cst_230 : f32 to vector<16x338xf32>
    %555 = arith.select %553, %441, %554 : vector<16x338xi1>, vector<16x338xf32>
    %556 = arith.addf %551, %555 : vector<16x338xf32>
    %cst_231 = arith.constant 8.000000e+00 : f32
    %557 = vector.broadcast %cst_231 : f32 to vector<16x338xf32>
    %558 = arith.cmpf oeq, %415, %557 : vector<16x338xf32>
    %cst_232 = arith.constant 0.000000e+00 : f32
    %559 = vector.broadcast %cst_232 : f32 to vector<16x338xf32>
    %560 = arith.select %558, %447, %559 : vector<16x338xi1>, vector<16x338xf32>
    %561 = arith.addf %556, %560 : vector<16x338xf32>
    %cst_233 = arith.constant 6.000000e+00 : f32
    %562 = vector.broadcast %cst_233 : f32 to vector<16x338xf32>
    %563 = arith.cmpf oeq, %415, %562 : vector<16x338xf32>
    %cst_234 = arith.constant 0.000000e+00 : f32
    %564 = vector.broadcast %cst_234 : f32 to vector<16x338xf32>
    %565 = arith.select %563, %420, %564 : vector<16x338xi1>, vector<16x338xf32>
    %cst_235 = arith.constant 7.000000e+00 : f32
    %566 = vector.broadcast %cst_235 : f32 to vector<16x338xf32>
    %567 = arith.cmpf oeq, %415, %566 : vector<16x338xf32>
    %cst_236 = arith.constant 0.000000e+00 : f32
    %568 = vector.broadcast %cst_236 : f32 to vector<16x338xf32>
    %569 = arith.select %567, %432, %568 : vector<16x338xi1>, vector<16x338xf32>
    %570 = arith.addf %565, %569 : vector<16x338xf32>
    %cst_237 = arith.constant 8.000000e+00 : f32
    %571 = vector.broadcast %cst_237 : f32 to vector<16x338xf32>
    %572 = arith.cmpf oeq, %415, %571 : vector<16x338xf32>
    %cst_238 = arith.constant 0.000000e+00 : f32
    %573 = vector.broadcast %cst_238 : f32 to vector<16x338xf32>
    %574 = arith.select %572, %441, %573 : vector<16x338xi1>, vector<16x338xf32>
    %575 = arith.addf %570, %574 : vector<16x338xf32>
    %cst_239 = arith.constant 9.000000e+00 : f32
    %576 = vector.broadcast %cst_239 : f32 to vector<16x338xf32>
    %577 = arith.cmpf oeq, %415, %576 : vector<16x338xf32>
    %cst_240 = arith.constant 0.000000e+00 : f32
    %578 = vector.broadcast %cst_240 : f32 to vector<16x338xf32>
    %579 = arith.select %577, %447, %578 : vector<16x338xi1>, vector<16x338xf32>
    %580 = arith.addf %575, %579 : vector<16x338xf32>
    %cst_241 = arith.constant 7.000000e+00 : f32
    %581 = vector.broadcast %cst_241 : f32 to vector<16x338xf32>
    %582 = arith.cmpf oeq, %415, %581 : vector<16x338xf32>
    %cst_242 = arith.constant 0.000000e+00 : f32
    %583 = vector.broadcast %cst_242 : f32 to vector<16x338xf32>
    %584 = arith.select %582, %420, %583 : vector<16x338xi1>, vector<16x338xf32>
    %cst_243 = arith.constant 8.000000e+00 : f32
    %585 = vector.broadcast %cst_243 : f32 to vector<16x338xf32>
    %586 = arith.cmpf oeq, %415, %585 : vector<16x338xf32>
    %cst_244 = arith.constant 0.000000e+00 : f32
    %587 = vector.broadcast %cst_244 : f32 to vector<16x338xf32>
    %588 = arith.select %586, %432, %587 : vector<16x338xi1>, vector<16x338xf32>
    %589 = arith.addf %584, %588 : vector<16x338xf32>
    %cst_245 = arith.constant 9.000000e+00 : f32
    %590 = vector.broadcast %cst_245 : f32 to vector<16x338xf32>
    %591 = arith.cmpf oeq, %415, %590 : vector<16x338xf32>
    %cst_246 = arith.constant 0.000000e+00 : f32
    %592 = vector.broadcast %cst_246 : f32 to vector<16x338xf32>
    %593 = arith.select %591, %441, %592 : vector<16x338xi1>, vector<16x338xf32>
    %594 = arith.addf %589, %593 : vector<16x338xf32>
    %cst_247 = arith.constant 1.000000e+01 : f32
    %595 = vector.broadcast %cst_247 : f32 to vector<16x338xf32>
    %596 = arith.cmpf oeq, %415, %595 : vector<16x338xf32>
    %cst_248 = arith.constant 0.000000e+00 : f32
    %597 = vector.broadcast %cst_248 : f32 to vector<16x338xf32>
    %598 = arith.select %596, %447, %597 : vector<16x338xi1>, vector<16x338xf32>
    %599 = arith.addf %594, %598 : vector<16x338xf32>
    %600 = tpu.concatenate %410, %466, %485, %504, %523, %542, %561, %580, %599 in 0 : vector<16x338xf32>, vector<16x338xf32>, vector<16x338xf32>, vector<16x338xf32>, vector<16x338xf32>, vector<16x338xf32>, vector<16x338xf32>, vector<16x338xf32>, vector<16x338xf32> -> vector<144x338xf32>
    %cst_249 = arith.constant dense<0.000000e+00> : vector<5x338xf32>
    %601 = tpu.matmul %0, %600, %cst_249 {dimension_numbers = #tpu.dot_dimension_numbers<[1], [0], [0], [1], [0, 0, 1, 1], [], []>} : vector<5x144xf32>, vector<144x338xf32>, vector<5x338xf32> -> vector<5x338xf32>
    %602 = arith.maximumf %401, %601 : vector<5x338xf32>
    %c3 = arith.constant 3 : index
    %c0_250 = arith.constant 0 : index
    %c0_251 = arith.constant 0 : index
    %603 = vector.load %arg1[%c3, %c0_250, %c0_251] : memref<4x16x338xf32, #tpu.memory_space<vmem>>, vector<1x16x338xf32>
    %604 = vector.shape_cast %603 : vector<1x16x338xf32> to vector<16x338xf32>
    %cst_252 = arith.constant 0.000000e+00 : f32
    %605 = vector.broadcast %cst_252 : f32 to vector<16x338xf32>
    %606 = arith.subf %605, %604 : vector<16x338xf32>
    %607 = math.exp %606 : vector<16x338xf32>
    %cst_253 = arith.constant 1.000000e+00 : f32
    %608 = vector.broadcast %cst_253 : f32 to vector<16x338xf32>
    %609 = arith.addf %608, %607 : vector<16x338xf32>
    %610 = tpu.reciprocal %609 {approx = true} : vector<16x338xf32> -> vector<16x338xf32>
    %611 = arith.mulf %604, %610 : vector<16x338xf32>
    %cst_254 = arith.constant -2.200000e+00 : f32
    %612 = vector.broadcast %cst_254 : f32 to vector<16x338xf32>
    %613 = arith.subf %604, %612 : vector<16x338xf32>
    %cst_255 = arith.constant 2.500000e+00 : f32
    %614 = vector.broadcast %cst_255 : f32 to vector<16x338xf32>
    %615 = arith.mulf %613, %614 : vector<16x338xf32>
    %616 = math.floor %615 : vector<16x338xf32>
    %617 = arith.subf %615, %616 : vector<16x338xf32>
    %618 = arith.mulf %617, %617 : vector<16x338xf32>
    %619 = arith.mulf %618, %617 : vector<16x338xf32>
    %cst_256 = arith.constant 0.166666672 : f32
    %620 = vector.broadcast %cst_256 : f32 to vector<16x338xf32>
    %621 = arith.mulf %619, %620 : vector<16x338xf32>
    %cst_257 = arith.constant -3.000000e+00 : f32
    %622 = vector.broadcast %cst_257 : f32 to vector<16x338xf32>
    %623 = arith.mulf %622, %617 : vector<16x338xf32>
    %cst_258 = arith.constant 3.000000e+00 : f32
    %624 = vector.broadcast %cst_258 : f32 to vector<16x338xf32>
    %625 = arith.addf %623, %624 : vector<16x338xf32>
    %626 = arith.mulf %625, %617 : vector<16x338xf32>
    %cst_259 = arith.constant 3.000000e+00 : f32
    %627 = vector.broadcast %cst_259 : f32 to vector<16x338xf32>
    %628 = arith.addf %626, %627 : vector<16x338xf32>
    %629 = arith.mulf %628, %617 : vector<16x338xf32>
    %cst_260 = arith.constant 1.000000e+00 : f32
    %630 = vector.broadcast %cst_260 : f32 to vector<16x338xf32>
    %631 = arith.addf %629, %630 : vector<16x338xf32>
    %cst_261 = arith.constant 0.166666672 : f32
    %632 = vector.broadcast %cst_261 : f32 to vector<16x338xf32>
    %633 = arith.mulf %631, %632 : vector<16x338xf32>
    %cst_262 = arith.constant 3.000000e+00 : f32
    %634 = vector.broadcast %cst_262 : f32 to vector<16x338xf32>
    %635 = arith.mulf %634, %617 : vector<16x338xf32>
    %cst_263 = arith.constant 6.000000e+00 : f32
    %636 = vector.broadcast %cst_263 : f32 to vector<16x338xf32>
    %637 = arith.subf %635, %636 : vector<16x338xf32>
    %638 = arith.mulf %637, %618 : vector<16x338xf32>
    %cst_264 = arith.constant 4.000000e+00 : f32
    %639 = vector.broadcast %cst_264 : f32 to vector<16x338xf32>
    %640 = arith.addf %638, %639 : vector<16x338xf32>
    %cst_265 = arith.constant 0.166666672 : f32
    %641 = vector.broadcast %cst_265 : f32 to vector<16x338xf32>
    %642 = arith.mulf %640, %641 : vector<16x338xf32>
    %cst_266 = arith.constant 1.000000e+00 : f32
    %643 = vector.broadcast %cst_266 : f32 to vector<16x338xf32>
    %644 = arith.subf %643, %617 : vector<16x338xf32>
    %645 = arith.mulf %644, %644 : vector<16x338xf32>
    %646 = arith.mulf %645, %644 : vector<16x338xf32>
    %cst_267 = arith.constant 0.166666672 : f32
    %647 = vector.broadcast %cst_267 : f32 to vector<16x338xf32>
    %648 = arith.mulf %646, %647 : vector<16x338xf32>
    %cst_268 = arith.constant 0.000000e+00 : f32
    %649 = vector.broadcast %cst_268 : f32 to vector<16x338xf32>
    %650 = arith.cmpf oeq, %616, %649 : vector<16x338xf32>
    %cst_269 = arith.constant 0.000000e+00 : f32
    %651 = vector.broadcast %cst_269 : f32 to vector<16x338xf32>
    %652 = arith.select %650, %621, %651 : vector<16x338xi1>, vector<16x338xf32>
    %cst_270 = arith.constant 1.000000e+00 : f32
    %653 = vector.broadcast %cst_270 : f32 to vector<16x338xf32>
    %654 = arith.cmpf oeq, %616, %653 : vector<16x338xf32>
    %cst_271 = arith.constant 0.000000e+00 : f32
    %655 = vector.broadcast %cst_271 : f32 to vector<16x338xf32>
    %656 = arith.select %654, %633, %655 : vector<16x338xi1>, vector<16x338xf32>
    %657 = arith.addf %652, %656 : vector<16x338xf32>
    %cst_272 = arith.constant 2.000000e+00 : f32
    %658 = vector.broadcast %cst_272 : f32 to vector<16x338xf32>
    %659 = arith.cmpf oeq, %616, %658 : vector<16x338xf32>
    %cst_273 = arith.constant 0.000000e+00 : f32
    %660 = vector.broadcast %cst_273 : f32 to vector<16x338xf32>
    %661 = arith.select %659, %642, %660 : vector<16x338xi1>, vector<16x338xf32>
    %662 = arith.addf %657, %661 : vector<16x338xf32>
    %cst_274 = arith.constant 3.000000e+00 : f32
    %663 = vector.broadcast %cst_274 : f32 to vector<16x338xf32>
    %664 = arith.cmpf oeq, %616, %663 : vector<16x338xf32>
    %cst_275 = arith.constant 0.000000e+00 : f32
    %665 = vector.broadcast %cst_275 : f32 to vector<16x338xf32>
    %666 = arith.select %664, %648, %665 : vector<16x338xi1>, vector<16x338xf32>
    %667 = arith.addf %662, %666 : vector<16x338xf32>
    %cst_276 = arith.constant 1.000000e+00 : f32
    %668 = vector.broadcast %cst_276 : f32 to vector<16x338xf32>
    %669 = arith.cmpf oeq, %616, %668 : vector<16x338xf32>
    %cst_277 = arith.constant 0.000000e+00 : f32
    %670 = vector.broadcast %cst_277 : f32 to vector<16x338xf32>
    %671 = arith.select %669, %621, %670 : vector<16x338xi1>, vector<16x338xf32>
    %cst_278 = arith.constant 2.000000e+00 : f32
    %672 = vector.broadcast %cst_278 : f32 to vector<16x338xf32>
    %673 = arith.cmpf oeq, %616, %672 : vector<16x338xf32>
    %cst_279 = arith.constant 0.000000e+00 : f32
    %674 = vector.broadcast %cst_279 : f32 to vector<16x338xf32>
    %675 = arith.select %673, %633, %674 : vector<16x338xi1>, vector<16x338xf32>
    %676 = arith.addf %671, %675 : vector<16x338xf32>
    %cst_280 = arith.constant 3.000000e+00 : f32
    %677 = vector.broadcast %cst_280 : f32 to vector<16x338xf32>
    %678 = arith.cmpf oeq, %616, %677 : vector<16x338xf32>
    %cst_281 = arith.constant 0.000000e+00 : f32
    %679 = vector.broadcast %cst_281 : f32 to vector<16x338xf32>
    %680 = arith.select %678, %642, %679 : vector<16x338xi1>, vector<16x338xf32>
    %681 = arith.addf %676, %680 : vector<16x338xf32>
    %cst_282 = arith.constant 4.000000e+00 : f32
    %682 = vector.broadcast %cst_282 : f32 to vector<16x338xf32>
    %683 = arith.cmpf oeq, %616, %682 : vector<16x338xf32>
    %cst_283 = arith.constant 0.000000e+00 : f32
    %684 = vector.broadcast %cst_283 : f32 to vector<16x338xf32>
    %685 = arith.select %683, %648, %684 : vector<16x338xi1>, vector<16x338xf32>
    %686 = arith.addf %681, %685 : vector<16x338xf32>
    %cst_284 = arith.constant 2.000000e+00 : f32
    %687 = vector.broadcast %cst_284 : f32 to vector<16x338xf32>
    %688 = arith.cmpf oeq, %616, %687 : vector<16x338xf32>
    %cst_285 = arith.constant 0.000000e+00 : f32
    %689 = vector.broadcast %cst_285 : f32 to vector<16x338xf32>
    %690 = arith.select %688, %621, %689 : vector<16x338xi1>, vector<16x338xf32>
    %cst_286 = arith.constant 3.000000e+00 : f32
    %691 = vector.broadcast %cst_286 : f32 to vector<16x338xf32>
    %692 = arith.cmpf oeq, %616, %691 : vector<16x338xf32>
    %cst_287 = arith.constant 0.000000e+00 : f32
    %693 = vector.broadcast %cst_287 : f32 to vector<16x338xf32>
    %694 = arith.select %692, %633, %693 : vector<16x338xi1>, vector<16x338xf32>
    %695 = arith.addf %690, %694 : vector<16x338xf32>
    %cst_288 = arith.constant 4.000000e+00 : f32
    %696 = vector.broadcast %cst_288 : f32 to vector<16x338xf32>
    %697 = arith.cmpf oeq, %616, %696 : vector<16x338xf32>
    %cst_289 = arith.constant 0.000000e+00 : f32
    %698 = vector.broadcast %cst_289 : f32 to vector<16x338xf32>
    %699 = arith.select %697, %642, %698 : vector<16x338xi1>, vector<16x338xf32>
    %700 = arith.addf %695, %699 : vector<16x338xf32>
    %cst_290 = arith.constant 5.000000e+00 : f32
    %701 = vector.broadcast %cst_290 : f32 to vector<16x338xf32>
    %702 = arith.cmpf oeq, %616, %701 : vector<16x338xf32>
    %cst_291 = arith.constant 0.000000e+00 : f32
    %703 = vector.broadcast %cst_291 : f32 to vector<16x338xf32>
    %704 = arith.select %702, %648, %703 : vector<16x338xi1>, vector<16x338xf32>
    %705 = arith.addf %700, %704 : vector<16x338xf32>
    %cst_292 = arith.constant 3.000000e+00 : f32
    %706 = vector.broadcast %cst_292 : f32 to vector<16x338xf32>
    %707 = arith.cmpf oeq, %616, %706 : vector<16x338xf32>
    %cst_293 = arith.constant 0.000000e+00 : f32
    %708 = vector.broadcast %cst_293 : f32 to vector<16x338xf32>
    %709 = arith.select %707, %621, %708 : vector<16x338xi1>, vector<16x338xf32>
    %cst_294 = arith.constant 4.000000e+00 : f32
    %710 = vector.broadcast %cst_294 : f32 to vector<16x338xf32>
    %711 = arith.cmpf oeq, %616, %710 : vector<16x338xf32>
    %cst_295 = arith.constant 0.000000e+00 : f32
    %712 = vector.broadcast %cst_295 : f32 to vector<16x338xf32>
    %713 = arith.select %711, %633, %712 : vector<16x338xi1>, vector<16x338xf32>
    %714 = arith.addf %709, %713 : vector<16x338xf32>
    %cst_296 = arith.constant 5.000000e+00 : f32
    %715 = vector.broadcast %cst_296 : f32 to vector<16x338xf32>
    %716 = arith.cmpf oeq, %616, %715 : vector<16x338xf32>
    %cst_297 = arith.constant 0.000000e+00 : f32
    %717 = vector.broadcast %cst_297 : f32 to vector<16x338xf32>
    %718 = arith.select %716, %642, %717 : vector<16x338xi1>, vector<16x338xf32>
    %719 = arith.addf %714, %718 : vector<16x338xf32>
    %cst_298 = arith.constant 6.000000e+00 : f32
    %720 = vector.broadcast %cst_298 : f32 to vector<16x338xf32>
    %721 = arith.cmpf oeq, %616, %720 : vector<16x338xf32>
    %cst_299 = arith.constant 0.000000e+00 : f32
    %722 = vector.broadcast %cst_299 : f32 to vector<16x338xf32>
    %723 = arith.select %721, %648, %722 : vector<16x338xi1>, vector<16x338xf32>
    %724 = arith.addf %719, %723 : vector<16x338xf32>
    %cst_300 = arith.constant 4.000000e+00 : f32
    %725 = vector.broadcast %cst_300 : f32 to vector<16x338xf32>
    %726 = arith.cmpf oeq, %616, %725 : vector<16x338xf32>
    %cst_301 = arith.constant 0.000000e+00 : f32
    %727 = vector.broadcast %cst_301 : f32 to vector<16x338xf32>
    %728 = arith.select %726, %621, %727 : vector<16x338xi1>, vector<16x338xf32>
    %cst_302 = arith.constant 5.000000e+00 : f32
    %729 = vector.broadcast %cst_302 : f32 to vector<16x338xf32>
    %730 = arith.cmpf oeq, %616, %729 : vector<16x338xf32>
    %cst_303 = arith.constant 0.000000e+00 : f32
    %731 = vector.broadcast %cst_303 : f32 to vector<16x338xf32>
    %732 = arith.select %730, %633, %731 : vector<16x338xi1>, vector<16x338xf32>
    %733 = arith.addf %728, %732 : vector<16x338xf32>
    %cst_304 = arith.constant 6.000000e+00 : f32
    %734 = vector.broadcast %cst_304 : f32 to vector<16x338xf32>
    %735 = arith.cmpf oeq, %616, %734 : vector<16x338xf32>
    %cst_305 = arith.constant 0.000000e+00 : f32
    %736 = vector.broadcast %cst_305 : f32 to vector<16x338xf32>
    %737 = arith.select %735, %642, %736 : vector<16x338xi1>, vector<16x338xf32>
    %738 = arith.addf %733, %737 : vector<16x338xf32>
    %cst_306 = arith.constant 7.000000e+00 : f32
    %739 = vector.broadcast %cst_306 : f32 to vector<16x338xf32>
    %740 = arith.cmpf oeq, %616, %739 : vector<16x338xf32>
    %cst_307 = arith.constant 0.000000e+00 : f32
    %741 = vector.broadcast %cst_307 : f32 to vector<16x338xf32>
    %742 = arith.select %740, %648, %741 : vector<16x338xi1>, vector<16x338xf32>
    %743 = arith.addf %738, %742 : vector<16x338xf32>
    %cst_308 = arith.constant 5.000000e+00 : f32
    %744 = vector.broadcast %cst_308 : f32 to vector<16x338xf32>
    %745 = arith.cmpf oeq, %616, %744 : vector<16x338xf32>
    %cst_309 = arith.constant 0.000000e+00 : f32
    %746 = vector.broadcast %cst_309 : f32 to vector<16x338xf32>
    %747 = arith.select %745, %621, %746 : vector<16x338xi1>, vector<16x338xf32>
    %cst_310 = arith.constant 6.000000e+00 : f32
    %748 = vector.broadcast %cst_310 : f32 to vector<16x338xf32>
    %749 = arith.cmpf oeq, %616, %748 : vector<16x338xf32>
    %cst_311 = arith.constant 0.000000e+00 : f32
    %750 = vector.broadcast %cst_311 : f32 to vector<16x338xf32>
    %751 = arith.select %749, %633, %750 : vector<16x338xi1>, vector<16x338xf32>
    %752 = arith.addf %747, %751 : vector<16x338xf32>
    %cst_312 = arith.constant 7.000000e+00 : f32
    %753 = vector.broadcast %cst_312 : f32 to vector<16x338xf32>
    %754 = arith.cmpf oeq, %616, %753 : vector<16x338xf32>
    %cst_313 = arith.constant 0.000000e+00 : f32
    %755 = vector.broadcast %cst_313 : f32 to vector<16x338xf32>
    %756 = arith.select %754, %642, %755 : vector<16x338xi1>, vector<16x338xf32>
    %757 = arith.addf %752, %756 : vector<16x338xf32>
    %cst_314 = arith.constant 8.000000e+00 : f32
    %758 = vector.broadcast %cst_314 : f32 to vector<16x338xf32>
    %759 = arith.cmpf oeq, %616, %758 : vector<16x338xf32>
    %cst_315 = arith.constant 0.000000e+00 : f32
    %760 = vector.broadcast %cst_315 : f32 to vector<16x338xf32>
    %761 = arith.select %759, %648, %760 : vector<16x338xi1>, vector<16x338xf32>
    %762 = arith.addf %757, %761 : vector<16x338xf32>
    %cst_316 = arith.constant 6.000000e+00 : f32
    %763 = vector.broadcast %cst_316 : f32 to vector<16x338xf32>
    %764 = arith.cmpf oeq, %616, %763 : vector<16x338xf32>
    %cst_317 = arith.constant 0.000000e+00 : f32
    %765 = vector.broadcast %cst_317 : f32 to vector<16x338xf32>
    %766 = arith.select %764, %621, %765 : vector<16x338xi1>, vector<16x338xf32>
    %cst_318 = arith.constant 7.000000e+00 : f32
    %767 = vector.broadcast %cst_318 : f32 to vector<16x338xf32>
    %768 = arith.cmpf oeq, %616, %767 : vector<16x338xf32>
    %cst_319 = arith.constant 0.000000e+00 : f32
    %769 = vector.broadcast %cst_319 : f32 to vector<16x338xf32>
    %770 = arith.select %768, %633, %769 : vector<16x338xi1>, vector<16x338xf32>
    %771 = arith.addf %766, %770 : vector<16x338xf32>
    %cst_320 = arith.constant 8.000000e+00 : f32
    %772 = vector.broadcast %cst_320 : f32 to vector<16x338xf32>
    %773 = arith.cmpf oeq, %616, %772 : vector<16x338xf32>
    %cst_321 = arith.constant 0.000000e+00 : f32
    %774 = vector.broadcast %cst_321 : f32 to vector<16x338xf32>
    %775 = arith.select %773, %642, %774 : vector<16x338xi1>, vector<16x338xf32>
    %776 = arith.addf %771, %775 : vector<16x338xf32>
    %cst_322 = arith.constant 9.000000e+00 : f32
    %777 = vector.broadcast %cst_322 : f32 to vector<16x338xf32>
    %778 = arith.cmpf oeq, %616, %777 : vector<16x338xf32>
    %cst_323 = arith.constant 0.000000e+00 : f32
    %779 = vector.broadcast %cst_323 : f32 to vector<16x338xf32>
    %780 = arith.select %778, %648, %779 : vector<16x338xi1>, vector<16x338xf32>
    %781 = arith.addf %776, %780 : vector<16x338xf32>
    %cst_324 = arith.constant 7.000000e+00 : f32
    %782 = vector.broadcast %cst_324 : f32 to vector<16x338xf32>
    %783 = arith.cmpf oeq, %616, %782 : vector<16x338xf32>
    %cst_325 = arith.constant 0.000000e+00 : f32
    %784 = vector.broadcast %cst_325 : f32 to vector<16x338xf32>
    %785 = arith.select %783, %621, %784 : vector<16x338xi1>, vector<16x338xf32>
    %cst_326 = arith.constant 8.000000e+00 : f32
    %786 = vector.broadcast %cst_326 : f32 to vector<16x338xf32>
    %787 = arith.cmpf oeq, %616, %786 : vector<16x338xf32>
    %cst_327 = arith.constant 0.000000e+00 : f32
    %788 = vector.broadcast %cst_327 : f32 to vector<16x338xf32>
    %789 = arith.select %787, %633, %788 : vector<16x338xi1>, vector<16x338xf32>
    %790 = arith.addf %785, %789 : vector<16x338xf32>
    %cst_328 = arith.constant 9.000000e+00 : f32
    %791 = vector.broadcast %cst_328 : f32 to vector<16x338xf32>
    %792 = arith.cmpf oeq, %616, %791 : vector<16x338xf32>
    %cst_329 = arith.constant 0.000000e+00 : f32
    %793 = vector.broadcast %cst_329 : f32 to vector<16x338xf32>
    %794 = arith.select %792, %642, %793 : vector<16x338xi1>, vector<16x338xf32>
    %795 = arith.addf %790, %794 : vector<16x338xf32>
    %cst_330 = arith.constant 1.000000e+01 : f32
    %796 = vector.broadcast %cst_330 : f32 to vector<16x338xf32>
    %797 = arith.cmpf oeq, %616, %796 : vector<16x338xf32>
    %cst_331 = arith.constant 0.000000e+00 : f32
    %798 = vector.broadcast %cst_331 : f32 to vector<16x338xf32>
    %799 = arith.select %797, %648, %798 : vector<16x338xi1>, vector<16x338xf32>
    %800 = arith.addf %795, %799 : vector<16x338xf32>
    %801 = tpu.concatenate %611, %667, %686, %705, %724, %743, %762, %781, %800 in 0 : vector<16x338xf32>, vector<16x338xf32>, vector<16x338xf32>, vector<16x338xf32>, vector<16x338xf32>, vector<16x338xf32>, vector<16x338xf32>, vector<16x338xf32>, vector<16x338xf32> -> vector<144x338xf32>
    %cst_332 = arith.constant dense<0.000000e+00> : vector<5x338xf32>
    %802 = tpu.matmul %0, %801, %cst_332 {dimension_numbers = #tpu.dot_dimension_numbers<[1], [0], [0], [1], [0, 0, 1, 1], [], []>} : vector<5x144xf32>, vector<144x338xf32>, vector<5x338xf32> -> vector<5x338xf32>
    %803 = arith.maximumf %602, %802 : vector<5x338xf32>
    %c0_333 = arith.constant 0 : index
    %c0_334 = arith.constant 0 : index
    %804 = vector.load %arg3[%c0_333, %c0_334] : memref<5x338xf32, #tpu.memory_space<vmem>>, vector<5x338xf32>
    tpu.vector_store %arg3[%c0_333, %c0_334], %803 {strides = array<i32>} : memref<5x338xf32, #tpu.memory_space<vmem>>, vector<5x338xf32>,
    return
  }
  func.func @transform_0(%arg0: i32) -> (i32, i32, i32) {
    %c0_i32 = arith.constant 0 : i32
    %c0_i32_0 = arith.constant 0 : i32
    %c0_i32_1 = arith.constant 0 : i32
    %c0_i32_2 = arith.constant 0 : i32
    return %c0_i32, %c0_i32_0, %c0_i32_1 : i32, i32, i32
  }
  func.func @transform_1(%arg0: i32) -> (i32, i32) {
    %c0_i32 = arith.constant 0 : i32
    %c0_i32_0 = arith.constant 0 : i32
    %c0_i32_1 = arith.constant 0 : i32
    return %c0_i32, %c0_i32_0 : i32, i32
  }
  func.func @transform_2(%arg0: i32) -> (i32, i32) {
    %c0_i32 = arith.constant 0 : i32
    %c0_i32_0 = arith.constant 0 : i32
    %c0_i32_1 = arith.constant 0 : i32
    return %c0_i32, %c0_i32_0 : i32, i32
  }
}

module attributes {stable_mosaic.version = 11 : i64} {
  func.func @_conv_kernel(%arg0: i32, %arg1: memref<128x162xf32, #tpu.memory_space<vmem>>, %arg2: memref<5x1152xf32, #tpu.memory_space<vmem>>, %arg3: memref<5x162xf32, #tpu.memory_space<vmem>>) attributes {dimension_semantics = [#tpu.dimension_semantics<arbitrary>], iteration_bounds = array<i64: 1>, scalar_prefetch = 0 : i64, scratch_operands = 0 : i64, tpu.core_type = #tpu.core_type<tc>, window_params = [{pipeline_mode = #tpu.pipeline_mode<synchronous>, transform_indices = @transform_0, window_bounds = array<i64: 128, 162>}, {pipeline_mode = #tpu.pipeline_mode<synchronous>, transform_indices = @transform_1, window_bounds = array<i64: 5, 1152>}, {pipeline_mode = #tpu.pipeline_mode<synchronous>, transform_indices = @transform_2, window_bounds = array<i64: 5, 162>}]} {
    %c0 = arith.constant 0 : index
    %c0_0 = arith.constant 0 : index
    %0 = vector.load %arg1[%c0, %c0_0] : memref<128x162xf32, #tpu.memory_space<vmem>>, vector<128x162xf32>
    %cst = arith.constant 0.000000e+00 : f32
    %1 = vector.broadcast %cst : f32 to vector<128x162xf32>
    %2 = arith.subf %1, %0 : vector<128x162xf32>
    %3 = math.exp %2 : vector<128x162xf32>
    %cst_1 = arith.constant 1.000000e+00 : f32
    %4 = vector.broadcast %cst_1 : f32 to vector<128x162xf32>
    %5 = arith.addf %4, %3 : vector<128x162xf32>
    %6 = tpu.reciprocal %5 {approx = true} : vector<128x162xf32> -> vector<128x162xf32>
    %7 = arith.mulf %0, %6 : vector<128x162xf32>
    %cst_2 = arith.constant -2.200000e+00 : f32
    %8 = vector.broadcast %cst_2 : f32 to vector<128x162xf32>
    %9 = arith.subf %0, %8 : vector<128x162xf32>
    %cst_3 = arith.constant 2.500000e+00 : f32
    %10 = vector.broadcast %cst_3 : f32 to vector<128x162xf32>
    %11 = arith.mulf %9, %10 : vector<128x162xf32>
    %12 = math.floor %11 : vector<128x162xf32>
    %13 = arith.subf %11, %12 : vector<128x162xf32>
    %14 = arith.mulf %13, %13 : vector<128x162xf32>
    %15 = arith.mulf %14, %13 : vector<128x162xf32>
    %cst_4 = arith.constant 0.166666672 : f32
    %16 = vector.broadcast %cst_4 : f32 to vector<128x162xf32>
    %17 = arith.mulf %15, %16 : vector<128x162xf32>
    %cst_5 = arith.constant -3.000000e+00 : f32
    %18 = vector.broadcast %cst_5 : f32 to vector<128x162xf32>
    %19 = arith.mulf %18, %13 : vector<128x162xf32>
    %cst_6 = arith.constant 3.000000e+00 : f32
    %20 = vector.broadcast %cst_6 : f32 to vector<128x162xf32>
    %21 = arith.addf %19, %20 : vector<128x162xf32>
    %22 = arith.mulf %21, %13 : vector<128x162xf32>
    %cst_7 = arith.constant 3.000000e+00 : f32
    %23 = vector.broadcast %cst_7 : f32 to vector<128x162xf32>
    %24 = arith.addf %22, %23 : vector<128x162xf32>
    %25 = arith.mulf %24, %13 : vector<128x162xf32>
    %cst_8 = arith.constant 1.000000e+00 : f32
    %26 = vector.broadcast %cst_8 : f32 to vector<128x162xf32>
    %27 = arith.addf %25, %26 : vector<128x162xf32>
    %cst_9 = arith.constant 0.166666672 : f32
    %28 = vector.broadcast %cst_9 : f32 to vector<128x162xf32>
    %29 = arith.mulf %27, %28 : vector<128x162xf32>
    %cst_10 = arith.constant 3.000000e+00 : f32
    %30 = vector.broadcast %cst_10 : f32 to vector<128x162xf32>
    %31 = arith.mulf %30, %13 : vector<128x162xf32>
    %cst_11 = arith.constant 6.000000e+00 : f32
    %32 = vector.broadcast %cst_11 : f32 to vector<128x162xf32>
    %33 = arith.subf %31, %32 : vector<128x162xf32>
    %34 = arith.mulf %33, %14 : vector<128x162xf32>
    %cst_12 = arith.constant 4.000000e+00 : f32
    %35 = vector.broadcast %cst_12 : f32 to vector<128x162xf32>
    %36 = arith.addf %34, %35 : vector<128x162xf32>
    %cst_13 = arith.constant 0.166666672 : f32
    %37 = vector.broadcast %cst_13 : f32 to vector<128x162xf32>
    %38 = arith.mulf %36, %37 : vector<128x162xf32>
    %cst_14 = arith.constant 1.000000e+00 : f32
    %39 = vector.broadcast %cst_14 : f32 to vector<128x162xf32>
    %40 = arith.subf %39, %13 : vector<128x162xf32>
    %41 = arith.mulf %40, %40 : vector<128x162xf32>
    %42 = arith.mulf %41, %40 : vector<128x162xf32>
    %cst_15 = arith.constant 0.166666672 : f32
    %43 = vector.broadcast %cst_15 : f32 to vector<128x162xf32>
    %44 = arith.mulf %42, %43 : vector<128x162xf32>
    %cst_16 = arith.constant 0.000000e+00 : f32
    %45 = vector.broadcast %cst_16 : f32 to vector<128x162xf32>
    %46 = arith.cmpf oeq, %12, %45 : vector<128x162xf32>
    %cst_17 = arith.constant 0.000000e+00 : f32
    %47 = vector.broadcast %cst_17 : f32 to vector<128x162xf32>
    %48 = arith.select %46, %17, %47 : vector<128x162xi1>, vector<128x162xf32>
    %cst_18 = arith.constant 1.000000e+00 : f32
    %49 = vector.broadcast %cst_18 : f32 to vector<128x162xf32>
    %50 = arith.cmpf oeq, %12, %49 : vector<128x162xf32>
    %cst_19 = arith.constant 0.000000e+00 : f32
    %51 = vector.broadcast %cst_19 : f32 to vector<128x162xf32>
    %52 = arith.select %50, %29, %51 : vector<128x162xi1>, vector<128x162xf32>
    %53 = arith.addf %48, %52 : vector<128x162xf32>
    %cst_20 = arith.constant 2.000000e+00 : f32
    %54 = vector.broadcast %cst_20 : f32 to vector<128x162xf32>
    %55 = arith.cmpf oeq, %12, %54 : vector<128x162xf32>
    %cst_21 = arith.constant 0.000000e+00 : f32
    %56 = vector.broadcast %cst_21 : f32 to vector<128x162xf32>
    %57 = arith.select %55, %38, %56 : vector<128x162xi1>, vector<128x162xf32>
    %58 = arith.addf %53, %57 : vector<128x162xf32>
    %cst_22 = arith.constant 3.000000e+00 : f32
    %59 = vector.broadcast %cst_22 : f32 to vector<128x162xf32>
    %60 = arith.cmpf oeq, %12, %59 : vector<128x162xf32>
    %cst_23 = arith.constant 0.000000e+00 : f32
    %61 = vector.broadcast %cst_23 : f32 to vector<128x162xf32>
    %62 = arith.select %60, %44, %61 : vector<128x162xi1>, vector<128x162xf32>
    %63 = arith.addf %58, %62 : vector<128x162xf32>
    %cst_24 = arith.constant 1.000000e+00 : f32
    %64 = vector.broadcast %cst_24 : f32 to vector<128x162xf32>
    %65 = arith.cmpf oeq, %12, %64 : vector<128x162xf32>
    %cst_25 = arith.constant 0.000000e+00 : f32
    %66 = vector.broadcast %cst_25 : f32 to vector<128x162xf32>
    %67 = arith.select %65, %17, %66 : vector<128x162xi1>, vector<128x162xf32>
    %cst_26 = arith.constant 2.000000e+00 : f32
    %68 = vector.broadcast %cst_26 : f32 to vector<128x162xf32>
    %69 = arith.cmpf oeq, %12, %68 : vector<128x162xf32>
    %cst_27 = arith.constant 0.000000e+00 : f32
    %70 = vector.broadcast %cst_27 : f32 to vector<128x162xf32>
    %71 = arith.select %69, %29, %70 : vector<128x162xi1>, vector<128x162xf32>
    %72 = arith.addf %67, %71 : vector<128x162xf32>
    %cst_28 = arith.constant 3.000000e+00 : f32
    %73 = vector.broadcast %cst_28 : f32 to vector<128x162xf32>
    %74 = arith.cmpf oeq, %12, %73 : vector<128x162xf32>
    %cst_29 = arith.constant 0.000000e+00 : f32
    %75 = vector.broadcast %cst_29 : f32 to vector<128x162xf32>
    %76 = arith.select %74, %38, %75 : vector<128x162xi1>, vector<128x162xf32>
    %77 = arith.addf %72, %76 : vector<128x162xf32>
    %cst_30 = arith.constant 4.000000e+00 : f32
    %78 = vector.broadcast %cst_30 : f32 to vector<128x162xf32>
    %79 = arith.cmpf oeq, %12, %78 : vector<128x162xf32>
    %cst_31 = arith.constant 0.000000e+00 : f32
    %80 = vector.broadcast %cst_31 : f32 to vector<128x162xf32>
    %81 = arith.select %79, %44, %80 : vector<128x162xi1>, vector<128x162xf32>
    %82 = arith.addf %77, %81 : vector<128x162xf32>
    %cst_32 = arith.constant 2.000000e+00 : f32
    %83 = vector.broadcast %cst_32 : f32 to vector<128x162xf32>
    %84 = arith.cmpf oeq, %12, %83 : vector<128x162xf32>
    %cst_33 = arith.constant 0.000000e+00 : f32
    %85 = vector.broadcast %cst_33 : f32 to vector<128x162xf32>
    %86 = arith.select %84, %17, %85 : vector<128x162xi1>, vector<128x162xf32>
    %cst_34 = arith.constant 3.000000e+00 : f32
    %87 = vector.broadcast %cst_34 : f32 to vector<128x162xf32>
    %88 = arith.cmpf oeq, %12, %87 : vector<128x162xf32>
    %cst_35 = arith.constant 0.000000e+00 : f32
    %89 = vector.broadcast %cst_35 : f32 to vector<128x162xf32>
    %90 = arith.select %88, %29, %89 : vector<128x162xi1>, vector<128x162xf32>
    %91 = arith.addf %86, %90 : vector<128x162xf32>
    %cst_36 = arith.constant 4.000000e+00 : f32
    %92 = vector.broadcast %cst_36 : f32 to vector<128x162xf32>
    %93 = arith.cmpf oeq, %12, %92 : vector<128x162xf32>
    %cst_37 = arith.constant 0.000000e+00 : f32
    %94 = vector.broadcast %cst_37 : f32 to vector<128x162xf32>
    %95 = arith.select %93, %38, %94 : vector<128x162xi1>, vector<128x162xf32>
    %96 = arith.addf %91, %95 : vector<128x162xf32>
    %cst_38 = arith.constant 5.000000e+00 : f32
    %97 = vector.broadcast %cst_38 : f32 to vector<128x162xf32>
    %98 = arith.cmpf oeq, %12, %97 : vector<128x162xf32>
    %cst_39 = arith.constant 0.000000e+00 : f32
    %99 = vector.broadcast %cst_39 : f32 to vector<128x162xf32>
    %100 = arith.select %98, %44, %99 : vector<128x162xi1>, vector<128x162xf32>
    %101 = arith.addf %96, %100 : vector<128x162xf32>
    %cst_40 = arith.constant 3.000000e+00 : f32
    %102 = vector.broadcast %cst_40 : f32 to vector<128x162xf32>
    %103 = arith.cmpf oeq, %12, %102 : vector<128x162xf32>
    %cst_41 = arith.constant 0.000000e+00 : f32
    %104 = vector.broadcast %cst_41 : f32 to vector<128x162xf32>
    %105 = arith.select %103, %17, %104 : vector<128x162xi1>, vector<128x162xf32>
    %cst_42 = arith.constant 4.000000e+00 : f32
    %106 = vector.broadcast %cst_42 : f32 to vector<128x162xf32>
    %107 = arith.cmpf oeq, %12, %106 : vector<128x162xf32>
    %cst_43 = arith.constant 0.000000e+00 : f32
    %108 = vector.broadcast %cst_43 : f32 to vector<128x162xf32>
    %109 = arith.select %107, %29, %108 : vector<128x162xi1>, vector<128x162xf32>
    %110 = arith.addf %105, %109 : vector<128x162xf32>
    %cst_44 = arith.constant 5.000000e+00 : f32
    %111 = vector.broadcast %cst_44 : f32 to vector<128x162xf32>
    %112 = arith.cmpf oeq, %12, %111 : vector<128x162xf32>
    %cst_45 = arith.constant 0.000000e+00 : f32
    %113 = vector.broadcast %cst_45 : f32 to vector<128x162xf32>
    %114 = arith.select %112, %38, %113 : vector<128x162xi1>, vector<128x162xf32>
    %115 = arith.addf %110, %114 : vector<128x162xf32>
    %cst_46 = arith.constant 6.000000e+00 : f32
    %116 = vector.broadcast %cst_46 : f32 to vector<128x162xf32>
    %117 = arith.cmpf oeq, %12, %116 : vector<128x162xf32>
    %cst_47 = arith.constant 0.000000e+00 : f32
    %118 = vector.broadcast %cst_47 : f32 to vector<128x162xf32>
    %119 = arith.select %117, %44, %118 : vector<128x162xi1>, vector<128x162xf32>
    %120 = arith.addf %115, %119 : vector<128x162xf32>
    %cst_48 = arith.constant 4.000000e+00 : f32
    %121 = vector.broadcast %cst_48 : f32 to vector<128x162xf32>
    %122 = arith.cmpf oeq, %12, %121 : vector<128x162xf32>
    %cst_49 = arith.constant 0.000000e+00 : f32
    %123 = vector.broadcast %cst_49 : f32 to vector<128x162xf32>
    %124 = arith.select %122, %17, %123 : vector<128x162xi1>, vector<128x162xf32>
    %cst_50 = arith.constant 5.000000e+00 : f32
    %125 = vector.broadcast %cst_50 : f32 to vector<128x162xf32>
    %126 = arith.cmpf oeq, %12, %125 : vector<128x162xf32>
    %cst_51 = arith.constant 0.000000e+00 : f32
    %127 = vector.broadcast %cst_51 : f32 to vector<128x162xf32>
    %128 = arith.select %126, %29, %127 : vector<128x162xi1>, vector<128x162xf32>
    %129 = arith.addf %124, %128 : vector<128x162xf32>
    %cst_52 = arith.constant 6.000000e+00 : f32
    %130 = vector.broadcast %cst_52 : f32 to vector<128x162xf32>
    %131 = arith.cmpf oeq, %12, %130 : vector<128x162xf32>
    %cst_53 = arith.constant 0.000000e+00 : f32
    %132 = vector.broadcast %cst_53 : f32 to vector<128x162xf32>
    %133 = arith.select %131, %38, %132 : vector<128x162xi1>, vector<128x162xf32>
    %134 = arith.addf %129, %133 : vector<128x162xf32>
    %cst_54 = arith.constant 7.000000e+00 : f32
    %135 = vector.broadcast %cst_54 : f32 to vector<128x162xf32>
    %136 = arith.cmpf oeq, %12, %135 : vector<128x162xf32>
    %cst_55 = arith.constant 0.000000e+00 : f32
    %137 = vector.broadcast %cst_55 : f32 to vector<128x162xf32>
    %138 = arith.select %136, %44, %137 : vector<128x162xi1>, vector<128x162xf32>
    %139 = arith.addf %134, %138 : vector<128x162xf32>
    %cst_56 = arith.constant 5.000000e+00 : f32
    %140 = vector.broadcast %cst_56 : f32 to vector<128x162xf32>
    %141 = arith.cmpf oeq, %12, %140 : vector<128x162xf32>
    %cst_57 = arith.constant 0.000000e+00 : f32
    %142 = vector.broadcast %cst_57 : f32 to vector<128x162xf32>
    %143 = arith.select %141, %17, %142 : vector<128x162xi1>, vector<128x162xf32>
    %cst_58 = arith.constant 6.000000e+00 : f32
    %144 = vector.broadcast %cst_58 : f32 to vector<128x162xf32>
    %145 = arith.cmpf oeq, %12, %144 : vector<128x162xf32>
    %cst_59 = arith.constant 0.000000e+00 : f32
    %146 = vector.broadcast %cst_59 : f32 to vector<128x162xf32>
    %147 = arith.select %145, %29, %146 : vector<128x162xi1>, vector<128x162xf32>
    %148 = arith.addf %143, %147 : vector<128x162xf32>
    %cst_60 = arith.constant 7.000000e+00 : f32
    %149 = vector.broadcast %cst_60 : f32 to vector<128x162xf32>
    %150 = arith.cmpf oeq, %12, %149 : vector<128x162xf32>
    %cst_61 = arith.constant 0.000000e+00 : f32
    %151 = vector.broadcast %cst_61 : f32 to vector<128x162xf32>
    %152 = arith.select %150, %38, %151 : vector<128x162xi1>, vector<128x162xf32>
    %153 = arith.addf %148, %152 : vector<128x162xf32>
    %cst_62 = arith.constant 8.000000e+00 : f32
    %154 = vector.broadcast %cst_62 : f32 to vector<128x162xf32>
    %155 = arith.cmpf oeq, %12, %154 : vector<128x162xf32>
    %cst_63 = arith.constant 0.000000e+00 : f32
    %156 = vector.broadcast %cst_63 : f32 to vector<128x162xf32>
    %157 = arith.select %155, %44, %156 : vector<128x162xi1>, vector<128x162xf32>
    %158 = arith.addf %153, %157 : vector<128x162xf32>
    %cst_64 = arith.constant 6.000000e+00 : f32
    %159 = vector.broadcast %cst_64 : f32 to vector<128x162xf32>
    %160 = arith.cmpf oeq, %12, %159 : vector<128x162xf32>
    %cst_65 = arith.constant 0.000000e+00 : f32
    %161 = vector.broadcast %cst_65 : f32 to vector<128x162xf32>
    %162 = arith.select %160, %17, %161 : vector<128x162xi1>, vector<128x162xf32>
    %cst_66 = arith.constant 7.000000e+00 : f32
    %163 = vector.broadcast %cst_66 : f32 to vector<128x162xf32>
    %164 = arith.cmpf oeq, %12, %163 : vector<128x162xf32>
    %cst_67 = arith.constant 0.000000e+00 : f32
    %165 = vector.broadcast %cst_67 : f32 to vector<128x162xf32>
    %166 = arith.select %164, %29, %165 : vector<128x162xi1>, vector<128x162xf32>
    %167 = arith.addf %162, %166 : vector<128x162xf32>
    %cst_68 = arith.constant 8.000000e+00 : f32
    %168 = vector.broadcast %cst_68 : f32 to vector<128x162xf32>
    %169 = arith.cmpf oeq, %12, %168 : vector<128x162xf32>
    %cst_69 = arith.constant 0.000000e+00 : f32
    %170 = vector.broadcast %cst_69 : f32 to vector<128x162xf32>
    %171 = arith.select %169, %38, %170 : vector<128x162xi1>, vector<128x162xf32>
    %172 = arith.addf %167, %171 : vector<128x162xf32>
    %cst_70 = arith.constant 9.000000e+00 : f32
    %173 = vector.broadcast %cst_70 : f32 to vector<128x162xf32>
    %174 = arith.cmpf oeq, %12, %173 : vector<128x162xf32>
    %cst_71 = arith.constant 0.000000e+00 : f32
    %175 = vector.broadcast %cst_71 : f32 to vector<128x162xf32>
    %176 = arith.select %174, %44, %175 : vector<128x162xi1>, vector<128x162xf32>
    %177 = arith.addf %172, %176 : vector<128x162xf32>
    %cst_72 = arith.constant 7.000000e+00 : f32
    %178 = vector.broadcast %cst_72 : f32 to vector<128x162xf32>
    %179 = arith.cmpf oeq, %12, %178 : vector<128x162xf32>
    %cst_73 = arith.constant 0.000000e+00 : f32
    %180 = vector.broadcast %cst_73 : f32 to vector<128x162xf32>
    %181 = arith.select %179, %17, %180 : vector<128x162xi1>, vector<128x162xf32>
    %cst_74 = arith.constant 8.000000e+00 : f32
    %182 = vector.broadcast %cst_74 : f32 to vector<128x162xf32>
    %183 = arith.cmpf oeq, %12, %182 : vector<128x162xf32>
    %cst_75 = arith.constant 0.000000e+00 : f32
    %184 = vector.broadcast %cst_75 : f32 to vector<128x162xf32>
    %185 = arith.select %183, %29, %184 : vector<128x162xi1>, vector<128x162xf32>
    %186 = arith.addf %181, %185 : vector<128x162xf32>
    %cst_76 = arith.constant 9.000000e+00 : f32
    %187 = vector.broadcast %cst_76 : f32 to vector<128x162xf32>
    %188 = arith.cmpf oeq, %12, %187 : vector<128x162xf32>
    %cst_77 = arith.constant 0.000000e+00 : f32
    %189 = vector.broadcast %cst_77 : f32 to vector<128x162xf32>
    %190 = arith.select %188, %38, %189 : vector<128x162xi1>, vector<128x162xf32>
    %191 = arith.addf %186, %190 : vector<128x162xf32>
    %cst_78 = arith.constant 1.000000e+01 : f32
    %192 = vector.broadcast %cst_78 : f32 to vector<128x162xf32>
    %193 = arith.cmpf oeq, %12, %192 : vector<128x162xf32>
    %cst_79 = arith.constant 0.000000e+00 : f32
    %194 = vector.broadcast %cst_79 : f32 to vector<128x162xf32>
    %195 = arith.select %193, %44, %194 : vector<128x162xi1>, vector<128x162xf32>
    %196 = arith.addf %191, %195 : vector<128x162xf32>
    %197 = tpu.concatenate %7, %63, %82, %101, %120, %139, %158, %177, %196 in 0 : vector<128x162xf32>, vector<128x162xf32>, vector<128x162xf32>, vector<128x162xf32>, vector<128x162xf32>, vector<128x162xf32>, vector<128x162xf32>, vector<128x162xf32>, vector<128x162xf32> -> vector<1152x162xf32>
    %c0_80 = arith.constant 0 : index
    %c0_81 = arith.constant 0 : index
    %198 = vector.load %arg2[%c0_80, %c0_81] : memref<5x1152xf32, #tpu.memory_space<vmem>>, vector<5x1152xf32>
    %cst_82 = arith.constant dense<0.000000e+00> : vector<5x162xf32>
    %199 = tpu.matmul %198, %197, %cst_82 {dimension_numbers = #tpu.dot_dimension_numbers<[1], [0], [0], [1], [0, 0, 1, 1], [], []>} : vector<5x1152xf32>, vector<1152x162xf32>, vector<5x162xf32> -> vector<5x162xf32>
    %c0_83 = arith.constant 0 : index
    %c0_84 = arith.constant 0 : index
    %200 = vector.load %arg3[%c0_83, %c0_84] : memref<5x162xf32, #tpu.memory_space<vmem>>, vector<5x162xf32>
    tpu.vector_store %arg3[%c0_83, %c0_84], %199 {strides = array<i32>} : memref<5x162xf32, #tpu.memory_space<vmem>>, vector<5x162xf32>,
    return
  }
  func.func @transform_0(%arg0: i32) -> (i32, i32) {
    %c0_i32 = arith.constant 0 : i32
    %c0_i32_0 = arith.constant 0 : i32
    %c0_i32_1 = arith.constant 0 : i32
    return %c0_i32, %c0_i32_0 : i32, i32
  }
  func.func @transform_1(%arg0: i32) -> (i32, i32) {
    %c0_i32 = arith.constant 0 : i32
    %c0_i32_0 = arith.constant 0 : i32
    %c0_i32_1 = arith.constant 0 : i32
    return %c0_i32, %c0_i32_0 : i32, i32
  }
  func.func @transform_2(%arg0: i32) -> (i32, i32) {
    %c0_i32 = arith.constant 0 : i32
    %c0_i32_0 = arith.constant 0 : i32
    %c0_i32_1 = arith.constant 0 : i32
    return %c0_i32, %c0_i32_0 : i32, i32
  }
}

module attributes {stable_mosaic.version = 11 : i64} {
  func.func @_conv3_linear_kernel(%arg0: i32, %arg1: memref<2x48x49xf32, #tpu.memory_space<vmem>>, %arg2: memref<2x432xf32, #tpu.memory_space<vmem>>, %arg3: memref<2x49x200xf32, #tpu.memory_space<vmem>>, %arg4: memref<1x200xf32, #tpu.memory_space<vmem>>, %arg5: memref<2x200xf32, #tpu.memory_space<vmem>>) attributes {dimension_semantics = [#tpu.dimension_semantics<arbitrary>], iteration_bounds = array<i64: 1>, scalar_prefetch = 0 : i64, scratch_operands = 0 : i64, tpu.core_type = #tpu.core_type<tc>, window_params = [{pipeline_mode = #tpu.pipeline_mode<synchronous>, transform_indices = @transform_0, window_bounds = array<i64: 2, 48, 49>}, {pipeline_mode = #tpu.pipeline_mode<synchronous>, transform_indices = @transform_1, window_bounds = array<i64: 2, 432>}, {pipeline_mode = #tpu.pipeline_mode<synchronous>, transform_indices = @transform_2, window_bounds = array<i64: 2, 49, 200>}, {pipeline_mode = #tpu.pipeline_mode<synchronous>, transform_indices = @transform_3, window_bounds = array<i64: 1, 200>}, {pipeline_mode = #tpu.pipeline_mode<synchronous>, transform_indices = @transform_4, window_bounds = array<i64: 2, 200>}]} {
    %c0 = arith.constant 0 : index
    %c0_0 = arith.constant 0 : index
    %0 = vector.load %arg2[%c0, %c0_0] : memref<2x432xf32, #tpu.memory_space<vmem>>, vector<2x432xf32>
    %c0_1 = arith.constant 0 : index
    %c0_2 = arith.constant 0 : index
    %c0_3 = arith.constant 0 : index
    %1 = vector.load %arg1[%c0_1, %c0_2, %c0_3] : memref<2x48x49xf32, #tpu.memory_space<vmem>>, vector<1x48x49xf32>
    %2 = vector.shape_cast %1 : vector<1x48x49xf32> to vector<48x49xf32>
    %cst = arith.constant 0.000000e+00 : f32
    %3 = vector.broadcast %cst : f32 to vector<48x49xf32>
    %4 = arith.subf %3, %2 : vector<48x49xf32>
    %5 = math.exp %4 : vector<48x49xf32>
    %cst_4 = arith.constant 1.000000e+00 : f32
    %6 = vector.broadcast %cst_4 : f32 to vector<48x49xf32>
    %7 = arith.addf %6, %5 : vector<48x49xf32>
    %8 = tpu.reciprocal %7 {approx = true} : vector<48x49xf32> -> vector<48x49xf32>
    %9 = arith.mulf %2, %8 : vector<48x49xf32>
    %cst_5 = arith.constant -2.200000e+00 : f32
    %10 = vector.broadcast %cst_5 : f32 to vector<48x49xf32>
    %11 = arith.subf %2, %10 : vector<48x49xf32>
    %cst_6 = arith.constant 2.500000e+00 : f32
    %12 = vector.broadcast %cst_6 : f32 to vector<48x49xf32>
    %13 = arith.mulf %11, %12 : vector<48x49xf32>
    %14 = math.floor %13 : vector<48x49xf32>
    %15 = arith.subf %13, %14 : vector<48x49xf32>
    %16 = arith.mulf %15, %15 : vector<48x49xf32>
    %17 = arith.mulf %16, %15 : vector<48x49xf32>
    %cst_7 = arith.constant 0.166666672 : f32
    %18 = vector.broadcast %cst_7 : f32 to vector<48x49xf32>
    %19 = arith.mulf %17, %18 : vector<48x49xf32>
    %cst_8 = arith.constant -3.000000e+00 : f32
    %20 = vector.broadcast %cst_8 : f32 to vector<48x49xf32>
    %21 = arith.mulf %20, %15 : vector<48x49xf32>
    %cst_9 = arith.constant 3.000000e+00 : f32
    %22 = vector.broadcast %cst_9 : f32 to vector<48x49xf32>
    %23 = arith.addf %21, %22 : vector<48x49xf32>
    %24 = arith.mulf %23, %15 : vector<48x49xf32>
    %cst_10 = arith.constant 3.000000e+00 : f32
    %25 = vector.broadcast %cst_10 : f32 to vector<48x49xf32>
    %26 = arith.addf %24, %25 : vector<48x49xf32>
    %27 = arith.mulf %26, %15 : vector<48x49xf32>
    %cst_11 = arith.constant 1.000000e+00 : f32
    %28 = vector.broadcast %cst_11 : f32 to vector<48x49xf32>
    %29 = arith.addf %27, %28 : vector<48x49xf32>
    %cst_12 = arith.constant 0.166666672 : f32
    %30 = vector.broadcast %cst_12 : f32 to vector<48x49xf32>
    %31 = arith.mulf %29, %30 : vector<48x49xf32>
    %cst_13 = arith.constant 3.000000e+00 : f32
    %32 = vector.broadcast %cst_13 : f32 to vector<48x49xf32>
    %33 = arith.mulf %32, %15 : vector<48x49xf32>
    %cst_14 = arith.constant 6.000000e+00 : f32
    %34 = vector.broadcast %cst_14 : f32 to vector<48x49xf32>
    %35 = arith.subf %33, %34 : vector<48x49xf32>
    %36 = arith.mulf %35, %16 : vector<48x49xf32>
    %cst_15 = arith.constant 4.000000e+00 : f32
    %37 = vector.broadcast %cst_15 : f32 to vector<48x49xf32>
    %38 = arith.addf %36, %37 : vector<48x49xf32>
    %cst_16 = arith.constant 0.166666672 : f32
    %39 = vector.broadcast %cst_16 : f32 to vector<48x49xf32>
    %40 = arith.mulf %38, %39 : vector<48x49xf32>
    %cst_17 = arith.constant 1.000000e+00 : f32
    %41 = vector.broadcast %cst_17 : f32 to vector<48x49xf32>
    %42 = arith.subf %41, %15 : vector<48x49xf32>
    %43 = arith.mulf %42, %42 : vector<48x49xf32>
    %44 = arith.mulf %43, %42 : vector<48x49xf32>
    %cst_18 = arith.constant 0.166666672 : f32
    %45 = vector.broadcast %cst_18 : f32 to vector<48x49xf32>
    %46 = arith.mulf %44, %45 : vector<48x49xf32>
    %cst_19 = arith.constant 0.000000e+00 : f32
    %47 = vector.broadcast %cst_19 : f32 to vector<48x49xf32>
    %48 = arith.cmpf oeq, %14, %47 : vector<48x49xf32>
    %cst_20 = arith.constant 0.000000e+00 : f32
    %49 = vector.broadcast %cst_20 : f32 to vector<48x49xf32>
    %50 = arith.select %48, %19, %49 : vector<48x49xi1>, vector<48x49xf32>
    %cst_21 = arith.constant 1.000000e+00 : f32
    %51 = vector.broadcast %cst_21 : f32 to vector<48x49xf32>
    %52 = arith.cmpf oeq, %14, %51 : vector<48x49xf32>
    %cst_22 = arith.constant 0.000000e+00 : f32
    %53 = vector.broadcast %cst_22 : f32 to vector<48x49xf32>
    %54 = arith.select %52, %31, %53 : vector<48x49xi1>, vector<48x49xf32>
    %55 = arith.addf %50, %54 : vector<48x49xf32>
    %cst_23 = arith.constant 2.000000e+00 : f32
    %56 = vector.broadcast %cst_23 : f32 to vector<48x49xf32>
    %57 = arith.cmpf oeq, %14, %56 : vector<48x49xf32>
    %cst_24 = arith.constant 0.000000e+00 : f32
    %58 = vector.broadcast %cst_24 : f32 to vector<48x49xf32>
    %59 = arith.select %57, %40, %58 : vector<48x49xi1>, vector<48x49xf32>
    %60 = arith.addf %55, %59 : vector<48x49xf32>
    %cst_25 = arith.constant 3.000000e+00 : f32
    %61 = vector.broadcast %cst_25 : f32 to vector<48x49xf32>
    %62 = arith.cmpf oeq, %14, %61 : vector<48x49xf32>
    %cst_26 = arith.constant 0.000000e+00 : f32
    %63 = vector.broadcast %cst_26 : f32 to vector<48x49xf32>
    %64 = arith.select %62, %46, %63 : vector<48x49xi1>, vector<48x49xf32>
    %65 = arith.addf %60, %64 : vector<48x49xf32>
    %cst_27 = arith.constant 1.000000e+00 : f32
    %66 = vector.broadcast %cst_27 : f32 to vector<48x49xf32>
    %67 = arith.cmpf oeq, %14, %66 : vector<48x49xf32>
    %cst_28 = arith.constant 0.000000e+00 : f32
    %68 = vector.broadcast %cst_28 : f32 to vector<48x49xf32>
    %69 = arith.select %67, %19, %68 : vector<48x49xi1>, vector<48x49xf32>
    %cst_29 = arith.constant 2.000000e+00 : f32
    %70 = vector.broadcast %cst_29 : f32 to vector<48x49xf32>
    %71 = arith.cmpf oeq, %14, %70 : vector<48x49xf32>
    %cst_30 = arith.constant 0.000000e+00 : f32
    %72 = vector.broadcast %cst_30 : f32 to vector<48x49xf32>
    %73 = arith.select %71, %31, %72 : vector<48x49xi1>, vector<48x49xf32>
    %74 = arith.addf %69, %73 : vector<48x49xf32>
    %cst_31 = arith.constant 3.000000e+00 : f32
    %75 = vector.broadcast %cst_31 : f32 to vector<48x49xf32>
    %76 = arith.cmpf oeq, %14, %75 : vector<48x49xf32>
    %cst_32 = arith.constant 0.000000e+00 : f32
    %77 = vector.broadcast %cst_32 : f32 to vector<48x49xf32>
    %78 = arith.select %76, %40, %77 : vector<48x49xi1>, vector<48x49xf32>
    %79 = arith.addf %74, %78 : vector<48x49xf32>
    %cst_33 = arith.constant 4.000000e+00 : f32
    %80 = vector.broadcast %cst_33 : f32 to vector<48x49xf32>
    %81 = arith.cmpf oeq, %14, %80 : vector<48x49xf32>
    %cst_34 = arith.constant 0.000000e+00 : f32
    %82 = vector.broadcast %cst_34 : f32 to vector<48x49xf32>
    %83 = arith.select %81, %46, %82 : vector<48x49xi1>, vector<48x49xf32>
    %84 = arith.addf %79, %83 : vector<48x49xf32>
    %cst_35 = arith.constant 2.000000e+00 : f32
    %85 = vector.broadcast %cst_35 : f32 to vector<48x49xf32>
    %86 = arith.cmpf oeq, %14, %85 : vector<48x49xf32>
    %cst_36 = arith.constant 0.000000e+00 : f32
    %87 = vector.broadcast %cst_36 : f32 to vector<48x49xf32>
    %88 = arith.select %86, %19, %87 : vector<48x49xi1>, vector<48x49xf32>
    %cst_37 = arith.constant 3.000000e+00 : f32
    %89 = vector.broadcast %cst_37 : f32 to vector<48x49xf32>
    %90 = arith.cmpf oeq, %14, %89 : vector<48x49xf32>
    %cst_38 = arith.constant 0.000000e+00 : f32
    %91 = vector.broadcast %cst_38 : f32 to vector<48x49xf32>
    %92 = arith.select %90, %31, %91 : vector<48x49xi1>, vector<48x49xf32>
    %93 = arith.addf %88, %92 : vector<48x49xf32>
    %cst_39 = arith.constant 4.000000e+00 : f32
    %94 = vector.broadcast %cst_39 : f32 to vector<48x49xf32>
    %95 = arith.cmpf oeq, %14, %94 : vector<48x49xf32>
    %cst_40 = arith.constant 0.000000e+00 : f32
    %96 = vector.broadcast %cst_40 : f32 to vector<48x49xf32>
    %97 = arith.select %95, %40, %96 : vector<48x49xi1>, vector<48x49xf32>
    %98 = arith.addf %93, %97 : vector<48x49xf32>
    %cst_41 = arith.constant 5.000000e+00 : f32
    %99 = vector.broadcast %cst_41 : f32 to vector<48x49xf32>
    %100 = arith.cmpf oeq, %14, %99 : vector<48x49xf32>
    %cst_42 = arith.constant 0.000000e+00 : f32
    %101 = vector.broadcast %cst_42 : f32 to vector<48x49xf32>
    %102 = arith.select %100, %46, %101 : vector<48x49xi1>, vector<48x49xf32>
    %103 = arith.addf %98, %102 : vector<48x49xf32>
    %cst_43 = arith.constant 3.000000e+00 : f32
    %104 = vector.broadcast %cst_43 : f32 to vector<48x49xf32>
    %105 = arith.cmpf oeq, %14, %104 : vector<48x49xf32>
    %cst_44 = arith.constant 0.000000e+00 : f32
    %106 = vector.broadcast %cst_44 : f32 to vector<48x49xf32>
    %107 = arith.select %105, %19, %106 : vector<48x49xi1>, vector<48x49xf32>
    %cst_45 = arith.constant 4.000000e+00 : f32
    %108 = vector.broadcast %cst_45 : f32 to vector<48x49xf32>
    %109 = arith.cmpf oeq, %14, %108 : vector<48x49xf32>
    %cst_46 = arith.constant 0.000000e+00 : f32
    %110 = vector.broadcast %cst_46 : f32 to vector<48x49xf32>
    %111 = arith.select %109, %31, %110 : vector<48x49xi1>, vector<48x49xf32>
    %112 = arith.addf %107, %111 : vector<48x49xf32>
    %cst_47 = arith.constant 5.000000e+00 : f32
    %113 = vector.broadcast %cst_47 : f32 to vector<48x49xf32>
    %114 = arith.cmpf oeq, %14, %113 : vector<48x49xf32>
    %cst_48 = arith.constant 0.000000e+00 : f32
    %115 = vector.broadcast %cst_48 : f32 to vector<48x49xf32>
    %116 = arith.select %114, %40, %115 : vector<48x49xi1>, vector<48x49xf32>
    %117 = arith.addf %112, %116 : vector<48x49xf32>
    %cst_49 = arith.constant 6.000000e+00 : f32
    %118 = vector.broadcast %cst_49 : f32 to vector<48x49xf32>
    %119 = arith.cmpf oeq, %14, %118 : vector<48x49xf32>
    %cst_50 = arith.constant 0.000000e+00 : f32
    %120 = vector.broadcast %cst_50 : f32 to vector<48x49xf32>
    %121 = arith.select %119, %46, %120 : vector<48x49xi1>, vector<48x49xf32>
    %122 = arith.addf %117, %121 : vector<48x49xf32>
    %cst_51 = arith.constant 4.000000e+00 : f32
    %123 = vector.broadcast %cst_51 : f32 to vector<48x49xf32>
    %124 = arith.cmpf oeq, %14, %123 : vector<48x49xf32>
    %cst_52 = arith.constant 0.000000e+00 : f32
    %125 = vector.broadcast %cst_52 : f32 to vector<48x49xf32>
    %126 = arith.select %124, %19, %125 : vector<48x49xi1>, vector<48x49xf32>
    %cst_53 = arith.constant 5.000000e+00 : f32
    %127 = vector.broadcast %cst_53 : f32 to vector<48x49xf32>
    %128 = arith.cmpf oeq, %14, %127 : vector<48x49xf32>
    %cst_54 = arith.constant 0.000000e+00 : f32
    %129 = vector.broadcast %cst_54 : f32 to vector<48x49xf32>
    %130 = arith.select %128, %31, %129 : vector<48x49xi1>, vector<48x49xf32>
    %131 = arith.addf %126, %130 : vector<48x49xf32>
    %cst_55 = arith.constant 6.000000e+00 : f32
    %132 = vector.broadcast %cst_55 : f32 to vector<48x49xf32>
    %133 = arith.cmpf oeq, %14, %132 : vector<48x49xf32>
    %cst_56 = arith.constant 0.000000e+00 : f32
    %134 = vector.broadcast %cst_56 : f32 to vector<48x49xf32>
    %135 = arith.select %133, %40, %134 : vector<48x49xi1>, vector<48x49xf32>
    %136 = arith.addf %131, %135 : vector<48x49xf32>
    %cst_57 = arith.constant 7.000000e+00 : f32
    %137 = vector.broadcast %cst_57 : f32 to vector<48x49xf32>
    %138 = arith.cmpf oeq, %14, %137 : vector<48x49xf32>
    %cst_58 = arith.constant 0.000000e+00 : f32
    %139 = vector.broadcast %cst_58 : f32 to vector<48x49xf32>
    %140 = arith.select %138, %46, %139 : vector<48x49xi1>, vector<48x49xf32>
    %141 = arith.addf %136, %140 : vector<48x49xf32>
    %cst_59 = arith.constant 5.000000e+00 : f32
    %142 = vector.broadcast %cst_59 : f32 to vector<48x49xf32>
    %143 = arith.cmpf oeq, %14, %142 : vector<48x49xf32>
    %cst_60 = arith.constant 0.000000e+00 : f32
    %144 = vector.broadcast %cst_60 : f32 to vector<48x49xf32>
    %145 = arith.select %143, %19, %144 : vector<48x49xi1>, vector<48x49xf32>
    %cst_61 = arith.constant 6.000000e+00 : f32
    %146 = vector.broadcast %cst_61 : f32 to vector<48x49xf32>
    %147 = arith.cmpf oeq, %14, %146 : vector<48x49xf32>
    %cst_62 = arith.constant 0.000000e+00 : f32
    %148 = vector.broadcast %cst_62 : f32 to vector<48x49xf32>
    %149 = arith.select %147, %31, %148 : vector<48x49xi1>, vector<48x49xf32>
    %150 = arith.addf %145, %149 : vector<48x49xf32>
    %cst_63 = arith.constant 7.000000e+00 : f32
    %151 = vector.broadcast %cst_63 : f32 to vector<48x49xf32>
    %152 = arith.cmpf oeq, %14, %151 : vector<48x49xf32>
    %cst_64 = arith.constant 0.000000e+00 : f32
    %153 = vector.broadcast %cst_64 : f32 to vector<48x49xf32>
    %154 = arith.select %152, %40, %153 : vector<48x49xi1>, vector<48x49xf32>
    %155 = arith.addf %150, %154 : vector<48x49xf32>
    %cst_65 = arith.constant 8.000000e+00 : f32
    %156 = vector.broadcast %cst_65 : f32 to vector<48x49xf32>
    %157 = arith.cmpf oeq, %14, %156 : vector<48x49xf32>
    %cst_66 = arith.constant 0.000000e+00 : f32
    %158 = vector.broadcast %cst_66 : f32 to vector<48x49xf32>
    %159 = arith.select %157, %46, %158 : vector<48x49xi1>, vector<48x49xf32>
    %160 = arith.addf %155, %159 : vector<48x49xf32>
    %cst_67 = arith.constant 6.000000e+00 : f32
    %161 = vector.broadcast %cst_67 : f32 to vector<48x49xf32>
    %162 = arith.cmpf oeq, %14, %161 : vector<48x49xf32>
    %cst_68 = arith.constant 0.000000e+00 : f32
    %163 = vector.broadcast %cst_68 : f32 to vector<48x49xf32>
    %164 = arith.select %162, %19, %163 : vector<48x49xi1>, vector<48x49xf32>
    %cst_69 = arith.constant 7.000000e+00 : f32
    %165 = vector.broadcast %cst_69 : f32 to vector<48x49xf32>
    %166 = arith.cmpf oeq, %14, %165 : vector<48x49xf32>
    %cst_70 = arith.constant 0.000000e+00 : f32
    %167 = vector.broadcast %cst_70 : f32 to vector<48x49xf32>
    %168 = arith.select %166, %31, %167 : vector<48x49xi1>, vector<48x49xf32>
    %169 = arith.addf %164, %168 : vector<48x49xf32>
    %cst_71 = arith.constant 8.000000e+00 : f32
    %170 = vector.broadcast %cst_71 : f32 to vector<48x49xf32>
    %171 = arith.cmpf oeq, %14, %170 : vector<48x49xf32>
    %cst_72 = arith.constant 0.000000e+00 : f32
    %172 = vector.broadcast %cst_72 : f32 to vector<48x49xf32>
    %173 = arith.select %171, %40, %172 : vector<48x49xi1>, vector<48x49xf32>
    %174 = arith.addf %169, %173 : vector<48x49xf32>
    %cst_73 = arith.constant 9.000000e+00 : f32
    %175 = vector.broadcast %cst_73 : f32 to vector<48x49xf32>
    %176 = arith.cmpf oeq, %14, %175 : vector<48x49xf32>
    %cst_74 = arith.constant 0.000000e+00 : f32
    %177 = vector.broadcast %cst_74 : f32 to vector<48x49xf32>
    %178 = arith.select %176, %46, %177 : vector<48x49xi1>, vector<48x49xf32>
    %179 = arith.addf %174, %178 : vector<48x49xf32>
    %cst_75 = arith.constant 7.000000e+00 : f32
    %180 = vector.broadcast %cst_75 : f32 to vector<48x49xf32>
    %181 = arith.cmpf oeq, %14, %180 : vector<48x49xf32>
    %cst_76 = arith.constant 0.000000e+00 : f32
    %182 = vector.broadcast %cst_76 : f32 to vector<48x49xf32>
    %183 = arith.select %181, %19, %182 : vector<48x49xi1>, vector<48x49xf32>
    %cst_77 = arith.constant 8.000000e+00 : f32
    %184 = vector.broadcast %cst_77 : f32 to vector<48x49xf32>
    %185 = arith.cmpf oeq, %14, %184 : vector<48x49xf32>
    %cst_78 = arith.constant 0.000000e+00 : f32
    %186 = vector.broadcast %cst_78 : f32 to vector<48x49xf32>
    %187 = arith.select %185, %31, %186 : vector<48x49xi1>, vector<48x49xf32>
    %188 = arith.addf %183, %187 : vector<48x49xf32>
    %cst_79 = arith.constant 9.000000e+00 : f32
    %189 = vector.broadcast %cst_79 : f32 to vector<48x49xf32>
    %190 = arith.cmpf oeq, %14, %189 : vector<48x49xf32>
    %cst_80 = arith.constant 0.000000e+00 : f32
    %191 = vector.broadcast %cst_80 : f32 to vector<48x49xf32>
    %192 = arith.select %190, %40, %191 : vector<48x49xi1>, vector<48x49xf32>
    %193 = arith.addf %188, %192 : vector<48x49xf32>
    %cst_81 = arith.constant 1.000000e+01 : f32
    %194 = vector.broadcast %cst_81 : f32 to vector<48x49xf32>
    %195 = arith.cmpf oeq, %14, %194 : vector<48x49xf32>
    %cst_82 = arith.constant 0.000000e+00 : f32
    %196 = vector.broadcast %cst_82 : f32 to vector<48x49xf32>
    %197 = arith.select %195, %46, %196 : vector<48x49xi1>, vector<48x49xf32>
    %198 = arith.addf %193, %197 : vector<48x49xf32>
    %199 = tpu.concatenate %9, %65, %84, %103, %122, %141, %160, %179, %198 in 0 : vector<48x49xf32>, vector<48x49xf32>, vector<48x49xf32>, vector<48x49xf32>, vector<48x49xf32>, vector<48x49xf32>, vector<48x49xf32>, vector<48x49xf32>, vector<48x49xf32> -> vector<432x49xf32>
    %cst_83 = arith.constant dense<0.000000e+00> : vector<2x49xf32>
    %200 = tpu.matmul %0, %199, %cst_83 {dimension_numbers = #tpu.dot_dimension_numbers<[1], [0], [0], [1], [0, 0, 1, 1], [], []>} : vector<2x432xf32>, vector<432x49xf32>, vector<2x49xf32> -> vector<2x49xf32>
    %c0_84 = arith.constant 0 : index
    %c0_85 = arith.constant 0 : index
    %201 = vector.load %arg4[%c0_84, %c0_85] : memref<1x200xf32, #tpu.memory_space<vmem>>, vector<1x200xf32>
    %202 = vector.extract_strided_slice %200 {offsets = [0, 0], sizes = [1, 49], strides = [1, 1]} : vector<2x49xf32> to vector<1x49xf32>
    %c0_86 = arith.constant 0 : index
    %c0_87 = arith.constant 0 : index
    %c0_88 = arith.constant 0 : index
    %203 = vector.load %arg3[%c0_86, %c0_87, %c0_88] : memref<2x49x200xf32, #tpu.memory_space<vmem>>, vector<1x49x200xf32>
    %204 = vector.shape_cast %203 : vector<1x49x200xf32> to vector<49x200xf32>
    %cst_89 = arith.constant dense<0.000000e+00> : vector<1x200xf32>
    %205 = tpu.matmul %202, %204, %cst_89 {dimension_numbers = #tpu.dot_dimension_numbers<[1], [0], [0], [1], [0, 0, 1, 1], [], []>} : vector<1x49xf32>, vector<49x200xf32>, vector<1x200xf32> -> vector<1x200xf32>
    %206 = arith.addf %201, %205 : vector<1x200xf32>
    %207 = vector.extract_strided_slice %200 {offsets = [1, 0], sizes = [1, 49], strides = [1, 1]} : vector<2x49xf32> to vector<1x49xf32>
    %c1 = arith.constant 1 : index
    %c0_90 = arith.constant 0 : index
    %c0_91 = arith.constant 0 : index
    %208 = vector.load %arg3[%c1, %c0_90, %c0_91] : memref<2x49x200xf32, #tpu.memory_space<vmem>>, vector<1x49x200xf32>
    %209 = vector.shape_cast %208 : vector<1x49x200xf32> to vector<49x200xf32>
    %cst_92 = arith.constant dense<0.000000e+00> : vector<1x200xf32>
    %210 = tpu.matmul %207, %209, %cst_92 {dimension_numbers = #tpu.dot_dimension_numbers<[1], [0], [0], [1], [0, 0, 1, 1], [], []>} : vector<1x49xf32>, vector<49x200xf32>, vector<1x200xf32> -> vector<1x200xf32>
    %211 = arith.addf %206, %210 : vector<1x200xf32>
    %cst_93 = arith.constant 0.000000e+00 : f32
    %212 = vector.broadcast %cst_93 : f32 to vector<1x200xf32>
    %213 = arith.maximumf %211, %212 : vector<1x200xf32>
    %c0_94 = arith.constant 0 : index
    %c0_95 = arith.constant 0 : index
    %214 = vector.load %arg5[%c0_94, %c0_95] : memref<2x200xf32, #tpu.memory_space<vmem>>, vector<1x200xf32>
    tpu.vector_store %arg5[%c0_94, %c0_95], %213 {strides = array<i32>} : memref<2x200xf32, #tpu.memory_space<vmem>>, vector<1x200xf32>,
    %c1_96 = arith.constant 1 : index
    %c0_97 = arith.constant 0 : index
    %c0_98 = arith.constant 0 : index
    %215 = vector.load %arg1[%c1_96, %c0_97, %c0_98] : memref<2x48x49xf32, #tpu.memory_space<vmem>>, vector<1x48x49xf32>
    %216 = vector.shape_cast %215 : vector<1x48x49xf32> to vector<48x49xf32>
    %cst_99 = arith.constant 0.000000e+00 : f32
    %217 = vector.broadcast %cst_99 : f32 to vector<48x49xf32>
    %218 = arith.subf %217, %216 : vector<48x49xf32>
    %219 = math.exp %218 : vector<48x49xf32>
    %cst_100 = arith.constant 1.000000e+00 : f32
    %220 = vector.broadcast %cst_100 : f32 to vector<48x49xf32>
    %221 = arith.addf %220, %219 : vector<48x49xf32>
    %222 = tpu.reciprocal %221 {approx = true} : vector<48x49xf32> -> vector<48x49xf32>
    %223 = arith.mulf %216, %222 : vector<48x49xf32>
    %cst_101 = arith.constant -2.200000e+00 : f32
    %224 = vector.broadcast %cst_101 : f32 to vector<48x49xf32>
    %225 = arith.subf %216, %224 : vector<48x49xf32>
    %cst_102 = arith.constant 2.500000e+00 : f32
    %226 = vector.broadcast %cst_102 : f32 to vector<48x49xf32>
    %227 = arith.mulf %225, %226 : vector<48x49xf32>
    %228 = math.floor %227 : vector<48x49xf32>
    %229 = arith.subf %227, %228 : vector<48x49xf32>
    %230 = arith.mulf %229, %229 : vector<48x49xf32>
    %231 = arith.mulf %230, %229 : vector<48x49xf32>
    %cst_103 = arith.constant 0.166666672 : f32
    %232 = vector.broadcast %cst_103 : f32 to vector<48x49xf32>
    %233 = arith.mulf %231, %232 : vector<48x49xf32>
    %cst_104 = arith.constant -3.000000e+00 : f32
    %234 = vector.broadcast %cst_104 : f32 to vector<48x49xf32>
    %235 = arith.mulf %234, %229 : vector<48x49xf32>
    %cst_105 = arith.constant 3.000000e+00 : f32
    %236 = vector.broadcast %cst_105 : f32 to vector<48x49xf32>
    %237 = arith.addf %235, %236 : vector<48x49xf32>
    %238 = arith.mulf %237, %229 : vector<48x49xf32>
    %cst_106 = arith.constant 3.000000e+00 : f32
    %239 = vector.broadcast %cst_106 : f32 to vector<48x49xf32>
    %240 = arith.addf %238, %239 : vector<48x49xf32>
    %241 = arith.mulf %240, %229 : vector<48x49xf32>
    %cst_107 = arith.constant 1.000000e+00 : f32
    %242 = vector.broadcast %cst_107 : f32 to vector<48x49xf32>
    %243 = arith.addf %241, %242 : vector<48x49xf32>
    %cst_108 = arith.constant 0.166666672 : f32
    %244 = vector.broadcast %cst_108 : f32 to vector<48x49xf32>
    %245 = arith.mulf %243, %244 : vector<48x49xf32>
    %cst_109 = arith.constant 3.000000e+00 : f32
    %246 = vector.broadcast %cst_109 : f32 to vector<48x49xf32>
    %247 = arith.mulf %246, %229 : vector<48x49xf32>
    %cst_110 = arith.constant 6.000000e+00 : f32
    %248 = vector.broadcast %cst_110 : f32 to vector<48x49xf32>
    %249 = arith.subf %247, %248 : vector<48x49xf32>
    %250 = arith.mulf %249, %230 : vector<48x49xf32>
    %cst_111 = arith.constant 4.000000e+00 : f32
    %251 = vector.broadcast %cst_111 : f32 to vector<48x49xf32>
    %252 = arith.addf %250, %251 : vector<48x49xf32>
    %cst_112 = arith.constant 0.166666672 : f32
    %253 = vector.broadcast %cst_112 : f32 to vector<48x49xf32>
    %254 = arith.mulf %252, %253 : vector<48x49xf32>
    %cst_113 = arith.constant 1.000000e+00 : f32
    %255 = vector.broadcast %cst_113 : f32 to vector<48x49xf32>
    %256 = arith.subf %255, %229 : vector<48x49xf32>
    %257 = arith.mulf %256, %256 : vector<48x49xf32>
    %258 = arith.mulf %257, %256 : vector<48x49xf32>
    %cst_114 = arith.constant 0.166666672 : f32
    %259 = vector.broadcast %cst_114 : f32 to vector<48x49xf32>
    %260 = arith.mulf %258, %259 : vector<48x49xf32>
    %cst_115 = arith.constant 0.000000e+00 : f32
    %261 = vector.broadcast %cst_115 : f32 to vector<48x49xf32>
    %262 = arith.cmpf oeq, %228, %261 : vector<48x49xf32>
    %cst_116 = arith.constant 0.000000e+00 : f32
    %263 = vector.broadcast %cst_116 : f32 to vector<48x49xf32>
    %264 = arith.select %262, %233, %263 : vector<48x49xi1>, vector<48x49xf32>
    %cst_117 = arith.constant 1.000000e+00 : f32
    %265 = vector.broadcast %cst_117 : f32 to vector<48x49xf32>
    %266 = arith.cmpf oeq, %228, %265 : vector<48x49xf32>
    %cst_118 = arith.constant 0.000000e+00 : f32
    %267 = vector.broadcast %cst_118 : f32 to vector<48x49xf32>
    %268 = arith.select %266, %245, %267 : vector<48x49xi1>, vector<48x49xf32>
    %269 = arith.addf %264, %268 : vector<48x49xf32>
    %cst_119 = arith.constant 2.000000e+00 : f32
    %270 = vector.broadcast %cst_119 : f32 to vector<48x49xf32>
    %271 = arith.cmpf oeq, %228, %270 : vector<48x49xf32>
    %cst_120 = arith.constant 0.000000e+00 : f32
    %272 = vector.broadcast %cst_120 : f32 to vector<48x49xf32>
    %273 = arith.select %271, %254, %272 : vector<48x49xi1>, vector<48x49xf32>
    %274 = arith.addf %269, %273 : vector<48x49xf32>
    %cst_121 = arith.constant 3.000000e+00 : f32
    %275 = vector.broadcast %cst_121 : f32 to vector<48x49xf32>
    %276 = arith.cmpf oeq, %228, %275 : vector<48x49xf32>
    %cst_122 = arith.constant 0.000000e+00 : f32
    %277 = vector.broadcast %cst_122 : f32 to vector<48x49xf32>
    %278 = arith.select %276, %260, %277 : vector<48x49xi1>, vector<48x49xf32>
    %279 = arith.addf %274, %278 : vector<48x49xf32>
    %cst_123 = arith.constant 1.000000e+00 : f32
    %280 = vector.broadcast %cst_123 : f32 to vector<48x49xf32>
    %281 = arith.cmpf oeq, %228, %280 : vector<48x49xf32>
    %cst_124 = arith.constant 0.000000e+00 : f32
    %282 = vector.broadcast %cst_124 : f32 to vector<48x49xf32>
    %283 = arith.select %281, %233, %282 : vector<48x49xi1>, vector<48x49xf32>
    %cst_125 = arith.constant 2.000000e+00 : f32
    %284 = vector.broadcast %cst_125 : f32 to vector<48x49xf32>
    %285 = arith.cmpf oeq, %228, %284 : vector<48x49xf32>
    %cst_126 = arith.constant 0.000000e+00 : f32
    %286 = vector.broadcast %cst_126 : f32 to vector<48x49xf32>
    %287 = arith.select %285, %245, %286 : vector<48x49xi1>, vector<48x49xf32>
    %288 = arith.addf %283, %287 : vector<48x49xf32>
    %cst_127 = arith.constant 3.000000e+00 : f32
    %289 = vector.broadcast %cst_127 : f32 to vector<48x49xf32>
    %290 = arith.cmpf oeq, %228, %289 : vector<48x49xf32>
    %cst_128 = arith.constant 0.000000e+00 : f32
    %291 = vector.broadcast %cst_128 : f32 to vector<48x49xf32>
    %292 = arith.select %290, %254, %291 : vector<48x49xi1>, vector<48x49xf32>
    %293 = arith.addf %288, %292 : vector<48x49xf32>
    %cst_129 = arith.constant 4.000000e+00 : f32
    %294 = vector.broadcast %cst_129 : f32 to vector<48x49xf32>
    %295 = arith.cmpf oeq, %228, %294 : vector<48x49xf32>
    %cst_130 = arith.constant 0.000000e+00 : f32
    %296 = vector.broadcast %cst_130 : f32 to vector<48x49xf32>
    %297 = arith.select %295, %260, %296 : vector<48x49xi1>, vector<48x49xf32>
    %298 = arith.addf %293, %297 : vector<48x49xf32>
    %cst_131 = arith.constant 2.000000e+00 : f32
    %299 = vector.broadcast %cst_131 : f32 to vector<48x49xf32>
    %300 = arith.cmpf oeq, %228, %299 : vector<48x49xf32>
    %cst_132 = arith.constant 0.000000e+00 : f32
    %301 = vector.broadcast %cst_132 : f32 to vector<48x49xf32>
    %302 = arith.select %300, %233, %301 : vector<48x49xi1>, vector<48x49xf32>
    %cst_133 = arith.constant 3.000000e+00 : f32
    %303 = vector.broadcast %cst_133 : f32 to vector<48x49xf32>
    %304 = arith.cmpf oeq, %228, %303 : vector<48x49xf32>
    %cst_134 = arith.constant 0.000000e+00 : f32
    %305 = vector.broadcast %cst_134 : f32 to vector<48x49xf32>
    %306 = arith.select %304, %245, %305 : vector<48x49xi1>, vector<48x49xf32>
    %307 = arith.addf %302, %306 : vector<48x49xf32>
    %cst_135 = arith.constant 4.000000e+00 : f32
    %308 = vector.broadcast %cst_135 : f32 to vector<48x49xf32>
    %309 = arith.cmpf oeq, %228, %308 : vector<48x49xf32>
    %cst_136 = arith.constant 0.000000e+00 : f32
    %310 = vector.broadcast %cst_136 : f32 to vector<48x49xf32>
    %311 = arith.select %309, %254, %310 : vector<48x49xi1>, vector<48x49xf32>
    %312 = arith.addf %307, %311 : vector<48x49xf32>
    %cst_137 = arith.constant 5.000000e+00 : f32
    %313 = vector.broadcast %cst_137 : f32 to vector<48x49xf32>
    %314 = arith.cmpf oeq, %228, %313 : vector<48x49xf32>
    %cst_138 = arith.constant 0.000000e+00 : f32
    %315 = vector.broadcast %cst_138 : f32 to vector<48x49xf32>
    %316 = arith.select %314, %260, %315 : vector<48x49xi1>, vector<48x49xf32>
    %317 = arith.addf %312, %316 : vector<48x49xf32>
    %cst_139 = arith.constant 3.000000e+00 : f32
    %318 = vector.broadcast %cst_139 : f32 to vector<48x49xf32>
    %319 = arith.cmpf oeq, %228, %318 : vector<48x49xf32>
    %cst_140 = arith.constant 0.000000e+00 : f32
    %320 = vector.broadcast %cst_140 : f32 to vector<48x49xf32>
    %321 = arith.select %319, %233, %320 : vector<48x49xi1>, vector<48x49xf32>
    %cst_141 = arith.constant 4.000000e+00 : f32
    %322 = vector.broadcast %cst_141 : f32 to vector<48x49xf32>
    %323 = arith.cmpf oeq, %228, %322 : vector<48x49xf32>
    %cst_142 = arith.constant 0.000000e+00 : f32
    %324 = vector.broadcast %cst_142 : f32 to vector<48x49xf32>
    %325 = arith.select %323, %245, %324 : vector<48x49xi1>, vector<48x49xf32>
    %326 = arith.addf %321, %325 : vector<48x49xf32>
    %cst_143 = arith.constant 5.000000e+00 : f32
    %327 = vector.broadcast %cst_143 : f32 to vector<48x49xf32>
    %328 = arith.cmpf oeq, %228, %327 : vector<48x49xf32>
    %cst_144 = arith.constant 0.000000e+00 : f32
    %329 = vector.broadcast %cst_144 : f32 to vector<48x49xf32>
    %330 = arith.select %328, %254, %329 : vector<48x49xi1>, vector<48x49xf32>
    %331 = arith.addf %326, %330 : vector<48x49xf32>
    %cst_145 = arith.constant 6.000000e+00 : f32
    %332 = vector.broadcast %cst_145 : f32 to vector<48x49xf32>
    %333 = arith.cmpf oeq, %228, %332 : vector<48x49xf32>
    %cst_146 = arith.constant 0.000000e+00 : f32
    %334 = vector.broadcast %cst_146 : f32 to vector<48x49xf32>
    %335 = arith.select %333, %260, %334 : vector<48x49xi1>, vector<48x49xf32>
    %336 = arith.addf %331, %335 : vector<48x49xf32>
    %cst_147 = arith.constant 4.000000e+00 : f32
    %337 = vector.broadcast %cst_147 : f32 to vector<48x49xf32>
    %338 = arith.cmpf oeq, %228, %337 : vector<48x49xf32>
    %cst_148 = arith.constant 0.000000e+00 : f32
    %339 = vector.broadcast %cst_148 : f32 to vector<48x49xf32>
    %340 = arith.select %338, %233, %339 : vector<48x49xi1>, vector<48x49xf32>
    %cst_149 = arith.constant 5.000000e+00 : f32
    %341 = vector.broadcast %cst_149 : f32 to vector<48x49xf32>
    %342 = arith.cmpf oeq, %228, %341 : vector<48x49xf32>
    %cst_150 = arith.constant 0.000000e+00 : f32
    %343 = vector.broadcast %cst_150 : f32 to vector<48x49xf32>
    %344 = arith.select %342, %245, %343 : vector<48x49xi1>, vector<48x49xf32>
    %345 = arith.addf %340, %344 : vector<48x49xf32>
    %cst_151 = arith.constant 6.000000e+00 : f32
    %346 = vector.broadcast %cst_151 : f32 to vector<48x49xf32>
    %347 = arith.cmpf oeq, %228, %346 : vector<48x49xf32>
    %cst_152 = arith.constant 0.000000e+00 : f32
    %348 = vector.broadcast %cst_152 : f32 to vector<48x49xf32>
    %349 = arith.select %347, %254, %348 : vector<48x49xi1>, vector<48x49xf32>
    %350 = arith.addf %345, %349 : vector<48x49xf32>
    %cst_153 = arith.constant 7.000000e+00 : f32
    %351 = vector.broadcast %cst_153 : f32 to vector<48x49xf32>
    %352 = arith.cmpf oeq, %228, %351 : vector<48x49xf32>
    %cst_154 = arith.constant 0.000000e+00 : f32
    %353 = vector.broadcast %cst_154 : f32 to vector<48x49xf32>
    %354 = arith.select %352, %260, %353 : vector<48x49xi1>, vector<48x49xf32>
    %355 = arith.addf %350, %354 : vector<48x49xf32>
    %cst_155 = arith.constant 5.000000e+00 : f32
    %356 = vector.broadcast %cst_155 : f32 to vector<48x49xf32>
    %357 = arith.cmpf oeq, %228, %356 : vector<48x49xf32>
    %cst_156 = arith.constant 0.000000e+00 : f32
    %358 = vector.broadcast %cst_156 : f32 to vector<48x49xf32>
    %359 = arith.select %357, %233, %358 : vector<48x49xi1>, vector<48x49xf32>
    %cst_157 = arith.constant 6.000000e+00 : f32
    %360 = vector.broadcast %cst_157 : f32 to vector<48x49xf32>
    %361 = arith.cmpf oeq, %228, %360 : vector<48x49xf32>
    %cst_158 = arith.constant 0.000000e+00 : f32
    %362 = vector.broadcast %cst_158 : f32 to vector<48x49xf32>
    %363 = arith.select %361, %245, %362 : vector<48x49xi1>, vector<48x49xf32>
    %364 = arith.addf %359, %363 : vector<48x49xf32>
    %cst_159 = arith.constant 7.000000e+00 : f32
    %365 = vector.broadcast %cst_159 : f32 to vector<48x49xf32>
    %366 = arith.cmpf oeq, %228, %365 : vector<48x49xf32>
    %cst_160 = arith.constant 0.000000e+00 : f32
    %367 = vector.broadcast %cst_160 : f32 to vector<48x49xf32>
    %368 = arith.select %366, %254, %367 : vector<48x49xi1>, vector<48x49xf32>
    %369 = arith.addf %364, %368 : vector<48x49xf32>
    %cst_161 = arith.constant 8.000000e+00 : f32
    %370 = vector.broadcast %cst_161 : f32 to vector<48x49xf32>
    %371 = arith.cmpf oeq, %228, %370 : vector<48x49xf32>
    %cst_162 = arith.constant 0.000000e+00 : f32
    %372 = vector.broadcast %cst_162 : f32 to vector<48x49xf32>
    %373 = arith.select %371, %260, %372 : vector<48x49xi1>, vector<48x49xf32>
    %374 = arith.addf %369, %373 : vector<48x49xf32>
    %cst_163 = arith.constant 6.000000e+00 : f32
    %375 = vector.broadcast %cst_163 : f32 to vector<48x49xf32>
    %376 = arith.cmpf oeq, %228, %375 : vector<48x49xf32>
    %cst_164 = arith.constant 0.000000e+00 : f32
    %377 = vector.broadcast %cst_164 : f32 to vector<48x49xf32>
    %378 = arith.select %376, %233, %377 : vector<48x49xi1>, vector<48x49xf32>
    %cst_165 = arith.constant 7.000000e+00 : f32
    %379 = vector.broadcast %cst_165 : f32 to vector<48x49xf32>
    %380 = arith.cmpf oeq, %228, %379 : vector<48x49xf32>
    %cst_166 = arith.constant 0.000000e+00 : f32
    %381 = vector.broadcast %cst_166 : f32 to vector<48x49xf32>
    %382 = arith.select %380, %245, %381 : vector<48x49xi1>, vector<48x49xf32>
    %383 = arith.addf %378, %382 : vector<48x49xf32>
    %cst_167 = arith.constant 8.000000e+00 : f32
    %384 = vector.broadcast %cst_167 : f32 to vector<48x49xf32>
    %385 = arith.cmpf oeq, %228, %384 : vector<48x49xf32>
    %cst_168 = arith.constant 0.000000e+00 : f32
    %386 = vector.broadcast %cst_168 : f32 to vector<48x49xf32>
    %387 = arith.select %385, %254, %386 : vector<48x49xi1>, vector<48x49xf32>
    %388 = arith.addf %383, %387 : vector<48x49xf32>
    %cst_169 = arith.constant 9.000000e+00 : f32
    %389 = vector.broadcast %cst_169 : f32 to vector<48x49xf32>
    %390 = arith.cmpf oeq, %228, %389 : vector<48x49xf32>
    %cst_170 = arith.constant 0.000000e+00 : f32
    %391 = vector.broadcast %cst_170 : f32 to vector<48x49xf32>
    %392 = arith.select %390, %260, %391 : vector<48x49xi1>, vector<48x49xf32>
    %393 = arith.addf %388, %392 : vector<48x49xf32>
    %cst_171 = arith.constant 7.000000e+00 : f32
    %394 = vector.broadcast %cst_171 : f32 to vector<48x49xf32>
    %395 = arith.cmpf oeq, %228, %394 : vector<48x49xf32>
    %cst_172 = arith.constant 0.000000e+00 : f32
    %396 = vector.broadcast %cst_172 : f32 to vector<48x49xf32>
    %397 = arith.select %395, %233, %396 : vector<48x49xi1>, vector<48x49xf32>
    %cst_173 = arith.constant 8.000000e+00 : f32
    %398 = vector.broadcast %cst_173 : f32 to vector<48x49xf32>
    %399 = arith.cmpf oeq, %228, %398 : vector<48x49xf32>
    %cst_174 = arith.constant 0.000000e+00 : f32
    %400 = vector.broadcast %cst_174 : f32 to vector<48x49xf32>
    %401 = arith.select %399, %245, %400 : vector<48x49xi1>, vector<48x49xf32>
    %402 = arith.addf %397, %401 : vector<48x49xf32>
    %cst_175 = arith.constant 9.000000e+00 : f32
    %403 = vector.broadcast %cst_175 : f32 to vector<48x49xf32>
    %404 = arith.cmpf oeq, %228, %403 : vector<48x49xf32>
    %cst_176 = arith.constant 0.000000e+00 : f32
    %405 = vector.broadcast %cst_176 : f32 to vector<48x49xf32>
    %406 = arith.select %404, %254, %405 : vector<48x49xi1>, vector<48x49xf32>
    %407 = arith.addf %402, %406 : vector<48x49xf32>
    %cst_177 = arith.constant 1.000000e+01 : f32
    %408 = vector.broadcast %cst_177 : f32 to vector<48x49xf32>
    %409 = arith.cmpf oeq, %228, %408 : vector<48x49xf32>
    %cst_178 = arith.constant 0.000000e+00 : f32
    %410 = vector.broadcast %cst_178 : f32 to vector<48x49xf32>
    %411 = arith.select %409, %260, %410 : vector<48x49xi1>, vector<48x49xf32>
    %412 = arith.addf %407, %411 : vector<48x49xf32>
    %413 = tpu.concatenate %223, %279, %298, %317, %336, %355, %374, %393, %412 in 0 : vector<48x49xf32>, vector<48x49xf32>, vector<48x49xf32>, vector<48x49xf32>, vector<48x49xf32>, vector<48x49xf32>, vector<48x49xf32>, vector<48x49xf32>, vector<48x49xf32> -> vector<432x49xf32>
    %cst_179 = arith.constant dense<0.000000e+00> : vector<2x49xf32>
    %414 = tpu.matmul %0, %413, %cst_179 {dimension_numbers = #tpu.dot_dimension_numbers<[1], [0], [0], [1], [0, 0, 1, 1], [], []>} : vector<2x432xf32>, vector<432x49xf32>, vector<2x49xf32> -> vector<2x49xf32>
    %c0_180 = arith.constant 0 : index
    %c0_181 = arith.constant 0 : index
    %415 = vector.load %arg4[%c0_180, %c0_181] : memref<1x200xf32, #tpu.memory_space<vmem>>, vector<1x200xf32>
    %416 = vector.extract_strided_slice %414 {offsets = [0, 0], sizes = [1, 49], strides = [1, 1]} : vector<2x49xf32> to vector<1x49xf32>
    %c0_182 = arith.constant 0 : index
    %c0_183 = arith.constant 0 : index
    %c0_184 = arith.constant 0 : index
    %417 = vector.load %arg3[%c0_182, %c0_183, %c0_184] : memref<2x49x200xf32, #tpu.memory_space<vmem>>, vector<1x49x200xf32>
    %418 = vector.shape_cast %417 : vector<1x49x200xf32> to vector<49x200xf32>
    %cst_185 = arith.constant dense<0.000000e+00> : vector<1x200xf32>
    %419 = tpu.matmul %416, %418, %cst_185 {dimension_numbers = #tpu.dot_dimension_numbers<[1], [0], [0], [1], [0, 0, 1, 1], [], []>} : vector<1x49xf32>, vector<49x200xf32>, vector<1x200xf32> -> vector<1x200xf32>
    %420 = arith.addf %415, %419 : vector<1x200xf32>
    %421 = vector.extract_strided_slice %414 {offsets = [1, 0], sizes = [1, 49], strides = [1, 1]} : vector<2x49xf32> to vector<1x49xf32>
    %c1_186 = arith.constant 1 : index
    %c0_187 = arith.constant 0 : index
    %c0_188 = arith.constant 0 : index
    %422 = vector.load %arg3[%c1_186, %c0_187, %c0_188] : memref<2x49x200xf32, #tpu.memory_space<vmem>>, vector<1x49x200xf32>
    %423 = vector.shape_cast %422 : vector<1x49x200xf32> to vector<49x200xf32>
    %cst_189 = arith.constant dense<0.000000e+00> : vector<1x200xf32>
    %424 = tpu.matmul %421, %423, %cst_189 {dimension_numbers = #tpu.dot_dimension_numbers<[1], [0], [0], [1], [0, 0, 1, 1], [], []>} : vector<1x49xf32>, vector<49x200xf32>, vector<1x200xf32> -> vector<1x200xf32>
    %425 = arith.addf %420, %424 : vector<1x200xf32>
    %cst_190 = arith.constant 0.000000e+00 : f32
    %426 = vector.broadcast %cst_190 : f32 to vector<1x200xf32>
    %427 = arith.maximumf %425, %426 : vector<1x200xf32>
    %c1_191 = arith.constant 1 : index
    %c0_192 = arith.constant 0 : index
    %428 = vector.load %arg5[%c1_191, %c0_192] : memref<2x200xf32, #tpu.memory_space<vmem>>, vector<1x200xf32>
    tpu.vector_store %arg5[%c1_191, %c0_192], %427 {strides = array<i32>} : memref<2x200xf32, #tpu.memory_space<vmem>>, vector<1x200xf32>,
    return
  }
  func.func @transform_0(%arg0: i32) -> (i32, i32, i32) {
    %c0_i32 = arith.constant 0 : i32
    %c0_i32_0 = arith.constant 0 : i32
    %c0_i32_1 = arith.constant 0 : i32
    %c0_i32_2 = arith.constant 0 : i32
    return %c0_i32, %c0_i32_0, %c0_i32_1 : i32, i32, i32
  }
  func.func @transform_1(%arg0: i32) -> (i32, i32) {
    %c0_i32 = arith.constant 0 : i32
    %c0_i32_0 = arith.constant 0 : i32
    %c0_i32_1 = arith.constant 0 : i32
    return %c0_i32, %c0_i32_0 : i32, i32
  }
  func.func @transform_2(%arg0: i32) -> (i32, i32, i32) {
    %c0_i32 = arith.constant 0 : i32
    %c0_i32_0 = arith.constant 0 : i32
    %c0_i32_1 = arith.constant 0 : i32
    %c0_i32_2 = arith.constant 0 : i32
    return %c0_i32, %c0_i32_0, %c0_i32_1 : i32, i32, i32
  }
  func.func @transform_3(%arg0: i32) -> (i32, i32) {
    %c0_i32 = arith.constant 0 : i32
    %c0_i32_0 = arith.constant 0 : i32
    %c0_i32_1 = arith.constant 0 : i32
    return %c0_i32, %c0_i32_0 : i32, i32
  }
  func.func @transform_4(%arg0: i32) -> (i32, i32) {
    %c0_i32 = arith.constant 0 : i32
    %c0_i32_0 = arith.constant 0 : i32
    %c0_i32_1 = arith.constant 0 : i32
    return %c0_i32, %c0_i32_0 : i32, i32
  }
}

</mosaic_0001>

<llo_original>
// kernel: kanc_hdc_forward.3
$region0: #{kanc_hdc_forward.3}
  #allocation0 [shape = 'u32[]', space=smem, size = 0x4, offset = 0x4, fixed_abs, tag = 'smem constant byte address 0x4 - core index']
  #allocation1 [shape = 'u32[144,128]{1,0:T(1,128)}', space=vmem, size = 0x12000, scoped, tag = 'internal scratch']
  %s0 = inlined_call_operand.vmem [shape: f32[4,16,338], index: 0, kind: input, shape index: {}]
  %s1 = inlined_call_operand.vmem [shape: f32[5,144], index: 1, kind: input, shape index: {}]
  %s2 = inlined_call_operand.vmem [shape: f32[5,338], index: 2, kind: output, shape index: {}]
  %s3 = sld [smem:[#allocation0]]
  $region18: #{kanc_hdc_forward.3} parent=0
    _
  %s5 = ssub.s32 1, %s3
  %s6 = scalar_select 0, %s5, %s3
  // Predicated region
  $region2: #{kanc_hdc_forward.3} parent=0 // pred_check
    _
  $region3: #{kanc_hdc_forward.3} parent=0 // pred_check_branch
    %8 = sbr.rel (0) target = $region5
  $region4: #{kanc_hdc_forward.3} parent=0 // pred_region
    _
  $region5: #{kanc_hdc_forward.3} parent=0 // pred_fallthru
    _
  // Predicated region
  $region6: #{kanc_hdc_forward.3} parent=0 // pred_check
    _
  $region7: #{kanc_hdc_forward.3} parent=0 // pred_check_branch
    %10 = sbr.rel (0) target = $region9
  $region8: #{kanc_hdc_forward.3} parent=0 // pred_region
    _
  $region9: #{kanc_hdc_forward.3} parent=0 // pred_fallthru
    _
  %v11 = vld [vmem:[%s1] sm:$0x1f]
  %v12 = vld [vmem:[%s1 + $0x8] sm:$0x1f]
  %v13 = vld [vmem:[%s0] sm:$0xff]
  %v14 = vld [vmem:[%s0 + $0x8] sm:$0xff]
  %v15 = vld [vmem:[%s0 + $0x10] sm:$0xff]
  %v16 = vld [vmem:[%s0 + $0x18] sm:$0xff]
  %v17 = vld [vmem:[%s0 + $0x20] sm:$0xff]
  %v18 = vld [vmem:[%s0 + $0x28] sm:$0xff]
  %v19 = vsub.f32 0.0, %v13
  %v20 = vsub.f32 0.0, %v14
  %v21 = vsub.f32 0.0, %v15
  %v22 = vsub.f32 0.0, %v16
  %v23 = vsub.f32 0.0, %v17
  %v24 = vsub.f32 0.0, %v18
  %v25 = vmul.f32 %v19, 1.442695
  %v26 = vpow.pop %v25
  %v27 = vmul.f32 %v20, 1.442695
  %v28 = vpow.pop %v27
  %v29 = vmul.f32 %v21, 1.442695
  %v30 = vpow.pop %v29
  %v31 = vmul.f32 %v22, 1.442695
  %v32 = vpow.pop %v31
  %v33 = vmul.f32 %v23, 1.442695
  %v34 = vpow.pop %v33
  %v35 = vmul.f32 %v24, 1.442695
  %v36 = vpow.pop %v35
  %v37 = vadd.f32 %v26, 1.0
  %v38 = vadd.f32 %v28, 1.0
  %v39 = vadd.f32 %v30, 1.0
  %v40 = vadd.f32 %v32, 1.0
  %v41 = vadd.f32 %v34, 1.0
  %v42 = vadd.f32 %v36, 1.0
  %v43 = vrcp.pop %v37
  %v44 = vrcp.pop %v38
  %v45 = vrcp.pop %v39
  %v46 = vrcp.pop %v40
  %v47 = vrcp.pop %v41
  %v48 = vrcp.pop %v42
  %v49 = vmul.f32 %v13, %v43
  %v50 = vmul.f32 %v14, %v44
  %v51 = vmul.f32 %v15, %v45
  %v52 = vmul.f32 %v16, %v46
  %v53 = vmul.f32 %v17, %v47
  %v54 = vmul.f32 %v18, %v48
  %v55 = vsub.f32 %v13, -2.2
  %v56 = vsub.f32 %v14, -2.2
  %v57 = vsub.f32 %v15, -2.2
  %v58 = vsub.f32 %v16, -2.2
  %v59 = vsub.f32 %v17, -2.2
  %v60 = vsub.f32 %v18, -2.2
  %v61 = vmul.f32 %v55, 2.5
  %v62 = vmul.f32 %v56, 2.5
  %v63 = vmul.f32 %v57, 2.5
  %v64 = vmul.f32 %v58, 2.5
  %v65 = vmul.f32 %v59, 2.5
  %v66 = vmul.f32 %v60, 2.5
  %v67 = vfloor.f32 %v61
  %v68 = vfloor.f32 %v62
  %v69 = vfloor.f32 %v63
  %v70 = vfloor.f32 %v64
  %v71 = vfloor.f32 %v65
  %v72 = vfloor.f32 %v66
  %v73 = vsub.f32 %v61, %v67
  %v74 = vsub.f32 %v62, %v68
  %v75 = vsub.f32 %v63, %v69
  %v76 = vsub.f32 %v64, %v70
  %v77 = vsub.f32 %v65, %v71
  %v78 = vsub.f32 %v66, %v72
  %v79 = vmul.f32 %v73, %v73
  %v80 = vmul.f32 %v74, %v74
  %v81 = vmul.f32 %v75, %v75
  %v82 = vmul.f32 %v76, %v76
  %v83 = vmul.f32 %v77, %v77
  %v84 = vmul.f32 %v78, %v78
  %v85 = vmul.f32 %v79, %v73
  %v86 = vmul.f32 %v80, %v74
  %v87 = vmul.f32 %v81, %v75
  %v88 = vmul.f32 %v82, %v76
  %v89 = vmul.f32 %v83, %v77
  %v90 = vmul.f32 %v84, %v78
  %v91 = vmul.f32 %v85, 0.16666667
  %v92 = vmul.f32 %v86, 0.16666667
  %v93 = vmul.f32 %v87, 0.16666667
  %v94 = vmul.f32 %v88, 0.16666667
  %v95 = vmul.f32 %v89, 0.16666667
  %v96 = vmul.f32 %v90, 0.16666667
  %v97 = vmul.f32 %v73, -3.0
  %v98 = vmul.f32 %v74, -3.0
  %v99 = vmul.f32 %v75, -3.0
  %v100 = vmul.f32 %v76, -3.0
  %v101 = vmul.f32 %v77, -3.0
  %v102 = vmul.f32 %v78, -3.0
  %v103 = vadd.f32 %v97, 3.0
  %v104 = vadd.f32 %v98, 3.0
  %v105 = vadd.f32 %v99, 3.0
  %v106 = vadd.f32 %v100, 3.0
  %v107 = vadd.f32 %v101, 3.0
  %v108 = vadd.f32 %v102, 3.0
  %v109 = vmul.f32 %v103, %v73
  %v110 = vmul.f32 %v104, %v74
  %v111 = vmul.f32 %v105, %v75
  %v112 = vmul.f32 %v106, %v76
  %v113 = vmul.f32 %v107, %v77
  %v114 = vmul.f32 %v108, %v78
  %v115 = vadd.f32 %v109, 3.0
  %v116 = vadd.f32 %v110, 3.0
  %v117 = vadd.f32 %v111, 3.0
  %v118 = vadd.f32 %v112, 3.0
  %v119 = vadd.f32 %v113, 3.0
  %v120 = vadd.f32 %v114, 3.0
  %v121 = vmul.f32 %v115, %v73
  %v122 = vmul.f32 %v116, %v74
  %v123 = vmul.f32 %v117, %v75
  %v124 = vmul.f32 %v118, %v76
  %v125 = vmul.f32 %v119, %v77
  %v126 = vmul.f32 %v120, %v78
  %v127 = vadd.f32 %v121, 1.0
  %v128 = vadd.f32 %v122, 1.0
  %v129 = vadd.f32 %v123, 1.0
  %v130 = vadd.f32 %v124, 1.0
  %v131 = vadd.f32 %v125, 1.0
  %v132 = vadd.f32 %v126, 1.0
  %v133 = vmul.f32 %v127, 0.16666667
  %v134 = vmul.f32 %v128, 0.16666667
  %v135 = vmul.f32 %v129, 0.16666667
  %v136 = vmul.f32 %v130, 0.16666667
  %v137 = vmul.f32 %v131, 0.16666667
  %v138 = vmul.f32 %v132, 0.16666667
  %v139 = vmul.f32 %v73, 3.0
  %v140 = vmul.f32 %v74, 3.0
  %v141 = vmul.f32 %v75, 3.0
  %v142 = vmul.f32 %v76, 3.0
  %v143 = vmul.f32 %v77, 3.0
  %v144 = vmul.f32 %v78, 3.0
  %v145 = vsub.f32 %v139, 6.0
  %v146 = vsub.f32 %v140, 6.0
  %v147 = vsub.f32 %v141, 6.0
  %v148 = vsub.f32 %v142, 6.0
  %v149 = vsub.f32 %v143, 6.0
  %v150 = vsub.f32 %v144, 6.0
  %v151 = vmul.f32 %v145, %v79
  %v152 = vmul.f32 %v146, %v80
  %v153 = vmul.f32 %v147, %v81
  %v154 = vmul.f32 %v148, %v82
  %v155 = vmul.f32 %v149, %v83
  %v156 = vmul.f32 %v150, %v84
  %v157 = vadd.f32 %v151, 4.0
  %v158 = vadd.f32 %v152, 4.0
  %v159 = vadd.f32 %v153, 4.0
  %v160 = vadd.f32 %v154, 4.0
  %v161 = vadd.f32 %v155, 4.0
  %v162 = vadd.f32 %v156, 4.0
  %v163 = vmul.f32 %v157, 0.16666667
  %v164 = vmul.f32 %v158, 0.16666667
  %v165 = vmul.f32 %v159, 0.16666667
  %v166 = vmul.f32 %v160, 0.16666667
  %v167 = vmul.f32 %v161, 0.16666667
  %v168 = vmul.f32 %v162, 0.16666667
  %v169 = vsub.f32 1.0, %v73
  %v170 = vsub.f32 1.0, %v74
  %v171 = vsub.f32 1.0, %v75
  %v172 = vsub.f32 1.0, %v76
  %v173 = vsub.f32 1.0, %v77
  %v174 = vsub.f32 1.0, %v78
  %v175 = vmul.f32 %v169, %v169
  %v176 = vmul.f32 %v170, %v170
  %v177 = vmul.f32 %v171, %v171
  %v178 = vmul.f32 %v172, %v172
  %v179 = vmul.f32 %v173, %v173
  %v180 = vmul.f32 %v174, %v174
  %v181 = vmul.f32 %v175, %v169
  %v182 = vmul.f32 %v176, %v170
  %v183 = vmul.f32 %v177, %v171
  %v184 = vmul.f32 %v178, %v172
  %v185 = vmul.f32 %v179, %v173
  %v186 = vmul.f32 %v180, %v174
  %v187 = vmul.f32 %v181, 0.16666667
  %v188 = vmul.f32 %v182, 0.16666667
  %v189 = vmul.f32 %v183, 0.16666667
  %v190 = vmul.f32 %v184, 0.16666667
  %v191 = vmul.f32 %v185, 0.16666667
  %v192 = vmul.f32 %v186, 0.16666667
  %vm193 = vcmp.eq.f32.partialorder %v67, 0.0
  %vm194 = vcmp.eq.f32.partialorder %v68, 0.0
  %vm195 = vcmp.eq.f32.partialorder %v69, 0.0
  %vm196 = vcmp.eq.f32.partialorder %v70, 0.0
  %vm197 = vcmp.eq.f32.partialorder %v71, 0.0
  %vm198 = vcmp.eq.f32.partialorder %v72, 0.0
  %v199 = vsel %vm193, %v91, 0.0
  %v200 = vsel %vm194, %v92, 0.0
  %v201 = vsel %vm195, %v93, 0.0
  %v202 = vsel %vm196, %v94, 0.0
  %v203 = vsel %vm197, %v95, 0.0
  %v204 = vsel %vm198, %v96, 0.0
  %vm205 = vcmp.eq.f32.partialorder %v67, 1.0
  %vm206 = vcmp.eq.f32.partialorder %v68, 1.0
  %vm207 = vcmp.eq.f32.partialorder %v69, 1.0
  %vm208 = vcmp.eq.f32.partialorder %v70, 1.0
  %vm209 = vcmp.eq.f32.partialorder %v71, 1.0
  %vm210 = vcmp.eq.f32.partialorder %v72, 1.0
  %v211 = vsel %vm205, %v133, 0.0
  %v212 = vsel %vm206, %v134, 0.0
  %v213 = vsel %vm207, %v135, 0.0
  %v214 = vsel %vm208, %v136, 0.0
  %v215 = vsel %vm209, %v137, 0.0
  %v216 = vsel %vm210, %v138, 0.0
  %v217 = vadd.f32 %v199, %v211
  %v218 = vadd.f32 %v200, %v212
  %v219 = vadd.f32 %v201, %v213
  %v220 = vadd.f32 %v202, %v214
  %v221 = vadd.f32 %v203, %v215
  %v222 = vadd.f32 %v204, %v216
  %vm223 = vcmp.eq.f32.partialorder %v67, 2.0
  %vm224 = vcmp.eq.f32.partialorder %v68, 2.0
  %vm225 = vcmp.eq.f32.partialorder %v69, 2.0
  %vm226 = vcmp.eq.f32.partialorder %v70, 2.0
  %vm227 = vcmp.eq.f32.partialorder %v71, 2.0
  %vm228 = vcmp.eq.f32.partialorder %v72, 2.0
  %v229 = vsel %vm223, %v163, 0.0
  %v230 = vsel %vm224, %v164, 0.0
  %v231 = vsel %vm225, %v165, 0.0
  %v232 = vsel %vm226, %v166, 0.0
  %v233 = vsel %vm227, %v167, 0.0
  %v234 = vsel %vm228, %v168, 0.0
  %v235 = vadd.f32 %v217, %v229
  %v236 = vadd.f32 %v218, %v230
  %v237 = vadd.f32 %v219, %v231
  %v238 = vadd.f32 %v220, %v232
  %v239 = vadd.f32 %v221, %v233
  %v240 = vadd.f32 %v222, %v234
  %vm241 = vcmp.eq.f32.partialorder %v67, 3.0
  %vm242 = vcmp.eq.f32.partialorder %v68, 3.0
  %vm243 = vcmp.eq.f32.partialorder %v69, 3.0
  %vm244 = vcmp.eq.f32.partialorder %v70, 3.0
  %vm245 = vcmp.eq.f32.partialorder %v71, 3.0
  %vm246 = vcmp.eq.f32.partialorder %v72, 3.0
  %v247 = vsel %vm241, %v187, 0.0
  %v248 = vsel %vm242, %v188, 0.0
  %v249 = vsel %vm243, %v189, 0.0
  %v250 = vsel %vm244, %v190, 0.0
  %v251 = vsel %vm245, %v191, 0.0
  %v252 = vsel %vm246, %v192, 0.0
  %v253 = vadd.f32 %v235, %v247
  %v254 = vadd.f32 %v236, %v248
  %v255 = vadd.f32 %v237, %v249
  %v256 = vadd.f32 %v238, %v250
  %v257 = vadd.f32 %v239, %v251
  %v258 = vadd.f32 %v240, %v252
  %v259 = vsel %vm205, %v91, 0.0
  %v260 = vsel %vm206, %v92, 0.0
  %v261 = vsel %vm207, %v93, 0.0
  %v262 = vsel %vm208, %v94, 0.0
  %v263 = vsel %vm209, %v95, 0.0
  %v264 = vsel %vm210, %v96, 0.0
  %v265 = vsel %vm223, %v133, 0.0
  %v266 = vsel %vm224, %v134, 0.0
  %v267 = vsel %vm225, %v135, 0.0
  %v268 = vsel %vm226, %v136, 0.0
  %v269 = vsel %vm227, %v137, 0.0
  %v270 = vsel %vm228, %v138, 0.0
  %v271 = vadd.f32 %v259, %v265
  %v272 = vadd.f32 %v260, %v266
  %v273 = vadd.f32 %v261, %v267
  %v274 = vadd.f32 %v262, %v268
  %v275 = vadd.f32 %v263, %v269
  %v276 = vadd.f32 %v264, %v270
  %v277 = vsel %vm241, %v163, 0.0
  %v278 = vsel %vm242, %v164, 0.0
  %v279 = vsel %vm243, %v165, 0.0
  %v280 = vsel %vm244, %v166, 0.0
  %v281 = vsel %vm245, %v167, 0.0
  %v282 = vsel %vm246, %v168, 0.0
  %v283 = vadd.f32 %v271, %v277
  %v284 = vadd.f32 %v272, %v278
  %v285 = vadd.f32 %v273, %v279
  %v286 = vadd.f32 %v274, %v280
  %v287 = vadd.f32 %v275, %v281
  %v288 = vadd.f32 %v276, %v282
  %vm289 = vcmp.eq.f32.partialorder %v67, 4.0
  %vm290 = vcmp.eq.f32.partialorder %v68, 4.0
  %vm291 = vcmp.eq.f32.partialorder %v69, 4.0
  %vm292 = vcmp.eq.f32.partialorder %v70, 4.0
  %vm293 = vcmp.eq.f32.partialorder %v71, 4.0
  %vm294 = vcmp.eq.f32.partialorder %v72, 4.0
  %v295 = vsel %vm289, %v187, 0.0
  %v296 = vsel %vm290, %v188, 0.0
  %v297 = vsel %vm291, %v189, 0.0
  %v298 = vsel %vm292, %v190, 0.0
  %v299 = vsel %vm293, %v191, 0.0
  %v300 = vsel %vm294, %v192, 0.0
  %v301 = vadd.f32 %v283, %v295
  %v302 = vadd.f32 %v284, %v296
  %v303 = vadd.f32 %v285, %v297
  %v304 = vadd.f32 %v286, %v298
  %v305 = vadd.f32 %v287, %v299
  %v306 = vadd.f32 %v288, %v300
  %v307 = vsel %vm223, %v91, 0.0
  %v308 = vsel %vm224, %v92, 0.0
  %v309 = vsel %vm225, %v93, 0.0
  %v310 = vsel %vm226, %v94, 0.0
  %v311 = vsel %vm227, %v95, 0.0
  %v312 = vsel %vm228, %v96, 0.0
  %v313 = vsel %vm241, %v133, 0.0
  %v314 = vsel %vm242, %v134, 0.0
  %v315 = vsel %vm243, %v135, 0.0
  %v316 = vsel %vm244, %v136, 0.0
  %v317 = vsel %vm245, %v137, 0.0
  %v318 = vsel %vm246, %v138, 0.0
  %v319 = vadd.f32 %v307, %v313
  %v320 = vadd.f32 %v308, %v314
  %v321 = vadd.f32 %v309, %v315
  %v322 = vadd.f32 %v310, %v316
  %v323 = vadd.f32 %v311, %v317
  %v324 = vadd.f32 %v312, %v318
  %v325 = vsel %vm289, %v163, 0.0
  %v326 = vsel %vm290, %v164, 0.0
  %v327 = vsel %vm291, %v165, 0.0
  %v328 = vsel %vm292, %v166, 0.0
  %v329 = vsel %vm293, %v167, 0.0
  %v330 = vsel %vm294, %v168, 0.0
  %v331 = vadd.f32 %v319, %v325
  %v332 = vadd.f32 %v320, %v326
  %v333 = vadd.f32 %v321, %v327
  %v334 = vadd.f32 %v322, %v328
  %v335 = vadd.f32 %v323, %v329
  %v336 = vadd.f32 %v324, %v330
  %vm337 = vcmp.eq.f32.partialorder %v67, 5.0
  %vm338 = vcmp.eq.f32.partialorder %v68, 5.0
  %vm339 = vcmp.eq.f32.partialorder %v69, 5.0
  %vm340 = vcmp.eq.f32.partialorder %v70, 5.0
  %vm341 = vcmp.eq.f32.partialorder %v71, 5.0
  %vm342 = vcmp.eq.f32.partialorder %v72, 5.0
  %v343 = vsel %vm337, %v187, 0.0
  %v344 = vsel %vm338, %v188, 0.0
  %v345 = vsel %vm339, %v189, 0.0
  %v346 = vsel %vm340, %v190, 0.0
  %v347 = vsel %vm341, %v191, 0.0
  %v348 = vsel %vm342, %v192, 0.0
  %v349 = vadd.f32 %v331, %v343
  %v350 = vadd.f32 %v332, %v344
  %v351 = vadd.f32 %v333, %v345
  %v352 = vadd.f32 %v334, %v346
  %v353 = vadd.f32 %v335, %v347
  %v354 = vadd.f32 %v336, %v348
  %v355 = vsel %vm241, %v91, 0.0
  %v356 = vsel %vm242, %v92, 0.0
  %v357 = vsel %vm243, %v93, 0.0
  %v358 = vsel %vm244, %v94, 0.0
  %v359 = vsel %vm245, %v95, 0.0
  %v360 = vsel %vm246, %v96, 0.0
  %v361 = vsel %vm289, %v133, 0.0
  %v362 = vsel %vm290, %v134, 0.0
  %v363 = vsel %vm291, %v135, 0.0
  %v364 = vsel %vm292, %v136, 0.0
  %v365 = vsel %vm293, %v137, 0.0
  %v366 = vsel %vm294, %v138, 0.0
  %v367 = vadd.f32 %v355, %v361
  %v368 = vadd.f32 %v356, %v362
  %v369 = vadd.f32 %v357, %v363
  %v370 = vadd.f32 %v358, %v364
  %v371 = vadd.f32 %v359, %v365
  %v372 = vadd.f32 %v360, %v366
  %v373 = vsel %vm337, %v163, 0.0
  %v374 = vsel %vm338, %v164, 0.0
  %v375 = vsel %vm339, %v165, 0.0
  %v376 = vsel %vm340, %v166, 0.0
  %v377 = vsel %vm341, %v167, 0.0
  %v378 = vsel %vm342, %v168, 0.0
  %v379 = vadd.f32 %v367, %v373
  %v380 = vadd.f32 %v368, %v374
  %v381 = vadd.f32 %v369, %v375
  %v382 = vadd.f32 %v370, %v376
  %v383 = vadd.f32 %v371, %v377
  %v384 = vadd.f32 %v372, %v378
  %vm385 = vcmp.eq.f32.partialorder %v67, 6.0
  %vm386 = vcmp.eq.f32.partialorder %v68, 6.0
  %vm387 = vcmp.eq.f32.partialorder %v69, 6.0
  %vm388 = vcmp.eq.f32.partialorder %v70, 6.0
  %vm389 = vcmp.eq.f32.partialorder %v71, 6.0
  %vm390 = vcmp.eq.f32.partialorder %v72, 6.0
  %v391 = vsel %vm385, %v187, 0.0
  %v392 = vsel %vm386, %v188, 0.0
  %v393 = vsel %vm387, %v189, 0.0
  %v394 = vsel %vm388, %v190, 0.0
  %v395 = vsel %vm389, %v191, 0.0
  %v396 = vsel %vm390, %v192, 0.0
  %v397 = vadd.f32 %v379, %v391
  %v398 = vadd.f32 %v380, %v392
  %v399 = vadd.f32 %v381, %v393
  %v400 = vadd.f32 %v382, %v394
  %v401 = vadd.f32 %v383, %v395
  %v402 = vadd.f32 %v384, %v396
  %v403 = vsel %vm289, %v91, 0.0
  %v404 = vsel %vm290, %v92, 0.0
  %v405 = vsel %vm291, %v93, 0.0
  %v406 = vsel %vm292, %v94, 0.0
  %v407 = vsel %vm293, %v95, 0.0
  %v408 = vsel %vm294, %v96, 0.0
  %v409 = vsel %vm337, %v133, 0.0
  %v410 = vsel %vm338, %v134, 0.0
  %v411 = vsel %vm339, %v135, 0.0
  %v412 = vsel %vm340, %v136, 0.0
  %v413 = vsel %vm341, %v137, 0.0
  %v414 = vsel %vm342, %v138, 0.0
  %v415 = vadd.f32 %v403, %v409
  %v416 = vadd.f32 %v404, %v410
  %v417 = vadd.f32 %v405, %v411
  %v418 = vadd.f32 %v406, %v412
  %v419 = vadd.f32 %v407, %v413
  %v420 = vadd.f32 %v408, %v414
  %v421 = vsel %vm385, %v163, 0.0
  %v422 = vsel %vm386, %v164, 0.0
  %v423 = vsel %vm387, %v165, 0.0
  %v424 = vsel %vm388, %v166, 0.0
  %v425 = vsel %vm389, %v167, 0.0
  %v426 = vsel %vm390, %v168, 0.0
  %v427 = vadd.f32 %v415, %v421
  %v428 = vadd.f32 %v416, %v422
  %v429 = vadd.f32 %v417, %v423
  %v430 = vadd.f32 %v418, %v424
  %v431 = vadd.f32 %v419, %v425
  %v432 = vadd.f32 %v420, %v426
  %vm433 = vcmp.eq.f32.partialorder %v67, 7.0
  %vm434 = vcmp.eq.f32.partialorder %v68, 7.0
  %vm435 = vcmp.eq.f32.partialorder %v69, 7.0
  %vm436 = vcmp.eq.f32.partialorder %v70, 7.0
  %vm437 = vcmp.eq.f32.partialorder %v71, 7.0
  %vm438 = vcmp.eq.f32.partialorder %v72, 7.0
  %v439 = vsel %vm433, %v187, 0.0
  %v440 = vsel %vm434, %v188, 0.0
  %v441 = vsel %vm435, %v189, 0.0
  %v442 = vsel %vm436, %v190, 0.0
  %v443 = vsel %vm437, %v191, 0.0
  %v444 = vsel %vm438, %v192, 0.0
  %v445 = vadd.f32 %v427, %v439
  %v446 = vadd.f32 %v428, %v440
  %v447 = vadd.f32 %v429, %v441
  %v448 = vadd.f32 %v430, %v442
  %v449 = vadd.f32 %v431, %v443
  %v450 = vadd.f32 %v432, %v444
  %v451 = vsel %vm337, %v91, 0.0
  %v452 = vsel %vm338, %v92, 0.0
  %v453 = vsel %vm339, %v93, 0.0
  %v454 = vsel %vm340, %v94, 0.0
  %v455 = vsel %vm341, %v95, 0.0
  %v456 = vsel %vm342, %v96, 0.0
  %v457 = vsel %vm385, %v133, 0.0
  %v458 = vsel %vm386, %v134, 0.0
  %v459 = vsel %vm387, %v135, 0.0
  %v460 = vsel %vm388, %v136, 0.0
  %v461 = vsel %vm389, %v137, 0.0
  %v462 = vsel %vm390, %v138, 0.0
  %v463 = vadd.f32 %v451, %v457
  %v464 = vadd.f32 %v452, %v458
  %v465 = vadd.f32 %v453, %v459
  %v466 = vadd.f32 %v454, %v460
  %v467 = vadd.f32 %v455, %v461
  %v468 = vadd.f32 %v456, %v462
  %v469 = vsel %vm433, %v163, 0.0
  %v470 = vsel %vm434, %v164, 0.0
  %v471 = vsel %vm435, %v165, 0.0
  %v472 = vsel %vm436, %v166, 0.0
  %v473 = vsel %vm437, %v167, 0.0
  %v474 = vsel %vm438, %v168, 0.0
  %v475 = vadd.f32 %v463, %v469
  %v476 = vadd.f32 %v464, %v470
  %v477 = vadd.f32 %v465, %v471
  %v478 = vadd.f32 %v466, %v472
  %v479 = vadd.f32 %v467, %v473
  %v480 = vadd.f32 %v468, %v474
  %vm481 = vcmp.eq.f32.partialorder %v67, 8.0
  %vm482 = vcmp.eq.f32.partialorder %v68, 8.0
  %vm483 = vcmp.eq.f32.partialorder %v69, 8.0
  %vm484 = vcmp.eq.f32.partialorder %v70, 8.0
  %vm485 = vcmp.eq.f32.partialorder %v71, 8.0
  %vm486 = vcmp.eq.f32.partialorder %v72, 8.0
  %v487 = vsel %vm481, %v187, 0.0
  %v488 = vsel %vm482, %v188, 0.0
  %v489 = vsel %vm483, %v189, 0.0
  %v490 = vsel %vm484, %v190, 0.0
  %v491 = vsel %vm485, %v191, 0.0
  %v492 = vsel %vm486, %v192, 0.0
  %v493 = vadd.f32 %v475, %v487
  %v494 = vadd.f32 %v476, %v488
  %v495 = vadd.f32 %v477, %v489
  %v496 = vadd.f32 %v478, %v490
  %v497 = vadd.f32 %v479, %v491
  %v498 = vadd.f32 %v480, %v492
  %v499 = vsel %vm385, %v91, 0.0
  %v500 = vsel %vm386, %v92, 0.0
  %v501 = vsel %vm387, %v93, 0.0
  %v502 = vsel %vm388, %v94, 0.0
  %v503 = vsel %vm389, %v95, 0.0
  %v504 = vsel %vm390, %v96, 0.0
  %v505 = vsel %vm433, %v133, 0.0
  %v506 = vsel %vm434, %v134, 0.0
  %v507 = vsel %vm435, %v135, 0.0
  %v508 = vsel %vm436, %v136, 0.0
  %v509 = vsel %vm437, %v137, 0.0
  %v510 = vsel %vm438, %v138, 0.0
  %v511 = vadd.f32 %v499, %v505
  %v512 = vadd.f32 %v500, %v506
  %v513 = vadd.f32 %v501, %v507
  %v514 = vadd.f32 %v502, %v508
  %v515 = vadd.f32 %v503, %v509
  %v516 = vadd.f32 %v504, %v510
  %v517 = vsel %vm481, %v163, 0.0
  %v518 = vsel %vm482, %v164, 0.0
  %v519 = vsel %vm483, %v165, 0.0
  %v520 = vsel %vm484, %v166, 0.0
  %v521 = vsel %vm485, %v167, 0.0
  %v522 = vsel %vm486, %v168, 0.0
  %v523 = vadd.f32 %v511, %v517
  %v524 = vadd.f32 %v512, %v518
  %v525 = vadd.f32 %v513, %v519
  %v526 = vadd.f32 %v514, %v520
  %v527 = vadd.f32 %v515, %v521
  %v528 = vadd.f32 %v516, %v522
  %vm529 = vcmp.eq.f32.partialorder %v67, 9.0
  %vm530 = vcmp.eq.f32.partialorder %v68, 9.0
  %vm531 = vcmp.eq.f32.partialorder %v69, 9.0
  %vm532 = vcmp.eq.f32.partialorder %v70, 9.0
  %vm533 = vcmp.eq.f32.partialorder %v71, 9.0
  %vm534 = vcmp.eq.f32.partialorder %v72, 9.0
  %v535 = vsel %vm529, %v187, 0.0
  %v536 = vsel %vm530, %v188, 0.0
  %v537 = vsel %vm531, %v189, 0.0
  %v538 = vsel %vm532, %v190, 0.0
  %v539 = vsel %vm533, %v191, 0.0
  %v540 = vsel %vm534, %v192, 0.0
  %v541 = vadd.f32 %v523, %v535
  %v542 = vadd.f32 %v524, %v536
  %v543 = vadd.f32 %v525, %v537
  %v544 = vadd.f32 %v526, %v538
  %v545 = vadd.f32 %v527, %v539
  %v546 = vadd.f32 %v528, %v540
  %v547 = vsel %vm433, %v91, 0.0
  %v548 = vsel %vm434, %v92, 0.0
  %v549 = vsel %vm435, %v93, 0.0
  %v550 = vsel %vm436, %v94, 0.0
  %v551 = vsel %vm437, %v95, 0.0
  %v552 = vsel %vm438, %v96, 0.0
  %v553 = vsel %vm481, %v133, 0.0
  %v554 = vsel %vm482, %v134, 0.0
  %v555 = vsel %vm483, %v135, 0.0
  %v556 = vsel %vm484, %v136, 0.0
  %v557 = vsel %vm485, %v137, 0.0
  %v558 = vsel %vm486, %v138, 0.0
  %v559 = vadd.f32 %v547, %v553
  %v560 = vadd.f32 %v548, %v554
  %v561 = vadd.f32 %v549, %v555
  %v562 = vadd.f32 %v550, %v556
  %v563 = vadd.f32 %v551, %v557
  %v564 = vadd.f32 %v552, %v558
  %v565 = vsel %vm529, %v163, 0.0
  %v566 = vsel %vm530, %v164, 0.0
  %v567 = vsel %vm531, %v165, 0.0
  %v568 = vsel %vm532, %v166, 0.0
  %v569 = vsel %vm533, %v167, 0.0
  %v570 = vsel %vm534, %v168, 0.0
  %v571 = vadd.f32 %v559, %v565
  %v572 = vadd.f32 %v560, %v566
  %v573 = vadd.f32 %v561, %v567
  %v574 = vadd.f32 %v562, %v568
  %v575 = vadd.f32 %v563, %v569
  %v576 = vadd.f32 %v564, %v570
  %vm577 = vcmp.eq.f32.partialorder %v67, 10.0
  %vm578 = vcmp.eq.f32.partialorder %v68, 10.0
  %vm579 = vcmp.eq.f32.partialorder %v69, 10.0
  %vm580 = vcmp.eq.f32.partialorder %v70, 10.0
  %vm581 = vcmp.eq.f32.partialorder %v71, 10.0
  %vm582 = vcmp.eq.f32.partialorder %v72, 10.0
  %v583 = vsel %vm577, %v187, 0.0
  %v584 = vsel %vm578, %v188, 0.0
  %v585 = vsel %vm579, %v189, 0.0
  %v586 = vsel %vm580, %v190, 0.0
  %v587 = vsel %vm581, %v191, 0.0
  %v588 = vsel %vm582, %v192, 0.0
  %v589 = vadd.f32 %v571, %v583
  %v590 = vadd.f32 %v572, %v584
  %v591 = vadd.f32 %v573, %v585
  %v592 = vadd.f32 %v574, %v586
  %v593 = vadd.f32 %v575, %v587
  %v594 = vadd.f32 %v576, %v588
  %vm595 = vcmask 130048
  %v597 = vsel %vm595, %v12, 0
  %599 = vmatprep.subr.mxu0 %v50
  %600 = vmatpush1.msra.mxu0 %v49
  %601 = vmatprep.subr.mxu0 %v53
  %602 = vmatpush1.msra.mxu0 %v52
  %603 = vmatprep.subr.mxu0 %v254
  %604 = vmatpush1.msra.mxu0 %v253
  %605 = vmatprep.subr.mxu0 %v257
  %606 = vmatpush1.msra.mxu0 %v256
  %607 = vmatprep.subr.mxu0 %v302
  %608 = vmatpush1.msra.mxu0 %v301
  %609 = vmatprep.subr.mxu0 %v305
  %610 = vmatpush1.msra.mxu0 %v304
  %611 = vmatprep.subr.mxu0 %v350
  %612 = vmatpush1.msra.mxu0 %v349
  %613 = vmatprep.subr.mxu0 %v353
  %614 = vmatpush1.msra.mxu0 %v352
  %615 = vmatprep.subr.mxu0 %v398
  %616 = vmatpush1.msra.mxu0 %v397
  %617 = vmatprep.subr.mxu0 %v401
  %618 = vmatpush1.msra.mxu0 %v400
  %619 = vmatprep.subr.mxu0 %v446
  %620 = vmatpush1.msra.mxu0 %v445
  %621 = vmatprep.subr.mxu0 %v449
  %622 = vmatpush1.msra.mxu0 %v448
  %623 = vmatprep.subr.mxu0 %v494
  %624 = vmatpush1.msra.mxu0 %v493
  %625 = vmatprep.subr.mxu0 %v497
  %626 = vmatpush1.msra.mxu0 %v496
  %627 = vmatprep.subr.mxu0 %v542
  %628 = vmatpush1.msra.mxu0 %v541
  %629 = vmatprep.subr.mxu0 %v545
  %630 = vmatpush1.msra.mxu0 %v544
  %631 = vmatprep.subr.mxu0 %v590
  %632 = vmatpush1.msra.mxu0 %v589
  %633 = vmatprep.subr.mxu0 %v593
  %634 = vmatpush1.msra.mxu0 %v592
  %635 = vmatprep.subr.mxu0 0.0
  %636 = vmatpush1.msra.mxu0 0.0
  %637 = vmatprep.subr.mxu0 0.0
  %638 = vmatpush1.msra.mxu0 0.0
  %639 = vmatprep.subr.mxu0 0.0
  %640 = vmatpush1.msra.mxu0 0.0
  %641 = vmatprep.subr.mxu0 0.0
  %642 = vmatpush1.msra.mxu0 0.0
  %643 = vmatprep.subr.mxu0 0.0
  %644 = vmatpush1.msra.mxu0 0.0
  %645 = vmatprep.subr.mxu0 0.0
  %646 = vmatpush1.msra.mxu0 0.0
  %647 = vmatprep.subr.mxu0 0.0
  %648 = vmatpush1.msra.mxu0 0.0
  %649 = vmatprep.subr.mxu0 0.0
  %650 = vmatpush1.msra.mxu0 0.0
  %651 = vmatprep.subr.mxu0 0.0
  %652 = vmatpush1.msra.mxu0 0.0
  %653 = vmatprep.subr.mxu0 0.0
  %654 = vmatpush1.msra.mxu0 0.0
  %655 = vmatprep.subr.mxu0 0.0
  %656 = vmatpush1.msra.mxu0 0.0
  %657 = vmatprep.subr.mxu0 0.0
  %658 = vmatpush1.msra.mxu0 0.0
  %659 = vmatprep.subr.mxu0 0.0
  %660 = vmatpush1.msra.mxu0 0.0
  %661 = vmatprep.subr.mxu0 0.0
  %662 = vmatpush1.msra.mxu0 0.0
  %663 = vmatprep.mubr.f32.mxu0 %v597
  %664 = vmatmul.mubr.f32.gmra.mrb[0].mxu0 %v11
  %v665 = vpop.f32.mrb[0].mxu0
  %v666 = vadd.f32 0.0, %v665
  %v667 = vpop.f32.mrb[0].mxu0
  %v668 = vadd.f32 0.0, %v667
  %669 = vdwg.mxu0
  %670 = vmatprep.subr.mxu0 0.0
  %671 = vmatpush1.msra.mxu0 %v51
  %672 = vmatprep.subr.mxu0 0.0
  %673 = vmatpush1.msra.mxu0 %v54
  %674 = vmatprep.subr.mxu0 0.0
  %675 = vmatpush1.msra.mxu0 %v255
  %676 = vmatprep.subr.mxu0 0.0
  %677 = vmatpush1.msra.mxu0 %v258
  %678 = vmatprep.subr.mxu0 0.0
  %679 = vmatpush1.msra.mxu0 %v303
  %680 = vmatprep.subr.mxu0 0.0
  %681 = vmatpush1.msra.mxu0 %v306
  %682 = vmatprep.subr.mxu0 0.0
  %683 = vmatpush1.msra.mxu0 %v351
  %684 = vmatprep.subr.mxu0 0.0
  %685 = vmatpush1.msra.mxu0 %v354
  %686 = vmatprep.subr.mxu0 0.0
  %687 = vmatpush1.msra.mxu0 %v399
  %688 = vmatprep.subr.mxu0 0.0
  %689 = vmatpush1.msra.mxu0 %v402
  %690 = vmatprep.subr.mxu0 0.0
  %691 = vmatpush1.msra.mxu0 %v447
  %692 = vmatprep.subr.mxu0 0.0
  %693 = vmatpush1.msra.mxu0 %v450
  %694 = vmatprep.subr.mxu0 0.0
  %695 = vmatpush1.msra.mxu0 %v495
  %696 = vmatprep.subr.mxu0 0.0
  %697 = vmatpush1.msra.mxu0 %v498
  %698 = vmatprep.subr.mxu0 0.0
  %699 = vmatpush1.msra.mxu0 %v543
  %700 = vmatprep.subr.mxu0 0.0
  %701 = vmatpush1.msra.mxu0 %v546
  %702 = vmatprep.subr.mxu0 0.0
  %703 = vmatpush1.msra.mxu0 %v591
  %704 = vmatprep.subr.mxu0 0.0
  %705 = vmatpush1.msra.mxu0 %v594
  %706 = vmatprep.subr.mxu0 0.0
  %707 = vmatpush1.msra.mxu0 0.0
  %708 = vmatprep.subr.mxu0 0.0
  %709 = vmatpush1.msra.mxu0 0.0
  %710 = vmatprep.subr.mxu0 0.0
  %711 = vmatpush1.msra.mxu0 0.0
  %712 = vmatprep.subr.mxu0 0.0
  %713 = vmatpush1.msra.mxu0 0.0
  %714 = vmatprep.subr.mxu0 0.0
  %715 = vmatpush1.msra.mxu0 0.0
  %716 = vmatprep.subr.mxu0 0.0
  %717 = vmatpush1.msra.mxu0 0.0
  %718 = vmatprep.subr.mxu0 0.0
  %719 = vmatpush1.msra.mxu0 0.0
  %720 = vmatprep.subr.mxu0 0.0
  %721 = vmatpush1.msra.mxu0 0.0
  %722 = vmatprep.subr.mxu0 0.0
  %723 = vmatpush1.msra.mxu0 0.0
  %724 = vmatprep.subr.mxu0 0.0
  %725 = vmatpush1.msra.mxu0 0.0
  %726 = vmatprep.subr.mxu0 0.0
  %727 = vmatpush1.msra.mxu0 0.0
  %728 = vmatprep.subr.mxu0 0.0
  %729 = vmatpush1.msra.mxu0 0.0
  %730 = vmatprep.subr.mxu0 0.0
  %731 = vmatpush1.msra.mxu0 0.0
  %732 = vmatprep.subr.mxu0 0.0
  %733 = vmatpush1.msra.mxu0 0.0
  %734 = vmatprep.mubr.f32.mxu0 %v597
  %735 = vmatmul.mubr.f32.gmra.mrb[0].mxu0 %v11
  %v736 = vpop.f32.mrb[0].mxu0
  %v737 = vadd.f32 0.0, %v736
  %v738 = vpop.f32.mrb[0].mxu0
  %739 = vdwg.mxu0
  %s740 = scalar_lea.vmem %s0, 48
  %v741 = vld [vmem:[%s740] sm:$0xff]
  %v742 = vld [vmem:[%s740 + $0x8] sm:$0xff]
  %v743 = vld [vmem:[%s740 + $0x10] sm:$0xff]
  %v744 = vld [vmem:[%s740 + $0x18] sm:$0xff]
  %v745 = vld [vmem:[%s740 + $0x20] sm:$0xff]
  %v746 = vld [vmem:[%s740 + $0x28] sm:$0xff]
  %v747 = vsub.f32 0.0, %v741
  %v748 = vsub.f32 0.0, %v742
  %v749 = vsub.f32 0.0, %v743
  %v750 = vsub.f32 0.0, %v744
  %v751 = vsub.f32 0.0, %v745
  %v752 = vsub.f32 0.0, %v746
  %v753 = vmul.f32 %v747, 1.442695
  %v754 = vpow.pop %v753
  %v755 = vmul.f32 %v748, 1.442695
  %v756 = vpow.pop %v755
  %v757 = vmul.f32 %v749, 1.442695
  %v758 = vpow.pop %v757
  %v759 = vmul.f32 %v750, 1.442695
  %v760 = vpow.pop %v759
  %v761 = vmul.f32 %v751, 1.442695
  %v762 = vpow.pop %v761
  %v763 = vmul.f32 %v752, 1.442695
  %v764 = vpow.pop %v763
  %v765 = vadd.f32 %v754, 1.0
  %v766 = vadd.f32 %v756, 1.0
  %v767 = vadd.f32 %v758, 1.0
  %v768 = vadd.f32 %v760, 1.0
  %v769 = vadd.f32 %v762, 1.0
  %v770 = vadd.f32 %v764, 1.0
  %v771 = vrcp.pop %v765
  %v772 = vrcp.pop %v766
  %v773 = vrcp.pop %v767
  %v774 = vrcp.pop %v768
  %v775 = vrcp.pop %v769
  %v776 = vrcp.pop %v770
  %v777 = vmul.f32 %v741, %v771
  %v778 = vmul.f32 %v742, %v772
  %v779 = vmul.f32 %v743, %v773
  %v780 = vmul.f32 %v744, %v774
  %v781 = vmul.f32 %v745, %v775
  %v782 = vmul.f32 %v746, %v776
  %v783 = vsub.f32 %v741, -2.2
  %v784 = vsub.f32 %v742, -2.2
  %v785 = vsub.f32 %v743, -2.2
  %v786 = vsub.f32 %v744, -2.2
  %v787 = vsub.f32 %v745, -2.2
  %v788 = vsub.f32 %v746, -2.2
  %v789 = vmul.f32 %v783, 2.5
  %v790 = vmul.f32 %v784, 2.5
  %v791 = vmul.f32 %v785, 2.5
  %v792 = vmul.f32 %v786, 2.5
  %v793 = vmul.f32 %v787, 2.5
  %v794 = vmul.f32 %v788, 2.5
  %v795 = vfloor.f32 %v789
  %v796 = vfloor.f32 %v790
  %v797 = vfloor.f32 %v791
  %v798 = vfloor.f32 %v792
  %v799 = vfloor.f32 %v793
  %v800 = vfloor.f32 %v794
  %v801 = vsub.f32 %v789, %v795
  %v802 = vsub.f32 %v790, %v796
  %v803 = vsub.f32 %v791, %v797
  %v804 = vsub.f32 %v792, %v798
  %v805 = vsub.f32 %v793, %v799
  %v806 = vsub.f32 %v794, %v800
  %v807 = vmul.f32 %v801, %v801
  %v808 = vmul.f32 %v802, %v802
  %v809 = vmul.f32 %v803, %v803
  %v810 = vmul.f32 %v804, %v804
  %v811 = vmul.f32 %v805, %v805
  %v812 = vmul.f32 %v806, %v806
  %v813 = vmul.f32 %v807, %v801
  %v814 = vmul.f32 %v808, %v802
  %v815 = vmul.f32 %v809, %v803
  %v816 = vmul.f32 %v810, %v804
  %v817 = vmul.f32 %v811, %v805
  %v818 = vmul.f32 %v812, %v806
  %v819 = vmul.f32 %v813, 0.16666667
  %v820 = vmul.f32 %v814, 0.16666667
  %v821 = vmul.f32 %v815, 0.16666667
  %v822 = vmul.f32 %v816, 0.16666667
  %v823 = vmul.f32 %v817, 0.16666667
  %v824 = vmul.f32 %v818, 0.16666667
  %v825 = vmul.f32 %v801, -3.0
  %v826 = vmul.f32 %v802, -3.0
  %v827 = vmul.f32 %v803, -3.0
  %v828 = vmul.f32 %v804, -3.0
  %v829 = vmul.f32 %v805, -3.0
  %v830 = vmul.f32 %v806, -3.0
  %v831 = vadd.f32 %v825, 3.0
  %v832 = vadd.f32 %v826, 3.0
  %v833 = vadd.f32 %v827, 3.0
  %v834 = vadd.f32 %v828, 3.0
  %v835 = vadd.f32 %v829, 3.0
  %v836 = vadd.f32 %v830, 3.0
  %v837 = vmul.f32 %v831, %v801
  %v838 = vmul.f32 %v832, %v802
  %v839 = vmul.f32 %v833, %v803
  %v840 = vmul.f32 %v834, %v804
  %v841 = vmul.f32 %v835, %v805
  %v842 = vmul.f32 %v836, %v806
  %v843 = vadd.f32 %v837, 3.0
  %v844 = vadd.f32 %v838, 3.0
  %v845 = vadd.f32 %v839, 3.0
  %v846 = vadd.f32 %v840, 3.0
  %v847 = vadd.f32 %v841, 3.0
  %v848 = vadd.f32 %v842, 3.0
  %v849 = vmul.f32 %v843, %v801
  %v850 = vmul.f32 %v844, %v802
  %v851 = vmul.f32 %v845, %v803
  %v852 = vmul.f32 %v846, %v804
  %v853 = vmul.f32 %v847, %v805
  %v854 = vmul.f32 %v848, %v806
  %v855 = vadd.f32 %v849, 1.0
  %v856 = vadd.f32 %v850, 1.0
  %v857 = vadd.f32 %v851, 1.0
  %v858 = vadd.f32 %v852, 1.0
  %v859 = vadd.f32 %v853, 1.0
  %v860 = vadd.f32 %v854, 1.0
  %v861 = vmul.f32 %v855, 0.16666667
  %v862 = vmul.f32 %v856, 0.16666667
  %v863 = vmul.f32 %v857, 0.16666667
  %v864 = vmul.f32 %v858, 0.16666667
  %v865 = vmul.f32 %v859, 0.16666667
  %v866 = vmul.f32 %v860, 0.16666667
  %v867 = vmul.f32 %v801, 3.0
  %v868 = vmul.f32 %v802, 3.0
  %v869 = vmul.f32 %v803, 3.0
  %v870 = vmul.f32 %v804, 3.0
  %v871 = vmul.f32 %v805, 3.0
  %v872 = vmul.f32 %v806, 3.0
  %v873 = vsub.f32 %v867, 6.0
  %v874 = vsub.f32 %v868, 6.0
  %v875 = vsub.f32 %v869, 6.0
  %v876 = vsub.f32 %v870, 6.0
  %v877 = vsub.f32 %v871, 6.0
  %v878 = vsub.f32 %v872, 6.0
  %v879 = vmul.f32 %v873, %v807
  %v880 = vmul.f32 %v874, %v808
  %v881 = vmul.f32 %v875, %v809
  %v882 = vmul.f32 %v876, %v810
  %v883 = vmul.f32 %v877, %v811
  %v884 = vmul.f32 %v878, %v812
  %v885 = vadd.f32 %v879, 4.0
  %v886 = vadd.f32 %v880, 4.0
  %v887 = vadd.f32 %v881, 4.0
  %v888 = vadd.f32 %v882, 4.0
  %v889 = vadd.f32 %v883, 4.0
  %v890 = vadd.f32 %v884, 4.0
  %v891 = vmul.f32 %v885, 0.16666667
  %v892 = vmul.f32 %v886, 0.16666667
  %v893 = vmul.f32 %v887, 0.16666667
  %v894 = vmul.f32 %v888, 0.16666667
  %v895 = vmul.f32 %v889, 0.16666667
  %v896 = vmul.f32 %v890, 0.16666667
  %v897 = vsub.f32 1.0, %v801
  %v898 = vsub.f32 1.0, %v802
  %v899 = vsub.f32 1.0, %v803
  %v900 = vsub.f32 1.0, %v804
  %v901 = vsub.f32 1.0, %v805
  %v902 = vsub.f32 1.0, %v806
  %v903 = vmul.f32 %v897, %v897
  %v904 = vmul.f32 %v898, %v898
  %v905 = vmul.f32 %v899, %v899
  %v906 = vmul.f32 %v900, %v900
  %v907 = vmul.f32 %v901, %v901
  %v908 = vmul.f32 %v902, %v902
  %v909 = vmul.f32 %v903, %v897
  %v910 = vmul.f32 %v904, %v898
  %v911 = vmul.f32 %v905, %v899
  %v912 = vmul.f32 %v906, %v900
  %v913 = vmul.f32 %v907, %v901
  %v914 = vmul.f32 %v908, %v902
  %v915 = vmul.f32 %v909, 0.16666667
  %v916 = vmul.f32 %v910, 0.16666667
  %v917 = vmul.f32 %v911, 0.16666667
  %v918 = vmul.f32 %v912, 0.16666667
  %v919 = vmul.f32 %v913, 0.16666667
  %v920 = vmul.f32 %v914, 0.16666667
  %vm921 = vcmp.eq.f32.partialorder %v795, 0.0
  %vm922 = vcmp.eq.f32.partialorder %v796, 0.0
  %vm923 = vcmp.eq.f32.partialorder %v797, 0.0
  %vm924 = vcmp.eq.f32.partialorder %v798, 0.0
  %vm925 = vcmp.eq.f32.partialorder %v799, 0.0
  %vm926 = vcmp.eq.f32.partialorder %v800, 0.0
  %v927 = vsel %vm921, %v819, 0.0
  %v928 = vsel %vm922, %v820, 0.0
  %v929 = vsel %vm923, %v821, 0.0
  %v930 = vsel %vm924, %v822, 0.0
  %v931 = vsel %vm925, %v823, 0.0
  %v932 = vsel %vm926, %v824, 0.0
  %vm933 = vcmp.eq.f32.partialorder %v795, 1.0
  %vm934 = vcmp.eq.f32.partialorder %v796, 1.0
  %vm935 = vcmp.eq.f32.partialorder %v797, 1.0
  %vm936 = vcmp.eq.f32.partialorder %v798, 1.0
  %vm937 = vcmp.eq.f32.partialorder %v799, 1.0
  %vm938 = vcmp.eq.f32.partialorder %v800, 1.0
  %v939 = vsel %vm933, %v861, 0.0
  %v940 = vsel %vm934, %v862, 0.0
  %v941 = vsel %vm935, %v863, 0.0
  %v942 = vsel %vm936, %v864, 0.0
  %v943 = vsel %vm937, %v865, 0.0
  %v944 = vsel %vm938, %v866, 0.0
  %v945 = vadd.f32 %v927, %v939
  %v946 = vadd.f32 %v928, %v940
  %v947 = vadd.f32 %v929, %v941
  %v948 = vadd.f32 %v930, %v942
  %v949 = vadd.f32 %v931, %v943
  %v950 = vadd.f32 %v932, %v944
  %vm951 = vcmp.eq.f32.partialorder %v795, 2.0
  %vm952 = vcmp.eq.f32.partialorder %v796, 2.0
  %vm953 = vcmp.eq.f32.partialorder %v797, 2.0
  %vm954 = vcmp.eq.f32.partialorder %v798, 2.0
  %vm955 = vcmp.eq.f32.partialorder %v799, 2.0
  %vm956 = vcmp.eq.f32.partialorder %v800, 2.0
  %v957 = vsel %vm951, %v891, 0.0
  %v958 = vsel %vm952, %v892, 0.0
  %v959 = vsel %vm953, %v893, 0.0
  %v960 = vsel %vm954, %v894, 0.0
  %v961 = vsel %vm955, %v895, 0.0
  %v962 = vsel %vm956, %v896, 0.0
  %v963 = vadd.f32 %v945, %v957
  %v964 = vadd.f32 %v946, %v958
  %v965 = vadd.f32 %v947, %v959
  %v966 = vadd.f32 %v948, %v960
  %v967 = vadd.f32 %v949, %v961
  %v968 = vadd.f32 %v950, %v962
  %vm969 = vcmp.eq.f32.partialorder %v795, 3.0
  %vm970 = vcmp.eq.f32.partialorder %v796, 3.0
  %vm971 = vcmp.eq.f32.partialorder %v797, 3.0
  %vm972 = vcmp.eq.f32.partialorder %v798, 3.0
  %vm973 = vcmp.eq.f32.partialorder %v799, 3.0
  %vm974 = vcmp.eq.f32.partialorder %v800, 3.0
  %v975 = vsel %vm969, %v915, 0.0
  %v976 = vsel %vm970, %v916, 0.0
  %v977 = vsel %vm971, %v917, 0.0
  %v978 = vsel %vm972, %v918, 0.0
  %v979 = vsel %vm973, %v919, 0.0
  %v980 = vsel %vm974, %v920, 0.0
  %v981 = vadd.f32 %v963, %v975
  %v982 = vadd.f32 %v964, %v976
  %v983 = vadd.f32 %v965, %v977
  %v984 = vadd.f32 %v966, %v978
  %v985 = vadd.f32 %v967, %v979
  %v986 = vadd.f32 %v968, %v980
  %v987 = vsel %vm933, %v819, 0.0
  %v988 = vsel %vm934, %v820, 0.0
  %v989 = vsel %vm935, %v821, 0.0
  %v990 = vsel %vm936, %v822, 0.0
  %v991 = vsel %vm937, %v823, 0.0
  %v992 = vsel %vm938, %v824, 0.0
  %v993 = vsel %vm951, %v861, 0.0
  %v994 = vsel %vm952, %v862, 0.0
  %v995 = vsel %vm953, %v863, 0.0
  %v996 = vsel %vm954, %v864, 0.0
  %v997 = vsel %vm955, %v865, 0.0
  %v998 = vsel %vm956, %v866, 0.0
  %v999 = vadd.f32 %v987, %v993
  %v1000 = vadd.f32 %v988, %v994
  %v1001 = vadd.f32 %v989, %v995
  %v1002 = vadd.f32 %v990, %v996
  %v1003 = vadd.f32 %v991, %v997
  %v1004 = vadd.f32 %v992, %v998
  %v1005 = vsel %vm969, %v891, 0.0
  %v1006 = vsel %vm970, %v892, 0.0
  %v1007 = vsel %vm971, %v893, 0.0
  %v1008 = vsel %vm972, %v894, 0.0
  %v1009 = vsel %vm973, %v895, 0.0
  %v1010 = vsel %vm974, %v896, 0.0
  %v1011 = vadd.f32 %v999, %v1005
  %v1012 = vadd.f32 %v1000, %v1006
  %v1013 = vadd.f32 %v1001, %v1007
  %v1014 = vadd.f32 %v1002, %v1008
  %v1015 = vadd.f32 %v1003, %v1009
  %v1016 = vadd.f32 %v1004, %v1010
  %vm1017 = vcmp.eq.f32.partialorder %v795, 4.0
  %vm1018 = vcmp.eq.f32.partialorder %v796, 4.0
  %vm1019 = vcmp.eq.f32.partialorder %v797, 4.0
  %vm1020 = vcmp.eq.f32.partialorder %v798, 4.0
  %vm1021 = vcmp.eq.f32.partialorder %v799, 4.0
  %vm1022 = vcmp.eq.f32.partialorder %v800, 4.0
  %v1023 = vsel %vm1017, %v915, 0.0
  %v1024 = vsel %vm1018, %v916, 0.0
  %v1025 = vsel %vm1019, %v917, 0.0
  %v1026 = vsel %vm1020, %v918, 0.0
  %v1027 = vsel %vm1021, %v919, 0.0
  %v1028 = vsel %vm1022, %v920, 0.0
  %v1029 = vadd.f32 %v1011, %v1023
  %v1030 = vadd.f32 %v1012, %v1024
  %v1031 = vadd.f32 %v1013, %v1025
  %v1032 = vadd.f32 %v1014, %v1026
  %v1033 = vadd.f32 %v1015, %v1027
  %v1034 = vadd.f32 %v1016, %v1028
  %v1035 = vsel %vm951, %v819, 0.0
  %v1036 = vsel %vm952, %v820, 0.0
  %v1037 = vsel %vm953, %v821, 0.0
  %v1038 = vsel %vm954, %v822, 0.0
  %v1039 = vsel %vm955, %v823, 0.0
  %v1040 = vsel %vm956, %v824, 0.0
  %v1041 = vsel %vm969, %v861, 0.0
  %v1042 = vsel %vm970, %v862, 0.0
  %v1043 = vsel %vm971, %v863, 0.0
  %v1044 = vsel %vm972, %v864, 0.0
  %v1045 = vsel %vm973, %v865, 0.0
  %v1046 = vsel %vm974, %v866, 0.0
  %v1047 = vadd.f32 %v1035, %v1041
  %v1048 = vadd.f32 %v1036, %v1042
  %v1049 = vadd.f32 %v1037, %v1043
  %v1050 = vadd.f32 %v1038, %v1044
  %v1051 = vadd.f32 %v1039, %v1045
  %v1052 = vadd.f32 %v1040, %v1046
  %v1053 = vsel %vm1017, %v891, 0.0
  %v1054 = vsel %vm1018, %v892, 0.0
  %v1055 = vsel %vm1019, %v893, 0.0
  %v1056 = vsel %vm1020, %v894, 0.0
  %v1057 = vsel %vm1021, %v895, 0.0
  %v1058 = vsel %vm1022, %v896, 0.0
  %v1059 = vadd.f32 %v1047, %v1053
  %v1060 = vadd.f32 %v1048, %v1054
  %v1061 = vadd.f32 %v1049, %v1055
  %v1062 = vadd.f32 %v1050, %v1056
  %v1063 = vadd.f32 %v1051, %v1057
  %v1064 = vadd.f32 %v1052, %v1058
  %vm1065 = vcmp.eq.f32.partialorder %v795, 5.0
  %vm1066 = vcmp.eq.f32.partialorder %v796, 5.0
  %vm1067 = vcmp.eq.f32.partialorder %v797, 5.0
  %vm1068 = vcmp.eq.f32.partialorder %v798, 5.0
  %vm1069 = vcmp.eq.f32.partialorder %v799, 5.0
  %vm1070 = vcmp.eq.f32.partialorder %v800, 5.0
  %v1071 = vsel %vm1065, %v915, 0.0
  %v1072 = vsel %vm1066, %v916, 0.0
  %v1073 = vsel %vm1067, %v917, 0.0
  %v1074 = vsel %vm1068, %v918, 0.0
  %v1075 = vsel %vm1069, %v919, 0.0
  %v1076 = vsel %vm1070, %v920, 0.0
  %v1077 = vadd.f32 %v1059, %v1071
  %v1078 = vadd.f32 %v1060, %v1072
  %v1079 = vadd.f32 %v1061, %v1073
  %v1080 = vadd.f32 %v1062, %v1074
  %v1081 = vadd.f32 %v1063, %v1075
  %v1082 = vadd.f32 %v1064, %v1076
  %v1083 = vsel %vm969, %v819, 0.0
  %v1084 = vsel %vm970, %v820, 0.0
  %v1085 = vsel %vm971, %v821, 0.0
  %v1086 = vsel %vm972, %v822, 0.0
  %v1087 = vsel %vm973, %v823, 0.0
  %v1088 = vsel %vm974, %v824, 0.0
  %v1089 = vsel %vm1017, %v861, 0.0
  %v1090 = vsel %vm1018, %v862, 0.0
  %v1091 = vsel %vm1019, %v863, 0.0
  %v1092 = vsel %vm1020, %v864, 0.0
  %v1093 = vsel %vm1021, %v865, 0.0
  %v1094 = vsel %vm1022, %v866, 0.0
  %v1095 = vadd.f32 %v1083, %v1089
  %v1096 = vadd.f32 %v1084, %v1090
  %v1097 = vadd.f32 %v1085, %v1091
  %v1098 = vadd.f32 %v1086, %v1092
  %v1099 = vadd.f32 %v1087, %v1093
  %v1100 = vadd.f32 %v1088, %v1094
  %v1101 = vsel %vm1065, %v891, 0.0
  %v1102 = vsel %vm1066, %v892, 0.0
  %v1103 = vsel %vm1067, %v893, 0.0
  %v1104 = vsel %vm1068, %v894, 0.0
  %v1105 = vsel %vm1069, %v895, 0.0
  %v1106 = vsel %vm1070, %v896, 0.0
  %v1107 = vadd.f32 %v1095, %v1101
  %v1108 = vadd.f32 %v1096, %v1102
  %v1109 = vadd.f32 %v1097, %v1103
  %v1110 = vadd.f32 %v1098, %v1104
  %v1111 = vadd.f32 %v1099, %v1105
  %v1112 = vadd.f32 %v1100, %v1106
  %vm1113 = vcmp.eq.f32.partialorder %v795, 6.0
  %vm1114 = vcmp.eq.f32.partialorder %v796, 6.0
  %vm1115 = vcmp.eq.f32.partialorder %v797, 6.0
  %vm1116 = vcmp.eq.f32.partialorder %v798, 6.0
  %vm1117 = vcmp.eq.f32.partialorder %v799, 6.0
  %vm1118 = vcmp.eq.f32.partialorder %v800, 6.0
  %v1119 = vsel %vm1113, %v915, 0.0
  %v1120 = vsel %vm1114, %v916, 0.0
  %v1121 = vsel %vm1115, %v917, 0.0
  %v1122 = vsel %vm1116, %v918, 0.0
  %v1123 = vsel %vm1117, %v919, 0.0
  %v1124 = vsel %vm1118, %v920, 0.0
  %v1125 = vadd.f32 %v1107, %v1119
  %v1126 = vadd.f32 %v1108, %v1120
  %v1127 = vadd.f32 %v1109, %v1121
  %v1128 = vadd.f32 %v1110, %v1122
  %v1129 = vadd.f32 %v1111, %v1123
  %v1130 = vadd.f32 %v1112, %v1124
  %v1131 = vsel %vm1017, %v819, 0.0
  %v1132 = vsel %vm1018, %v820, 0.0
  %v1133 = vsel %vm1019, %v821, 0.0
  %v1134 = vsel %vm1020, %v822, 0.0
  %v1135 = vsel %vm1021, %v823, 0.0
  %v1136 = vsel %vm1022, %v824, 0.0
  %v1137 = vsel %vm1065, %v861, 0.0
  %v1138 = vsel %vm1066, %v862, 0.0
  %v1139 = vsel %vm1067, %v863, 0.0
  %v1140 = vsel %vm1068, %v864, 0.0
  %v1141 = vsel %vm1069, %v865, 0.0
  %v1142 = vsel %vm1070, %v866, 0.0
  %v1143 = vadd.f32 %v1131, %v1137
  %v1144 = vadd.f32 %v1132, %v1138
  %v1145 = vadd.f32 %v1133, %v1139
  %v1146 = vadd.f32 %v1134, %v1140
  %v1147 = vadd.f32 %v1135, %v1141
  %v1148 = vadd.f32 %v1136, %v1142
  %v1149 = vsel %vm1113, %v891, 0.0
  %v1150 = vsel %vm1114, %v892, 0.0
  %v1151 = vsel %vm1115, %v893, 0.0
  %v1152 = vsel %vm1116, %v894, 0.0
  %v1153 = vsel %vm1117, %v895, 0.0
  %v1154 = vsel %vm1118, %v896, 0.0
  %v1155 = vadd.f32 %v1143, %v1149
  %v1156 = vadd.f32 %v1144, %v1150
  %v1157 = vadd.f32 %v1145, %v1151
  %v1158 = vadd.f32 %v1146, %v1152
  %v1159 = vadd.f32 %v1147, %v1153
  %v1160 = vadd.f32 %v1148, %v1154
  %vm1161 = vcmp.eq.f32.partialorder %v795, 7.0
  %vm1162 = vcmp.eq.f32.partialorder %v796, 7.0
  %vm1163 = vcmp.eq.f32.partialorder %v797, 7.0
  %vm1164 = vcmp.eq.f32.partialorder %v798, 7.0
  %vm1165 = vcmp.eq.f32.partialorder %v799, 7.0
  %vm1166 = vcmp.eq.f32.partialorder %v800, 7.0
  %v1167 = vsel %vm1161, %v915, 0.0
  %v1168 = vsel %vm1162, %v916, 0.0
  %v1169 = vsel %vm1163, %v917, 0.0
  %v1170 = vsel %vm1164, %v918, 0.0
  %v1171 = vsel %vm1165, %v919, 0.0
  %v1172 = vsel %vm1166, %v920, 0.0
  %v1173 = vadd.f32 %v1155, %v1167
  %v1174 = vadd.f32 %v1156, %v1168
  %v1175 = vadd.f32 %v1157, %v1169
  %v1176 = vadd.f32 %v1158, %v1170
  %v1177 = vadd.f32 %v1159, %v1171
  %v1178 = vadd.f32 %v1160, %v1172
  %v1179 = vsel %vm1065, %v819, 0.0
  %v1180 = vsel %vm1066, %v820, 0.0
  %v1181 = vsel %vm1067, %v821, 0.0
  %v1182 = vsel %vm1068, %v822, 0.0
  %v1183 = vsel %vm1069, %v823, 0.0
  %v1184 = vsel %vm1070, %v824, 0.0
  %v1185 = vsel %vm1113, %v861, 0.0
  %v1186 = vsel %vm1114, %v862, 0.0
  %v1187 = vsel %vm1115, %v863, 0.0
  %v1188 = vsel %vm1116, %v864, 0.0
  %v1189 = vsel %vm1117, %v865, 0.0
  %v1190 = vsel %vm1118, %v866, 0.0
  %v1191 = vadd.f32 %v1179, %v1185
  %v1192 = vadd.f32 %v1180, %v1186
  %v1193 = vadd.f32 %v1181, %v1187
  %v1194 = vadd.f32 %v1182, %v1188
  %v1195 = vadd.f32 %v1183, %v1189
  %v1196 = vadd.f32 %v1184, %v1190
  %v1197 = vsel %vm1161, %v891, 0.0
  %v1198 = vsel %vm1162, %v892, 0.0
  %v1199 = vsel %vm1163, %v893, 0.0
  %v1200 = vsel %vm1164, %v894, 0.0
  %v1201 = vsel %vm1165, %v895, 0.0
  %v1202 = vsel %vm1166, %v896, 0.0
  %v1203 = vadd.f32 %v1191, %v1197
  %v1204 = vadd.f32 %v1192, %v1198
  %v1205 = vadd.f32 %v1193, %v1199
  %v1206 = vadd.f32 %v1194, %v1200
  %v1207 = vadd.f32 %v1195, %v1201
  %v1208 = vadd.f32 %v1196, %v1202
  %vm1209 = vcmp.eq.f32.partialorder %v795, 8.0
  %vm1210 = vcmp.eq.f32.partialorder %v796, 8.0
  %vm1211 = vcmp.eq.f32.partialorder %v797, 8.0
  %vm1212 = vcmp.eq.f32.partialorder %v798, 8.0
  %vm1213 = vcmp.eq.f32.partialorder %v799, 8.0
  %vm1214 = vcmp.eq.f32.partialorder %v800, 8.0
  %v1215 = vsel %vm1209, %v915, 0.0
  %v1216 = vsel %vm1210, %v916, 0.0
  %v1217 = vsel %vm1211, %v917, 0.0
  %v1218 = vsel %vm1212, %v918, 0.0
  %v1219 = vsel %vm1213, %v919, 0.0
  %v1220 = vsel %vm1214, %v920, 0.0
  %v1221 = vadd.f32 %v1203, %v1215
  %v1222 = vadd.f32 %v1204, %v1216
  %v1223 = vadd.f32 %v1205, %v1217
  %v1224 = vadd.f32 %v1206, %v1218
  %v1225 = vadd.f32 %v1207, %v1219
  %v1226 = vadd.f32 %v1208, %v1220
  %v1227 = vsel %vm1113, %v819, 0.0
  %v1228 = vsel %vm1114, %v820, 0.0
  %v1229 = vsel %vm1115, %v821, 0.0
  %v1230 = vsel %vm1116, %v822, 0.0
  %v1231 = vsel %vm1117, %v823, 0.0
  %v1232 = vsel %vm1118, %v824, 0.0
  %v1233 = vsel %vm1161, %v861, 0.0
  %v1234 = vsel %vm1162, %v862, 0.0
  %v1235 = vsel %vm1163, %v863, 0.0
  %v1236 = vsel %vm1164, %v864, 0.0
  %v1237 = vsel %vm1165, %v865, 0.0
  %v1238 = vsel %vm1166, %v866, 0.0
  %v1239 = vadd.f32 %v1227, %v1233
  %v1240 = vadd.f32 %v1228, %v1234
  %v1241 = vadd.f32 %v1229, %v1235
  %v1242 = vadd.f32 %v1230, %v1236
  %v1243 = vadd.f32 %v1231, %v1237
  %v1244 = vadd.f32 %v1232, %v1238
  %v1245 = vsel %vm1209, %v891, 0.0
  %v1246 = vsel %vm1210, %v892, 0.0
  %v1247 = vsel %vm1211, %v893, 0.0
  %v1248 = vsel %vm1212, %v894, 0.0
  %v1249 = vsel %vm1213, %v895, 0.0
  %v1250 = vsel %vm1214, %v896, 0.0
  %v1251 = vadd.f32 %v1239, %v1245
  %v1252 = vadd.f32 %v1240, %v1246
  %v1253 = vadd.f32 %v1241, %v1247
  %v1254 = vadd.f32 %v1242, %v1248
  %v1255 = vadd.f32 %v1243, %v1249
  %v1256 = vadd.f32 %v1244, %v1250
  %vm1257 = vcmp.eq.f32.partialorder %v795, 9.0
  %vm1258 = vcmp.eq.f32.partialorder %v796, 9.0
  %vm1259 = vcmp.eq.f32.partialorder %v797, 9.0
  %vm1260 = vcmp.eq.f32.partialorder %v798, 9.0
  %vm1261 = vcmp.eq.f32.partialorder %v799, 9.0
  %vm1262 = vcmp.eq.f32.partialorder %v800, 9.0
  %v1263 = vsel %vm1257, %v915, 0.0
  %v1264 = vsel %vm1258, %v916, 0.0
  %v1265 = vsel %vm1259, %v917, 0.0
  %v1266 = vsel %vm1260, %v918, 0.0
  %v1267 = vsel %vm1261, %v919, 0.0
  %v1268 = vsel %vm1262, %v920, 0.0
  %v1269 = vadd.f32 %v1251, %v1263
  %v1270 = vadd.f32 %v1252, %v1264
  %v1271 = vadd.f32 %v1253, %v1265
  %v1272 = vadd.f32 %v1254, %v1266
  %v1273 = vadd.f32 %v1255, %v1267
  %v1274 = vadd.f32 %v1256, %v1268
  %v1275 = vsel %vm1161, %v819, 0.0
  %v1276 = vsel %vm1162, %v820, 0.0
  %v1277 = vsel %vm1163, %v821, 0.0
  %v1278 = vsel %vm1164, %v822, 0.0
  %v1279 = vsel %vm1165, %v823, 0.0
  %v1280 = vsel %vm1166, %v824, 0.0
  %v1281 = vsel %vm1209, %v861, 0.0
  %v1282 = vsel %vm1210, %v862, 0.0
  %v1283 = vsel %vm1211, %v863, 0.0
  %v1284 = vsel %vm1212, %v864, 0.0
  %v1285 = vsel %vm1213, %v865, 0.0
  %v1286 = vsel %vm1214, %v866, 0.0
  %v1287 = vadd.f32 %v1275, %v1281
  %v1288 = vadd.f32 %v1276, %v1282
  %v1289 = vadd.f32 %v1277, %v1283
  %v1290 = vadd.f32 %v1278, %v1284
  %v1291 = vadd.f32 %v1279, %v1285
  %v1292 = vadd.f32 %v1280, %v1286
  %v1293 = vsel %vm1257, %v891, 0.0
  %v1294 = vsel %vm1258, %v892, 0.0
  %v1295 = vsel %vm1259, %v893, 0.0
  %v1296 = vsel %vm1260, %v894, 0.0
  %v1297 = vsel %vm1261, %v895, 0.0
  %v1298 = vsel %vm1262, %v896, 0.0
  %v1299 = vadd.f32 %v1287, %v1293
  %v1300 = vadd.f32 %v1288, %v1294
  %v1301 = vadd.f32 %v1289, %v1295
  %v1302 = vadd.f32 %v1290, %v1296
  %v1303 = vadd.f32 %v1291, %v1297
  %v1304 = vadd.f32 %v1292, %v1298
  %vm1305 = vcmp.eq.f32.partialorder %v795, 10.0
  %vm1306 = vcmp.eq.f32.partialorder %v796, 10.0
  %vm1307 = vcmp.eq.f32.partialorder %v797, 10.0
  %vm1308 = vcmp.eq.f32.partialorder %v798, 10.0
  %vm1309 = vcmp.eq.f32.partialorder %v799, 10.0
  %vm1310 = vcmp.eq.f32.partialorder %v800, 10.0
  %v1311 = vsel %vm1305, %v915, 0.0
  %v1312 = vsel %vm1306, %v916, 0.0
  %v1313 = vsel %vm1307, %v917, 0.0
  %v1314 = vsel %vm1308, %v918, 0.0
  %v1315 = vsel %vm1309, %v919, 0.0
  %v1316 = vsel %vm1310, %v920, 0.0
  %v1317 = vadd.f32 %v1299, %v1311
  %v1318 = vadd.f32 %v1300, %v1312
  %v1319 = vadd.f32 %v1301, %v1313
  %v1320 = vadd.f32 %v1302, %v1314
  %v1321 = vadd.f32 %v1303, %v1315
  %v1322 = vadd.f32 %v1304, %v1316
  %1323 = vmatprep.subr.mxu0 %v778
  %1324 = vmatpush1.msra.mxu0 %v777
  %1325 = vmatprep.subr.mxu0 %v781
  %1326 = vmatpush1.msra.mxu0 %v780
  %1327 = vmatprep.subr.mxu0 %v982
  %1328 = vmatpush1.msra.mxu0 %v981
  %1329 = vmatprep.subr.mxu0 %v985
  %1330 = vmatpush1.msra.mxu0 %v984
  %1331 = vmatprep.subr.mxu0 %v1030
  %1332 = vmatpush1.msra.mxu0 %v1029
  %1333 = vmatprep.subr.mxu0 %v1033
  %1334 = vmatpush1.msra.mxu0 %v1032
  %1335 = vmatprep.subr.mxu0 %v1078
  %1336 = vmatpush1.msra.mxu0 %v1077
  %1337 = vmatprep.subr.mxu0 %v1081
  %1338 = vmatpush1.msra.mxu0 %v1080
  %1339 = vmatprep.subr.mxu0 %v1126
  %1340 = vmatpush1.msra.mxu0 %v1125
  %1341 = vmatprep.subr.mxu0 %v1129
  %1342 = vmatpush1.msra.mxu0 %v1128
  %1343 = vmatprep.subr.mxu0 %v1174
  %1344 = vmatpush1.msra.mxu0 %v1173
  %1345 = vmatprep.subr.mxu0 %v1177
  %1346 = vmatpush1.msra.mxu0 %v1176
  %1347 = vmatprep.subr.mxu0 %v1222
  %1348 = vmatpush1.msra.mxu0 %v1221
  %1349 = vmatprep.subr.mxu0 %v1225
  %1350 = vmatpush1.msra.mxu0 %v1224
  %1351 = vmatprep.subr.mxu0 %v1270
  %1352 = vmatpush1.msra.mxu0 %v1269
  %1353 = vmatprep.subr.mxu0 %v1273
  %1354 = vmatpush1.msra.mxu0 %v1272
  %1355 = vmatprep.subr.mxu0 %v1318
  %1356 = vmatpush1.msra.mxu0 %v1317
  %1357 = vmatprep.subr.mxu0 %v1321
  %1358 = vmatpush1.msra.mxu0 %v1320
  %1359 = vmatprep.subr.mxu0 0.0
  %1360 = vmatpush1.msra.mxu0 0.0
  %1361 = vmatprep.subr.mxu0 0.0
  %1362 = vmatpush1.msra.mxu0 0.0
  %1363 = vmatprep.subr.mxu0 0.0
  %1364 = vmatpush1.msra.mxu0 0.0
  %1365 = vmatprep.subr.mxu0 0.0
  %1366 = vmatpush1.msra.mxu0 0.0
  %1367 = vmatprep.subr.mxu0 0.0
  %1368 = vmatpush1.msra.mxu0 0.0
  %1369 = vmatprep.subr.mxu0 0.0
  %1370 = vmatpush1.msra.mxu0 0.0
  %1371 = vmatprep.subr.mxu0 0.0
  %1372 = vmatpush1.msra.mxu0 0.0
  %1373 = vmatprep.subr.mxu0 0.0
  %1374 = vmatpush1.msra.mxu0 0.0
  %1375 = vmatprep.subr.mxu0 0.0
  %1376 = vmatpush1.msra.mxu0 0.0
  %1377 = vmatprep.subr.mxu0 0.0
  %1378 = vmatpush1.msra.mxu0 0.0
  %1379 = vmatprep.subr.mxu0 0.0
  %1380 = vmatpush1.msra.mxu0 0.0
  %1381 = vmatprep.subr.mxu0 0.0
  %1382 = vmatpush1.msra.mxu0 0.0
  %1383 = vmatprep.subr.mxu0 0.0
  %1384 = vmatpush1.msra.mxu0 0.0
  %1385 = vmatprep.subr.mxu0 0.0
  %1386 = vmatpush1.msra.mxu0 0.0
  %1387 = vmatprep.mubr.f32.mxu0 %v597
  %1388 = vmatmul.mubr.f32.gmra.mrb[0].mxu0 %v11
  %v1389 = vpop.f32.mrb[0].mxu0
  %v1390 = vadd.f32 0.0, %v1389
  %v1391 = vpop.f32.mrb[0].mxu0
  %v1392 = vadd.f32 0.0, %v1391
  %1393 = vdwg.mxu0
  %1394 = vmatprep.subr.mxu0 0.0
  %1395 = vmatpush1.msra.mxu0 %v779
  %1396 = vmatprep.subr.mxu0 0.0
  %1397 = vmatpush1.msra.mxu0 %v782
  %1398 = vmatprep.subr.mxu0 0.0
  %1399 = vmatpush1.msra.mxu0 %v983
  %1400 = vmatprep.subr.mxu0 0.0
  %1401 = vmatpush1.msra.mxu0 %v986
  %1402 = vmatprep.subr.mxu0 0.0
  %1403 = vmatpush1.msra.mxu0 %v1031
  %1404 = vmatprep.subr.mxu0 0.0
  %1405 = vmatpush1.msra.mxu0 %v1034
  %1406 = vmatprep.subr.mxu0 0.0
  %1407 = vmatpush1.msra.mxu0 %v1079
  %1408 = vmatprep.subr.mxu0 0.0
  %1409 = vmatpush1.msra.mxu0 %v1082
  %1410 = vmatprep.subr.mxu0 0.0
  %1411 = vmatpush1.msra.mxu0 %v1127
  %1412 = vmatprep.subr.mxu0 0.0
  %1413 = vmatpush1.msra.mxu0 %v1130
  %1414 = vmatprep.subr.mxu0 0.0
  %1415 = vmatpush1.msra.mxu0 %v1175
  %1416 = vmatprep.subr.mxu0 0.0
  %1417 = vmatpush1.msra.mxu0 %v1178
  %1418 = vmatprep.subr.mxu0 0.0
  %1419 = vmatpush1.msra.mxu0 %v1223
  %1420 = vmatprep.subr.mxu0 0.0
  %1421 = vmatpush1.msra.mxu0 %v1226
  %1422 = vmatprep.subr.mxu0 0.0
  %1423 = vmatpush1.msra.mxu0 %v1271
  %1424 = vmatprep.subr.mxu0 0.0
  %1425 = vmatpush1.msra.mxu0 %v1274
  %1426 = vmatprep.subr.mxu0 0.0
  %1427 = vmatpush1.msra.mxu0 %v1319
  %1428 = vmatprep.subr.mxu0 0.0
  %1429 = vmatpush1.msra.mxu0 %v1322
  %1430 = vmatprep.subr.mxu0 0.0
  %1431 = vmatpush1.msra.mxu0 0.0
  %1432 = vmatprep.subr.mxu0 0.0
  %1433 = vmatpush1.msra.mxu0 0.0
  %1434 = vmatprep.subr.mxu0 0.0
  %1435 = vmatpush1.msra.mxu0 0.0
  %1436 = vmatprep.subr.mxu0 0.0
  %1437 = vmatpush1.msra.mxu0 0.0
  %1438 = vmatprep.subr.mxu0 0.0
  %1439 = vmatpush1.msra.mxu0 0.0
  %1440 = vmatprep.subr.mxu0 0.0
  %1441 = vmatpush1.msra.mxu0 0.0
  %1442 = vmatprep.subr.mxu0 0.0
  %1443 = vmatpush1.msra.mxu0 0.0
  %1444 = vmatprep.subr.mxu0 0.0
  %1445 = vmatpush1.msra.mxu0 0.0
  %1446 = vmatprep.subr.mxu0 0.0
  %1447 = vmatpush1.msra.mxu0 0.0
  %1448 = vmatprep.subr.mxu0 0.0
  %1449 = vmatpush1.msra.mxu0 0.0
  %1450 = vmatprep.subr.mxu0 0.0
  %1451 = vmatpush1.msra.mxu0 0.0
  %1452 = vmatprep.subr.mxu0 0.0
  %1453 = vmatpush1.msra.mxu0 0.0
  %1454 = vmatprep.subr.mxu0 0.0
  %1455 = vmatpush1.msra.mxu0 0.0
  %1456 = vmatprep.subr.mxu0 0.0
  %1457 = vmatpush1.msra.mxu0 0.0
  %1458 = vmatprep.mubr.f32.mxu0 %v597
  %1459 = vmatmul.mubr.f32.gmra.mrb[0].mxu0 %v11
  %v1460 = vpop.f32.mrb[0].mxu0
  %v1461 = vadd.f32 0.0, %v1460
  %v1462 = vpop.f32.mrb[0].mxu0
  %1463 = vdwg.mxu0
  %v1464 = vmax.f32 %v666, %v1390
  %v1465 = vmax.f32 %v668, %v1392
  %v1466 = vmax.f32 %v737, %v1461
  %s1467 = scalar_lea.vmem %s0, 96
  %v1468 = vld [vmem:[%s1467] sm:$0xff]
  %v1469 = vld [vmem:[%s1467 + $0x8] sm:$0xff]
  %v1470 = vld [vmem:[%s1467 + $0x10] sm:$0xff]
  %v1471 = vld [vmem:[%s1467 + $0x18] sm:$0xff]
  %v1472 = vld [vmem:[%s1467 + $0x20] sm:$0xff]
  %v1473 = vld [vmem:[%s1467 + $0x28] sm:$0xff]
  %v1474 = vsub.f32 0.0, %v1468
  %v1475 = vsub.f32 0.0, %v1469
  %v1476 = vsub.f32 0.0, %v1470
  %v1477 = vsub.f32 0.0, %v1471
  %v1478 = vsub.f32 0.0, %v1472
  %v1479 = vsub.f32 0.0, %v1473
  %v1480 = vmul.f32 %v1474, 1.442695
  %v1481 = vpow.pop %v1480
  %v1482 = vmul.f32 %v1475, 1.442695
  %v1483 = vpow.pop %v1482
  %v1484 = vmul.f32 %v1476, 1.442695
  %v1485 = vpow.pop %v1484
  %v1486 = vmul.f32 %v1477, 1.442695
  %v1487 = vpow.pop %v1486
  %v1488 = vmul.f32 %v1478, 1.442695
  %v1489 = vpow.pop %v1488
  %v1490 = vmul.f32 %v1479, 1.442695
  %v1491 = vpow.pop %v1490
  %v1492 = vadd.f32 %v1481, 1.0
  %v1493 = vadd.f32 %v1483, 1.0
  %v1494 = vadd.f32 %v1485, 1.0
  %v1495 = vadd.f32 %v1487, 1.0
  %v1496 = vadd.f32 %v1489, 1.0
  %v1497 = vadd.f32 %v1491, 1.0
  %v1498 = vrcp.pop %v1492
  %v1499 = vrcp.pop %v1493
  %v1500 = vrcp.pop %v1494
  %v1501 = vrcp.pop %v1495
  %v1502 = vrcp.pop %v1496
  %v1503 = vrcp.pop %v1497
  %v1504 = vmul.f32 %v1468, %v1498
  %v1505 = vmul.f32 %v1469, %v1499
  %v1506 = vmul.f32 %v1470, %v1500
  %v1507 = vmul.f32 %v1471, %v1501
  %v1508 = vmul.f32 %v1472, %v1502
  %v1509 = vmul.f32 %v1473, %v1503
  %v1510 = vsub.f32 %v1468, -2.2
  %v1511 = vsub.f32 %v1469, -2.2
  %v1512 = vsub.f32 %v1470, -2.2
  %v1513 = vsub.f32 %v1471, -2.2
  %v1514 = vsub.f32 %v1472, -2.2
  %v1515 = vsub.f32 %v1473, -2.2
  %v1516 = vmul.f32 %v1510, 2.5
  %v1517 = vmul.f32 %v1511, 2.5
  %v1518 = vmul.f32 %v1512, 2.5
  %v1519 = vmul.f32 %v1513, 2.5
  %v1520 = vmul.f32 %v1514, 2.5
  %v1521 = vmul.f32 %v1515, 2.5
  %v1522 = vfloor.f32 %v1516
  %v1523 = vfloor.f32 %v1517
  %v1524 = vfloor.f32 %v1518
  %v1525 = vfloor.f32 %v1519
  %v1526 = vfloor.f32 %v1520
  %v1527 = vfloor.f32 %v1521
  %v1528 = vsub.f32 %v1516, %v1522
  %v1529 = vsub.f32 %v1517, %v1523
  %v1530 = vsub.f32 %v1518, %v1524
  %v1531 = vsub.f32 %v1519, %v1525
  %v1532 = vsub.f32 %v1520, %v1526
  %v1533 = vsub.f32 %v1521, %v1527
  %v1534 = vmul.f32 %v1528, %v1528
  %v1535 = vmul.f32 %v1529, %v1529
  %v1536 = vmul.f32 %v1530, %v1530
  %v1537 = vmul.f32 %v1531, %v1531
  %v1538 = vmul.f32 %v1532, %v1532
  %v1539 = vmul.f32 %v1533, %v1533
  %v1540 = vmul.f32 %v1534, %v1528
  %v1541 = vmul.f32 %v1535, %v1529
  %v1542 = vmul.f32 %v1536, %v1530
  %v1543 = vmul.f32 %v1537, %v1531
  %v1544 = vmul.f32 %v1538, %v1532
  %v1545 = vmul.f32 %v1539, %v1533
  %v1546 = vmul.f32 %v1540, 0.16666667
  %v1547 = vmul.f32 %v1541, 0.16666667
  %v1548 = vmul.f32 %v1542, 0.16666667
  %v1549 = vmul.f32 %v1543, 0.16666667
  %v1550 = vmul.f32 %v1544, 0.16666667
  %v1551 = vmul.f32 %v1545, 0.16666667
  %v1552 = vmul.f32 %v1528, -3.0
  %v1553 = vmul.f32 %v1529, -3.0
  %v1554 = vmul.f32 %v1530, -3.0
  %v1555 = vmul.f32 %v1531, -3.0
  %v1556 = vmul.f32 %v1532, -3.0
  %v1557 = vmul.f32 %v1533, -3.0
  %v1558 = vadd.f32 %v1552, 3.0
  %v1559 = vadd.f32 %v1553, 3.0
  %v1560 = vadd.f32 %v1554, 3.0
  %v1561 = vadd.f32 %v1555, 3.0
  %v1562 = vadd.f32 %v1556, 3.0
  %v1563 = vadd.f32 %v1557, 3.0
  %v1564 = vmul.f32 %v1558, %v1528
  %v1565 = vmul.f32 %v1559, %v1529
  %v1566 = vmul.f32 %v1560, %v1530
  %v1567 = vmul.f32 %v1561, %v1531
  %v1568 = vmul.f32 %v1562, %v1532
  %v1569 = vmul.f32 %v1563, %v1533
  %v1570 = vadd.f32 %v1564, 3.0
  %v1571 = vadd.f32 %v1565, 3.0
  %v1572 = vadd.f32 %v1566, 3.0
  %v1573 = vadd.f32 %v1567, 3.0
  %v1574 = vadd.f32 %v1568, 3.0
  %v1575 = vadd.f32 %v1569, 3.0
  %v1576 = vmul.f32 %v1570, %v1528
  %v1577 = vmul.f32 %v1571, %v1529
  %v1578 = vmul.f32 %v1572, %v1530
  %v1579 = vmul.f32 %v1573, %v1531
  %v1580 = vmul.f32 %v1574, %v1532
  %v1581 = vmul.f32 %v1575, %v1533
  %v1582 = vadd.f32 %v1576, 1.0
  %v1583 = vadd.f32 %v1577, 1.0
  %v1584 = vadd.f32 %v1578, 1.0
  %v1585 = vadd.f32 %v1579, 1.0
  %v1586 = vadd.f32 %v1580, 1.0
  %v1587 = vadd.f32 %v1581, 1.0
  %v1588 = vmul.f32 %v1582, 0.16666667
  %v1589 = vmul.f32 %v1583, 0.16666667
  %v1590 = vmul.f32 %v1584, 0.16666667
  %v1591 = vmul.f32 %v1585, 0.16666667
  %v1592 = vmul.f32 %v1586, 0.16666667
  %v1593 = vmul.f32 %v1587, 0.16666667
  %v1594 = vmul.f32 %v1528, 3.0
  %v1595 = vmul.f32 %v1529, 3.0
  %v1596 = vmul.f32 %v1530, 3.0
  %v1597 = vmul.f32 %v1531, 3.0
  %v1598 = vmul.f32 %v1532, 3.0
  %v1599 = vmul.f32 %v1533, 3.0
  %v1600 = vsub.f32 %v1594, 6.0
  %v1601 = vsub.f32 %v1595, 6.0
  %v1602 = vsub.f32 %v1596, 6.0
  %v1603 = vsub.f32 %v1597, 6.0
  %v1604 = vsub.f32 %v1598, 6.0
  %v1605 = vsub.f32 %v1599, 6.0
  %v1606 = vmul.f32 %v1600, %v1534
  %v1607 = vmul.f32 %v1601, %v1535
  %v1608 = vmul.f32 %v1602, %v1536
  %v1609 = vmul.f32 %v1603, %v1537
  %v1610 = vmul.f32 %v1604, %v1538
  %v1611 = vmul.f32 %v1605, %v1539
  %v1612 = vadd.f32 %v1606, 4.0
  %v1613 = vadd.f32 %v1607, 4.0
  %v1614 = vadd.f32 %v1608, 4.0
  %v1615 = vadd.f32 %v1609, 4.0
  %v1616 = vadd.f32 %v1610, 4.0
  %v1617 = vadd.f32 %v1611, 4.0
  %v1618 = vmul.f32 %v1612, 0.16666667
  %v1619 = vmul.f32 %v1613, 0.16666667
  %v1620 = vmul.f32 %v1614, 0.16666667
  %v1621 = vmul.f32 %v1615, 0.16666667
  %v1622 = vmul.f32 %v1616, 0.16666667
  %v1623 = vmul.f32 %v1617, 0.16666667
  %v1624 = vsub.f32 1.0, %v1528
  %v1625 = vsub.f32 1.0, %v1529
  %v1626 = vsub.f32 1.0, %v1530
  %v1627 = vsub.f32 1.0, %v1531
  %v1628 = vsub.f32 1.0, %v1532
  %v1629 = vsub.f32 1.0, %v1533
  %v1630 = vmul.f32 %v1624, %v1624
  %v1631 = vmul.f32 %v1625, %v1625
  %v1632 = vmul.f32 %v1626, %v1626
  %v1633 = vmul.f32 %v1627, %v1627
  %v1634 = vmul.f32 %v1628, %v1628
  %v1635 = vmul.f32 %v1629, %v1629
  %v1636 = vmul.f32 %v1630, %v1624
  %v1637 = vmul.f32 %v1631, %v1625
  %v1638 = vmul.f32 %v1632, %v1626
  %v1639 = vmul.f32 %v1633, %v1627
  %v1640 = vmul.f32 %v1634, %v1628
  %v1641 = vmul.f32 %v1635, %v1629
  %v1642 = vmul.f32 %v1636, 0.16666667
  %v1643 = vmul.f32 %v1637, 0.16666667
  %v1644 = vmul.f32 %v1638, 0.16666667
  %v1645 = vmul.f32 %v1639, 0.16666667
  %v1646 = vmul.f32 %v1640, 0.16666667
  %v1647 = vmul.f32 %v1641, 0.16666667
  %vm1648 = vcmp.eq.f32.partialorder %v1522, 0.0
  %vm1649 = vcmp.eq.f32.partialorder %v1523, 0.0
  %vm1650 = vcmp.eq.f32.partialorder %v1524, 0.0
  %vm1651 = vcmp.eq.f32.partialorder %v1525, 0.0
  %vm1652 = vcmp.eq.f32.partialorder %v1526, 0.0
  %vm1653 = vcmp.eq.f32.partialorder %v1527, 0.0
  %v1654 = vsel %vm1648, %v1546, 0.0
  %v1655 = vsel %vm1649, %v1547, 0.0
  %v1656 = vsel %vm1650, %v1548, 0.0
  %v1657 = vsel %vm1651, %v1549, 0.0
  %v1658 = vsel %vm1652, %v1550, 0.0
  %v1659 = vsel %vm1653, %v1551, 0.0
  %vm1660 = vcmp.eq.f32.partialorder %v1522, 1.0
  %vm1661 = vcmp.eq.f32.partialorder %v1523, 1.0
  %vm1662 = vcmp.eq.f32.partialorder %v1524, 1.0
  %vm1663 = vcmp.eq.f32.partialorder %v1525, 1.0
  %vm1664 = vcmp.eq.f32.partialorder %v1526, 1.0
  %vm1665 = vcmp.eq.f32.partialorder %v1527, 1.0
  %v1666 = vsel %vm1660, %v1588, 0.0
  %v1667 = vsel %vm1661, %v1589, 0.0
  %v1668 = vsel %vm1662, %v1590, 0.0
  %v1669 = vsel %vm1663, %v1591, 0.0
  %v1670 = vsel %vm1664, %v1592, 0.0
  %v1671 = vsel %vm1665, %v1593, 0.0
  %v1672 = vadd.f32 %v1654, %v1666
  %v1673 = vadd.f32 %v1655, %v1667
  %v1674 = vadd.f32 %v1656, %v1668
  %v1675 = vadd.f32 %v1657, %v1669
  %v1676 = vadd.f32 %v1658, %v1670
  %v1677 = vadd.f32 %v1659, %v1671
  %vm1678 = vcmp.eq.f32.partialorder %v1522, 2.0
  %vm1679 = vcmp.eq.f32.partialorder %v1523, 2.0
  %vm1680 = vcmp.eq.f32.partialorder %v1524, 2.0
  %vm1681 = vcmp.eq.f32.partialorder %v1525, 2.0
  %vm1682 = vcmp.eq.f32.partialorder %v1526, 2.0
  %vm1683 = vcmp.eq.f32.partialorder %v1527, 2.0
  %v1684 = vsel %vm1678, %v1618, 0.0
  %v1685 = vsel %vm1679, %v1619, 0.0
  %v1686 = vsel %vm1680, %v1620, 0.0
  %v1687 = vsel %vm1681, %v1621, 0.0
  %v1688 = vsel %vm1682, %v1622, 0.0
  %v1689 = vsel %vm1683, %v1623, 0.0
  %v1690 = vadd.f32 %v1672, %v1684
  %v1691 = vadd.f32 %v1673, %v1685
  %v1692 = vadd.f32 %v1674, %v1686
  %v1693 = vadd.f32 %v1675, %v1687
  %v1694 = vadd.f32 %v1676, %v1688
  %v1695 = vadd.f32 %v1677, %v1689
  %vm1696 = vcmp.eq.f32.partialorder %v1522, 3.0
  %vm1697 = vcmp.eq.f32.partialorder %v1523, 3.0
  %vm1698 = vcmp.eq.f32.partialorder %v1524, 3.0
  %vm1699 = vcmp.eq.f32.partialorder %v1525, 3.0
  %vm1700 = vcmp.eq.f32.partialorder %v1526, 3.0
  %vm1701 = vcmp.eq.f32.partialorder %v1527, 3.0
  %v1702 = vsel %vm1696, %v1642, 0.0
  %v1703 = vsel %vm1697, %v1643, 0.0
  %v1704 = vsel %vm1698, %v1644, 0.0
  %v1705 = vsel %vm1699, %v1645, 0.0
  %v1706 = vsel %vm1700, %v1646, 0.0
  %v1707 = vsel %vm1701, %v1647, 0.0
  %v1708 = vadd.f32 %v1690, %v1702
  %v1709 = vadd.f32 %v1691, %v1703
  %v1710 = vadd.f32 %v1692, %v1704
  %v1711 = vadd.f32 %v1693, %v1705
  %v1712 = vadd.f32 %v1694, %v1706
  %v1713 = vadd.f32 %v1695, %v1707
  %v1714 = vsel %vm1660, %v1546, 0.0
  %v1715 = vsel %vm1661, %v1547, 0.0
  %v1716 = vsel %vm1662, %v1548, 0.0
  %v1717 = vsel %vm1663, %v1549, 0.0
  %v1718 = vsel %vm1664, %v1550, 0.0
  %v1719 = vsel %vm1665, %v1551, 0.0
  %v1720 = vsel %vm1678, %v1588, 0.0
  %v1721 = vsel %vm1679, %v1589, 0.0
  %v1722 = vsel %vm1680, %v1590, 0.0
  %v1723 = vsel %vm1681, %v1591, 0.0
  %v1724 = vsel %vm1682, %v1592, 0.0
  %v1725 = vsel %vm1683, %v1593, 0.0
  %v1726 = vadd.f32 %v1714, %v1720
  %v1727 = vadd.f32 %v1715, %v1721
  %v1728 = vadd.f32 %v1716, %v1722
  %v1729 = vadd.f32 %v1717, %v1723
  %v1730 = vadd.f32 %v1718, %v1724
  %v1731 = vadd.f32 %v1719, %v1725
  %v1732 = vsel %vm1696, %v1618, 0.0
  %v1733 = vsel %vm1697, %v1619, 0.0
  %v1734 = vsel %vm1698, %v1620, 0.0
  %v1735 = vsel %vm1699, %v1621, 0.0
  %v1736 = vsel %vm1700, %v1622, 0.0
  %v1737 = vsel %vm1701, %v1623, 0.0
  %v1738 = vadd.f32 %v1726, %v1732
  %v1739 = vadd.f32 %v1727, %v1733
  %v1740 = vadd.f32 %v1728, %v1734
  %v1741 = vadd.f32 %v1729, %v1735
  %v1742 = vadd.f32 %v1730, %v1736
  %v1743 = vadd.f32 %v1731, %v1737
  %vm1744 = vcmp.eq.f32.partialorder %v1522, 4.0
  %vm1745 = vcmp.eq.f32.partialorder %v1523, 4.0
  %vm1746 = vcmp.eq.f32.partialorder %v1524, 4.0
  %vm1747 = vcmp.eq.f32.partialorder %v1525, 4.0
  %vm1748 = vcmp.eq.f32.partialorder %v1526, 4.0
  %vm1749 = vcmp.eq.f32.partialorder %v1527, 4.0
  %v1750 = vsel %vm1744, %v1642, 0.0
  %v1751 = vsel %vm1745, %v1643, 0.0
  %v1752 = vsel %vm1746, %v1644, 0.0
  %v1753 = vsel %vm1747, %v1645, 0.0
  %v1754 = vsel %vm1748, %v1646, 0.0
  %v1755 = vsel %vm1749, %v1647, 0.0
  %v1756 = vadd.f32 %v1738, %v1750
  %v1757 = vadd.f32 %v1739, %v1751
  %v1758 = vadd.f32 %v1740, %v1752
  %v1759 = vadd.f32 %v1741, %v1753
  %v1760 = vadd.f32 %v1742, %v1754
  %v1761 = vadd.f32 %v1743, %v1755
  %v1762 = vsel %vm1678, %v1546, 0.0
  %v1763 = vsel %vm1679, %v1547, 0.0
  %v1764 = vsel %vm1680, %v1548, 0.0
  %v1765 = vsel %vm1681, %v1549, 0.0
  %v1766 = vsel %vm1682, %v1550, 0.0
  %v1767 = vsel %vm1683, %v1551, 0.0
  %v1768 = vsel %vm1696, %v1588, 0.0
  %v1769 = vsel %vm1697, %v1589, 0.0
  %v1770 = vsel %vm1698, %v1590, 0.0
  %v1771 = vsel %vm1699, %v1591, 0.0
  %v1772 = vsel %vm1700, %v1592, 0.0
  %v1773 = vsel %vm1701, %v1593, 0.0
  %v1774 = vadd.f32 %v1762, %v1768
  %v1775 = vadd.f32 %v1763, %v1769
  %v1776 = vadd.f32 %v1764, %v1770
  %v1777 = vadd.f32 %v1765, %v1771
  %v1778 = vadd.f32 %v1766, %v1772
  %v1779 = vadd.f32 %v1767, %v1773
  %v1780 = vsel %vm1744, %v1618, 0.0
  %v1781 = vsel %vm1745, %v1619, 0.0
  %v1782 = vsel %vm1746, %v1620, 0.0
  %v1783 = vsel %vm1747, %v1621, 0.0
  %v1784 = vsel %vm1748, %v1622, 0.0
  %v1785 = vsel %vm1749, %v1623, 0.0
  %v1786 = vadd.f32 %v1774, %v1780
  %v1787 = vadd.f32 %v1775, %v1781
  %v1788 = vadd.f32 %v1776, %v1782
  %v1789 = vadd.f32 %v1777, %v1783
  %v1790 = vadd.f32 %v1778, %v1784
  %v1791 = vadd.f32 %v1779, %v1785
  %vm1792 = vcmp.eq.f32.partialorder %v1522, 5.0
  %vm1793 = vcmp.eq.f32.partialorder %v1523, 5.0
  %vm1794 = vcmp.eq.f32.partialorder %v1524, 5.0
  %vm1795 = vcmp.eq.f32.partialorder %v1525, 5.0
  %vm1796 = vcmp.eq.f32.partialorder %v1526, 5.0
  %vm1797 = vcmp.eq.f32.partialorder %v1527, 5.0
  %v1798 = vsel %vm1792, %v1642, 0.0
  %v1799 = vsel %vm1793, %v1643, 0.0
  %v1800 = vsel %vm1794, %v1644, 0.0
  %v1801 = vsel %vm1795, %v1645, 0.0
  %v1802 = vsel %vm1796, %v1646, 0.0
  %v1803 = vsel %vm1797, %v1647, 0.0
  %v1804 = vadd.f32 %v1786, %v1798
  %v1805 = vadd.f32 %v1787, %v1799
  %v1806 = vadd.f32 %v1788, %v1800
  %v1807 = vadd.f32 %v1789, %v1801
  %v1808 = vadd.f32 %v1790, %v1802
  %v1809 = vadd.f32 %v1791, %v1803
  %v1810 = vsel %vm1696, %v1546, 0.0
  %v1811 = vsel %vm1697, %v1547, 0.0
  %v1812 = vsel %vm1698, %v1548, 0.0
  %v1813 = vsel %vm1699, %v1549, 0.0
  %v1814 = vsel %vm1700, %v1550, 0.0
  %v1815 = vsel %vm1701, %v1551, 0.0
  %v1816 = vsel %vm1744, %v1588, 0.0
  %v1817 = vsel %vm1745, %v1589, 0.0
  %v1818 = vsel %vm1746, %v1590, 0.0
  %v1819 = vsel %vm1747, %v1591, 0.0
  %v1820 = vsel %vm1748, %v1592, 0.0
  %v1821 = vsel %vm1749, %v1593, 0.0
  %v1822 = vadd.f32 %v1810, %v1816
  %v1823 = vadd.f32 %v1811, %v1817
  %v1824 = vadd.f32 %v1812, %v1818
  %v1825 = vadd.f32 %v1813, %v1819
  %v1826 = vadd.f32 %v1814, %v1820
  %v1827 = vadd.f32 %v1815, %v1821
  %v1828 = vsel %vm1792, %v1618, 0.0
  %v1829 = vsel %vm1793, %v1619, 0.0
  %v1830 = vsel %vm1794, %v1620, 0.0
  %v1831 = vsel %vm1795, %v1621, 0.0
  %v1832 = vsel %vm1796, %v1622, 0.0
  %v1833 = vsel %vm1797, %v1623, 0.0
  %v1834 = vadd.f32 %v1822, %v1828
  %v1835 = vadd.f32 %v1823, %v1829
  %v1836 = vadd.f32 %v1824, %v1830
  %v1837 = vadd.f32 %v1825, %v1831
  %v1838 = vadd.f32 %v1826, %v1832
  %v1839 = vadd.f32 %v1827, %v1833
  %vm1840 = vcmp.eq.f32.partialorder %v1522, 6.0
  %vm1841 = vcmp.eq.f32.partialorder %v1523, 6.0
  %vm1842 = vcmp.eq.f32.partialorder %v1524, 6.0
  %vm1843 = vcmp.eq.f32.partialorder %v1525, 6.0
  %vm1844 = vcmp.eq.f32.partialorder %v1526, 6.0
  %vm1845 = vcmp.eq.f32.partialorder %v1527, 6.0
  %v1846 = vsel %vm1840, %v1642, 0.0
  %v1847 = vsel %vm1841, %v1643, 0.0
  %v1848 = vsel %vm1842, %v1644, 0.0
  %v1849 = vsel %vm1843, %v1645, 0.0
  %v1850 = vsel %vm1844, %v1646, 0.0
  %v1851 = vsel %vm1845, %v1647, 0.0
  %v1852 = vadd.f32 %v1834, %v1846
  %v1853 = vadd.f32 %v1835, %v1847
  %v1854 = vadd.f32 %v1836, %v1848
  %v1855 = vadd.f32 %v1837, %v1849
  %v1856 = vadd.f32 %v1838, %v1850
  %v1857 = vadd.f32 %v1839, %v1851
  %v1858 = vsel %vm1744, %v1546, 0.0
  %v1859 = vsel %vm1745, %v1547, 0.0
  %v1860 = vsel %vm1746, %v1548, 0.0
  %v1861 = vsel %vm1747, %v1549, 0.0
  %v1862 = vsel %vm1748, %v1550, 0.0
  %v1863 = vsel %vm1749, %v1551, 0.0
  %v1864 = vsel %vm1792, %v1588, 0.0
  %v1865 = vsel %vm1793, %v1589, 0.0
  %v1866 = vsel %vm1794, %v1590, 0.0
  %v1867 = vsel %vm1795, %v1591, 0.0
  %v1868 = vsel %vm1796, %v1592, 0.0
  %v1869 = vsel %vm1797, %v1593, 0.0
  %v1870 = vadd.f32 %v1858, %v1864
  %v1871 = vadd.f32 %v1859, %v1865
  %v1872 = vadd.f32 %v1860, %v1866
  %v1873 = vadd.f32 %v1861, %v1867
  %v1874 = vadd.f32 %v1862, %v1868
  %v1875 = vadd.f32 %v1863, %v1869
  %v1876 = vsel %vm1840, %v1618, 0.0
  %v1877 = vsel %vm1841, %v1619, 0.0
  %v1878 = vsel %vm1842, %v1620, 0.0
  %v1879 = vsel %vm1843, %v1621, 0.0
  %v1880 = vsel %vm1844, %v1622, 0.0
  %v1881 = vsel %vm1845, %v1623, 0.0
  %v1882 = vadd.f32 %v1870, %v1876
  %v1883 = vadd.f32 %v1871, %v1877
  %v1884 = vadd.f32 %v1872, %v1878
  %v1885 = vadd.f32 %v1873, %v1879
  %v1886 = vadd.f32 %v1874, %v1880
  %v1887 = vadd.f32 %v1875, %v1881
  %vm1888 = vcmp.eq.f32.partialorder %v1522, 7.0
  %vm1889 = vcmp.eq.f32.partialorder %v1523, 7.0
  %vm1890 = vcmp.eq.f32.partialorder %v1524, 7.0
  %vm1891 = vcmp.eq.f32.partialorder %v1525, 7.0
  %vm1892 = vcmp.eq.f32.partialorder %v1526, 7.0
  %vm1893 = vcmp.eq.f32.partialorder %v1527, 7.0
  %v1894 = vsel %vm1888, %v1642, 0.0
  %v1895 = vsel %vm1889, %v1643, 0.0
  %v1896 = vsel %vm1890, %v1644, 0.0
  %v1897 = vsel %vm1891, %v1645, 0.0
  %v1898 = vsel %vm1892, %v1646, 0.0
  %v1899 = vsel %vm1893, %v1647, 0.0
  %v1900 = vadd.f32 %v1882, %v1894
  %v1901 = vadd.f32 %v1883, %v1895
  %v1902 = vadd.f32 %v1884, %v1896
  %v1903 = vadd.f32 %v1885, %v1897
  %v1904 = vadd.f32 %v1886, %v1898
  %v1905 = vadd.f32 %v1887, %v1899
  %v1906 = vsel %vm1792, %v1546, 0.0
  %v1907 = vsel %vm1793, %v1547, 0.0
  %v1908 = vsel %vm1794, %v1548, 0.0
  %v1909 = vsel %vm1795, %v1549, 0.0
  %v1910 = vsel %vm1796, %v1550, 0.0
  %v1911 = vsel %vm1797, %v1551, 0.0
  %v1912 = vsel %vm1840, %v1588, 0.0
  %v1913 = vsel %vm1841, %v1589, 0.0
  %v1914 = vsel %vm1842, %v1590, 0.0
  %v1915 = vsel %vm1843, %v1591, 0.0
  %v1916 = vsel %vm1844, %v1592, 0.0
  %v1917 = vsel %vm1845, %v1593, 0.0
  %v1918 = vadd.f32 %v1906, %v1912
  %v1919 = vadd.f32 %v1907, %v1913
  %v1920 = vadd.f32 %v1908, %v1914
  %v1921 = vadd.f32 %v1909, %v1915
  %v1922 = vadd.f32 %v1910, %v1916
  %v1923 = vadd.f32 %v1911, %v1917
  %v1924 = vsel %vm1888, %v1618, 0.0
  %v1925 = vsel %vm1889, %v1619, 0.0
  %v1926 = vsel %vm1890, %v1620, 0.0
  %v1927 = vsel %vm1891, %v1621, 0.0
  %v1928 = vsel %vm1892, %v1622, 0.0
  %v1929 = vsel %vm1893, %v1623, 0.0
  %v1930 = vadd.f32 %v1918, %v1924
  %v1931 = vadd.f32 %v1919, %v1925
  %v1932 = vadd.f32 %v1920, %v1926
  %v1933 = vadd.f32 %v1921, %v1927
  %v1934 = vadd.f32 %v1922, %v1928
  %v1935 = vadd.f32 %v1923, %v1929
  %vm1936 = vcmp.eq.f32.partialorder %v1522, 8.0
  %vm1937 = vcmp.eq.f32.partialorder %v1523, 8.0
  %vm1938 = vcmp.eq.f32.partialorder %v1524, 8.0
  %vm1939 = vcmp.eq.f32.partialorder %v1525, 8.0
  %vm1940 = vcmp.eq.f32.partialorder %v1526, 8.0
  %vm1941 = vcmp.eq.f32.partialorder %v1527, 8.0
  %v1942 = vsel %vm1936, %v1642, 0.0
  %v1943 = vsel %vm1937, %v1643, 0.0
  %v1944 = vsel %vm1938, %v1644, 0.0
  %v1945 = vsel %vm1939, %v1645, 0.0
  %v1946 = vsel %vm1940, %v1646, 0.0
  %v1947 = vsel %vm1941, %v1647, 0.0
  %v1948 = vadd.f32 %v1930, %v1942
  %v1949 = vadd.f32 %v1931, %v1943
  %v1950 = vadd.f32 %v1932, %v1944
  %v1951 = vadd.f32 %v1933, %v1945
  %v1952 = vadd.f32 %v1934, %v1946
  %v1953 = vadd.f32 %v1935, %v1947
  %v1954 = vsel %vm1840, %v1546, 0.0
  %v1955 = vsel %vm1841, %v1547, 0.0
  %v1956 = vsel %vm1842, %v1548, 0.0
  %v1957 = vsel %vm1843, %v1549, 0.0
  %v1958 = vsel %vm1844, %v1550, 0.0
  %v1959 = vsel %vm1845, %v1551, 0.0
  %v1960 = vsel %vm1888, %v1588, 0.0
  %v1961 = vsel %vm1889, %v1589, 0.0
  %v1962 = vsel %vm1890, %v1590, 0.0
  %v1963 = vsel %vm1891, %v1591, 0.0
  %v1964 = vsel %vm1892, %v1592, 0.0
  %v1965 = vsel %vm1893, %v1593, 0.0
  %v1966 = vadd.f32 %v1954, %v1960
  %v1967 = vadd.f32 %v1955, %v1961
  %v1968 = vadd.f32 %v1956, %v1962
  %v1969 = vadd.f32 %v1957, %v1963
  %v1970 = vadd.f32 %v1958, %v1964
  %v1971 = vadd.f32 %v1959, %v1965
  %v1972 = vsel %vm1936, %v1618, 0.0
  %v1973 = vsel %vm1937, %v1619, 0.0
  %v1974 = vsel %vm1938, %v1620, 0.0
  %v1975 = vsel %vm1939, %v1621, 0.0
  %v1976 = vsel %vm1940, %v1622, 0.0
  %v1977 = vsel %vm1941, %v1623, 0.0
  %v1978 = vadd.f32 %v1966, %v1972
  %v1979 = vadd.f32 %v1967, %v1973
  %v1980 = vadd.f32 %v1968, %v1974
  %v1981 = vadd.f32 %v1969, %v1975
  %v1982 = vadd.f32 %v1970, %v1976
  %v1983 = vadd.f32 %v1971, %v1977
  %vm1984 = vcmp.eq.f32.partialorder %v1522, 9.0
  %vm1985 = vcmp.eq.f32.partialorder %v1523, 9.0
  %vm1986 = vcmp.eq.f32.partialorder %v1524, 9.0
  %vm1987 = vcmp.eq.f32.partialorder %v1525, 9.0
  %vm1988 = vcmp.eq.f32.partialorder %v1526, 9.0
  %vm1989 = vcmp.eq.f32.partialorder %v1527, 9.0
  %v1990 = vsel %vm1984, %v1642, 0.0
  %v1991 = vsel %vm1985, %v1643, 0.0
  %v1992 = vsel %vm1986, %v1644, 0.0
  %v1993 = vsel %vm1987, %v1645, 0.0
  %v1994 = vsel %vm1988, %v1646, 0.0
  %v1995 = vsel %vm1989, %v1647, 0.0
  %v1996 = vadd.f32 %v1978, %v1990
  %v1997 = vadd.f32 %v1979, %v1991
  %v1998 = vadd.f32 %v1980, %v1992
  %v1999 = vadd.f32 %v1981, %v1993
  %v2000 = vadd.f32 %v1982, %v1994
  %v2001 = vadd.f32 %v1983, %v1995
  %v2002 = vsel %vm1888, %v1546, 0.0
  %v2003 = vsel %vm1889, %v1547, 0.0
  %v2004 = vsel %vm1890, %v1548, 0.0
  %v2005 = vsel %vm1891, %v1549, 0.0
  %v2006 = vsel %vm1892, %v1550, 0.0
  %v2007 = vsel %vm1893, %v1551, 0.0
  %v2008 = vsel %vm1936, %v1588, 0.0
  %v2009 = vsel %vm1937, %v1589, 0.0
  %v2010 = vsel %vm1938, %v1590, 0.0
  %v2011 = vsel %vm1939, %v1591, 0.0
  %v2012 = vsel %vm1940, %v1592, 0.0
  %v2013 = vsel %vm1941, %v1593, 0.0
  %v2014 = vadd.f32 %v2002, %v2008
  %v2015 = vadd.f32 %v2003, %v2009
  %v2016 = vadd.f32 %v2004, %v2010
  %v2017 = vadd.f32 %v2005, %v2011
  %v2018 = vadd.f32 %v2006, %v2012
  %v2019 = vadd.f32 %v2007, %v2013
  %v2020 = vsel %vm1984, %v1618, 0.0
  %v2021 = vsel %vm1985, %v1619, 0.0
  %v2022 = vsel %vm1986, %v1620, 0.0
  %v2023 = vsel %vm1987, %v1621, 0.0
  %v2024 = vsel %vm1988, %v1622, 0.0
  %v2025 = vsel %vm1989, %v1623, 0.0
  %v2026 = vadd.f32 %v2014, %v2020
  %v2027 = vadd.f32 %v2015, %v2021
  %v2028 = vadd.f32 %v2016, %v2022
  %v2029 = vadd.f32 %v2017, %v2023
  %v2030 = vadd.f32 %v2018, %v2024
  %v2031 = vadd.f32 %v2019, %v2025
  %vm2032 = vcmp.eq.f32.partialorder %v1522, 10.0
  %vm2033 = vcmp.eq.f32.partialorder %v1523, 10.0
  %vm2034 = vcmp.eq.f32.partialorder %v1524, 10.0
  %vm2035 = vcmp.eq.f32.partialorder %v1525, 10.0
  %vm2036 = vcmp.eq.f32.partialorder %v1526, 10.0
  %vm2037 = vcmp.eq.f32.partialorder %v1527, 10.0
  %v2038 = vsel %vm2032, %v1642, 0.0
  %v2039 = vsel %vm2033, %v1643, 0.0
  %v2040 = vsel %vm2034, %v1644, 0.0
  %v2041 = vsel %vm2035, %v1645, 0.0
  %v2042 = vsel %vm2036, %v1646, 0.0
  %v2043 = vsel %vm2037, %v1647, 0.0
  %v2044 = vadd.f32 %v2026, %v2038
  %v2045 = vadd.f32 %v2027, %v2039
  %v2046 = vadd.f32 %v2028, %v2040
  %v2047 = vadd.f32 %v2029, %v2041
  %v2048 = vadd.f32 %v2030, %v2042
  %v2049 = vadd.f32 %v2031, %v2043
  %2050 = vmatprep.subr.mxu0 %v1505
  %2051 = vmatpush1.msra.mxu0 %v1504
  %2052 = vmatprep.subr.mxu0 %v1508
  %2053 = vmatpush1.msra.mxu0 %v1507
  %2054 = vmatprep.subr.mxu0 %v1709
  %2055 = vmatpush1.msra.mxu0 %v1708
  %2056 = vmatprep.subr.mxu0 %v1712
  %2057 = vmatpush1.msra.mxu0 %v1711
  %2058 = vmatprep.subr.mxu0 %v1757
  %2059 = vmatpush1.msra.mxu0 %v1756
  %2060 = vmatprep.subr.mxu0 %v1760
  %2061 = vmatpush1.msra.mxu0 %v1759
  %2062 = vmatprep.subr.mxu0 %v1805
  %2063 = vmatpush1.msra.mxu0 %v1804
  %2064 = vmatprep.subr.mxu0 %v1808
  %2065 = vmatpush1.msra.mxu0 %v1807
  %2066 = vmatprep.subr.mxu0 %v1853
  %2067 = vmatpush1.msra.mxu0 %v1852
  %2068 = vmatprep.subr.mxu0 %v1856
  %2069 = vmatpush1.msra.mxu0 %v1855
  %2070 = vmatprep.subr.mxu0 %v1901
  %2071 = vmatpush1.msra.mxu0 %v1900
  %2072 = vmatprep.subr.mxu0 %v1904
  %2073 = vmatpush1.msra.mxu0 %v1903
  %2074 = vmatprep.subr.mxu0 %v1949
  %2075 = vmatpush1.msra.mxu0 %v1948
  %2076 = vmatprep.subr.mxu0 %v1952
  %2077 = vmatpush1.msra.mxu0 %v1951
  %2078 = vmatprep.subr.mxu0 %v1997
  %2079 = vmatpush1.msra.mxu0 %v1996
  %2080 = vmatprep.subr.mxu0 %v2000
  %2081 = vmatpush1.msra.mxu0 %v1999
  %2082 = vmatprep.subr.mxu0 %v2045
  %2083 = vmatpush1.msra.mxu0 %v2044
  %2084 = vmatprep.subr.mxu0 %v2048
  %2085 = vmatpush1.msra.mxu0 %v2047
  %2086 = vmatprep.subr.mxu0 0.0
  %2087 = vmatpush1.msra.mxu0 0.0
  %2088 = vmatprep.subr.mxu0 0.0
  %2089 = vmatpush1.msra.mxu0 0.0
  %2090 = vmatprep.subr.mxu0 0.0
  %2091 = vmatpush1.msra.mxu0 0.0
  %2092 = vmatprep.subr.mxu0 0.0
  %2093 = vmatpush1.msra.mxu0 0.0
  %2094 = vmatprep.subr.mxu0 0.0
  %2095 = vmatpush1.msra.mxu0 0.0
  %2096 = vmatprep.subr.mxu0 0.0
  %2097 = vmatpush1.msra.mxu0 0.0
  %2098 = vmatprep.subr.mxu0 0.0
  %2099 = vmatpush1.msra.mxu0 0.0
  %2100 = vmatprep.subr.mxu0 0.0
  %2101 = vmatpush1.msra.mxu0 0.0
  %2102 = vmatprep.subr.mxu0 0.0
  %2103 = vmatpush1.msra.mxu0 0.0
  %2104 = vmatprep.subr.mxu0 0.0
  %2105 = vmatpush1.msra.mxu0 0.0
  %2106 = vmatprep.subr.mxu0 0.0
  %2107 = vmatpush1.msra.mxu0 0.0
  %2108 = vmatprep.subr.mxu0 0.0
  %2109 = vmatpush1.msra.mxu0 0.0
  %2110 = vmatprep.subr.mxu0 0.0
  %2111 = vmatpush1.msra.mxu0 0.0
  %2112 = vmatprep.subr.mxu0 0.0
  %2113 = vmatpush1.msra.mxu0 0.0
  %2114 = vmatprep.mubr.f32.mxu0 %v597
  %2115 = vmatmul.mubr.f32.gmra.mrb[0].mxu0 %v11
  %v2116 = vpop.f32.mrb[0].mxu0
  %v2117 = vadd.f32 0.0, %v2116
  %v2118 = vpop.f32.mrb[0].mxu0
  %v2119 = vadd.f32 0.0, %v2118
  %2120 = vdwg.mxu0
  %2121 = vmatprep.subr.mxu0 0.0
  %2122 = vmatpush1.msra.mxu0 %v1506
  %2123 = vmatprep.subr.mxu0 0.0
  %2124 = vmatpush1.msra.mxu0 %v1509
  %2125 = vmatprep.subr.mxu0 0.0
  %2126 = vmatpush1.msra.mxu0 %v1710
  %2127 = vmatprep.subr.mxu0 0.0
  %2128 = vmatpush1.msra.mxu0 %v1713
  %2129 = vmatprep.subr.mxu0 0.0
  %2130 = vmatpush1.msra.mxu0 %v1758
  %2131 = vmatprep.subr.mxu0 0.0
  %2132 = vmatpush1.msra.mxu0 %v1761
  %2133 = vmatprep.subr.mxu0 0.0
  %2134 = vmatpush1.msra.mxu0 %v1806
  %2135 = vmatprep.subr.mxu0 0.0
  %2136 = vmatpush1.msra.mxu0 %v1809
  %2137 = vmatprep.subr.mxu0 0.0
  %2138 = vmatpush1.msra.mxu0 %v1854
  %2139 = vmatprep.subr.mxu0 0.0
  %2140 = vmatpush1.msra.mxu0 %v1857
  %2141 = vmatprep.subr.mxu0 0.0
  %2142 = vmatpush1.msra.mxu0 %v1902
  %2143 = vmatprep.subr.mxu0 0.0
  %2144 = vmatpush1.msra.mxu0 %v1905
  %2145 = vmatprep.subr.mxu0 0.0
  %2146 = vmatpush1.msra.mxu0 %v1950
  %2147 = vmatprep.subr.mxu0 0.0
  %2148 = vmatpush1.msra.mxu0 %v1953
  %2149 = vmatprep.subr.mxu0 0.0
  %2150 = vmatpush1.msra.mxu0 %v1998
  %2151 = vmatprep.subr.mxu0 0.0
  %2152 = vmatpush1.msra.mxu0 %v2001
  %2153 = vmatprep.subr.mxu0 0.0
  %2154 = vmatpush1.msra.mxu0 %v2046
  %2155 = vmatprep.subr.mxu0 0.0
  %2156 = vmatpush1.msra.mxu0 %v2049
  %2157 = vmatprep.subr.mxu0 0.0
  %2158 = vmatpush1.msra.mxu0 0.0
  %2159 = vmatprep.subr.mxu0 0.0
  %2160 = vmatpush1.msra.mxu0 0.0
  %2161 = vmatprep.subr.mxu0 0.0
  %2162 = vmatpush1.msra.mxu0 0.0
  %2163 = vmatprep.subr.mxu0 0.0
  %2164 = vmatpush1.msra.mxu0 0.0
  %2165 = vmatprep.subr.mxu0 0.0
  %2166 = vmatpush1.msra.mxu0 0.0
  %2167 = vmatprep.subr.mxu0 0.0
  %2168 = vmatpush1.msra.mxu0 0.0
  %2169 = vmatprep.subr.mxu0 0.0
  %2170 = vmatpush1.msra.mxu0 0.0
  %2171 = vmatprep.subr.mxu0 0.0
  %2172 = vmatpush1.msra.mxu0 0.0
  %2173 = vmatprep.subr.mxu0 0.0
  %2174 = vmatpush1.msra.mxu0 0.0
  %2175 = vmatprep.subr.mxu0 0.0
  %2176 = vmatpush1.msra.mxu0 0.0
  %2177 = vmatprep.subr.mxu0 0.0
  %2178 = vmatpush1.msra.mxu0 0.0
  %2179 = vmatprep.subr.mxu0 0.0
  %2180 = vmatpush1.msra.mxu0 0.0
  %2181 = vmatprep.subr.mxu0 0.0
  %2182 = vmatpush1.msra.mxu0 0.0
  %2183 = vmatprep.subr.mxu0 0.0
  %2184 = vmatpush1.msra.mxu0 0.0
  %2185 = vmatprep.mubr.f32.mxu0 %v597
  %2186 = vmatmul.mubr.f32.gmra.mrb[0].mxu0 %v11
  %v2187 = vpop.f32.mrb[0].mxu0
  %v2188 = vadd.f32 0.0, %v2187
  %v2189 = vpop.f32.mrb[0].mxu0
  %2190 = vdwg.mxu0
  %v2191 = vmax.f32 %v1464, %v2117
  %v2192 = vmax.f32 %v1465, %v2119
  %v2193 = vmax.f32 %v1466, %v2188
  %s2194 = scalar_lea.vmem %s0, 144
  %v2195 = vld [vmem:[%s2194] sm:$0xff]
  %v2196 = vld [vmem:[%s2194 + $0x8] sm:$0xff]
  %v2197 = vld [vmem:[%s2194 + $0x10] sm:$0xff]
  %v2198 = vld [vmem:[%s2194 + $0x18] sm:$0xff]
  %v2199 = vld [vmem:[%s2194 + $0x20] sm:$0xff]
  %v2200 = vld [vmem:[%s2194 + $0x28] sm:$0xff]
  %v2201 = vsub.f32 0.0, %v2195
  %v2202 = vsub.f32 0.0, %v2196
  %v2203 = vsub.f32 0.0, %v2197
  %v2204 = vsub.f32 0.0, %v2198
  %v2205 = vsub.f32 0.0, %v2199
  %v2206 = vsub.f32 0.0, %v2200
  %v2207 = vmul.f32 %v2201, 1.442695
  %v2208 = vpow.pop %v2207
  %v2209 = vmul.f32 %v2202, 1.442695
  %v2210 = vpow.pop %v2209
  %v2211 = vmul.f32 %v2203, 1.442695
  %v2212 = vpow.pop %v2211
  %v2213 = vmul.f32 %v2204, 1.442695
  %v2214 = vpow.pop %v2213
  %v2215 = vmul.f32 %v2205, 1.442695
  %v2216 = vpow.pop %v2215
  %v2217 = vmul.f32 %v2206, 1.442695
  %v2218 = vpow.pop %v2217
  %v2219 = vadd.f32 %v2208, 1.0
  %v2220 = vadd.f32 %v2210, 1.0
  %v2221 = vadd.f32 %v2212, 1.0
  %v2222 = vadd.f32 %v2214, 1.0
  %v2223 = vadd.f32 %v2216, 1.0
  %v2224 = vadd.f32 %v2218, 1.0
  %v2225 = vrcp.pop %v2219
  %v2226 = vrcp.pop %v2220
  %v2227 = vrcp.pop %v2221
  %v2228 = vrcp.pop %v2222
  %v2229 = vrcp.pop %v2223
  %v2230 = vrcp.pop %v2224
  %v2231 = vmul.f32 %v2195, %v2225
  %v2232 = vmul.f32 %v2196, %v2226
  %v2233 = vmul.f32 %v2197, %v2227
  %v2234 = vmul.f32 %v2198, %v2228
  %v2235 = vmul.f32 %v2199, %v2229
  %v2236 = vmul.f32 %v2200, %v2230
  %v2237 = vsub.f32 %v2195, -2.2
  %v2238 = vsub.f32 %v2196, -2.2
  %v2239 = vsub.f32 %v2197, -2.2
  %v2240 = vsub.f32 %v2198, -2.2
  %v2241 = vsub.f32 %v2199, -2.2
  %v2242 = vsub.f32 %v2200, -2.2
  %v2243 = vmul.f32 %v2237, 2.5
  %v2244 = vmul.f32 %v2238, 2.5
  %v2245 = vmul.f32 %v2239, 2.5
  %v2246 = vmul.f32 %v2240, 2.5
  %v2247 = vmul.f32 %v2241, 2.5
  %v2248 = vmul.f32 %v2242, 2.5
  %v2249 = vfloor.f32 %v2243
  %v2250 = vfloor.f32 %v2244
  %v2251 = vfloor.f32 %v2245
  %v2252 = vfloor.f32 %v2246
  %v2253 = vfloor.f32 %v2247
  %v2254 = vfloor.f32 %v2248
  %v2255 = vsub.f32 %v2243, %v2249
  %v2256 = vsub.f32 %v2244, %v2250
  %v2257 = vsub.f32 %v2245, %v2251
  %v2258 = vsub.f32 %v2246, %v2252
  %v2259 = vsub.f32 %v2247, %v2253
  %v2260 = vsub.f32 %v2248, %v2254
  %v2261 = vmul.f32 %v2255, %v2255
  %v2262 = vmul.f32 %v2256, %v2256
  %v2263 = vmul.f32 %v2257, %v2257
  %v2264 = vmul.f32 %v2258, %v2258
  %v2265 = vmul.f32 %v2259, %v2259
  %v2266 = vmul.f32 %v2260, %v2260
  %v2267 = vmul.f32 %v2261, %v2255
  %v2268 = vmul.f32 %v2262, %v2256
  %v2269 = vmul.f32 %v2263, %v2257
  %v2270 = vmul.f32 %v2264, %v2258
  %v2271 = vmul.f32 %v2265, %v2259
  %v2272 = vmul.f32 %v2266, %v2260
  %v2273 = vmul.f32 %v2267, 0.16666667
  %v2274 = vmul.f32 %v2268, 0.16666667
  %v2275 = vmul.f32 %v2269, 0.16666667
  %v2276 = vmul.f32 %v2270, 0.16666667
  %v2277 = vmul.f32 %v2271, 0.16666667
  %v2278 = vmul.f32 %v2272, 0.16666667
  %v2279 = vmul.f32 %v2255, -3.0
  %v2280 = vmul.f32 %v2256, -3.0
  %v2281 = vmul.f32 %v2257, -3.0
  %v2282 = vmul.f32 %v2258, -3.0
  %v2283 = vmul.f32 %v2259, -3.0
  %v2284 = vmul.f32 %v2260, -3.0
  %v2285 = vadd.f32 %v2279, 3.0
  %v2286 = vadd.f32 %v2280, 3.0
  %v2287 = vadd.f32 %v2281, 3.0
  %v2288 = vadd.f32 %v2282, 3.0
  %v2289 = vadd.f32 %v2283, 3.0
  %v2290 = vadd.f32 %v2284, 3.0
  %v2291 = vmul.f32 %v2285, %v2255
  %v2292 = vmul.f32 %v2286, %v2256
  %v2293 = vmul.f32 %v2287, %v2257
  %v2294 = vmul.f32 %v2288, %v2258
  %v2295 = vmul.f32 %v2289, %v2259
  %v2296 = vmul.f32 %v2290, %v2260
  %v2297 = vadd.f32 %v2291, 3.0
  %v2298 = vadd.f32 %v2292, 3.0
  %v2299 = vadd.f32 %v2293, 3.0
  %v2300 = vadd.f32 %v2294, 3.0
  %v2301 = vadd.f32 %v2295, 3.0
  %v2302 = vadd.f32 %v2296, 3.0
  %v2303 = vmul.f32 %v2297, %v2255
  %v2304 = vmul.f32 %v2298, %v2256
  %v2305 = vmul.f32 %v2299, %v2257
  %v2306 = vmul.f32 %v2300, %v2258
  %v2307 = vmul.f32 %v2301, %v2259
  %v2308 = vmul.f32 %v2302, %v2260
  %v2309 = vadd.f32 %v2303, 1.0
  %v2310 = vadd.f32 %v2304, 1.0
  %v2311 = vadd.f32 %v2305, 1.0
  %v2312 = vadd.f32 %v2306, 1.0
  %v2313 = vadd.f32 %v2307, 1.0
  %v2314 = vadd.f32 %v2308, 1.0
  %v2315 = vmul.f32 %v2309, 0.16666667
  %v2316 = vmul.f32 %v2310, 0.16666667
  %v2317 = vmul.f32 %v2311, 0.16666667
  %v2318 = vmul.f32 %v2312, 0.16666667
  %v2319 = vmul.f32 %v2313, 0.16666667
  %v2320 = vmul.f32 %v2314, 0.16666667
  %v2321 = vmul.f32 %v2255, 3.0
  %v2322 = vmul.f32 %v2256, 3.0
  %v2323 = vmul.f32 %v2257, 3.0
  %v2324 = vmul.f32 %v2258, 3.0
  %v2325 = vmul.f32 %v2259, 3.0
  %v2326 = vmul.f32 %v2260, 3.0
  %v2327 = vsub.f32 %v2321, 6.0
  %v2328 = vsub.f32 %v2322, 6.0
  %v2329 = vsub.f32 %v2323, 6.0
  %v2330 = vsub.f32 %v2324, 6.0
  %v2331 = vsub.f32 %v2325, 6.0
  %v2332 = vsub.f32 %v2326, 6.0
  %v2333 = vmul.f32 %v2327, %v2261
  %v2334 = vmul.f32 %v2328, %v2262
  %v2335 = vmul.f32 %v2329, %v2263
  %v2336 = vmul.f32 %v2330, %v2264
  %v2337 = vmul.f32 %v2331, %v2265
  %v2338 = vmul.f32 %v2332, %v2266
  %v2339 = vadd.f32 %v2333, 4.0
  %v2340 = vadd.f32 %v2334, 4.0
  %v2341 = vadd.f32 %v2335, 4.0
  %v2342 = vadd.f32 %v2336, 4.0
  %v2343 = vadd.f32 %v2337, 4.0
  %v2344 = vadd.f32 %v2338, 4.0
  %v2345 = vmul.f32 %v2339, 0.16666667
  %v2346 = vmul.f32 %v2340, 0.16666667
  %v2347 = vmul.f32 %v2341, 0.16666667
  %v2348 = vmul.f32 %v2342, 0.16666667
  %v2349 = vmul.f32 %v2343, 0.16666667
  %v2350 = vmul.f32 %v2344, 0.16666667
  %v2351 = vsub.f32 1.0, %v2255
  %v2352 = vsub.f32 1.0, %v2256
  %v2353 = vsub.f32 1.0, %v2257
  %v2354 = vsub.f32 1.0, %v2258
  %v2355 = vsub.f32 1.0, %v2259
  %v2356 = vsub.f32 1.0, %v2260
  %v2357 = vmul.f32 %v2351, %v2351
  %v2358 = vmul.f32 %v2352, %v2352
  %v2359 = vmul.f32 %v2353, %v2353
  %v2360 = vmul.f32 %v2354, %v2354
  %v2361 = vmul.f32 %v2355, %v2355
  %v2362 = vmul.f32 %v2356, %v2356
  %v2363 = vmul.f32 %v2357, %v2351
  %v2364 = vmul.f32 %v2358, %v2352
  %v2365 = vmul.f32 %v2359, %v2353
  %v2366 = vmul.f32 %v2360, %v2354
  %v2367 = vmul.f32 %v2361, %v2355
  %v2368 = vmul.f32 %v2362, %v2356
  %v2369 = vmul.f32 %v2363, 0.16666667
  %v2370 = vmul.f32 %v2364, 0.16666667
  %v2371 = vmul.f32 %v2365, 0.16666667
  %v2372 = vmul.f32 %v2366, 0.16666667
  %v2373 = vmul.f32 %v2367, 0.16666667
  %v2374 = vmul.f32 %v2368, 0.16666667
  %vm2375 = vcmp.eq.f32.partialorder %v2249, 0.0
  %vm2376 = vcmp.eq.f32.partialorder %v2250, 0.0
  %vm2377 = vcmp.eq.f32.partialorder %v2251, 0.0
  %vm2378 = vcmp.eq.f32.partialorder %v2252, 0.0
  %vm2379 = vcmp.eq.f32.partialorder %v2253, 0.0
  %vm2380 = vcmp.eq.f32.partialorder %v2254, 0.0
  %v2381 = vsel %vm2375, %v2273, 0.0
  %v2382 = vsel %vm2376, %v2274, 0.0
  %v2383 = vsel %vm2377, %v2275, 0.0
  %v2384 = vsel %vm2378, %v2276, 0.0
  %v2385 = vsel %vm2379, %v2277, 0.0
  %v2386 = vsel %vm2380, %v2278, 0.0
  %vm2387 = vcmp.eq.f32.partialorder %v2249, 1.0
  %vm2388 = vcmp.eq.f32.partialorder %v2250, 1.0
  %vm2389 = vcmp.eq.f32.partialorder %v2251, 1.0
  %vm2390 = vcmp.eq.f32.partialorder %v2252, 1.0
  %vm2391 = vcmp.eq.f32.partialorder %v2253, 1.0
  %vm2392 = vcmp.eq.f32.partialorder %v2254, 1.0
  %v2393 = vsel %vm2387, %v2315, 0.0
  %v2394 = vsel %vm2388, %v2316, 0.0
  %v2395 = vsel %vm2389, %v2317, 0.0
  %v2396 = vsel %vm2390, %v2318, 0.0
  %v2397 = vsel %vm2391, %v2319, 0.0
  %v2398 = vsel %vm2392, %v2320, 0.0
  %v2399 = vadd.f32 %v2381, %v2393
  %v2400 = vadd.f32 %v2382, %v2394
  %v2401 = vadd.f32 %v2383, %v2395
  %v2402 = vadd.f32 %v2384, %v2396
  %v2403 = vadd.f32 %v2385, %v2397
  %v2404 = vadd.f32 %v2386, %v2398
  %vm2405 = vcmp.eq.f32.partialorder %v2249, 2.0
  %vm2406 = vcmp.eq.f32.partialorder %v2250, 2.0
  %vm2407 = vcmp.eq.f32.partialorder %v2251, 2.0
  %vm2408 = vcmp.eq.f32.partialorder %v2252, 2.0
  %vm2409 = vcmp.eq.f32.partialorder %v2253, 2.0
  %vm2410 = vcmp.eq.f32.partialorder %v2254, 2.0
  %v2411 = vsel %vm2405, %v2345, 0.0
  %v2412 = vsel %vm2406, %v2346, 0.0
  %v2413 = vsel %vm2407, %v2347, 0.0
  %v2414 = vsel %vm2408, %v2348, 0.0
  %v2415 = vsel %vm2409, %v2349, 0.0
  %v2416 = vsel %vm2410, %v2350, 0.0
  %v2417 = vadd.f32 %v2399, %v2411
  %v2418 = vadd.f32 %v2400, %v2412
  %v2419 = vadd.f32 %v2401, %v2413
  %v2420 = vadd.f32 %v2402, %v2414
  %v2421 = vadd.f32 %v2403, %v2415
  %v2422 = vadd.f32 %v2404, %v2416
  %vm2423 = vcmp.eq.f32.partialorder %v2249, 3.0
  %vm2424 = vcmp.eq.f32.partialorder %v2250, 3.0
  %vm2425 = vcmp.eq.f32.partialorder %v2251, 3.0
  %vm2426 = vcmp.eq.f32.partialorder %v2252, 3.0
  %vm2427 = vcmp.eq.f32.partialorder %v2253, 3.0
  %vm2428 = vcmp.eq.f32.partialorder %v2254, 3.0
  %v2429 = vsel %vm2423, %v2369, 0.0
  %v2430 = vsel %vm2424, %v2370, 0.0
  %v2431 = vsel %vm2425, %v2371, 0.0
  %v2432 = vsel %vm2426, %v2372, 0.0
  %v2433 = vsel %vm2427, %v2373, 0.0
  %v2434 = vsel %vm2428, %v2374, 0.0
  %v2435 = vadd.f32 %v2417, %v2429
  %v2436 = vadd.f32 %v2418, %v2430
  %v2437 = vadd.f32 %v2419, %v2431
  %v2438 = vadd.f32 %v2420, %v2432
  %v2439 = vadd.f32 %v2421, %v2433
  %v2440 = vadd.f32 %v2422, %v2434
  %v2441 = vsel %vm2387, %v2273, 0.0
  %v2442 = vsel %vm2388, %v2274, 0.0
  %v2443 = vsel %vm2389, %v2275, 0.0
  %v2444 = vsel %vm2390, %v2276, 0.0
  %v2445 = vsel %vm2391, %v2277, 0.0
  %v2446 = vsel %vm2392, %v2278, 0.0
  %v2447 = vsel %vm2405, %v2315, 0.0
  %v2448 = vsel %vm2406, %v2316, 0.0
  %v2449 = vsel %vm2407, %v2317, 0.0
  %v2450 = vsel %vm2408, %v2318, 0.0
  %v2451 = vsel %vm2409, %v2319, 0.0
  %v2452 = vsel %vm2410, %v2320, 0.0
  %v2453 = vadd.f32 %v2441, %v2447
  %v2454 = vadd.f32 %v2442, %v2448
  %v2455 = vadd.f32 %v2443, %v2449
  %v2456 = vadd.f32 %v2444, %v2450
  %v2457 = vadd.f32 %v2445, %v2451
  %v2458 = vadd.f32 %v2446, %v2452
  %v2459 = vsel %vm2423, %v2345, 0.0
  %v2460 = vsel %vm2424, %v2346, 0.0
  %v2461 = vsel %vm2425, %v2347, 0.0
  %v2462 = vsel %vm2426, %v2348, 0.0
  %v2463 = vsel %vm2427, %v2349, 0.0
  %v2464 = vsel %vm2428, %v2350, 0.0
  %v2465 = vadd.f32 %v2453, %v2459
  %v2466 = vadd.f32 %v2454, %v2460
  %v2467 = vadd.f32 %v2455, %v2461
  %v2468 = vadd.f32 %v2456, %v2462
  %v2469 = vadd.f32 %v2457, %v2463
  %v2470 = vadd.f32 %v2458, %v2464
  %vm2471 = vcmp.eq.f32.partialorder %v2249, 4.0
  %vm2472 = vcmp.eq.f32.partialorder %v2250, 4.0
  %vm2473 = vcmp.eq.f32.partialorder %v2251, 4.0
  %vm2474 = vcmp.eq.f32.partialorder %v2252, 4.0
  %vm2475 = vcmp.eq.f32.partialorder %v2253, 4.0
  %vm2476 = vcmp.eq.f32.partialorder %v2254, 4.0
  %v2477 = vsel %vm2471, %v2369, 0.0
  %v2478 = vsel %vm2472, %v2370, 0.0
  %v2479 = vsel %vm2473, %v2371, 0.0
  %v2480 = vsel %vm2474, %v2372, 0.0
  %v2481 = vsel %vm2475, %v2373, 0.0
  %v2482 = vsel %vm2476, %v2374, 0.0
  %v2483 = vadd.f32 %v2465, %v2477
  %v2484 = vadd.f32 %v2466, %v2478
  %v2485 = vadd.f32 %v2467, %v2479
  %v2486 = vadd.f32 %v2468, %v2480
  %v2487 = vadd.f32 %v2469, %v2481
  %v2488 = vadd.f32 %v2470, %v2482
  %v2489 = vsel %vm2405, %v2273, 0.0
  %v2490 = vsel %vm2406, %v2274, 0.0
  %v2491 = vsel %vm2407, %v2275, 0.0
  %v2492 = vsel %vm2408, %v2276, 0.0
  %v2493 = vsel %vm2409, %v2277, 0.0
  %v2494 = vsel %vm2410, %v2278, 0.0
  %v2495 = vsel %vm2423, %v2315, 0.0
  %v2496 = vsel %vm2424, %v2316, 0.0
  %v2497 = vsel %vm2425, %v2317, 0.0
  %v2498 = vsel %vm2426, %v2318, 0.0
  %v2499 = vsel %vm2427, %v2319, 0.0
  %v2500 = vsel %vm2428, %v2320, 0.0
  %v2501 = vadd.f32 %v2489, %v2495
  %v2502 = vadd.f32 %v2490, %v2496
  %v2503 = vadd.f32 %v2491, %v2497
  %v2504 = vadd.f32 %v2492, %v2498
  %v2505 = vadd.f32 %v2493, %v2499
  %v2506 = vadd.f32 %v2494, %v2500
  %v2507 = vsel %vm2471, %v2345, 0.0
  %v2508 = vsel %vm2472, %v2346, 0.0
  %v2509 = vsel %vm2473, %v2347, 0.0
  %v2510 = vsel %vm2474, %v2348, 0.0
  %v2511 = vsel %vm2475, %v2349, 0.0
  %v2512 = vsel %vm2476, %v2350, 0.0
  %v2513 = vadd.f32 %v2501, %v2507
  %v2514 = vadd.f32 %v2502, %v2508
  %v2515 = vadd.f32 %v2503, %v2509
  %v2516 = vadd.f32 %v2504, %v2510
  %v2517 = vadd.f32 %v2505, %v2511
  %v2518 = vadd.f32 %v2506, %v2512
  %vm2519 = vcmp.eq.f32.partialorder %v2249, 5.0
  %vm2520 = vcmp.eq.f32.partialorder %v2250, 5.0
  %vm2521 = vcmp.eq.f32.partialorder %v2251, 5.0
  %vm2522 = vcmp.eq.f32.partialorder %v2252, 5.0
  %vm2523 = vcmp.eq.f32.partialorder %v2253, 5.0
  %vm2524 = vcmp.eq.f32.partialorder %v2254, 5.0
  %v2525 = vsel %vm2519, %v2369, 0.0
  %v2526 = vsel %vm2520, %v2370, 0.0
  %v2527 = vsel %vm2521, %v2371, 0.0
  %v2528 = vsel %vm2522, %v2372, 0.0
  %v2529 = vsel %vm2523, %v2373, 0.0
  %v2530 = vsel %vm2524, %v2374, 0.0
  %v2531 = vadd.f32 %v2513, %v2525
  %v2532 = vadd.f32 %v2514, %v2526
  %v2533 = vadd.f32 %v2515, %v2527
  %v2534 = vadd.f32 %v2516, %v2528
  %v2535 = vadd.f32 %v2517, %v2529
  %v2536 = vadd.f32 %v2518, %v2530
  %v2537 = vsel %vm2423, %v2273, 0.0
  %v2538 = vsel %vm2424, %v2274, 0.0
  %v2539 = vsel %vm2425, %v2275, 0.0
  %v2540 = vsel %vm2426, %v2276, 0.0
  %v2541 = vsel %vm2427, %v2277, 0.0
  %v2542 = vsel %vm2428, %v2278, 0.0
  %v2543 = vsel %vm2471, %v2315, 0.0
  %v2544 = vsel %vm2472, %v2316, 0.0
  %v2545 = vsel %vm2473, %v2317, 0.0
  %v2546 = vsel %vm2474, %v2318, 0.0
  %v2547 = vsel %vm2475, %v2319, 0.0
  %v2548 = vsel %vm2476, %v2320, 0.0
  %v2549 = vadd.f32 %v2537, %v2543
  %v2550 = vadd.f32 %v2538, %v2544
  %v2551 = vadd.f32 %v2539, %v2545
  %v2552 = vadd.f32 %v2540, %v2546
  %v2553 = vadd.f32 %v2541, %v2547
  %v2554 = vadd.f32 %v2542, %v2548
  %v2555 = vsel %vm2519, %v2345, 0.0
  %v2556 = vsel %vm2520, %v2346, 0.0
  %v2557 = vsel %vm2521, %v2347, 0.0
  %v2558 = vsel %vm2522, %v2348, 0.0
  %v2559 = vsel %vm2523, %v2349, 0.0
  %v2560 = vsel %vm2524, %v2350, 0.0
  %v2561 = vadd.f32 %v2549, %v2555
  %v2562 = vadd.f32 %v2550, %v2556
  %v2563 = vadd.f32 %v2551, %v2557
  %v2564 = vadd.f32 %v2552, %v2558
  %v2565 = vadd.f32 %v2553, %v2559
  %v2566 = vadd.f32 %v2554, %v2560
  %vm2567 = vcmp.eq.f32.partialorder %v2249, 6.0
  %vm2568 = vcmp.eq.f32.partialorder %v2250, 6.0
  %vm2569 = vcmp.eq.f32.partialorder %v2251, 6.0
  %vm2570 = vcmp.eq.f32.partialorder %v2252, 6.0
  %vm2571 = vcmp.eq.f32.partialorder %v2253, 6.0
  %vm2572 = vcmp.eq.f32.partialorder %v2254, 6.0
  %v2573 = vsel %vm2567, %v2369, 0.0
  %v2574 = vsel %vm2568, %v2370, 0.0
  %v2575 = vsel %vm2569, %v2371, 0.0
  %v2576 = vsel %vm2570, %v2372, 0.0
  %v2577 = vsel %vm2571, %v2373, 0.0
  %v2578 = vsel %vm2572, %v2374, 0.0
  %v2579 = vadd.f32 %v2561, %v2573
  %v2580 = vadd.f32 %v2562, %v2574
  %v2581 = vadd.f32 %v2563, %v2575
  %v2582 = vadd.f32 %v2564, %v2576
  %v2583 = vadd.f32 %v2565, %v2577
  %v2584 = vadd.f32 %v2566, %v2578
  %v2585 = vsel %vm2471, %v2273, 0.0
  %v2586 = vsel %vm2472, %v2274, 0.0
  %v2587 = vsel %vm2473, %v2275, 0.0
  %v2588 = vsel %vm2474, %v2276, 0.0
  %v2589 = vsel %vm2475, %v2277, 0.0
  %v2590 = vsel %vm2476, %v2278, 0.0
  %v2591 = vsel %vm2519, %v2315, 0.0
  %v2592 = vsel %vm2520, %v2316, 0.0
  %v2593 = vsel %vm2521, %v2317, 0.0
  %v2594 = vsel %vm2522, %v2318, 0.0
  %v2595 = vsel %vm2523, %v2319, 0.0
  %v2596 = vsel %vm2524, %v2320, 0.0
  %v2597 = vadd.f32 %v2585, %v2591
  %v2598 = vadd.f32 %v2586, %v2592
  %v2599 = vadd.f32 %v2587, %v2593
  %v2600 = vadd.f32 %v2588, %v2594
  %v2601 = vadd.f32 %v2589, %v2595
  %v2602 = vadd.f32 %v2590, %v2596
  %v2603 = vsel %vm2567, %v2345, 0.0
  %v2604 = vsel %vm2568, %v2346, 0.0
  %v2605 = vsel %vm2569, %v2347, 0.0
  %v2606 = vsel %vm2570, %v2348, 0.0
  %v2607 = vsel %vm2571, %v2349, 0.0
  %v2608 = vsel %vm2572, %v2350, 0.0
  %v2609 = vadd.f32 %v2597, %v2603
  %v2610 = vadd.f32 %v2598, %v2604
  %v2611 = vadd.f32 %v2599, %v2605
  %v2612 = vadd.f32 %v2600, %v2606
  %v2613 = vadd.f32 %v2601, %v2607
  %v2614 = vadd.f32 %v2602, %v2608
  %vm2615 = vcmp.eq.f32.partialorder %v2249, 7.0
  %vm2616 = vcmp.eq.f32.partialorder %v2250, 7.0
  %vm2617 = vcmp.eq.f32.partialorder %v2251, 7.0
  %vm2618 = vcmp.eq.f32.partialorder %v2252, 7.0
  %vm2619 = vcmp.eq.f32.partialorder %v2253, 7.0
  %vm2620 = vcmp.eq.f32.partialorder %v2254, 7.0
  %v2621 = vsel %vm2615, %v2369, 0.0
  %v2622 = vsel %vm2616, %v2370, 0.0
  %v2623 = vsel %vm2617, %v2371, 0.0
  %v2624 = vsel %vm2618, %v2372, 0.0
  %v2625 = vsel %vm2619, %v2373, 0.0
  %v2626 = vsel %vm2620, %v2374, 0.0
  %v2627 = vadd.f32 %v2609, %v2621
  %v2628 = vadd.f32 %v2610, %v2622
  %v2629 = vadd.f32 %v2611, %v2623
  %v2630 = vadd.f32 %v2612, %v2624
  %v2631 = vadd.f32 %v2613, %v2625
  %v2632 = vadd.f32 %v2614, %v2626
  %v2633 = vsel %vm2519, %v2273, 0.0
  %v2634 = vsel %vm2520, %v2274, 0.0
  %v2635 = vsel %vm2521, %v2275, 0.0
  %v2636 = vsel %vm2522, %v2276, 0.0
  %v2637 = vsel %vm2523, %v2277, 0.0
  %v2638 = vsel %vm2524, %v2278, 0.0
  %v2639 = vsel %vm2567, %v2315, 0.0
  %v2640 = vsel %vm2568, %v2316, 0.0
  %v2641 = vsel %vm2569, %v2317, 0.0
  %v2642 = vsel %vm2570, %v2318, 0.0
  %v2643 = vsel %vm2571, %v2319, 0.0
  %v2644 = vsel %vm2572, %v2320, 0.0
  %v2645 = vadd.f32 %v2633, %v2639
  %v2646 = vadd.f32 %v2634, %v2640
  %v2647 = vadd.f32 %v2635, %v2641
  %v2648 = vadd.f32 %v2636, %v2642
  %v2649 = vadd.f32 %v2637, %v2643
  %v2650 = vadd.f32 %v2638, %v2644
  %v2651 = vsel %vm2615, %v2345, 0.0
  %v2652 = vsel %vm2616, %v2346, 0.0
  %v2653 = vsel %vm2617, %v2347, 0.0
  %v2654 = vsel %vm2618, %v2348, 0.0
  %v2655 = vsel %vm2619, %v2349, 0.0
  %v2656 = vsel %vm2620, %v2350, 0.0
  %v2657 = vadd.f32 %v2645, %v2651
  %v2658 = vadd.f32 %v2646, %v2652
  %v2659 = vadd.f32 %v2647, %v2653
  %v2660 = vadd.f32 %v2648, %v2654
  %v2661 = vadd.f32 %v2649, %v2655
  %v2662 = vadd.f32 %v2650, %v2656
  %vm2663 = vcmp.eq.f32.partialorder %v2249, 8.0
  %vm2664 = vcmp.eq.f32.partialorder %v2250, 8.0
  %vm2665 = vcmp.eq.f32.partialorder %v2251, 8.0
  %vm2666 = vcmp.eq.f32.partialorder %v2252, 8.0
  %vm2667 = vcmp.eq.f32.partialorder %v2253, 8.0
  %vm2668 = vcmp.eq.f32.partialorder %v2254, 8.0
  %v2669 = vsel %vm2663, %v2369, 0.0
  %v2670 = vsel %vm2664, %v2370, 0.0
  %v2671 = vsel %vm2665, %v2371, 0.0
  %v2672 = vsel %vm2666, %v2372, 0.0
  %v2673 = vsel %vm2667, %v2373, 0.0
  %v2674 = vsel %vm2668, %v2374, 0.0
  %v2675 = vadd.f32 %v2657, %v2669
  %v2676 = vadd.f32 %v2658, %v2670
  %v2677 = vadd.f32 %v2659, %v2671
  %v2678 = vadd.f32 %v2660, %v2672
  %v2679 = vadd.f32 %v2661, %v2673
  %v2680 = vadd.f32 %v2662, %v2674
  %v2681 = vsel %vm2567, %v2273, 0.0
  %v2682 = vsel %vm2568, %v2274, 0.0
  %v2683 = vsel %vm2569, %v2275, 0.0
  %v2684 = vsel %vm2570, %v2276, 0.0
  %v2685 = vsel %vm2571, %v2277, 0.0
  %v2686 = vsel %vm2572, %v2278, 0.0
  %v2687 = vsel %vm2615, %v2315, 0.0
  %v2688 = vsel %vm2616, %v2316, 0.0
  %v2689 = vsel %vm2617, %v2317, 0.0
  %v2690 = vsel %vm2618, %v2318, 0.0
  %v2691 = vsel %vm2619, %v2319, 0.0
  %v2692 = vsel %vm2620, %v2320, 0.0
  %v2693 = vadd.f32 %v2681, %v2687
  %v2694 = vadd.f32 %v2682, %v2688
  %v2695 = vadd.f32 %v2683, %v2689
  %v2696 = vadd.f32 %v2684, %v2690
  %v2697 = vadd.f32 %v2685, %v2691
  %v2698 = vadd.f32 %v2686, %v2692
  %v2699 = vsel %vm2663, %v2345, 0.0
  %v2700 = vsel %vm2664, %v2346, 0.0
  %v2701 = vsel %vm2665, %v2347, 0.0
  %v2702 = vsel %vm2666, %v2348, 0.0
  %v2703 = vsel %vm2667, %v2349, 0.0
  %v2704 = vsel %vm2668, %v2350, 0.0
  %v2705 = vadd.f32 %v2693, %v2699
  %v2706 = vadd.f32 %v2694, %v2700
  %v2707 = vadd.f32 %v2695, %v2701
  %v2708 = vadd.f32 %v2696, %v2702
  %v2709 = vadd.f32 %v2697, %v2703
  %v2710 = vadd.f32 %v2698, %v2704
  %vm2711 = vcmp.eq.f32.partialorder %v2249, 9.0
  %vm2712 = vcmp.eq.f32.partialorder %v2250, 9.0
  %vm2713 = vcmp.eq.f32.partialorder %v2251, 9.0
  %vm2714 = vcmp.eq.f32.partialorder %v2252, 9.0
  %vm2715 = vcmp.eq.f32.partialorder %v2253, 9.0
  %vm2716 = vcmp.eq.f32.partialorder %v2254, 9.0
  %v2717 = vsel %vm2711, %v2369, 0.0
  %v2718 = vsel %vm2712, %v2370, 0.0
  %v2719 = vsel %vm2713, %v2371, 0.0
  %v2720 = vsel %vm2714, %v2372, 0.0
  %v2721 = vsel %vm2715, %v2373, 0.0
  %v2722 = vsel %vm2716, %v2374, 0.0
  %v2723 = vadd.f32 %v2705, %v2717
  %v2724 = vadd.f32 %v2706, %v2718
  %v2725 = vadd.f32 %v2707, %v2719
  %v2726 = vadd.f32 %v2708, %v2720
  %v2727 = vadd.f32 %v2709, %v2721
  %v2728 = vadd.f32 %v2710, %v2722
  %v2729 = vsel %vm2615, %v2273, 0.0
  %v2730 = vsel %vm2616, %v2274, 0.0
  %v2731 = vsel %vm2617, %v2275, 0.0
  %v2732 = vsel %vm2618, %v2276, 0.0
  %v2733 = vsel %vm2619, %v2277, 0.0
  %v2734 = vsel %vm2620, %v2278, 0.0
  %v2735 = vsel %vm2663, %v2315, 0.0
  %v2736 = vsel %vm2664, %v2316, 0.0
  %v2737 = vsel %vm2665, %v2317, 0.0
  %v2738 = vsel %vm2666, %v2318, 0.0
  %v2739 = vsel %vm2667, %v2319, 0.0
  %v2740 = vsel %vm2668, %v2320, 0.0
  %v2741 = vadd.f32 %v2729, %v2735
  %v2742 = vadd.f32 %v2730, %v2736
  %v2743 = vadd.f32 %v2731, %v2737
  %v2744 = vadd.f32 %v2732, %v2738
  %v2745 = vadd.f32 %v2733, %v2739
  %v2746 = vadd.f32 %v2734, %v2740
  %v2747 = vsel %vm2711, %v2345, 0.0
  %v2748 = vsel %vm2712, %v2346, 0.0
  %v2749 = vsel %vm2713, %v2347, 0.0
  %v2750 = vsel %vm2714, %v2348, 0.0
  %v2751 = vsel %vm2715, %v2349, 0.0
  %v2752 = vsel %vm2716, %v2350, 0.0
  %v2753 = vadd.f32 %v2741, %v2747
  %v2754 = vadd.f32 %v2742, %v2748
  %v2755 = vadd.f32 %v2743, %v2749
  %v2756 = vadd.f32 %v2744, %v2750
  %v2757 = vadd.f32 %v2745, %v2751
  %v2758 = vadd.f32 %v2746, %v2752
  %vm2759 = vcmp.eq.f32.partialorder %v2249, 10.0
  %vm2760 = vcmp.eq.f32.partialorder %v2250, 10.0
  %vm2761 = vcmp.eq.f32.partialorder %v2251, 10.0
  %vm2762 = vcmp.eq.f32.partialorder %v2252, 10.0
  %vm2763 = vcmp.eq.f32.partialorder %v2253, 10.0
  %vm2764 = vcmp.eq.f32.partialorder %v2254, 10.0
  %v2765 = vsel %vm2759, %v2369, 0.0
  %v2766 = vsel %vm2760, %v2370, 0.0
  %v2767 = vsel %vm2761, %v2371, 0.0
  %v2768 = vsel %vm2762, %v2372, 0.0
  %v2769 = vsel %vm2763, %v2373, 0.0
  %v2770 = vsel %vm2764, %v2374, 0.0
  %v2771 = vadd.f32 %v2753, %v2765
  %v2772 = vadd.f32 %v2754, %v2766
  %v2773 = vadd.f32 %v2755, %v2767
  %v2774 = vadd.f32 %v2756, %v2768
  %v2775 = vadd.f32 %v2757, %v2769
  %v2776 = vadd.f32 %v2758, %v2770
  %2777 = vmatprep.subr.mxu0 %v2232
  %2778 = vmatpush1.msra.mxu0 %v2231
  %2779 = vmatprep.subr.mxu0 %v2235
  %2780 = vmatpush1.msra.mxu0 %v2234
  %2781 = vmatprep.subr.mxu0 %v2436
  %2782 = vmatpush1.msra.mxu0 %v2435
  %2783 = vmatprep.subr.mxu0 %v2439
  %2784 = vmatpush1.msra.mxu0 %v2438
  %2785 = vmatprep.subr.mxu0 %v2484
  %2786 = vmatpush1.msra.mxu0 %v2483
  %2787 = vmatprep.subr.mxu0 %v2487
  %2788 = vmatpush1.msra.mxu0 %v2486
  %2789 = vmatprep.subr.mxu0 %v2532
  %2790 = vmatpush1.msra.mxu0 %v2531
  %2791 = vmatprep.subr.mxu0 %v2535
  %2792 = vmatpush1.msra.mxu0 %v2534
  %2793 = vmatprep.subr.mxu0 %v2580
  %2794 = vmatpush1.msra.mxu0 %v2579
  %2795 = vmatprep.subr.mxu0 %v2583
  %2796 = vmatpush1.msra.mxu0 %v2582
  %2797 = vmatprep.subr.mxu0 %v2628
  %2798 = vmatpush1.msra.mxu0 %v2627
  %2799 = vmatprep.subr.mxu0 %v2631
  %2800 = vmatpush1.msra.mxu0 %v2630
  %2801 = vmatprep.subr.mxu0 %v2676
  %2802 = vmatpush1.msra.mxu0 %v2675
  %2803 = vmatprep.subr.mxu0 %v2679
  %2804 = vmatpush1.msra.mxu0 %v2678
  %2805 = vmatprep.subr.mxu0 %v2724
  %2806 = vmatpush1.msra.mxu0 %v2723
  %2807 = vmatprep.subr.mxu0 %v2727
  %2808 = vmatpush1.msra.mxu0 %v2726
  %2809 = vmatprep.subr.mxu0 %v2772
  %2810 = vmatpush1.msra.mxu0 %v2771
  %2811 = vmatprep.subr.mxu0 %v2775
  %2812 = vmatpush1.msra.mxu0 %v2774
  %2813 = vmatprep.subr.mxu0 0.0
  %2814 = vmatpush1.msra.mxu0 0.0
  %2815 = vmatprep.subr.mxu0 0.0
  %2816 = vmatpush1.msra.mxu0 0.0
  %2817 = vmatprep.subr.mxu0 0.0
  %2818 = vmatpush1.msra.mxu0 0.0
  %2819 = vmatprep.subr.mxu0 0.0
  %2820 = vmatpush1.msra.mxu0 0.0
  %2821 = vmatprep.subr.mxu0 0.0
  %2822 = vmatpush1.msra.mxu0 0.0
  %2823 = vmatprep.subr.mxu0 0.0
  %2824 = vmatpush1.msra.mxu0 0.0
  %2825 = vmatprep.subr.mxu0 0.0
  %2826 = vmatpush1.msra.mxu0 0.0
  %2827 = vmatprep.subr.mxu0 0.0
  %2828 = vmatpush1.msra.mxu0 0.0
  %2829 = vmatprep.subr.mxu0 0.0
  %2830 = vmatpush1.msra.mxu0 0.0
  %2831 = vmatprep.subr.mxu0 0.0
  %2832 = vmatpush1.msra.mxu0 0.0
  %2833 = vmatprep.subr.mxu0 0.0
  %2834 = vmatpush1.msra.mxu0 0.0
  %2835 = vmatprep.subr.mxu0 0.0
  %2836 = vmatpush1.msra.mxu0 0.0
  %2837 = vmatprep.subr.mxu0 0.0
  %2838 = vmatpush1.msra.mxu0 0.0
  %2839 = vmatprep.subr.mxu0 0.0
  %2840 = vmatpush1.msra.mxu0 0.0
  %2841 = vmatprep.mubr.f32.mxu0 %v597
  %2842 = vmatmul.mubr.f32.gmra.mrb[0].mxu0 %v11
  %v2843 = vpop.f32.mrb[0].mxu0
  %v2844 = vadd.f32 0.0, %v2843
  %v2845 = vpop.f32.mrb[0].mxu0
  %v2846 = vadd.f32 0.0, %v2845
  %2847 = vdwg.mxu0
  %2848 = vmatprep.subr.mxu0 0.0
  %2849 = vmatpush1.msra.mxu0 %v2233
  %2850 = vmatprep.subr.mxu0 0.0
  %2851 = vmatpush1.msra.mxu0 %v2236
  %2852 = vmatprep.subr.mxu0 0.0
  %2853 = vmatpush1.msra.mxu0 %v2437
  %2854 = vmatprep.subr.mxu0 0.0
  %2855 = vmatpush1.msra.mxu0 %v2440
  %2856 = vmatprep.subr.mxu0 0.0
  %2857 = vmatpush1.msra.mxu0 %v2485
  %2858 = vmatprep.subr.mxu0 0.0
  %2859 = vmatpush1.msra.mxu0 %v2488
  %2860 = vmatprep.subr.mxu0 0.0
  %2861 = vmatpush1.msra.mxu0 %v2533
  %2862 = vmatprep.subr.mxu0 0.0
  %2863 = vmatpush1.msra.mxu0 %v2536
  %2864 = vmatprep.subr.mxu0 0.0
  %2865 = vmatpush1.msra.mxu0 %v2581
  %2866 = vmatprep.subr.mxu0 0.0
  %2867 = vmatpush1.msra.mxu0 %v2584
  %2868 = vmatprep.subr.mxu0 0.0
  %2869 = vmatpush1.msra.mxu0 %v2629
  %2870 = vmatprep.subr.mxu0 0.0
  %2871 = vmatpush1.msra.mxu0 %v2632
  %2872 = vmatprep.subr.mxu0 0.0
  %2873 = vmatpush1.msra.mxu0 %v2677
  %2874 = vmatprep.subr.mxu0 0.0
  %2875 = vmatpush1.msra.mxu0 %v2680
  %2876 = vmatprep.subr.mxu0 0.0
  %2877 = vmatpush1.msra.mxu0 %v2725
  %2878 = vmatprep.subr.mxu0 0.0
  %2879 = vmatpush1.msra.mxu0 %v2728
  %2880 = vmatprep.subr.mxu0 0.0
  %2881 = vmatpush1.msra.mxu0 %v2773
  %2882 = vmatprep.subr.mxu0 0.0
  %2883 = vmatpush1.msra.mxu0 %v2776
  %2884 = vmatprep.subr.mxu0 0.0
  %2885 = vmatpush1.msra.mxu0 0.0
  %2886 = vmatprep.subr.mxu0 0.0
  %2887 = vmatpush1.msra.mxu0 0.0
  %2888 = vmatprep.subr.mxu0 0.0
  %2889 = vmatpush1.msra.mxu0 0.0
  %2890 = vmatprep.subr.mxu0 0.0
  %2891 = vmatpush1.msra.mxu0 0.0
  %2892 = vmatprep.subr.mxu0 0.0
  %2893 = vmatpush1.msra.mxu0 0.0
  %2894 = vmatprep.subr.mxu0 0.0
  %2895 = vmatpush1.msra.mxu0 0.0
  %2896 = vmatprep.subr.mxu0 0.0
  %2897 = vmatpush1.msra.mxu0 0.0
  %2898 = vmatprep.subr.mxu0 0.0
  %2899 = vmatpush1.msra.mxu0 0.0
  %2900 = vmatprep.subr.mxu0 0.0
  %2901 = vmatpush1.msra.mxu0 0.0
  %2902 = vmatprep.subr.mxu0 0.0
  %2903 = vmatpush1.msra.mxu0 0.0
  %2904 = vmatprep.subr.mxu0 0.0
  %2905 = vmatpush1.msra.mxu0 0.0
  %2906 = vmatprep.subr.mxu0 0.0
  %2907 = vmatpush1.msra.mxu0 0.0
  %2908 = vmatprep.subr.mxu0 0.0
  %2909 = vmatpush1.msra.mxu0 0.0
  %2910 = vmatprep.subr.mxu0 0.0
  %2911 = vmatpush1.msra.mxu0 0.0
  %2912 = vmatprep.mubr.f32.mxu0 %v597
  %2913 = vmatmul.mubr.f32.gmra.mrb[0].mxu0 %v11
  %v2914 = vpop.f32.mrb[0].mxu0
  %v2915 = vadd.f32 0.0, %v2914
  %v2916 = vpop.f32.mrb[0].mxu0
  %2917 = vdwg.mxu0
  %v2918 = vmax.f32 %v2191, %v2844
  %v2919 = vmax.f32 %v2192, %v2846
  %v2920 = vmax.f32 %v2193, %v2915
  %2921 = vst [vmem:[%s2] sm:$0x1f] %v2918
  %2922 = vst [vmem:[%s2 + $0x8] sm:$0x1f] %v2919
  %vm2923 = vcmask 667648
  %2924 = vst.msk [vmem:[%s2 + $0x10] sm:$0x1f] %vm2923, %v2920
  // Predicated region
  $region10: #{kanc_hdc_forward.3} parent=0 // pred_check
    _
  $region11: #{kanc_hdc_forward.3} parent=0 // pred_check_branch
    %2926 = sbr.rel (0) target = $region13
  $region12: #{kanc_hdc_forward.3} parent=0 // pred_region
    _
  $region13: #{kanc_hdc_forward.3} parent=0 // pred_fallthru
    _
  // Predicated region
  $region14: #{kanc_hdc_forward.3} parent=0 // pred_check
    _
  $region15: #{kanc_hdc_forward.3} parent=0 // pred_check_branch
    %2928 = sbr.rel (0) target = $region17
  $region16: #{kanc_hdc_forward.3} parent=0 // pred_region
    _
  $region17: #{kanc_hdc_forward.3} parent=0 // pred_fallthru
    _

// kernel: kanc_hdc_forward.4
$region0: #{kanc_hdc_forward.4}
  #allocation0 [shape = 'u32[]', space=smem, size = 0x4, offset = 0x4, fixed_abs, tag = 'smem constant byte address 0x4 - core index']
  #allocation1 [shape = 'u32[144,128]{1,0:T(1,128)}', space=vmem, size = 0x12000, scoped, tag = 'internal scratch']
  %s0 = inlined_call_operand.vmem [shape: f32[128,162], index: 0, kind: input, shape index: {}]
  %s1 = inlined_call_operand.vmem [shape: f32[5,1152], index: 1, kind: input, shape index: {}]
  %s2 = inlined_call_operand.vmem [shape: f32[5,162], index: 2, kind: output, shape index: {}]
  %s3 = sld [smem:[#allocation0]]
  $region18: #{kanc_hdc_forward.4} parent=0
    _
  %s5 = ssub.s32 1, %s3
  %s6 = scalar_select 0, %s5, %s3
  // Predicated region
  $region2: #{kanc_hdc_forward.4} parent=0 // pred_check
    _
  $region3: #{kanc_hdc_forward.4} parent=0 // pred_check_branch
    %8 = sbr.rel (0) target = $region5
  $region4: #{kanc_hdc_forward.4} parent=0 // pred_region
    _
  $region5: #{kanc_hdc_forward.4} parent=0 // pred_fallthru
    _
  // Predicated region
  $region6: #{kanc_hdc_forward.4} parent=0 // pred_check
    _
  $region7: #{kanc_hdc_forward.4} parent=0 // pred_check_branch
    %10 = sbr.rel (0) target = $region9
  $region8: #{kanc_hdc_forward.4} parent=0 // pred_region
    _
  $region9: #{kanc_hdc_forward.4} parent=0 // pred_fallthru
    _
  %v11 = vld [vmem:[%s0] sm:$0xff]
  %v12 = vld [vmem:[%s0 + $0x8] sm:$0xff]
  %v13 = vld [vmem:[%s0 + $0x10] sm:$0xff]
  %v14 = vld [vmem:[%s0 + $0x18] sm:$0xff]
  %v15 = vld [vmem:[%s0 + $0x20] sm:$0xff]
  %v16 = vld [vmem:[%s0 + $0x28] sm:$0xff]
  %v17 = vld [vmem:[%s0 + $0x30] sm:$0xff]
  %v18 = vld [vmem:[%s0 + $0x38] sm:$0xff]
  %v19 = vld [vmem:[%s0 + $0x40] sm:$0xff]
  %v20 = vld [vmem:[%s0 + $0x48] sm:$0xff]
  %v21 = vld [vmem:[%s0 + $0x50] sm:$0xff]
  %v22 = vld [vmem:[%s0 + $0x58] sm:$0xff]
  %v23 = vld [vmem:[%s0 + $0x60] sm:$0xff]
  %v24 = vld [vmem:[%s0 + $0x68] sm:$0xff]
  %v25 = vld [vmem:[%s0 + $0x70] sm:$0xff]
  %v26 = vld [vmem:[%s0 + $0x78] sm:$0xff]
  %v27 = vld [vmem:[%s0 + $0x80] sm:$0xff]
  %v28 = vld [vmem:[%s0 + $0x88] sm:$0xff]
  %v29 = vld [vmem:[%s0 + $0x90] sm:$0xff]
  %v30 = vld [vmem:[%s0 + $0x98] sm:$0xff]
  %v31 = vld [vmem:[%s0 + $0xa0] sm:$0xff]
  %v32 = vld [vmem:[%s0 + $0xa8] sm:$0xff]
  %v33 = vld [vmem:[%s0 + $0xb0] sm:$0xff]
  %v34 = vld [vmem:[%s0 + $0xb8] sm:$0xff]
  %v35 = vld [vmem:[%s0 + $0xc0] sm:$0xff]
  %v36 = vld [vmem:[%s0 + $0xc8] sm:$0xff]
  %v37 = vld [vmem:[%s0 + $0xd0] sm:$0xff]
  %v38 = vld [vmem:[%s0 + $0xd8] sm:$0xff]
  %v39 = vld [vmem:[%s0 + $0xe0] sm:$0xff]
  %v40 = vld [vmem:[%s0 + $0xe8] sm:$0xff]
  %v41 = vld [vmem:[%s0 + $0xf0] sm:$0xff]
  %v42 = vld [vmem:[%s0 + $0xf8] sm:$0xff]
  %v43 = vsub.f32 0.0, %v11
  %v44 = vsub.f32 0.0, %v12
  %v45 = vsub.f32 0.0, %v13
  %v46 = vsub.f32 0.0, %v14
  %v47 = vsub.f32 0.0, %v15
  %v48 = vsub.f32 0.0, %v16
  %v49 = vsub.f32 0.0, %v17
  %v50 = vsub.f32 0.0, %v18
  %v51 = vsub.f32 0.0, %v19
  %v52 = vsub.f32 0.0, %v20
  %v53 = vsub.f32 0.0, %v21
  %v54 = vsub.f32 0.0, %v22
  %v55 = vsub.f32 0.0, %v23
  %v56 = vsub.f32 0.0, %v24
  %v57 = vsub.f32 0.0, %v25
  %v58 = vsub.f32 0.0, %v26
  %v59 = vsub.f32 0.0, %v27
  %v60 = vsub.f32 0.0, %v28
  %v61 = vsub.f32 0.0, %v29
  %v62 = vsub.f32 0.0, %v30
  %v63 = vsub.f32 0.0, %v31
  %v64 = vsub.f32 0.0, %v32
  %v65 = vsub.f32 0.0, %v33
  %v66 = vsub.f32 0.0, %v34
  %v67 = vsub.f32 0.0, %v35
  %v68 = vsub.f32 0.0, %v36
  %v69 = vsub.f32 0.0, %v37
  %v70 = vsub.f32 0.0, %v38
  %v71 = vsub.f32 0.0, %v39
  %v72 = vsub.f32 0.0, %v40
  %v73 = vsub.f32 0.0, %v41
  %v74 = vsub.f32 0.0, %v42
  %v75 = vmul.f32 %v43, 1.442695
  %v76 = vpow.pop %v75
  %v77 = vmul.f32 %v44, 1.442695
  %v78 = vpow.pop %v77
  %v79 = vmul.f32 %v45, 1.442695
  %v80 = vpow.pop %v79
  %v81 = vmul.f32 %v46, 1.442695
  %v82 = vpow.pop %v81
  %v83 = vmul.f32 %v47, 1.442695
  %v84 = vpow.pop %v83
  %v85 = vmul.f32 %v48, 1.442695
  %v86 = vpow.pop %v85
  %v87 = vmul.f32 %v49, 1.442695
  %v88 = vpow.pop %v87
  %v89 = vmul.f32 %v50, 1.442695
  %v90 = vpow.pop %v89
  %v91 = vmul.f32 %v51, 1.442695
  %v92 = vpow.pop %v91
  %v93 = vmul.f32 %v52, 1.442695
  %v94 = vpow.pop %v93
  %v95 = vmul.f32 %v53, 1.442695
  %v96 = vpow.pop %v95
  %v97 = vmul.f32 %v54, 1.442695
  %v98 = vpow.pop %v97
  %v99 = vmul.f32 %v55, 1.442695
  %v100 = vpow.pop %v99
  %v101 = vmul.f32 %v56, 1.442695
  %v102 = vpow.pop %v101
  %v103 = vmul.f32 %v57, 1.442695
  %v104 = vpow.pop %v103
  %v105 = vmul.f32 %v58, 1.442695
  %v106 = vpow.pop %v105
  %v107 = vmul.f32 %v59, 1.442695
  %v108 = vpow.pop %v107
  %v109 = vmul.f32 %v60, 1.442695
  %v110 = vpow.pop %v109
  %v111 = vmul.f32 %v61, 1.442695
  %v112 = vpow.pop %v111
  %v113 = vmul.f32 %v62, 1.442695
  %v114 = vpow.pop %v113
  %v115 = vmul.f32 %v63, 1.442695
  %v116 = vpow.pop %v115
  %v117 = vmul.f32 %v64, 1.442695
  %v118 = vpow.pop %v117
  %v119 = vmul.f32 %v65, 1.442695
  %v120 = vpow.pop %v119
  %v121 = vmul.f32 %v66, 1.442695
  %v122 = vpow.pop %v121
  %v123 = vmul.f32 %v67, 1.442695
  %v124 = vpow.pop %v123
  %v125 = vmul.f32 %v68, 1.442695
  %v126 = vpow.pop %v125
  %v127 = vmul.f32 %v69, 1.442695
  %v128 = vpow.pop %v127
  %v129 = vmul.f32 %v70, 1.442695
  %v130 = vpow.pop %v129
  %v131 = vmul.f32 %v71, 1.442695
  %v132 = vpow.pop %v131
  %v133 = vmul.f32 %v72, 1.442695
  %v134 = vpow.pop %v133
  %v135 = vmul.f32 %v73, 1.442695
  %v136 = vpow.pop %v135
  %v137 = vmul.f32 %v74, 1.442695
  %v138 = vpow.pop %v137
  %v139 = vadd.f32 %v76, 1.0
  %v140 = vadd.f32 %v78, 1.0
  %v141 = vadd.f32 %v80, 1.0
  %v142 = vadd.f32 %v82, 1.0
  %v143 = vadd.f32 %v84, 1.0
  %v144 = vadd.f32 %v86, 1.0
  %v145 = vadd.f32 %v88, 1.0
  %v146 = vadd.f32 %v90, 1.0
  %v147 = vadd.f32 %v92, 1.0
  %v148 = vadd.f32 %v94, 1.0
  %v149 = vadd.f32 %v96, 1.0
  %v150 = vadd.f32 %v98, 1.0
  %v151 = vadd.f32 %v100, 1.0
  %v152 = vadd.f32 %v102, 1.0
  %v153 = vadd.f32 %v104, 1.0
  %v154 = vadd.f32 %v106, 1.0
  %v155 = vadd.f32 %v108, 1.0
  %v156 = vadd.f32 %v110, 1.0
  %v157 = vadd.f32 %v112, 1.0
  %v158 = vadd.f32 %v114, 1.0
  %v159 = vadd.f32 %v116, 1.0
  %v160 = vadd.f32 %v118, 1.0
  %v161 = vadd.f32 %v120, 1.0
  %v162 = vadd.f32 %v122, 1.0
  %v163 = vadd.f32 %v124, 1.0
  %v164 = vadd.f32 %v126, 1.0
  %v165 = vadd.f32 %v128, 1.0
  %v166 = vadd.f32 %v130, 1.0
  %v167 = vadd.f32 %v132, 1.0
  %v168 = vadd.f32 %v134, 1.0
  %v169 = vadd.f32 %v136, 1.0
  %v170 = vadd.f32 %v138, 1.0
  %v171 = vrcp.pop %v139
  %v172 = vrcp.pop %v140
  %v173 = vrcp.pop %v141
  %v174 = vrcp.pop %v142
  %v175 = vrcp.pop %v143
  %v176 = vrcp.pop %v144
  %v177 = vrcp.pop %v145
  %v178 = vrcp.pop %v146
  %v179 = vrcp.pop %v147
  %v180 = vrcp.pop %v148
  %v181 = vrcp.pop %v149
  %v182 = vrcp.pop %v150
  %v183 = vrcp.pop %v151
  %v184 = vrcp.pop %v152
  %v185 = vrcp.pop %v153
  %v186 = vrcp.pop %v154
  %v187 = vrcp.pop %v155
  %v188 = vrcp.pop %v156
  %v189 = vrcp.pop %v157
  %v190 = vrcp.pop %v158
  %v191 = vrcp.pop %v159
  %v192 = vrcp.pop %v160
  %v193 = vrcp.pop %v161
  %v194 = vrcp.pop %v162
  %v195 = vrcp.pop %v163
  %v196 = vrcp.pop %v164
  %v197 = vrcp.pop %v165
  %v198 = vrcp.pop %v166
  %v199 = vrcp.pop %v167
  %v200 = vrcp.pop %v168
  %v201 = vrcp.pop %v169
  %v202 = vrcp.pop %v170
  %v203 = vmul.f32 %v11, %v171
  %v204 = vmul.f32 %v12, %v172
  %v205 = vmul.f32 %v13, %v173
  %v206 = vmul.f32 %v14, %v174
  %v207 = vmul.f32 %v15, %v175
  %v208 = vmul.f32 %v16, %v176
  %v209 = vmul.f32 %v17, %v177
  %v210 = vmul.f32 %v18, %v178
  %v211 = vmul.f32 %v19, %v179
  %v212 = vmul.f32 %v20, %v180
  %v213 = vmul.f32 %v21, %v181
  %v214 = vmul.f32 %v22, %v182
  %v215 = vmul.f32 %v23, %v183
  %v216 = vmul.f32 %v24, %v184
  %v217 = vmul.f32 %v25, %v185
  %v218 = vmul.f32 %v26, %v186
  %v219 = vmul.f32 %v27, %v187
  %v220 = vmul.f32 %v28, %v188
  %v221 = vmul.f32 %v29, %v189
  %v222 = vmul.f32 %v30, %v190
  %v223 = vmul.f32 %v31, %v191
  %v224 = vmul.f32 %v32, %v192
  %v225 = vmul.f32 %v33, %v193
  %v226 = vmul.f32 %v34, %v194
  %v227 = vmul.f32 %v35, %v195
  %v228 = vmul.f32 %v36, %v196
  %v229 = vmul.f32 %v37, %v197
  %v230 = vmul.f32 %v38, %v198
  %v231 = vmul.f32 %v39, %v199
  %v232 = vmul.f32 %v40, %v200
  %v233 = vmul.f32 %v41, %v201
  %v234 = vmul.f32 %v42, %v202
  %v235 = vsub.f32 %v11, -2.2
  %v236 = vsub.f32 %v12, -2.2
  %v237 = vsub.f32 %v13, -2.2
  %v238 = vsub.f32 %v14, -2.2
  %v239 = vsub.f32 %v15, -2.2
  %v240 = vsub.f32 %v16, -2.2
  %v241 = vsub.f32 %v17, -2.2
  %v242 = vsub.f32 %v18, -2.2
  %v243 = vsub.f32 %v19, -2.2
  %v244 = vsub.f32 %v20, -2.2
  %v245 = vsub.f32 %v21, -2.2
  %v246 = vsub.f32 %v22, -2.2
  %v247 = vsub.f32 %v23, -2.2
  %v248 = vsub.f32 %v24, -2.2
  %v249 = vsub.f32 %v25, -2.2
  %v250 = vsub.f32 %v26, -2.2
  %v251 = vsub.f32 %v27, -2.2
  %v252 = vsub.f32 %v28, -2.2
  %v253 = vsub.f32 %v29, -2.2
  %v254 = vsub.f32 %v30, -2.2
  %v255 = vsub.f32 %v31, -2.2
  %v256 = vsub.f32 %v32, -2.2
  %v257 = vsub.f32 %v33, -2.2
  %v258 = vsub.f32 %v34, -2.2
  %v259 = vsub.f32 %v35, -2.2
  %v260 = vsub.f32 %v36, -2.2
  %v261 = vsub.f32 %v37, -2.2
  %v262 = vsub.f32 %v38, -2.2
  %v263 = vsub.f32 %v39, -2.2
  %v264 = vsub.f32 %v40, -2.2
  %v265 = vsub.f32 %v41, -2.2
  %v266 = vsub.f32 %v42, -2.2
  %v267 = vmul.f32 %v235, 2.5
  %v268 = vmul.f32 %v236, 2.5
  %v269 = vmul.f32 %v237, 2.5
  %v270 = vmul.f32 %v238, 2.5
  %v271 = vmul.f32 %v239, 2.5
  %v272 = vmul.f32 %v240, 2.5
  %v273 = vmul.f32 %v241, 2.5
  %v274 = vmul.f32 %v242, 2.5
  %v275 = vmul.f32 %v243, 2.5
  %v276 = vmul.f32 %v244, 2.5
  %v277 = vmul.f32 %v245, 2.5
  %v278 = vmul.f32 %v246, 2.5
  %v279 = vmul.f32 %v247, 2.5
  %v280 = vmul.f32 %v248, 2.5
  %v281 = vmul.f32 %v249, 2.5
  %v282 = vmul.f32 %v250, 2.5
  %v283 = vmul.f32 %v251, 2.5
  %v284 = vmul.f32 %v252, 2.5
  %v285 = vmul.f32 %v253, 2.5
  %v286 = vmul.f32 %v254, 2.5
  %v287 = vmul.f32 %v255, 2.5
  %v288 = vmul.f32 %v256, 2.5
  %v289 = vmul.f32 %v257, 2.5
  %v290 = vmul.f32 %v258, 2.5
  %v291 = vmul.f32 %v259, 2.5
  %v292 = vmul.f32 %v260, 2.5
  %v293 = vmul.f32 %v261, 2.5
  %v294 = vmul.f32 %v262, 2.5
  %v295 = vmul.f32 %v263, 2.5
  %v296 = vmul.f32 %v264, 2.5
  %v297 = vmul.f32 %v265, 2.5
  %v298 = vmul.f32 %v266, 2.5
  %v299 = vfloor.f32 %v267
  %v300 = vfloor.f32 %v268
  %v301 = vfloor.f32 %v269
  %v302 = vfloor.f32 %v270
  %v303 = vfloor.f32 %v271
  %v304 = vfloor.f32 %v272
  %v305 = vfloor.f32 %v273
  %v306 = vfloor.f32 %v274
  %v307 = vfloor.f32 %v275
  %v308 = vfloor.f32 %v276
  %v309 = vfloor.f32 %v277
  %v310 = vfloor.f32 %v278
  %v311 = vfloor.f32 %v279
  %v312 = vfloor.f32 %v280
  %v313 = vfloor.f32 %v281
  %v314 = vfloor.f32 %v282
  %v315 = vfloor.f32 %v283
  %v316 = vfloor.f32 %v284
  %v317 = vfloor.f32 %v285
  %v318 = vfloor.f32 %v286
  %v319 = vfloor.f32 %v287
  %v320 = vfloor.f32 %v288
  %v321 = vfloor.f32 %v289
  %v322 = vfloor.f32 %v290
  %v323 = vfloor.f32 %v291
  %v324 = vfloor.f32 %v292
  %v325 = vfloor.f32 %v293
  %v326 = vfloor.f32 %v294
  %v327 = vfloor.f32 %v295
  %v328 = vfloor.f32 %v296
  %v329 = vfloor.f32 %v297
  %v330 = vfloor.f32 %v298
  %v331 = vsub.f32 %v267, %v299
  %v332 = vsub.f32 %v268, %v300
  %v333 = vsub.f32 %v269, %v301
  %v334 = vsub.f32 %v270, %v302
  %v335 = vsub.f32 %v271, %v303
  %v336 = vsub.f32 %v272, %v304
  %v337 = vsub.f32 %v273, %v305
  %v338 = vsub.f32 %v274, %v306
  %v339 = vsub.f32 %v275, %v307
  %v340 = vsub.f32 %v276, %v308
  %v341 = vsub.f32 %v277, %v309
  %v342 = vsub.f32 %v278, %v310
  %v343 = vsub.f32 %v279, %v311
  %v344 = vsub.f32 %v280, %v312
  %v345 = vsub.f32 %v281, %v313
  %v346 = vsub.f32 %v282, %v314
  %v347 = vsub.f32 %v283, %v315
  %v348 = vsub.f32 %v284, %v316
  %v349 = vsub.f32 %v285, %v317
  %v350 = vsub.f32 %v286, %v318
  %v351 = vsub.f32 %v287, %v319
  %v352 = vsub.f32 %v288, %v320
  %v353 = vsub.f32 %v289, %v321
  %v354 = vsub.f32 %v290, %v322
  %v355 = vsub.f32 %v291, %v323
  %v356 = vsub.f32 %v292, %v324
  %v357 = vsub.f32 %v293, %v325
  %v358 = vsub.f32 %v294, %v326
  %v359 = vsub.f32 %v295, %v327
  %v360 = vsub.f32 %v296, %v328
  %v361 = vsub.f32 %v297, %v329
  %v362 = vsub.f32 %v298, %v330
  %v363 = vmul.f32 %v331, %v331
  %v364 = vmul.f32 %v332, %v332
  %v365 = vmul.f32 %v333, %v333
  %v366 = vmul.f32 %v334, %v334
  %v367 = vmul.f32 %v335, %v335
  %v368 = vmul.f32 %v336, %v336
  %v369 = vmul.f32 %v337, %v337
  %v370 = vmul.f32 %v338, %v338
  %v371 = vmul.f32 %v339, %v339
  %v372 = vmul.f32 %v340, %v340
  %v373 = vmul.f32 %v341, %v341
  %v374 = vmul.f32 %v342, %v342
  %v375 = vmul.f32 %v343, %v343
  %v376 = vmul.f32 %v344, %v344
  %v377 = vmul.f32 %v345, %v345
  %v378 = vmul.f32 %v346, %v346
  %v379 = vmul.f32 %v347, %v347
  %v380 = vmul.f32 %v348, %v348
  %v381 = vmul.f32 %v349, %v349
  %v382 = vmul.f32 %v350, %v350
  %v383 = vmul.f32 %v351, %v351
  %v384 = vmul.f32 %v352, %v352
  %v385 = vmul.f32 %v353, %v353
  %v386 = vmul.f32 %v354, %v354
  %v387 = vmul.f32 %v355, %v355
  %v388 = vmul.f32 %v356, %v356
  %v389 = vmul.f32 %v357, %v357
  %v390 = vmul.f32 %v358, %v358
  %v391 = vmul.f32 %v359, %v359
  %v392 = vmul.f32 %v360, %v360
  %v393 = vmul.f32 %v361, %v361
  %v394 = vmul.f32 %v362, %v362
  %v395 = vmul.f32 %v363, %v331
  %v396 = vmul.f32 %v364, %v332
  %v397 = vmul.f32 %v365, %v333
  %v398 = vmul.f32 %v366, %v334
  %v399 = vmul.f32 %v367, %v335
  %v400 = vmul.f32 %v368, %v336
  %v401 = vmul.f32 %v369, %v337
  %v402 = vmul.f32 %v370, %v338
  %v403 = vmul.f32 %v371, %v339
  %v404 = vmul.f32 %v372, %v340
  %v405 = vmul.f32 %v373, %v341
  %v406 = vmul.f32 %v374, %v342
  %v407 = vmul.f32 %v375, %v343
  %v408 = vmul.f32 %v376, %v344
  %v409 = vmul.f32 %v377, %v345
  %v410 = vmul.f32 %v378, %v346
  %v411 = vmul.f32 %v379, %v347
  %v412 = vmul.f32 %v380, %v348
  %v413 = vmul.f32 %v381, %v349
  %v414 = vmul.f32 %v382, %v350
  %v415 = vmul.f32 %v383, %v351
  %v416 = vmul.f32 %v384, %v352
  %v417 = vmul.f32 %v385, %v353
  %v418 = vmul.f32 %v386, %v354
  %v419 = vmul.f32 %v387, %v355
  %v420 = vmul.f32 %v388, %v356
  %v421 = vmul.f32 %v389, %v357
  %v422 = vmul.f32 %v390, %v358
  %v423 = vmul.f32 %v391, %v359
  %v424 = vmul.f32 %v392, %v360
  %v425 = vmul.f32 %v393, %v361
  %v426 = vmul.f32 %v394, %v362
  %v427 = vmul.f32 %v395, 0.16666667
  %v428 = vmul.f32 %v396, 0.16666667
  %v429 = vmul.f32 %v397, 0.16666667
  %v430 = vmul.f32 %v398, 0.16666667
  %v431 = vmul.f32 %v399, 0.16666667
  %v432 = vmul.f32 %v400, 0.16666667
  %v433 = vmul.f32 %v401, 0.16666667
  %v434 = vmul.f32 %v402, 0.16666667
  %v435 = vmul.f32 %v403, 0.16666667
  %v436 = vmul.f32 %v404, 0.16666667
  %v437 = vmul.f32 %v405, 0.16666667
  %v438 = vmul.f32 %v406, 0.16666667
  %v439 = vmul.f32 %v407, 0.16666667
  %v440 = vmul.f32 %v408, 0.16666667
  %v441 = vmul.f32 %v409, 0.16666667
  %v442 = vmul.f32 %v410, 0.16666667
  %v443 = vmul.f32 %v411, 0.16666667
  %v444 = vmul.f32 %v412, 0.16666667
  %v445 = vmul.f32 %v413, 0.16666667
  %v446 = vmul.f32 %v414, 0.16666667
  %v447 = vmul.f32 %v415, 0.16666667
  %v448 = vmul.f32 %v416, 0.16666667
  %v449 = vmul.f32 %v417, 0.16666667
  %v450 = vmul.f32 %v418, 0.16666667
  %v451 = vmul.f32 %v419, 0.16666667
  %v452 = vmul.f32 %v420, 0.16666667
  %v453 = vmul.f32 %v421, 0.16666667
  %v454 = vmul.f32 %v422, 0.16666667
  %v455 = vmul.f32 %v423, 0.16666667
  %v456 = vmul.f32 %v424, 0.16666667
  %v457 = vmul.f32 %v425, 0.16666667
  %v458 = vmul.f32 %v426, 0.16666667
  %v459 = vmul.f32 %v331, -3.0
  %v460 = vmul.f32 %v332, -3.0
  %v461 = vmul.f32 %v333, -3.0
  %v462 = vmul.f32 %v334, -3.0
  %v463 = vmul.f32 %v335, -3.0
  %v464 = vmul.f32 %v336, -3.0
  %v465 = vmul.f32 %v337, -3.0
  %v466 = vmul.f32 %v338, -3.0
  %v467 = vmul.f32 %v339, -3.0
  %v468 = vmul.f32 %v340, -3.0
  %v469 = vmul.f32 %v341, -3.0
  %v470 = vmul.f32 %v342, -3.0
  %v471 = vmul.f32 %v343, -3.0
  %v472 = vmul.f32 %v344, -3.0
  %v473 = vmul.f32 %v345, -3.0
  %v474 = vmul.f32 %v346, -3.0
  %v475 = vmul.f32 %v347, -3.0
  %v476 = vmul.f32 %v348, -3.0
  %v477 = vmul.f32 %v349, -3.0
  %v478 = vmul.f32 %v350, -3.0
  %v479 = vmul.f32 %v351, -3.0
  %v480 = vmul.f32 %v352, -3.0
  %v481 = vmul.f32 %v353, -3.0
  %v482 = vmul.f32 %v354, -3.0
  %v483 = vmul.f32 %v355, -3.0
  %v484 = vmul.f32 %v356, -3.0
  %v485 = vmul.f32 %v357, -3.0
  %v486 = vmul.f32 %v358, -3.0
  %v487 = vmul.f32 %v359, -3.0
  %v488 = vmul.f32 %v360, -3.0
  %v489 = vmul.f32 %v361, -3.0
  %v490 = vmul.f32 %v362, -3.0
  %v491 = vadd.f32 %v459, 3.0
  %v492 = vadd.f32 %v460, 3.0
  %v493 = vadd.f32 %v461, 3.0
  %v494 = vadd.f32 %v462, 3.0
  %v495 = vadd.f32 %v463, 3.0
  %v496 = vadd.f32 %v464, 3.0
  %v497 = vadd.f32 %v465, 3.0
  %v498 = vadd.f32 %v466, 3.0
  %v499 = vadd.f32 %v467, 3.0
  %v500 = vadd.f32 %v468, 3.0
  %v501 = vadd.f32 %v469, 3.0
  %v502 = vadd.f32 %v470, 3.0
  %v503 = vadd.f32 %v471, 3.0
  %v504 = vadd.f32 %v472, 3.0
  %v505 = vadd.f32 %v473, 3.0
  %v506 = vadd.f32 %v474, 3.0
  %v507 = vadd.f32 %v475, 3.0
  %v508 = vadd.f32 %v476, 3.0
  %v509 = vadd.f32 %v477, 3.0
  %v510 = vadd.f32 %v478, 3.0
  %v511 = vadd.f32 %v479, 3.0
  %v512 = vadd.f32 %v480, 3.0
  %v513 = vadd.f32 %v481, 3.0
  %v514 = vadd.f32 %v482, 3.0
  %v515 = vadd.f32 %v483, 3.0
  %v516 = vadd.f32 %v484, 3.0
  %v517 = vadd.f32 %v485, 3.0
  %v518 = vadd.f32 %v486, 3.0
  %v519 = vadd.f32 %v487, 3.0
  %v520 = vadd.f32 %v488, 3.0
  %v521 = vadd.f32 %v489, 3.0
  %v522 = vadd.f32 %v490, 3.0
  %v523 = vmul.f32 %v491, %v331
  %v524 = vmul.f32 %v492, %v332
  %v525 = vmul.f32 %v493, %v333
  %v526 = vmul.f32 %v494, %v334
  %v527 = vmul.f32 %v495, %v335
  %v528 = vmul.f32 %v496, %v336
  %v529 = vmul.f32 %v497, %v337
  %v530 = vmul.f32 %v498, %v338
  %v531 = vmul.f32 %v499, %v339
  %v532 = vmul.f32 %v500, %v340
  %v533 = vmul.f32 %v501, %v341
  %v534 = vmul.f32 %v502, %v342
  %v535 = vmul.f32 %v503, %v343
  %v536 = vmul.f32 %v504, %v344
  %v537 = vmul.f32 %v505, %v345
  %v538 = vmul.f32 %v506, %v346
  %v539 = vmul.f32 %v507, %v347
  %v540 = vmul.f32 %v508, %v348
  %v541 = vmul.f32 %v509, %v349
  %v542 = vmul.f32 %v510, %v350
  %v543 = vmul.f32 %v511, %v351
  %v544 = vmul.f32 %v512, %v352
  %v545 = vmul.f32 %v513, %v353
  %v546 = vmul.f32 %v514, %v354
  %v547 = vmul.f32 %v515, %v355
  %v548 = vmul.f32 %v516, %v356
  %v549 = vmul.f32 %v517, %v357
  %v550 = vmul.f32 %v518, %v358
  %v551 = vmul.f32 %v519, %v359
  %v552 = vmul.f32 %v520, %v360
  %v553 = vmul.f32 %v521, %v361
  %v554 = vmul.f32 %v522, %v362
  %v555 = vadd.f32 %v523, 3.0
  %v556 = vadd.f32 %v524, 3.0
  %v557 = vadd.f32 %v525, 3.0
  %v558 = vadd.f32 %v526, 3.0
  %v559 = vadd.f32 %v527, 3.0
  %v560 = vadd.f32 %v528, 3.0
  %v561 = vadd.f32 %v529, 3.0
  %v562 = vadd.f32 %v530, 3.0
  %v563 = vadd.f32 %v531, 3.0
  %v564 = vadd.f32 %v532, 3.0
  %v565 = vadd.f32 %v533, 3.0
  %v566 = vadd.f32 %v534, 3.0
  %v567 = vadd.f32 %v535, 3.0
  %v568 = vadd.f32 %v536, 3.0
  %v569 = vadd.f32 %v537, 3.0
  %v570 = vadd.f32 %v538, 3.0
  %v571 = vadd.f32 %v539, 3.0
  %v572 = vadd.f32 %v540, 3.0
  %v573 = vadd.f32 %v541, 3.0
  %v574 = vadd.f32 %v542, 3.0
  %v575 = vadd.f32 %v543, 3.0
  %v576 = vadd.f32 %v544, 3.0
  %v577 = vadd.f32 %v545, 3.0
  %v578 = vadd.f32 %v546, 3.0
  %v579 = vadd.f32 %v547, 3.0
  %v580 = vadd.f32 %v548, 3.0
  %v581 = vadd.f32 %v549, 3.0
  %v582 = vadd.f32 %v550, 3.0
  %v583 = vadd.f32 %v551, 3.0
  %v584 = vadd.f32 %v552, 3.0
  %v585 = vadd.f32 %v553, 3.0
  %v586 = vadd.f32 %v554, 3.0
  %v587 = vmul.f32 %v555, %v331
  %v588 = vmul.f32 %v556, %v332
  %v589 = vmul.f32 %v557, %v333
  %v590 = vmul.f32 %v558, %v334
  %v591 = vmul.f32 %v559, %v335
  %v592 = vmul.f32 %v560, %v336
  %v593 = vmul.f32 %v561, %v337
  %v594 = vmul.f32 %v562, %v338
  %v595 = vmul.f32 %v563, %v339
  %v596 = vmul.f32 %v564, %v340
  %v597 = vmul.f32 %v565, %v341
  %v598 = vmul.f32 %v566, %v342
  %v599 = vmul.f32 %v567, %v343
  %v600 = vmul.f32 %v568, %v344
  %v601 = vmul.f32 %v569, %v345
  %v602 = vmul.f32 %v570, %v346
  %v603 = vmul.f32 %v571, %v347
  %v604 = vmul.f32 %v572, %v348
  %v605 = vmul.f32 %v573, %v349
  %v606 = vmul.f32 %v574, %v350
  %v607 = vmul.f32 %v575, %v351
  %v608 = vmul.f32 %v576, %v352
  %v609 = vmul.f32 %v577, %v353
  %v610 = vmul.f32 %v578, %v354
  %v611 = vmul.f32 %v579, %v355
  %v612 = vmul.f32 %v580, %v356
  %v613 = vmul.f32 %v581, %v357
  %v614 = vmul.f32 %v582, %v358
  %v615 = vmul.f32 %v583, %v359
  %v616 = vmul.f32 %v584, %v360
  %v617 = vmul.f32 %v585, %v361
  %v618 = vmul.f32 %v586, %v362
  %v619 = vadd.f32 %v587, 1.0
  %v620 = vadd.f32 %v588, 1.0
  %v621 = vadd.f32 %v589, 1.0
  %v622 = vadd.f32 %v590, 1.0
  %v623 = vadd.f32 %v591, 1.0
  %v624 = vadd.f32 %v592, 1.0
  %v625 = vadd.f32 %v593, 1.0
  %v626 = vadd.f32 %v594, 1.0
  %v627 = vadd.f32 %v595, 1.0
  %v628 = vadd.f32 %v596, 1.0
  %v629 = vadd.f32 %v597, 1.0
  %v630 = vadd.f32 %v598, 1.0
  %v631 = vadd.f32 %v599, 1.0
  %v632 = vadd.f32 %v600, 1.0
  %v633 = vadd.f32 %v601, 1.0
  %v634 = vadd.f32 %v602, 1.0
  %v635 = vadd.f32 %v603, 1.0
  %v636 = vadd.f32 %v604, 1.0
  %v637 = vadd.f32 %v605, 1.0
  %v638 = vadd.f32 %v606, 1.0
  %v639 = vadd.f32 %v607, 1.0
  %v640 = vadd.f32 %v608, 1.0
  %v641 = vadd.f32 %v609, 1.0
  %v642 = vadd.f32 %v610, 1.0
  %v643 = vadd.f32 %v611, 1.0
  %v644 = vadd.f32 %v612, 1.0
  %v645 = vadd.f32 %v613, 1.0
  %v646 = vadd.f32 %v614, 1.0
  %v647 = vadd.f32 %v615, 1.0
  %v648 = vadd.f32 %v616, 1.0
  %v649 = vadd.f32 %v617, 1.0
  %v650 = vadd.f32 %v618, 1.0
  %v651 = vmul.f32 %v619, 0.16666667
  %v652 = vmul.f32 %v620, 0.16666667
  %v653 = vmul.f32 %v621, 0.16666667
  %v654 = vmul.f32 %v622, 0.16666667
  %v655 = vmul.f32 %v623, 0.16666667
  %v656 = vmul.f32 %v624, 0.16666667
  %v657 = vmul.f32 %v625, 0.16666667
  %v658 = vmul.f32 %v626, 0.16666667
  %v659 = vmul.f32 %v627, 0.16666667
  %v660 = vmul.f32 %v628, 0.16666667
  %v661 = vmul.f32 %v629, 0.16666667
  %v662 = vmul.f32 %v630, 0.16666667
  %v663 = vmul.f32 %v631, 0.16666667
  %v664 = vmul.f32 %v632, 0.16666667
  %v665 = vmul.f32 %v633, 0.16666667
  %v666 = vmul.f32 %v634, 0.16666667
  %v667 = vmul.f32 %v635, 0.16666667
  %v668 = vmul.f32 %v636, 0.16666667
  %v669 = vmul.f32 %v637, 0.16666667
  %v670 = vmul.f32 %v638, 0.16666667
  %v671 = vmul.f32 %v639, 0.16666667
  %v672 = vmul.f32 %v640, 0.16666667
  %v673 = vmul.f32 %v641, 0.16666667
  %v674 = vmul.f32 %v642, 0.16666667
  %v675 = vmul.f32 %v643, 0.16666667
  %v676 = vmul.f32 %v644, 0.16666667
  %v677 = vmul.f32 %v645, 0.16666667
  %v678 = vmul.f32 %v646, 0.16666667
  %v679 = vmul.f32 %v647, 0.16666667
  %v680 = vmul.f32 %v648, 0.16666667
  %v681 = vmul.f32 %v649, 0.16666667
  %v682 = vmul.f32 %v650, 0.16666667
  %v683 = vmul.f32 %v331, 3.0
  %v684 = vmul.f32 %v332, 3.0
  %v685 = vmul.f32 %v333, 3.0
  %v686 = vmul.f32 %v334, 3.0
  %v687 = vmul.f32 %v335, 3.0
  %v688 = vmul.f32 %v336, 3.0
  %v689 = vmul.f32 %v337, 3.0
  %v690 = vmul.f32 %v338, 3.0
  %v691 = vmul.f32 %v339, 3.0
  %v692 = vmul.f32 %v340, 3.0
  %v693 = vmul.f32 %v341, 3.0
  %v694 = vmul.f32 %v342, 3.0
  %v695 = vmul.f32 %v343, 3.0
  %v696 = vmul.f32 %v344, 3.0
  %v697 = vmul.f32 %v345, 3.0
  %v698 = vmul.f32 %v346, 3.0
  %v699 = vmul.f32 %v347, 3.0
  %v700 = vmul.f32 %v348, 3.0
  %v701 = vmul.f32 %v349, 3.0
  %v702 = vmul.f32 %v350, 3.0
  %v703 = vmul.f32 %v351, 3.0
  %v704 = vmul.f32 %v352, 3.0
  %v705 = vmul.f32 %v353, 3.0
  %v706 = vmul.f32 %v354, 3.0
  %v707 = vmul.f32 %v355, 3.0
  %v708 = vmul.f32 %v356, 3.0
  %v709 = vmul.f32 %v357, 3.0
  %v710 = vmul.f32 %v358, 3.0
  %v711 = vmul.f32 %v359, 3.0
  %v712 = vmul.f32 %v360, 3.0
  %v713 = vmul.f32 %v361, 3.0
  %v714 = vmul.f32 %v362, 3.0
  %v715 = vsub.f32 %v683, 6.0
  %v716 = vsub.f32 %v684, 6.0
  %v717 = vsub.f32 %v685, 6.0
  %v718 = vsub.f32 %v686, 6.0
  %v719 = vsub.f32 %v687, 6.0
  %v720 = vsub.f32 %v688, 6.0
  %v721 = vsub.f32 %v689, 6.0
  %v722 = vsub.f32 %v690, 6.0
  %v723 = vsub.f32 %v691, 6.0
  %v724 = vsub.f32 %v692, 6.0
  %v725 = vsub.f32 %v693, 6.0
  %v726 = vsub.f32 %v694, 6.0
  %v727 = vsub.f32 %v695, 6.0
  %v728 = vsub.f32 %v696, 6.0
  %v729 = vsub.f32 %v697, 6.0
  %v730 = vsub.f32 %v698, 6.0
  %v731 = vsub.f32 %v699, 6.0
  %v732 = vsub.f32 %v700, 6.0
  %v733 = vsub.f32 %v701, 6.0
  %v734 = vsub.f32 %v702, 6.0
  %v735 = vsub.f32 %v703, 6.0
  %v736 = vsub.f32 %v704, 6.0
  %v737 = vsub.f32 %v705, 6.0
  %v738 = vsub.f32 %v706, 6.0
  %v739 = vsub.f32 %v707, 6.0
  %v740 = vsub.f32 %v708, 6.0
  %v741 = vsub.f32 %v709, 6.0
  %v742 = vsub.f32 %v710, 6.0
  %v743 = vsub.f32 %v711, 6.0
  %v744 = vsub.f32 %v712, 6.0
  %v745 = vsub.f32 %v713, 6.0
  %v746 = vsub.f32 %v714, 6.0
  %v747 = vmul.f32 %v715, %v363
  %v748 = vmul.f32 %v716, %v364
  %v749 = vmul.f32 %v717, %v365
  %v750 = vmul.f32 %v718, %v366
  %v751 = vmul.f32 %v719, %v367
  %v752 = vmul.f32 %v720, %v368
  %v753 = vmul.f32 %v721, %v369
  %v754 = vmul.f32 %v722, %v370
  %v755 = vmul.f32 %v723, %v371
  %v756 = vmul.f32 %v724, %v372
  %v757 = vmul.f32 %v725, %v373
  %v758 = vmul.f32 %v726, %v374
  %v759 = vmul.f32 %v727, %v375
  %v760 = vmul.f32 %v728, %v376
  %v761 = vmul.f32 %v729, %v377
  %v762 = vmul.f32 %v730, %v378
  %v763 = vmul.f32 %v731, %v379
  %v764 = vmul.f32 %v732, %v380
  %v765 = vmul.f32 %v733, %v381
  %v766 = vmul.f32 %v734, %v382
  %v767 = vmul.f32 %v735, %v383
  %v768 = vmul.f32 %v736, %v384
  %v769 = vmul.f32 %v737, %v385
  %v770 = vmul.f32 %v738, %v386
  %v771 = vmul.f32 %v739, %v387
  %v772 = vmul.f32 %v740, %v388
  %v773 = vmul.f32 %v741, %v389
  %v774 = vmul.f32 %v742, %v390
  %v775 = vmul.f32 %v743, %v391
  %v776 = vmul.f32 %v744, %v392
  %v777 = vmul.f32 %v745, %v393
  %v778 = vmul.f32 %v746, %v394
  %v779 = vadd.f32 %v747, 4.0
  %v780 = vadd.f32 %v748, 4.0
  %v781 = vadd.f32 %v749, 4.0
  %v782 = vadd.f32 %v750, 4.0
  %v783 = vadd.f32 %v751, 4.0
  %v784 = vadd.f32 %v752, 4.0
  %v785 = vadd.f32 %v753, 4.0
  %v786 = vadd.f32 %v754, 4.0
  %v787 = vadd.f32 %v755, 4.0
  %v788 = vadd.f32 %v756, 4.0
  %v789 = vadd.f32 %v757, 4.0
  %v790 = vadd.f32 %v758, 4.0
  %v791 = vadd.f32 %v759, 4.0
  %v792 = vadd.f32 %v760, 4.0
  %v793 = vadd.f32 %v761, 4.0
  %v794 = vadd.f32 %v762, 4.0
  %v795 = vadd.f32 %v763, 4.0
  %v796 = vadd.f32 %v764, 4.0
  %v797 = vadd.f32 %v765, 4.0
  %v798 = vadd.f32 %v766, 4.0
  %v799 = vadd.f32 %v767, 4.0
  %v800 = vadd.f32 %v768, 4.0
  %v801 = vadd.f32 %v769, 4.0
  %v802 = vadd.f32 %v770, 4.0
  %v803 = vadd.f32 %v771, 4.0
  %v804 = vadd.f32 %v772, 4.0
  %v805 = vadd.f32 %v773, 4.0
  %v806 = vadd.f32 %v774, 4.0
  %v807 = vadd.f32 %v775, 4.0
  %v808 = vadd.f32 %v776, 4.0
  %v809 = vadd.f32 %v777, 4.0
  %v810 = vadd.f32 %v778, 4.0
  %v811 = vmul.f32 %v779, 0.16666667
  %v812 = vmul.f32 %v780, 0.16666667
  %v813 = vmul.f32 %v781, 0.16666667
  %v814 = vmul.f32 %v782, 0.16666667
  %v815 = vmul.f32 %v783, 0.16666667
  %v816 = vmul.f32 %v784, 0.16666667
  %v817 = vmul.f32 %v785, 0.16666667
  %v818 = vmul.f32 %v786, 0.16666667
  %v819 = vmul.f32 %v787, 0.16666667
  %v820 = vmul.f32 %v788, 0.16666667
  %v821 = vmul.f32 %v789, 0.16666667
  %v822 = vmul.f32 %v790, 0.16666667
  %v823 = vmul.f32 %v791, 0.16666667
  %v824 = vmul.f32 %v792, 0.16666667
  %v825 = vmul.f32 %v793, 0.16666667
  %v826 = vmul.f32 %v794, 0.16666667
  %v827 = vmul.f32 %v795, 0.16666667
  %v828 = vmul.f32 %v796, 0.16666667
  %v829 = vmul.f32 %v797, 0.16666667
  %v830 = vmul.f32 %v798, 0.16666667
  %v831 = vmul.f32 %v799, 0.16666667
  %v832 = vmul.f32 %v800, 0.16666667
  %v833 = vmul.f32 %v801, 0.16666667
  %v834 = vmul.f32 %v802, 0.16666667
  %v835 = vmul.f32 %v803, 0.16666667
  %v836 = vmul.f32 %v804, 0.16666667
  %v837 = vmul.f32 %v805, 0.16666667
  %v838 = vmul.f32 %v806, 0.16666667
  %v839 = vmul.f32 %v807, 0.16666667
  %v840 = vmul.f32 %v808, 0.16666667
  %v841 = vmul.f32 %v809, 0.16666667
  %v842 = vmul.f32 %v810, 0.16666667
  %v843 = vsub.f32 1.0, %v331
  %v844 = vsub.f32 1.0, %v332
  %v845 = vsub.f32 1.0, %v333
  %v846 = vsub.f32 1.0, %v334
  %v847 = vsub.f32 1.0, %v335
  %v848 = vsub.f32 1.0, %v336
  %v849 = vsub.f32 1.0, %v337
  %v850 = vsub.f32 1.0, %v338
  %v851 = vsub.f32 1.0, %v339
  %v852 = vsub.f32 1.0, %v340
  %v853 = vsub.f32 1.0, %v341
  %v854 = vsub.f32 1.0, %v342
  %v855 = vsub.f32 1.0, %v343
  %v856 = vsub.f32 1.0, %v344
  %v857 = vsub.f32 1.0, %v345
  %v858 = vsub.f32 1.0, %v346
  %v859 = vsub.f32 1.0, %v347
  %v860 = vsub.f32 1.0, %v348
  %v861 = vsub.f32 1.0, %v349
  %v862 = vsub.f32 1.0, %v350
  %v863 = vsub.f32 1.0, %v351
  %v864 = vsub.f32 1.0, %v352
  %v865 = vsub.f32 1.0, %v353
  %v866 = vsub.f32 1.0, %v354
  %v867 = vsub.f32 1.0, %v355
  %v868 = vsub.f32 1.0, %v356
  %v869 = vsub.f32 1.0, %v357
  %v870 = vsub.f32 1.0, %v358
  %v871 = vsub.f32 1.0, %v359
  %v872 = vsub.f32 1.0, %v360
  %v873 = vsub.f32 1.0, %v361
  %v874 = vsub.f32 1.0, %v362
  %v875 = vmul.f32 %v843, %v843
  %v876 = vmul.f32 %v844, %v844
  %v877 = vmul.f32 %v845, %v845
  %v878 = vmul.f32 %v846, %v846
  %v879 = vmul.f32 %v847, %v847
  %v880 = vmul.f32 %v848, %v848
  %v881 = vmul.f32 %v849, %v849
  %v882 = vmul.f32 %v850, %v850
  %v883 = vmul.f32 %v851, %v851
  %v884 = vmul.f32 %v852, %v852
  %v885 = vmul.f32 %v853, %v853
  %v886 = vmul.f32 %v854, %v854
  %v887 = vmul.f32 %v855, %v855
  %v888 = vmul.f32 %v856, %v856
  %v889 = vmul.f32 %v857, %v857
  %v890 = vmul.f32 %v858, %v858
  %v891 = vmul.f32 %v859, %v859
  %v892 = vmul.f32 %v860, %v860
  %v893 = vmul.f32 %v861, %v861
  %v894 = vmul.f32 %v862, %v862
  %v895 = vmul.f32 %v863, %v863
  %v896 = vmul.f32 %v864, %v864
  %v897 = vmul.f32 %v865, %v865
  %v898 = vmul.f32 %v866, %v866
  %v899 = vmul.f32 %v867, %v867
  %v900 = vmul.f32 %v868, %v868
  %v901 = vmul.f32 %v869, %v869
  %v902 = vmul.f32 %v870, %v870
  %v903 = vmul.f32 %v871, %v871
  %v904 = vmul.f32 %v872, %v872
  %v905 = vmul.f32 %v873, %v873
  %v906 = vmul.f32 %v874, %v874
  %v907 = vmul.f32 %v875, %v843
  %v908 = vmul.f32 %v876, %v844
  %v909 = vmul.f32 %v877, %v845
  %v910 = vmul.f32 %v878, %v846
  %v911 = vmul.f32 %v879, %v847
  %v912 = vmul.f32 %v880, %v848
  %v913 = vmul.f32 %v881, %v849
  %v914 = vmul.f32 %v882, %v850
  %v915 = vmul.f32 %v883, %v851
  %v916 = vmul.f32 %v884, %v852
  %v917 = vmul.f32 %v885, %v853
  %v918 = vmul.f32 %v886, %v854
  %v919 = vmul.f32 %v887, %v855
  %v920 = vmul.f32 %v888, %v856
  %v921 = vmul.f32 %v889, %v857
  %v922 = vmul.f32 %v890, %v858
  %v923 = vmul.f32 %v891, %v859
  %v924 = vmul.f32 %v892, %v860
  %v925 = vmul.f32 %v893, %v861
  %v926 = vmul.f32 %v894, %v862
  %v927 = vmul.f32 %v895, %v863
  %v928 = vmul.f32 %v896, %v864
  %v929 = vmul.f32 %v897, %v865
  %v930 = vmul.f32 %v898, %v866
  %v931 = vmul.f32 %v899, %v867
  %v932 = vmul.f32 %v900, %v868
  %v933 = vmul.f32 %v901, %v869
  %v934 = vmul.f32 %v902, %v870
  %v935 = vmul.f32 %v903, %v871
  %v936 = vmul.f32 %v904, %v872
  %v937 = vmul.f32 %v905, %v873
  %v938 = vmul.f32 %v906, %v874
  %v939 = vmul.f32 %v907, 0.16666667
  %v940 = vmul.f32 %v908, 0.16666667
  %v941 = vmul.f32 %v909, 0.16666667
  %v942 = vmul.f32 %v910, 0.16666667
  %v943 = vmul.f32 %v911, 0.16666667
  %v944 = vmul.f32 %v912, 0.16666667
  %v945 = vmul.f32 %v913, 0.16666667
  %v946 = vmul.f32 %v914, 0.16666667
  %v947 = vmul.f32 %v915, 0.16666667
  %v948 = vmul.f32 %v916, 0.16666667
  %v949 = vmul.f32 %v917, 0.16666667
  %v950 = vmul.f32 %v918, 0.16666667
  %v951 = vmul.f32 %v919, 0.16666667
  %v952 = vmul.f32 %v920, 0.16666667
  %v953 = vmul.f32 %v921, 0.16666667
  %v954 = vmul.f32 %v922, 0.16666667
  %v955 = vmul.f32 %v923, 0.16666667
  %v956 = vmul.f32 %v924, 0.16666667
  %v957 = vmul.f32 %v925, 0.16666667
  %v958 = vmul.f32 %v926, 0.16666667
  %v959 = vmul.f32 %v927, 0.16666667
  %v960 = vmul.f32 %v928, 0.16666667
  %v961 = vmul.f32 %v929, 0.16666667
  %v962 = vmul.f32 %v930, 0.16666667
  %v963 = vmul.f32 %v931, 0.16666667
  %v964 = vmul.f32 %v932, 0.16666667
  %v965 = vmul.f32 %v933, 0.16666667
  %v966 = vmul.f32 %v934, 0.16666667
  %v967 = vmul.f32 %v935, 0.16666667
  %v968 = vmul.f32 %v936, 0.16666667
  %v969 = vmul.f32 %v937, 0.16666667
  %v970 = vmul.f32 %v938, 0.16666667
  %vm971 = vcmp.eq.f32.partialorder %v299, 0.0
  %vm972 = vcmp.eq.f32.partialorder %v300, 0.0
  %vm973 = vcmp.eq.f32.partialorder %v301, 0.0
  %vm974 = vcmp.eq.f32.partialorder %v302, 0.0
  %vm975 = vcmp.eq.f32.partialorder %v303, 0.0
  %vm976 = vcmp.eq.f32.partialorder %v304, 0.0
  %vm977 = vcmp.eq.f32.partialorder %v305, 0.0
  %vm978 = vcmp.eq.f32.partialorder %v306, 0.0
  %vm979 = vcmp.eq.f32.partialorder %v307, 0.0
  %vm980 = vcmp.eq.f32.partialorder %v308, 0.0
  %vm981 = vcmp.eq.f32.partialorder %v309, 0.0
  %vm982 = vcmp.eq.f32.partialorder %v310, 0.0
  %vm983 = vcmp.eq.f32.partialorder %v311, 0.0
  %vm984 = vcmp.eq.f32.partialorder %v312, 0.0
  %vm985 = vcmp.eq.f32.partialorder %v313, 0.0
  %vm986 = vcmp.eq.f32.partialorder %v314, 0.0
  %vm987 = vcmp.eq.f32.partialorder %v315, 0.0
  %vm988 = vcmp.eq.f32.partialorder %v316, 0.0
  %vm989 = vcmp.eq.f32.partialorder %v317, 0.0
  %vm990 = vcmp.eq.f32.partialorder %v318, 0.0
  %vm991 = vcmp.eq.f32.partialorder %v319, 0.0
  %vm992 = vcmp.eq.f32.partialorder %v320, 0.0
  %vm993 = vcmp.eq.f32.partialorder %v321, 0.0
  %vm994 = vcmp.eq.f32.partialorder %v322, 0.0
  %vm995 = vcmp.eq.f32.partialorder %v323, 0.0
  %vm996 = vcmp.eq.f32.partialorder %v324, 0.0
  %vm997 = vcmp.eq.f32.partialorder %v325, 0.0
  %vm998 = vcmp.eq.f32.partialorder %v326, 0.0
  %vm999 = vcmp.eq.f32.partialorder %v327, 0.0
  %vm1000 = vcmp.eq.f32.partialorder %v328, 0.0
  %vm1001 = vcmp.eq.f32.partialorder %v329, 0.0
  %vm1002 = vcmp.eq.f32.partialorder %v330, 0.0
  %v1003 = vsel %vm971, %v427, 0.0
  %v1004 = vsel %vm972, %v428, 0.0
  %v1005 = vsel %vm973, %v429, 0.0
  %v1006 = vsel %vm974, %v430, 0.0
  %v1007 = vsel %vm975, %v431, 0.0
  %v1008 = vsel %vm976, %v432, 0.0
  %v1009 = vsel %vm977, %v433, 0.0
  %v1010 = vsel %vm978, %v434, 0.0
  %v1011 = vsel %vm979, %v435, 0.0
  %v1012 = vsel %vm980, %v436, 0.0
  %v1013 = vsel %vm981, %v437, 0.0
  %v1014 = vsel %vm982, %v438, 0.0
  %v1015 = vsel %vm983, %v439, 0.0
  %v1016 = vsel %vm984, %v440, 0.0
  %v1017 = vsel %vm985, %v441, 0.0
  %v1018 = vsel %vm986, %v442, 0.0
  %v1019 = vsel %vm987, %v443, 0.0
  %v1020 = vsel %vm988, %v444, 0.0
  %v1021 = vsel %vm989, %v445, 0.0
  %v1022 = vsel %vm990, %v446, 0.0
  %v1023 = vsel %vm991, %v447, 0.0
  %v1024 = vsel %vm992, %v448, 0.0
  %v1025 = vsel %vm993, %v449, 0.0
  %v1026 = vsel %vm994, %v450, 0.0
  %v1027 = vsel %vm995, %v451, 0.0
  %v1028 = vsel %vm996, %v452, 0.0
  %v1029 = vsel %vm997, %v453, 0.0
  %v1030 = vsel %vm998, %v454, 0.0
  %v1031 = vsel %vm999, %v455, 0.0
  %v1032 = vsel %vm1000, %v456, 0.0
  %v1033 = vsel %vm1001, %v457, 0.0
  %v1034 = vsel %vm1002, %v458, 0.0
  %vm1035 = vcmp.eq.f32.partialorder %v299, 1.0
  %vm1036 = vcmp.eq.f32.partialorder %v300, 1.0
  %vm1037 = vcmp.eq.f32.partialorder %v301, 1.0
  %vm1038 = vcmp.eq.f32.partialorder %v302, 1.0
  %vm1039 = vcmp.eq.f32.partialorder %v303, 1.0
  %vm1040 = vcmp.eq.f32.partialorder %v304, 1.0
  %vm1041 = vcmp.eq.f32.partialorder %v305, 1.0
  %vm1042 = vcmp.eq.f32.partialorder %v306, 1.0
  %vm1043 = vcmp.eq.f32.partialorder %v307, 1.0
  %vm1044 = vcmp.eq.f32.partialorder %v308, 1.0
  %vm1045 = vcmp.eq.f32.partialorder %v309, 1.0
  %vm1046 = vcmp.eq.f32.partialorder %v310, 1.0
  %vm1047 = vcmp.eq.f32.partialorder %v311, 1.0
  %vm1048 = vcmp.eq.f32.partialorder %v312, 1.0
  %vm1049 = vcmp.eq.f32.partialorder %v313, 1.0
  %vm1050 = vcmp.eq.f32.partialorder %v314, 1.0
  %vm1051 = vcmp.eq.f32.partialorder %v315, 1.0
  %vm1052 = vcmp.eq.f32.partialorder %v316, 1.0
  %vm1053 = vcmp.eq.f32.partialorder %v317, 1.0
  %vm1054 = vcmp.eq.f32.partialorder %v318, 1.0
  %vm1055 = vcmp.eq.f32.partialorder %v319, 1.0
  %vm1056 = vcmp.eq.f32.partialorder %v320, 1.0
  %vm1057 = vcmp.eq.f32.partialorder %v321, 1.0
  %vm1058 = vcmp.eq.f32.partialorder %v322, 1.0
  %vm1059 = vcmp.eq.f32.partialorder %v323, 1.0
  %vm1060 = vcmp.eq.f32.partialorder %v324, 1.0
  %vm1061 = vcmp.eq.f32.partialorder %v325, 1.0
  %vm1062 = vcmp.eq.f32.partialorder %v326, 1.0
  %vm1063 = vcmp.eq.f32.partialorder %v327, 1.0
  %vm1064 = vcmp.eq.f32.partialorder %v328, 1.0
  %vm1065 = vcmp.eq.f32.partialorder %v329, 1.0
  %vm1066 = vcmp.eq.f32.partialorder %v330, 1.0
  %v1067 = vsel %vm1035, %v651, 0.0
  %v1068 = vsel %vm1036, %v652, 0.0
  %v1069 = vsel %vm1037, %v653, 0.0
  %v1070 = vsel %vm1038, %v654, 0.0
  %v1071 = vsel %vm1039, %v655, 0.0
  %v1072 = vsel %vm1040, %v656, 0.0
  %v1073 = vsel %vm1041, %v657, 0.0
  %v1074 = vsel %vm1042, %v658, 0.0
  %v1075 = vsel %vm1043, %v659, 0.0
  %v1076 = vsel %vm1044, %v660, 0.0
  %v1077 = vsel %vm1045, %v661, 0.0
  %v1078 = vsel %vm1046, %v662, 0.0
  %v1079 = vsel %vm1047, %v663, 0.0
  %v1080 = vsel %vm1048, %v664, 0.0
  %v1081 = vsel %vm1049, %v665, 0.0
  %v1082 = vsel %vm1050, %v666, 0.0
  %v1083 = vsel %vm1051, %v667, 0.0
  %v1084 = vsel %vm1052, %v668, 0.0
  %v1085 = vsel %vm1053, %v669, 0.0
  %v1086 = vsel %vm1054, %v670, 0.0
  %v1087 = vsel %vm1055, %v671, 0.0
  %v1088 = vsel %vm1056, %v672, 0.0
  %v1089 = vsel %vm1057, %v673, 0.0
  %v1090 = vsel %vm1058, %v674, 0.0
  %v1091 = vsel %vm1059, %v675, 0.0
  %v1092 = vsel %vm1060, %v676, 0.0
  %v1093 = vsel %vm1061, %v677, 0.0
  %v1094 = vsel %vm1062, %v678, 0.0
  %v1095 = vsel %vm1063, %v679, 0.0
  %v1096 = vsel %vm1064, %v680, 0.0
  %v1097 = vsel %vm1065, %v681, 0.0
  %v1098 = vsel %vm1066, %v682, 0.0
  %v1099 = vadd.f32 %v1003, %v1067
  %v1100 = vadd.f32 %v1004, %v1068
  %v1101 = vadd.f32 %v1005, %v1069
  %v1102 = vadd.f32 %v1006, %v1070
  %v1103 = vadd.f32 %v1007, %v1071
  %v1104 = vadd.f32 %v1008, %v1072
  %v1105 = vadd.f32 %v1009, %v1073
  %v1106 = vadd.f32 %v1010, %v1074
  %v1107 = vadd.f32 %v1011, %v1075
  %v1108 = vadd.f32 %v1012, %v1076
  %v1109 = vadd.f32 %v1013, %v1077
  %v1110 = vadd.f32 %v1014, %v1078
  %v1111 = vadd.f32 %v1015, %v1079
  %v1112 = vadd.f32 %v1016, %v1080
  %v1113 = vadd.f32 %v1017, %v1081
  %v1114 = vadd.f32 %v1018, %v1082
  %v1115 = vadd.f32 %v1019, %v1083
  %v1116 = vadd.f32 %v1020, %v1084
  %v1117 = vadd.f32 %v1021, %v1085
  %v1118 = vadd.f32 %v1022, %v1086
  %v1119 = vadd.f32 %v1023, %v1087
  %v1120 = vadd.f32 %v1024, %v1088
  %v1121 = vadd.f32 %v1025, %v1089
  %v1122 = vadd.f32 %v1026, %v1090
  %v1123 = vadd.f32 %v1027, %v1091
  %v1124 = vadd.f32 %v1028, %v1092
  %v1125 = vadd.f32 %v1029, %v1093
  %v1126 = vadd.f32 %v1030, %v1094
  %v1127 = vadd.f32 %v1031, %v1095
  %v1128 = vadd.f32 %v1032, %v1096
  %v1129 = vadd.f32 %v1033, %v1097
  %v1130 = vadd.f32 %v1034, %v1098
  %vm1131 = vcmp.eq.f32.partialorder %v299, 2.0
  %vm1132 = vcmp.eq.f32.partialorder %v300, 2.0
  %vm1133 = vcmp.eq.f32.partialorder %v301, 2.0
  %vm1134 = vcmp.eq.f32.partialorder %v302, 2.0
  %vm1135 = vcmp.eq.f32.partialorder %v303, 2.0
  %vm1136 = vcmp.eq.f32.partialorder %v304, 2.0
  %vm1137 = vcmp.eq.f32.partialorder %v305, 2.0
  %vm1138 = vcmp.eq.f32.partialorder %v306, 2.0
  %vm1139 = vcmp.eq.f32.partialorder %v307, 2.0
  %vm1140 = vcmp.eq.f32.partialorder %v308, 2.0
  %vm1141 = vcmp.eq.f32.partialorder %v309, 2.0
  %vm1142 = vcmp.eq.f32.partialorder %v310, 2.0
  %vm1143 = vcmp.eq.f32.partialorder %v311, 2.0
  %vm1144 = vcmp.eq.f32.partialorder %v312, 2.0
  %vm1145 = vcmp.eq.f32.partialorder %v313, 2.0
  %vm1146 = vcmp.eq.f32.partialorder %v314, 2.0
  %vm1147 = vcmp.eq.f32.partialorder %v315, 2.0
  %vm1148 = vcmp.eq.f32.partialorder %v316, 2.0
  %vm1149 = vcmp.eq.f32.partialorder %v317, 2.0
  %vm1150 = vcmp.eq.f32.partialorder %v318, 2.0
  %vm1151 = vcmp.eq.f32.partialorder %v319, 2.0
  %vm1152 = vcmp.eq.f32.partialorder %v320, 2.0
  %vm1153 = vcmp.eq.f32.partialorder %v321, 2.0
  %vm1154 = vcmp.eq.f32.partialorder %v322, 2.0
  %vm1155 = vcmp.eq.f32.partialorder %v323, 2.0
  %vm1156 = vcmp.eq.f32.partialorder %v324, 2.0
  %vm1157 = vcmp.eq.f32.partialorder %v325, 2.0
  %vm1158 = vcmp.eq.f32.partialorder %v326, 2.0
  %vm1159 = vcmp.eq.f32.partialorder %v327, 2.0
  %vm1160 = vcmp.eq.f32.partialorder %v328, 2.0
  %vm1161 = vcmp.eq.f32.partialorder %v329, 2.0
  %vm1162 = vcmp.eq.f32.partialorder %v330, 2.0
  %v1163 = vsel %vm1131, %v811, 0.0
  %v1164 = vsel %vm1132, %v812, 0.0
  %v1165 = vsel %vm1133, %v813, 0.0
  %v1166 = vsel %vm1134, %v814, 0.0
  %v1167 = vsel %vm1135, %v815, 0.0
  %v1168 = vsel %vm1136, %v816, 0.0
  %v1169 = vsel %vm1137, %v817, 0.0
  %v1170 = vsel %vm1138, %v818, 0.0
  %v1171 = vsel %vm1139, %v819, 0.0
  %v1172 = vsel %vm1140, %v820, 0.0
  %v1173 = vsel %vm1141, %v821, 0.0
  %v1174 = vsel %vm1142, %v822, 0.0
  %v1175 = vsel %vm1143, %v823, 0.0
  %v1176 = vsel %vm1144, %v824, 0.0
  %v1177 = vsel %vm1145, %v825, 0.0
  %v1178 = vsel %vm1146, %v826, 0.0
  %v1179 = vsel %vm1147, %v827, 0.0
  %v1180 = vsel %vm1148, %v828, 0.0
  %v1181 = vsel %vm1149, %v829, 0.0
  %v1182 = vsel %vm1150, %v830, 0.0
  %v1183 = vsel %vm1151, %v831, 0.0
  %v1184 = vsel %vm1152, %v832, 0.0
  %v1185 = vsel %vm1153, %v833, 0.0
  %v1186 = vsel %vm1154, %v834, 0.0
  %v1187 = vsel %vm1155, %v835, 0.0
  %v1188 = vsel %vm1156, %v836, 0.0
  %v1189 = vsel %vm1157, %v837, 0.0
  %v1190 = vsel %vm1158, %v838, 0.0
  %v1191 = vsel %vm1159, %v839, 0.0
  %v1192 = vsel %vm1160, %v840, 0.0
  %v1193 = vsel %vm1161, %v841, 0.0
  %v1194 = vsel %vm1162, %v842, 0.0
  %v1195 = vadd.f32 %v1099, %v1163
  %v1196 = vadd.f32 %v1100, %v1164
  %v1197 = vadd.f32 %v1101, %v1165
  %v1198 = vadd.f32 %v1102, %v1166
  %v1199 = vadd.f32 %v1103, %v1167
  %v1200 = vadd.f32 %v1104, %v1168
  %v1201 = vadd.f32 %v1105, %v1169
  %v1202 = vadd.f32 %v1106, %v1170
  %v1203 = vadd.f32 %v1107, %v1171
  %v1204 = vadd.f32 %v1108, %v1172
  %v1205 = vadd.f32 %v1109, %v1173
  %v1206 = vadd.f32 %v1110, %v1174
  %v1207 = vadd.f32 %v1111, %v1175
  %v1208 = vadd.f32 %v1112, %v1176
  %v1209 = vadd.f32 %v1113, %v1177
  %v1210 = vadd.f32 %v1114, %v1178
  %v1211 = vadd.f32 %v1115, %v1179
  %v1212 = vadd.f32 %v1116, %v1180
  %v1213 = vadd.f32 %v1117, %v1181
  %v1214 = vadd.f32 %v1118, %v1182
  %v1215 = vadd.f32 %v1119, %v1183
  %v1216 = vadd.f32 %v1120, %v1184
  %v1217 = vadd.f32 %v1121, %v1185
  %v1218 = vadd.f32 %v1122, %v1186
  %v1219 = vadd.f32 %v1123, %v1187
  %v1220 = vadd.f32 %v1124, %v1188
  %v1221 = vadd.f32 %v1125, %v1189
  %v1222 = vadd.f32 %v1126, %v1190
  %v1223 = vadd.f32 %v1127, %v1191
  %v1224 = vadd.f32 %v1128, %v1192
  %v1225 = vadd.f32 %v1129, %v1193
  %v1226 = vadd.f32 %v1130, %v1194
  %vm1227 = vcmp.eq.f32.partialorder %v299, 3.0
  %vm1228 = vcmp.eq.f32.partialorder %v300, 3.0
  %vm1229 = vcmp.eq.f32.partialorder %v301, 3.0
  %vm1230 = vcmp.eq.f32.partialorder %v302, 3.0
  %vm1231 = vcmp.eq.f32.partialorder %v303, 3.0
  %vm1232 = vcmp.eq.f32.partialorder %v304, 3.0
  %vm1233 = vcmp.eq.f32.partialorder %v305, 3.0
  %vm1234 = vcmp.eq.f32.partialorder %v306, 3.0
  %vm1235 = vcmp.eq.f32.partialorder %v307, 3.0
  %vm1236 = vcmp.eq.f32.partialorder %v308, 3.0
  %vm1237 = vcmp.eq.f32.partialorder %v309, 3.0
  %vm1238 = vcmp.eq.f32.partialorder %v310, 3.0
  %vm1239 = vcmp.eq.f32.partialorder %v311, 3.0
  %vm1240 = vcmp.eq.f32.partialorder %v312, 3.0
  %vm1241 = vcmp.eq.f32.partialorder %v313, 3.0
  %vm1242 = vcmp.eq.f32.partialorder %v314, 3.0
  %vm1243 = vcmp.eq.f32.partialorder %v315, 3.0
  %vm1244 = vcmp.eq.f32.partialorder %v316, 3.0
  %vm1245 = vcmp.eq.f32.partialorder %v317, 3.0
  %vm1246 = vcmp.eq.f32.partialorder %v318, 3.0
  %vm1247 = vcmp.eq.f32.partialorder %v319, 3.0
  %vm1248 = vcmp.eq.f32.partialorder %v320, 3.0
  %vm1249 = vcmp.eq.f32.partialorder %v321, 3.0
  %vm1250 = vcmp.eq.f32.partialorder %v322, 3.0
  %vm1251 = vcmp.eq.f32.partialorder %v323, 3.0
  %vm1252 = vcmp.eq.f32.partialorder %v324, 3.0
  %vm1253 = vcmp.eq.f32.partialorder %v325, 3.0
  %vm1254 = vcmp.eq.f32.partialorder %v326, 3.0
  %vm1255 = vcmp.eq.f32.partialorder %v327, 3.0
  %vm1256 = vcmp.eq.f32.partialorder %v328, 3.0
  %vm1257 = vcmp.eq.f32.partialorder %v329, 3.0
  %vm1258 = vcmp.eq.f32.partialorder %v330, 3.0
  %v1259 = vsel %vm1227, %v939, 0.0
  %v1260 = vsel %vm1228, %v940, 0.0
  %v1261 = vsel %vm1229, %v941, 0.0
  %v1262 = vsel %vm1230, %v942, 0.0
  %v1263 = vsel %vm1231, %v943, 0.0
  %v1264 = vsel %vm1232, %v944, 0.0
  %v1265 = vsel %vm1233, %v945, 0.0
  %v1266 = vsel %vm1234, %v946, 0.0
  %v1267 = vsel %vm1235, %v947, 0.0
  %v1268 = vsel %vm1236, %v948, 0.0
  %v1269 = vsel %vm1237, %v949, 0.0
  %v1270 = vsel %vm1238, %v950, 0.0
  %v1271 = vsel %vm1239, %v951, 0.0
  %v1272 = vsel %vm1240, %v952, 0.0
  %v1273 = vsel %vm1241, %v953, 0.0
  %v1274 = vsel %vm1242, %v954, 0.0
  %v1275 = vsel %vm1243, %v955, 0.0
  %v1276 = vsel %vm1244, %v956, 0.0
  %v1277 = vsel %vm1245, %v957, 0.0
  %v1278 = vsel %vm1246, %v958, 0.0
  %v1279 = vsel %vm1247, %v959, 0.0
  %v1280 = vsel %vm1248, %v960, 0.0
  %v1281 = vsel %vm1249, %v961, 0.0
  %v1282 = vsel %vm1250, %v962, 0.0
  %v1283 = vsel %vm1251, %v963, 0.0
  %v1284 = vsel %vm1252, %v964, 0.0
  %v1285 = vsel %vm1253, %v965, 0.0
  %v1286 = vsel %vm1254, %v966, 0.0
  %v1287 = vsel %vm1255, %v967, 0.0
  %v1288 = vsel %vm1256, %v968, 0.0
  %v1289 = vsel %vm1257, %v969, 0.0
  %v1290 = vsel %vm1258, %v970, 0.0
  %v1291 = vadd.f32 %v1195, %v1259
  %v1292 = vadd.f32 %v1196, %v1260
  %v1293 = vadd.f32 %v1197, %v1261
  %v1294 = vadd.f32 %v1198, %v1262
  %v1295 = vadd.f32 %v1199, %v1263
  %v1296 = vadd.f32 %v1200, %v1264
  %v1297 = vadd.f32 %v1201, %v1265
  %v1298 = vadd.f32 %v1202, %v1266
  %v1299 = vadd.f32 %v1203, %v1267
  %v1300 = vadd.f32 %v1204, %v1268
  %v1301 = vadd.f32 %v1205, %v1269
  %v1302 = vadd.f32 %v1206, %v1270
  %v1303 = vadd.f32 %v1207, %v1271
  %v1304 = vadd.f32 %v1208, %v1272
  %v1305 = vadd.f32 %v1209, %v1273
  %v1306 = vadd.f32 %v1210, %v1274
  %v1307 = vadd.f32 %v1211, %v1275
  %v1308 = vadd.f32 %v1212, %v1276
  %v1309 = vadd.f32 %v1213, %v1277
  %v1310 = vadd.f32 %v1214, %v1278
  %v1311 = vadd.f32 %v1215, %v1279
  %v1312 = vadd.f32 %v1216, %v1280
  %v1313 = vadd.f32 %v1217, %v1281
  %v1314 = vadd.f32 %v1218, %v1282
  %v1315 = vadd.f32 %v1219, %v1283
  %v1316 = vadd.f32 %v1220, %v1284
  %v1317 = vadd.f32 %v1221, %v1285
  %v1318 = vadd.f32 %v1222, %v1286
  %v1319 = vadd.f32 %v1223, %v1287
  %v1320 = vadd.f32 %v1224, %v1288
  %v1321 = vadd.f32 %v1225, %v1289
  %v1322 = vadd.f32 %v1226, %v1290
  %v1323 = vsel %vm1035, %v427, 0.0
  %v1324 = vsel %vm1036, %v428, 0.0
  %v1325 = vsel %vm1037, %v429, 0.0
  %v1326 = vsel %vm1038, %v430, 0.0
  %v1327 = vsel %vm1039, %v431, 0.0
  %v1328 = vsel %vm1040, %v432, 0.0
  %v1329 = vsel %vm1041, %v433, 0.0
  %v1330 = vsel %vm1042, %v434, 0.0
  %v1331 = vsel %vm1043, %v435, 0.0
  %v1332 = vsel %vm1044, %v436, 0.0
  %v1333 = vsel %vm1045, %v437, 0.0
  %v1334 = vsel %vm1046, %v438, 0.0
  %v1335 = vsel %vm1047, %v439, 0.0
  %v1336 = vsel %vm1048, %v440, 0.0
  %v1337 = vsel %vm1049, %v441, 0.0
  %v1338 = vsel %vm1050, %v442, 0.0
  %v1339 = vsel %vm1051, %v443, 0.0
  %v1340 = vsel %vm1052, %v444, 0.0
  %v1341 = vsel %vm1053, %v445, 0.0
  %v1342 = vsel %vm1054, %v446, 0.0
  %v1343 = vsel %vm1055, %v447, 0.0
  %v1344 = vsel %vm1056, %v448, 0.0
  %v1345 = vsel %vm1057, %v449, 0.0
  %v1346 = vsel %vm1058, %v450, 0.0
  %v1347 = vsel %vm1059, %v451, 0.0
  %v1348 = vsel %vm1060, %v452, 0.0
  %v1349 = vsel %vm1061, %v453, 0.0
  %v1350 = vsel %vm1062, %v454, 0.0
  %v1351 = vsel %vm1063, %v455, 0.0
  %v1352 = vsel %vm1064, %v456, 0.0
  %v1353 = vsel %vm1065, %v457, 0.0
  %v1354 = vsel %vm1066, %v458, 0.0
  %v1355 = vsel %vm1131, %v651, 0.0
  %v1356 = vsel %vm1132, %v652, 0.0
  %v1357 = vsel %vm1133, %v653, 0.0
  %v1358 = vsel %vm1134, %v654, 0.0
  %v1359 = vsel %vm1135, %v655, 0.0
  %v1360 = vsel %vm1136, %v656, 0.0
  %v1361 = vsel %vm1137, %v657, 0.0
  %v1362 = vsel %vm1138, %v658, 0.0
  %v1363 = vsel %vm1139, %v659, 0.0
  %v1364 = vsel %vm1140, %v660, 0.0
  %v1365 = vsel %vm1141, %v661, 0.0
  %v1366 = vsel %vm1142, %v662, 0.0
  %v1367 = vsel %vm1143, %v663, 0.0
  %v1368 = vsel %vm1144, %v664, 0.0
  %v1369 = vsel %vm1145, %v665, 0.0
  %v1370 = vsel %vm1146, %v666, 0.0
  %v1371 = vsel %vm1147, %v667, 0.0
  %v1372 = vsel %vm1148, %v668, 0.0
  %v1373 = vsel %vm1149, %v669, 0.0
  %v1374 = vsel %vm1150, %v670, 0.0
  %v1375 = vsel %vm1151, %v671, 0.0
  %v1376 = vsel %vm1152, %v672, 0.0
  %v1377 = vsel %vm1153, %v673, 0.0
  %v1378 = vsel %vm1154, %v674, 0.0
  %v1379 = vsel %vm1155, %v675, 0.0
  %v1380 = vsel %vm1156, %v676, 0.0
  %v1381 = vsel %vm1157, %v677, 0.0
  %v1382 = vsel %vm1158, %v678, 0.0
  %v1383 = vsel %vm1159, %v679, 0.0
  %v1384 = vsel %vm1160, %v680, 0.0
  %v1385 = vsel %vm1161, %v681, 0.0
  %v1386 = vsel %vm1162, %v682, 0.0
  %v1387 = vadd.f32 %v1323, %v1355
  %v1388 = vadd.f32 %v1324, %v1356
  %v1389 = vadd.f32 %v1325, %v1357
  %v1390 = vadd.f32 %v1326, %v1358
  %v1391 = vadd.f32 %v1327, %v1359
  %v1392 = vadd.f32 %v1328, %v1360
  %v1393 = vadd.f32 %v1329, %v1361
  %v1394 = vadd.f32 %v1330, %v1362
  %v1395 = vadd.f32 %v1331, %v1363
  %v1396 = vadd.f32 %v1332, %v1364
  %v1397 = vadd.f32 %v1333, %v1365
  %v1398 = vadd.f32 %v1334, %v1366
  %v1399 = vadd.f32 %v1335, %v1367
  %v1400 = vadd.f32 %v1336, %v1368
  %v1401 = vadd.f32 %v1337, %v1369
  %v1402 = vadd.f32 %v1338, %v1370
  %v1403 = vadd.f32 %v1339, %v1371
  %v1404 = vadd.f32 %v1340, %v1372
  %v1405 = vadd.f32 %v1341, %v1373
  %v1406 = vadd.f32 %v1342, %v1374
  %v1407 = vadd.f32 %v1343, %v1375
  %v1408 = vadd.f32 %v1344, %v1376
  %v1409 = vadd.f32 %v1345, %v1377
  %v1410 = vadd.f32 %v1346, %v1378
  %v1411 = vadd.f32 %v1347, %v1379
  %v1412 = vadd.f32 %v1348, %v1380
  %v1413 = vadd.f32 %v1349, %v1381
  %v1414 = vadd.f32 %v1350, %v1382
  %v1415 = vadd.f32 %v1351, %v1383
  %v1416 = vadd.f32 %v1352, %v1384
  %v1417 = vadd.f32 %v1353, %v1385
  %v1418 = vadd.f32 %v1354, %v1386
  %v1419 = vsel %vm1227, %v811, 0.0
  %v1420 = vsel %vm1228, %v812, 0.0
  %v1421 = vsel %vm1229, %v813, 0.0
  %v1422 = vsel %vm1230, %v814, 0.0
  %v1423 = vsel %vm1231, %v815, 0.0
  %v1424 = vsel %vm1232, %v816, 0.0
  %v1425 = vsel %vm1233, %v817, 0.0
  %v1426 = vsel %vm1234, %v818, 0.0
  %v1427 = vsel %vm1235, %v819, 0.0
  %v1428 = vsel %vm1236, %v820, 0.0
  %v1429 = vsel %vm1237, %v821, 0.0
  %v1430 = vsel %vm1238, %v822, 0.0
  %v1431 = vsel %vm1239, %v823, 0.0
  %v1432 = vsel %vm1240, %v824, 0.0
  %v1433 = vsel %vm1241, %v825, 0.0
  %v1434 = vsel %vm1242, %v826, 0.0
  %v1435 = vsel %vm1243, %v827, 0.0
  %v1436 = vsel %vm1244, %v828, 0.0
  %v1437 = vsel %vm1245, %v829, 0.0
  %v1438 = vsel %vm1246, %v830, 0.0
  %v1439 = vsel %vm1247, %v831, 0.0
  %v1440 = vsel %vm1248, %v832, 0.0
  %v1441 = vsel %vm1249, %v833, 0.0
  %v1442 = vsel %vm1250, %v834, 0.0
  %v1443 = vsel %vm1251, %v835, 0.0
  %v1444 = vsel %vm1252, %v836, 0.0
  %v1445 = vsel %vm1253, %v837, 0.0
  %v1446 = vsel %vm1254, %v838, 0.0
  %v1447 = vsel %vm1255, %v839, 0.0
  %v1448 = vsel %vm1256, %v840, 0.0
  %v1449 = vsel %vm1257, %v841, 0.0
  %v1450 = vsel %vm1258, %v842, 0.0
  %v1451 = vadd.f32 %v1387, %v1419
  %v1452 = vadd.f32 %v1388, %v1420
  %v1453 = vadd.f32 %v1389, %v1421
  %v1454 = vadd.f32 %v1390, %v1422
  %v1455 = vadd.f32 %v1391, %v1423
  %v1456 = vadd.f32 %v1392, %v1424
  %v1457 = vadd.f32 %v1393, %v1425
  %v1458 = vadd.f32 %v1394, %v1426
  %v1459 = vadd.f32 %v1395, %v1427
  %v1460 = vadd.f32 %v1396, %v1428
  %v1461 = vadd.f32 %v1397, %v1429
  %v1462 = vadd.f32 %v1398, %v1430
  %v1463 = vadd.f32 %v1399, %v1431
  %v1464 = vadd.f32 %v1400, %v1432
  %v1465 = vadd.f32 %v1401, %v1433
  %v1466 = vadd.f32 %v1402, %v1434
  %v1467 = vadd.f32 %v1403, %v1435
  %v1468 = vadd.f32 %v1404, %v1436
  %v1469 = vadd.f32 %v1405, %v1437
  %v1470 = vadd.f32 %v1406, %v1438
  %v1471 = vadd.f32 %v1407, %v1439
  %v1472 = vadd.f32 %v1408, %v1440
  %v1473 = vadd.f32 %v1409, %v1441
  %v1474 = vadd.f32 %v1410, %v1442
  %v1475 = vadd.f32 %v1411, %v1443
  %v1476 = vadd.f32 %v1412, %v1444
  %v1477 = vadd.f32 %v1413, %v1445
  %v1478 = vadd.f32 %v1414, %v1446
  %v1479 = vadd.f32 %v1415, %v1447
  %v1480 = vadd.f32 %v1416, %v1448
  %v1481 = vadd.f32 %v1417, %v1449
  %v1482 = vadd.f32 %v1418, %v1450
  %vm1483 = vcmp.eq.f32.partialorder %v299, 4.0
  %vm1484 = vcmp.eq.f32.partialorder %v300, 4.0
  %vm1485 = vcmp.eq.f32.partialorder %v301, 4.0
  %vm1486 = vcmp.eq.f32.partialorder %v302, 4.0
  %vm1487 = vcmp.eq.f32.partialorder %v303, 4.0
  %vm1488 = vcmp.eq.f32.partialorder %v304, 4.0
  %vm1489 = vcmp.eq.f32.partialorder %v305, 4.0
  %vm1490 = vcmp.eq.f32.partialorder %v306, 4.0
  %vm1491 = vcmp.eq.f32.partialorder %v307, 4.0
  %vm1492 = vcmp.eq.f32.partialorder %v308, 4.0
  %vm1493 = vcmp.eq.f32.partialorder %v309, 4.0
  %vm1494 = vcmp.eq.f32.partialorder %v310, 4.0
  %vm1495 = vcmp.eq.f32.partialorder %v311, 4.0
  %vm1496 = vcmp.eq.f32.partialorder %v312, 4.0
  %vm1497 = vcmp.eq.f32.partialorder %v313, 4.0
  %vm1498 = vcmp.eq.f32.partialorder %v314, 4.0
  %vm1499 = vcmp.eq.f32.partialorder %v315, 4.0
  %vm1500 = vcmp.eq.f32.partialorder %v316, 4.0
  %vm1501 = vcmp.eq.f32.partialorder %v317, 4.0
  %vm1502 = vcmp.eq.f32.partialorder %v318, 4.0
  %vm1503 = vcmp.eq.f32.partialorder %v319, 4.0
  %vm1504 = vcmp.eq.f32.partialorder %v320, 4.0
  %vm1505 = vcmp.eq.f32.partialorder %v321, 4.0
  %vm1506 = vcmp.eq.f32.partialorder %v322, 4.0
  %vm1507 = vcmp.eq.f32.partialorder %v323, 4.0
  %vm1508 = vcmp.eq.f32.partialorder %v324, 4.0
  %vm1509 = vcmp.eq.f32.partialorder %v325, 4.0
  %vm1510 = vcmp.eq.f32.partialorder %v326, 4.0
  %vm1511 = vcmp.eq.f32.partialorder %v327, 4.0
  %vm1512 = vcmp.eq.f32.partialorder %v328, 4.0
  %vm1513 = vcmp.eq.f32.partialorder %v329, 4.0
  %vm1514 = vcmp.eq.f32.partialorder %v330, 4.0
  %v1515 = vsel %vm1483, %v939, 0.0
  %v1516 = vsel %vm1484, %v940, 0.0
  %v1517 = vsel %vm1485, %v941, 0.0
  %v1518 = vsel %vm1486, %v942, 0.0
  %v1519 = vsel %vm1487, %v943, 0.0
  %v1520 = vsel %vm1488, %v944, 0.0
  %v1521 = vsel %vm1489, %v945, 0.0
  %v1522 = vsel %vm1490, %v946, 0.0
  %v1523 = vsel %vm1491, %v947, 0.0
  %v1524 = vsel %vm1492, %v948, 0.0
  %v1525 = vsel %vm1493, %v949, 0.0
  %v1526 = vsel %vm1494, %v950, 0.0
  %v1527 = vsel %vm1495, %v951, 0.0
  %v1528 = vsel %vm1496, %v952, 0.0
  %v1529 = vsel %vm1497, %v953, 0.0
  %v1530 = vsel %vm1498, %v954, 0.0
  %v1531 = vsel %vm1499, %v955, 0.0
  %v1532 = vsel %vm1500, %v956, 0.0
  %v1533 = vsel %vm1501, %v957, 0.0
  %v1534 = vsel %vm1502, %v958, 0.0
  %v1535 = vsel %vm1503, %v959, 0.0
  %v1536 = vsel %vm1504, %v960, 0.0
  %v1537 = vsel %vm1505, %v961, 0.0
  %v1538 = vsel %vm1506, %v962, 0.0
  %v1539 = vsel %vm1507, %v963, 0.0
  %v1540 = vsel %vm1508, %v964, 0.0
  %v1541 = vsel %vm1509, %v965, 0.0
  %v1542 = vsel %vm1510, %v966, 0.0
  %v1543 = vsel %vm1511, %v967, 0.0
  %v1544 = vsel %vm1512, %v968, 0.0
  %v1545 = vsel %vm1513, %v969, 0.0
  %v1546 = vsel %vm1514, %v970, 0.0
  %v1547 = vadd.f32 %v1451, %v1515
  %v1548 = vadd.f32 %v1452, %v1516
  %v1549 = vadd.f32 %v1453, %v1517
  %v1550 = vadd.f32 %v1454, %v1518
  %v1551 = vadd.f32 %v1455, %v1519
  %v1552 = vadd.f32 %v1456, %v1520
  %v1553 = vadd.f32 %v1457, %v1521
  %v1554 = vadd.f32 %v1458, %v1522
  %v1555 = vadd.f32 %v1459, %v1523
  %v1556 = vadd.f32 %v1460, %v1524
  %v1557 = vadd.f32 %v1461, %v1525
  %v1558 = vadd.f32 %v1462, %v1526
  %v1559 = vadd.f32 %v1463, %v1527
  %v1560 = vadd.f32 %v1464, %v1528
  %v1561 = vadd.f32 %v1465, %v1529
  %v1562 = vadd.f32 %v1466, %v1530
  %v1563 = vadd.f32 %v1467, %v1531
  %v1564 = vadd.f32 %v1468, %v1532
  %v1565 = vadd.f32 %v1469, %v1533
  %v1566 = vadd.f32 %v1470, %v1534
  %v1567 = vadd.f32 %v1471, %v1535
  %v1568 = vadd.f32 %v1472, %v1536
  %v1569 = vadd.f32 %v1473, %v1537
  %v1570 = vadd.f32 %v1474, %v1538
  %v1571 = vadd.f32 %v1475, %v1539
  %v1572 = vadd.f32 %v1476, %v1540
  %v1573 = vadd.f32 %v1477, %v1541
  %v1574 = vadd.f32 %v1478, %v1542
  %v1575 = vadd.f32 %v1479, %v1543
  %v1576 = vadd.f32 %v1480, %v1544
  %v1577 = vadd.f32 %v1481, %v1545
  %v1578 = vadd.f32 %v1482, %v1546
  %v1579 = vsel %vm1131, %v427, 0.0
  %v1580 = vsel %vm1132, %v428, 0.0
  %v1581 = vsel %vm1133, %v429, 0.0
  %v1582 = vsel %vm1134, %v430, 0.0
  %v1583 = vsel %vm1135, %v431, 0.0
  %v1584 = vsel %vm1136, %v432, 0.0
  %v1585 = vsel %vm1137, %v433, 0.0
  %v1586 = vsel %vm1138, %v434, 0.0
  %v1587 = vsel %vm1139, %v435, 0.0
  %v1588 = vsel %vm1140, %v436, 0.0
  %v1589 = vsel %vm1141, %v437, 0.0
  %v1590 = vsel %vm1142, %v438, 0.0
  %v1591 = vsel %vm1143, %v439, 0.0
  %v1592 = vsel %vm1144, %v440, 0.0
  %v1593 = vsel %vm1145, %v441, 0.0
  %v1594 = vsel %vm1146, %v442, 0.0
  %v1595 = vsel %vm1147, %v443, 0.0
  %v1596 = vsel %vm1148, %v444, 0.0
  %v1597 = vsel %vm1149, %v445, 0.0
  %v1598 = vsel %vm1150, %v446, 0.0
  %v1599 = vsel %vm1151, %v447, 0.0
  %v1600 = vsel %vm1152, %v448, 0.0
  %v1601 = vsel %vm1153, %v449, 0.0
  %v1602 = vsel %vm1154, %v450, 0.0
  %v1603 = vsel %vm1155, %v451, 0.0
  %v1604 = vsel %vm1156, %v452, 0.0
  %v1605 = vsel %vm1157, %v453, 0.0
  %v1606 = vsel %vm1158, %v454, 0.0
  %v1607 = vsel %vm1159, %v455, 0.0
  %v1608 = vsel %vm1160, %v456, 0.0
  %v1609 = vsel %vm1161, %v457, 0.0
  %v1610 = vsel %vm1162, %v458, 0.0
  %v1611 = vsel %vm1227, %v651, 0.0
  %v1612 = vsel %vm1228, %v652, 0.0
  %v1613 = vsel %vm1229, %v653, 0.0
  %v1614 = vsel %vm1230, %v654, 0.0
  %v1615 = vsel %vm1231, %v655, 0.0
  %v1616 = vsel %vm1232, %v656, 0.0
  %v1617 = vsel %vm1233, %v657, 0.0
  %v1618 = vsel %vm1234, %v658, 0.0
  %v1619 = vsel %vm1235, %v659, 0.0
  %v1620 = vsel %vm1236, %v660, 0.0
  %v1621 = vsel %vm1237, %v661, 0.0
  %v1622 = vsel %vm1238, %v662, 0.0
  %v1623 = vsel %vm1239, %v663, 0.0
  %v1624 = vsel %vm1240, %v664, 0.0
  %v1625 = vsel %vm1241, %v665, 0.0
  %v1626 = vsel %vm1242, %v666, 0.0
  %v1627 = vsel %vm1243, %v667, 0.0
  %v1628 = vsel %vm1244, %v668, 0.0
  %v1629 = vsel %vm1245, %v669, 0.0
  %v1630 = vsel %vm1246, %v670, 0.0
  %v1631 = vsel %vm1247, %v671, 0.0
  %v1632 = vsel %vm1248, %v672, 0.0
  %v1633 = vsel %vm1249, %v673, 0.0
  %v1634 = vsel %vm1250, %v674, 0.0
  %v1635 = vsel %vm1251, %v675, 0.0
  %v1636 = vsel %vm1252, %v676, 0.0
  %v1637 = vsel %vm1253, %v677, 0.0
  %v1638 = vsel %vm1254, %v678, 0.0
  %v1639 = vsel %vm1255, %v679, 0.0
  %v1640 = vsel %vm1256, %v680, 0.0
  %v1641 = vsel %vm1257, %v681, 0.0
  %v1642 = vsel %vm1258, %v682, 0.0
  %v1643 = vadd.f32 %v1579, %v1611
  %v1644 = vadd.f32 %v1580, %v1612
  %v1645 = vadd.f32 %v1581, %v1613
  %v1646 = vadd.f32 %v1582, %v1614
  %v1647 = vadd.f32 %v1583, %v1615
  %v1648 = vadd.f32 %v1584, %v1616
  %v1649 = vadd.f32 %v1585, %v1617
  %v1650 = vadd.f32 %v1586, %v1618
  %v1651 = vadd.f32 %v1587, %v1619
  %v1652 = vadd.f32 %v1588, %v1620
  %v1653 = vadd.f32 %v1589, %v1621
  %v1654 = vadd.f32 %v1590, %v1622
  %v1655 = vadd.f32 %v1591, %v1623
  %v1656 = vadd.f32 %v1592, %v1624
  %v1657 = vadd.f32 %v1593, %v1625
  %v1658 = vadd.f32 %v1594, %v1626
  %v1659 = vadd.f32 %v1595, %v1627
  %v1660 = vadd.f32 %v1596, %v1628
  %v1661 = vadd.f32 %v1597, %v1629
  %v1662 = vadd.f32 %v1598, %v1630
  %v1663 = vadd.f32 %v1599, %v1631
  %v1664 = vadd.f32 %v1600, %v1632
  %v1665 = vadd.f32 %v1601, %v1633
  %v1666 = vadd.f32 %v1602, %v1634
  %v1667 = vadd.f32 %v1603, %v1635
  %v1668 = vadd.f32 %v1604, %v1636
  %v1669 = vadd.f32 %v1605, %v1637
  %v1670 = vadd.f32 %v1606, %v1638
  %v1671 = vadd.f32 %v1607, %v1639
  %v1672 = vadd.f32 %v1608, %v1640
  %v1673 = vadd.f32 %v1609, %v1641
  %v1674 = vadd.f32 %v1610, %v1642
  %v1675 = vsel %vm1483, %v811, 0.0
  %v1676 = vsel %vm1484, %v812, 0.0
  %v1677 = vsel %vm1485, %v813, 0.0
  %v1678 = vsel %vm1486, %v814, 0.0
  %v1679 = vsel %vm1487, %v815, 0.0
  %v1680 = vsel %vm1488, %v816, 0.0
  %v1681 = vsel %vm1489, %v817, 0.0
  %v1682 = vsel %vm1490, %v818, 0.0
  %v1683 = vsel %vm1491, %v819, 0.0
  %v1684 = vsel %vm1492, %v820, 0.0
  %v1685 = vsel %vm1493, %v821, 0.0
  %v1686 = vsel %vm1494, %v822, 0.0
  %v1687 = vsel %vm1495, %v823, 0.0
  %v1688 = vsel %vm1496, %v824, 0.0
  %v1689 = vsel %vm1497, %v825, 0.0
  %v1690 = vsel %vm1498, %v826, 0.0
  %v1691 = vsel %vm1499, %v827, 0.0
  %v1692 = vsel %vm1500, %v828, 0.0
  %v1693 = vsel %vm1501, %v829, 0.0
  %v1694 = vsel %vm1502, %v830, 0.0
  %v1695 = vsel %vm1503, %v831, 0.0
  %v1696 = vsel %vm1504, %v832, 0.0
  %v1697 = vsel %vm1505, %v833, 0.0
  %v1698 = vsel %vm1506, %v834, 0.0
  %v1699 = vsel %vm1507, %v835, 0.0
  %v1700 = vsel %vm1508, %v836, 0.0
  %v1701 = vsel %vm1509, %v837, 0.0
  %v1702 = vsel %vm1510, %v838, 0.0
  %v1703 = vsel %vm1511, %v839, 0.0
  %v1704 = vsel %vm1512, %v840, 0.0
  %v1705 = vsel %vm1513, %v841, 0.0
  %v1706 = vsel %vm1514, %v842, 0.0
  %v1707 = vadd.f32 %v1643, %v1675
  %v1708 = vadd.f32 %v1644, %v1676
  %v1709 = vadd.f32 %v1645, %v1677
  %v1710 = vadd.f32 %v1646, %v1678
  %v1711 = vadd.f32 %v1647, %v1679
  %v1712 = vadd.f32 %v1648, %v1680
  %v1713 = vadd.f32 %v1649, %v1681
  %v1714 = vadd.f32 %v1650, %v1682
  %v1715 = vadd.f32 %v1651, %v1683
  %v1716 = vadd.f32 %v1652, %v1684
  %v1717 = vadd.f32 %v1653, %v1685
  %v1718 = vadd.f32 %v1654, %v1686
  %v1719 = vadd.f32 %v1655, %v1687
  %v1720 = vadd.f32 %v1656, %v1688
  %v1721 = vadd.f32 %v1657, %v1689
  %v1722 = vadd.f32 %v1658, %v1690
  %v1723 = vadd.f32 %v1659, %v1691
  %v1724 = vadd.f32 %v1660, %v1692
  %v1725 = vadd.f32 %v1661, %v1693
  %v1726 = vadd.f32 %v1662, %v1694
  %v1727 = vadd.f32 %v1663, %v1695
  %v1728 = vadd.f32 %v1664, %v1696
  %v1729 = vadd.f32 %v1665, %v1697
  %v1730 = vadd.f32 %v1666, %v1698
  %v1731 = vadd.f32 %v1667, %v1699
  %v1732 = vadd.f32 %v1668, %v1700
  %v1733 = vadd.f32 %v1669, %v1701
  %v1734 = vadd.f32 %v1670, %v1702
  %v1735 = vadd.f32 %v1671, %v1703
  %v1736 = vadd.f32 %v1672, %v1704
  %v1737 = vadd.f32 %v1673, %v1705
  %v1738 = vadd.f32 %v1674, %v1706
  %vm1739 = vcmp.eq.f32.partialorder %v299, 5.0
  %vm1740 = vcmp.eq.f32.partialorder %v300, 5.0
  %vm1741 = vcmp.eq.f32.partialorder %v301, 5.0
  %vm1742 = vcmp.eq.f32.partialorder %v302, 5.0
  %vm1743 = vcmp.eq.f32.partialorder %v303, 5.0
  %vm1744 = vcmp.eq.f32.partialorder %v304, 5.0
  %vm1745 = vcmp.eq.f32.partialorder %v305, 5.0
  %vm1746 = vcmp.eq.f32.partialorder %v306, 5.0
  %vm1747 = vcmp.eq.f32.partialorder %v307, 5.0
  %vm1748 = vcmp.eq.f32.partialorder %v308, 5.0
  %vm1749 = vcmp.eq.f32.partialorder %v309, 5.0
  %vm1750 = vcmp.eq.f32.partialorder %v310, 5.0
  %vm1751 = vcmp.eq.f32.partialorder %v311, 5.0
  %vm1752 = vcmp.eq.f32.partialorder %v312, 5.0
  %vm1753 = vcmp.eq.f32.partialorder %v313, 5.0
  %vm1754 = vcmp.eq.f32.partialorder %v314, 5.0
  %vm1755 = vcmp.eq.f32.partialorder %v315, 5.0
  %vm1756 = vcmp.eq.f32.partialorder %v316, 5.0
  %vm1757 = vcmp.eq.f32.partialorder %v317, 5.0
  %vm1758 = vcmp.eq.f32.partialorder %v318, 5.0
  %vm1759 = vcmp.eq.f32.partialorder %v319, 5.0
  %vm1760 = vcmp.eq.f32.partialorder %v320, 5.0
  %vm1761 = vcmp.eq.f32.partialorder %v321, 5.0
  %vm1762 = vcmp.eq.f32.partialorder %v322, 5.0
  %vm1763 = vcmp.eq.f32.partialorder %v323, 5.0
  %vm1764 = vcmp.eq.f32.partialorder %v324, 5.0
  %vm1765 = vcmp.eq.f32.partialorder %v325, 5.0
  %vm1766 = vcmp.eq.f32.partialorder %v326, 5.0
  %vm1767 = vcmp.eq.f32.partialorder %v327, 5.0
  %vm1768 = vcmp.eq.f32.partialorder %v328, 5.0
  %vm1769 = vcmp.eq.f32.partialorder %v329, 5.0
  %vm1770 = vcmp.eq.f32.partialorder %v330, 5.0
  %v1771 = vsel %vm1739, %v939, 0.0
  %v1772 = vsel %vm1740, %v940, 0.0
  %v1773 = vsel %vm1741, %v941, 0.0
  %v1774 = vsel %vm1742, %v942, 0.0
  %v1775 = vsel %vm1743, %v943, 0.0
  %v1776 = vsel %vm1744, %v944, 0.0
  %v1777 = vsel %vm1745, %v945, 0.0
  %v1778 = vsel %vm1746, %v946, 0.0
  %v1779 = vsel %vm1747, %v947, 0.0
  %v1780 = vsel %vm1748, %v948, 0.0
  %v1781 = vsel %vm1749, %v949, 0.0
  %v1782 = vsel %vm1750, %v950, 0.0
  %v1783 = vsel %vm1751, %v951, 0.0
  %v1784 = vsel %vm1752, %v952, 0.0
  %v1785 = vsel %vm1753, %v953, 0.0
  %v1786 = vsel %vm1754, %v954, 0.0
  %v1787 = vsel %vm1755, %v955, 0.0
  %v1788 = vsel %vm1756, %v956, 0.0
  %v1789 = vsel %vm1757, %v957, 0.0
  %v1790 = vsel %vm1758, %v958, 0.0
  %v1791 = vsel %vm1759, %v959, 0.0
  %v1792 = vsel %vm1760, %v960, 0.0
  %v1793 = vsel %vm1761, %v961, 0.0
  %v1794 = vsel %vm1762, %v962, 0.0
  %v1795 = vsel %vm1763, %v963, 0.0
  %v1796 = vsel %vm1764, %v964, 0.0
  %v1797 = vsel %vm1765, %v965, 0.0
  %v1798 = vsel %vm1766, %v966, 0.0
  %v1799 = vsel %vm1767, %v967, 0.0
  %v1800 = vsel %vm1768, %v968, 0.0
  %v1801 = vsel %vm1769, %v969, 0.0
  %v1802 = vsel %vm1770, %v970, 0.0
  %v1803 = vadd.f32 %v1707, %v1771
  %v1804 = vadd.f32 %v1708, %v1772
  %v1805 = vadd.f32 %v1709, %v1773
  %v1806 = vadd.f32 %v1710, %v1774
  %v1807 = vadd.f32 %v1711, %v1775
  %v1808 = vadd.f32 %v1712, %v1776
  %v1809 = vadd.f32 %v1713, %v1777
  %v1810 = vadd.f32 %v1714, %v1778
  %v1811 = vadd.f32 %v1715, %v1779
  %v1812 = vadd.f32 %v1716, %v1780
  %v1813 = vadd.f32 %v1717, %v1781
  %v1814 = vadd.f32 %v1718, %v1782
  %v1815 = vadd.f32 %v1719, %v1783
  %v1816 = vadd.f32 %v1720, %v1784
  %v1817 = vadd.f32 %v1721, %v1785
  %v1818 = vadd.f32 %v1722, %v1786
  %v1819 = vadd.f32 %v1723, %v1787
  %v1820 = vadd.f32 %v1724, %v1788
  %v1821 = vadd.f32 %v1725, %v1789
  %v1822 = vadd.f32 %v1726, %v1790
  %v1823 = vadd.f32 %v1727, %v1791
  %v1824 = vadd.f32 %v1728, %v1792
  %v1825 = vadd.f32 %v1729, %v1793
  %v1826 = vadd.f32 %v1730, %v1794
  %v1827 = vadd.f32 %v1731, %v1795
  %v1828 = vadd.f32 %v1732, %v1796
  %v1829 = vadd.f32 %v1733, %v1797
  %v1830 = vadd.f32 %v1734, %v1798
  %v1831 = vadd.f32 %v1735, %v1799
  %v1832 = vadd.f32 %v1736, %v1800
  %v1833 = vadd.f32 %v1737, %v1801
  %v1834 = vadd.f32 %v1738, %v1802
  %v1835 = vsel %vm1227, %v427, 0.0
  %v1836 = vsel %vm1228, %v428, 0.0
  %v1837 = vsel %vm1229, %v429, 0.0
  %v1838 = vsel %vm1230, %v430, 0.0
  %v1839 = vsel %vm1231, %v431, 0.0
  %v1840 = vsel %vm1232, %v432, 0.0
  %v1841 = vsel %vm1233, %v433, 0.0
  %v1842 = vsel %vm1234, %v434, 0.0
  %v1843 = vsel %vm1235, %v435, 0.0
  %v1844 = vsel %vm1236, %v436, 0.0
  %v1845 = vsel %vm1237, %v437, 0.0
  %v1846 = vsel %vm1238, %v438, 0.0
  %v1847 = vsel %vm1239, %v439, 0.0
  %v1848 = vsel %vm1240, %v440, 0.0
  %v1849 = vsel %vm1241, %v441, 0.0
  %v1850 = vsel %vm1242, %v442, 0.0
  %v1851 = vsel %vm1243, %v443, 0.0
  %v1852 = vsel %vm1244, %v444, 0.0
  %v1853 = vsel %vm1245, %v445, 0.0
  %v1854 = vsel %vm1246, %v446, 0.0
  %v1855 = vsel %vm1247, %v447, 0.0
  %v1856 = vsel %vm1248, %v448, 0.0
  %v1857 = vsel %vm1249, %v449, 0.0
  %v1858 = vsel %vm1250, %v450, 0.0
  %v1859 = vsel %vm1251, %v451, 0.0
  %v1860 = vsel %vm1252, %v452, 0.0
  %v1861 = vsel %vm1253, %v453, 0.0
  %v1862 = vsel %vm1254, %v454, 0.0
  %v1863 = vsel %vm1255, %v455, 0.0
  %v1864 = vsel %vm1256, %v456, 0.0
  %v1865 = vsel %vm1257, %v457, 0.0
  %v1866 = vsel %vm1258, %v458, 0.0
  %v1867 = vsel %vm1483, %v651, 0.0
  %v1868 = vsel %vm1484, %v652, 0.0
  %v1869 = vsel %vm1485, %v653, 0.0
  %v1870 = vsel %vm1486, %v654, 0.0
  %v1871 = vsel %vm1487, %v655, 0.0
  %v1872 = vsel %vm1488, %v656, 0.0
  %v1873 = vsel %vm1489, %v657, 0.0
  %v1874 = vsel %vm1490, %v658, 0.0
  %v1875 = vsel %vm1491, %v659, 0.0
  %v1876 = vsel %vm1492, %v660, 0.0
  %v1877 = vsel %vm1493, %v661, 0.0
  %v1878 = vsel %vm1494, %v662, 0.0
  %v1879 = vsel %vm1495, %v663, 0.0
  %v1880 = vsel %vm1496, %v664, 0.0
  %v1881 = vsel %vm1497, %v665, 0.0
  %v1882 = vsel %vm1498, %v666, 0.0
  %v1883 = vsel %vm1499, %v667, 0.0
  %v1884 = vsel %vm1500, %v668, 0.0
  %v1885 = vsel %vm1501, %v669, 0.0
  %v1886 = vsel %vm1502, %v670, 0.0
  %v1887 = vsel %vm1503, %v671, 0.0
  %v1888 = vsel %vm1504, %v672, 0.0
  %v1889 = vsel %vm1505, %v673, 0.0
  %v1890 = vsel %vm1506, %v674, 0.0
  %v1891 = vsel %vm1507, %v675, 0.0
  %v1892 = vsel %vm1508, %v676, 0.0
  %v1893 = vsel %vm1509, %v677, 0.0
  %v1894 = vsel %vm1510, %v678, 0.0
  %v1895 = vsel %vm1511, %v679, 0.0
  %v1896 = vsel %vm1512, %v680, 0.0
  %v1897 = vsel %vm1513, %v681, 0.0
  %v1898 = vsel %vm1514, %v682, 0.0
  %v1899 = vadd.f32 %v1835, %v1867
  %v1900 = vadd.f32 %v1836, %v1868
  %v1901 = vadd.f32 %v1837, %v1869
  %v1902 = vadd.f32 %v1838, %v1870
  %v1903 = vadd.f32 %v1839, %v1871
  %v1904 = vadd.f32 %v1840, %v1872
  %v1905 = vadd.f32 %v1841, %v1873
  %v1906 = vadd.f32 %v1842, %v1874
  %v1907 = vadd.f32 %v1843, %v1875
  %v1908 = vadd.f32 %v1844, %v1876
  %v1909 = vadd.f32 %v1845, %v1877
  %v1910 = vadd.f32 %v1846, %v1878
  %v1911 = vadd.f32 %v1847, %v1879
  %v1912 = vadd.f32 %v1848, %v1880
  %v1913 = vadd.f32 %v1849, %v1881
  %v1914 = vadd.f32 %v1850, %v1882
  %v1915 = vadd.f32 %v1851, %v1883
  %v1916 = vadd.f32 %v1852, %v1884
  %v1917 = vadd.f32 %v1853, %v1885
  %v1918 = vadd.f32 %v1854, %v1886
  %v1919 = vadd.f32 %v1855, %v1887
  %v1920 = vadd.f32 %v1856, %v1888
  %v1921 = vadd.f32 %v1857, %v1889
  %v1922 = vadd.f32 %v1858, %v1890
  %v1923 = vadd.f32 %v1859, %v1891
  %v1924 = vadd.f32 %v1860, %v1892
  %v1925 = vadd.f32 %v1861, %v1893
  %v1926 = vadd.f32 %v1862, %v1894
  %v1927 = vadd.f32 %v1863, %v1895
  %v1928 = vadd.f32 %v1864, %v1896
  %v1929 = vadd.f32 %v1865, %v1897
  %v1930 = vadd.f32 %v1866, %v1898
  %v1931 = vsel %vm1739, %v811, 0.0
  %v1932 = vsel %vm1740, %v812, 0.0
  %v1933 = vsel %vm1741, %v813, 0.0
  %v1934 = vsel %vm1742, %v814, 0.0
  %v1935 = vsel %vm1743, %v815, 0.0
  %v1936 = vsel %vm1744, %v816, 0.0
  %v1937 = vsel %vm1745, %v817, 0.0
  %v1938 = vsel %vm1746, %v818, 0.0
  %v1939 = vsel %vm1747, %v819, 0.0
  %v1940 = vsel %vm1748, %v820, 0.0
  %v1941 = vsel %vm1749, %v821, 0.0
  %v1942 = vsel %vm1750, %v822, 0.0
  %v1943 = vsel %vm1751, %v823, 0.0
  %v1944 = vsel %vm1752, %v824, 0.0
  %v1945 = vsel %vm1753, %v825, 0.0
  %v1946 = vsel %vm1754, %v826, 0.0
  %v1947 = vsel %vm1755, %v827, 0.0
  %v1948 = vsel %vm1756, %v828, 0.0
  %v1949 = vsel %vm1757, %v829, 0.0
  %v1950 = vsel %vm1758, %v830, 0.0
  %v1951 = vsel %vm1759, %v831, 0.0
  %v1952 = vsel %vm1760, %v832, 0.0
  %v1953 = vsel %vm1761, %v833, 0.0
  %v1954 = vsel %vm1762, %v834, 0.0
  %v1955 = vsel %vm1763, %v835, 0.0
  %v1956 = vsel %vm1764, %v836, 0.0
  %v1957 = vsel %vm1765, %v837, 0.0
  %v1958 = vsel %vm1766, %v838, 0.0
  %v1959 = vsel %vm1767, %v839, 0.0
  %v1960 = vsel %vm1768, %v840, 0.0
  %v1961 = vsel %vm1769, %v841, 0.0
  %v1962 = vsel %vm1770, %v842, 0.0
  %v1963 = vadd.f32 %v1899, %v1931
  %v1964 = vadd.f32 %v1900, %v1932
  %v1965 = vadd.f32 %v1901, %v1933
  %v1966 = vadd.f32 %v1902, %v1934
  %v1967 = vadd.f32 %v1903, %v1935
  %v1968 = vadd.f32 %v1904, %v1936
  %v1969 = vadd.f32 %v1905, %v1937
  %v1970 = vadd.f32 %v1906, %v1938
  %v1971 = vadd.f32 %v1907, %v1939
  %v1972 = vadd.f32 %v1908, %v1940
  %v1973 = vadd.f32 %v1909, %v1941
  %v1974 = vadd.f32 %v1910, %v1942
  %v1975 = vadd.f32 %v1911, %v1943
  %v1976 = vadd.f32 %v1912, %v1944
  %v1977 = vadd.f32 %v1913, %v1945
  %v1978 = vadd.f32 %v1914, %v1946
  %v1979 = vadd.f32 %v1915, %v1947
  %v1980 = vadd.f32 %v1916, %v1948
  %v1981 = vadd.f32 %v1917, %v1949
  %v1982 = vadd.f32 %v1918, %v1950
  %v1983 = vadd.f32 %v1919, %v1951
  %v1984 = vadd.f32 %v1920, %v1952
  %v1985 = vadd.f32 %v1921, %v1953
  %v1986 = vadd.f32 %v1922, %v1954
  %v1987 = vadd.f32 %v1923, %v1955
  %v1988 = vadd.f32 %v1924, %v1956
  %v1989 = vadd.f32 %v1925, %v1957
  %v1990 = vadd.f32 %v1926, %v1958
  %v1991 = vadd.f32 %v1927, %v1959
  %v1992 = vadd.f32 %v1928, %v1960
  %v1993 = vadd.f32 %v1929, %v1961
  %v1994 = vadd.f32 %v1930, %v1962
  %vm1995 = vcmp.eq.f32.partialorder %v299, 6.0
  %vm1996 = vcmp.eq.f32.partialorder %v300, 6.0
  %vm1997 = vcmp.eq.f32.partialorder %v301, 6.0
  %vm1998 = vcmp.eq.f32.partialorder %v302, 6.0
  %vm1999 = vcmp.eq.f32.partialorder %v303, 6.0
  %vm2000 = vcmp.eq.f32.partialorder %v304, 6.0
  %vm2001 = vcmp.eq.f32.partialorder %v305, 6.0
  %vm2002 = vcmp.eq.f32.partialorder %v306, 6.0
  %vm2003 = vcmp.eq.f32.partialorder %v307, 6.0
  %vm2004 = vcmp.eq.f32.partialorder %v308, 6.0
  %vm2005 = vcmp.eq.f32.partialorder %v309, 6.0
  %vm2006 = vcmp.eq.f32.partialorder %v310, 6.0
  %vm2007 = vcmp.eq.f32.partialorder %v311, 6.0
  %vm2008 = vcmp.eq.f32.partialorder %v312, 6.0
  %vm2009 = vcmp.eq.f32.partialorder %v313, 6.0
  %vm2010 = vcmp.eq.f32.partialorder %v314, 6.0
  %vm2011 = vcmp.eq.f32.partialorder %v315, 6.0
  %vm2012 = vcmp.eq.f32.partialorder %v316, 6.0
  %vm2013 = vcmp.eq.f32.partialorder %v317, 6.0
  %vm2014 = vcmp.eq.f32.partialorder %v318, 6.0
  %vm2015 = vcmp.eq.f32.partialorder %v319, 6.0
  %vm2016 = vcmp.eq.f32.partialorder %v320, 6.0
  %vm2017 = vcmp.eq.f32.partialorder %v321, 6.0
  %vm2018 = vcmp.eq.f32.partialorder %v322, 6.0
  %vm2019 = vcmp.eq.f32.partialorder %v323, 6.0
  %vm2020 = vcmp.eq.f32.partialorder %v324, 6.0
  %vm2021 = vcmp.eq.f32.partialorder %v325, 6.0
  %vm2022 = vcmp.eq.f32.partialorder %v326, 6.0
  %vm2023 = vcmp.eq.f32.partialorder %v327, 6.0
  %vm2024 = vcmp.eq.f32.partialorder %v328, 6.0
  %vm2025 = vcmp.eq.f32.partialorder %v329, 6.0
  %vm2026 = vcmp.eq.f32.partialorder %v330, 6.0
  %v2027 = vsel %vm1995, %v939, 0.0
  %v2028 = vsel %vm1996, %v940, 0.0
  %v2029 = vsel %vm1997, %v941, 0.0
  %v2030 = vsel %vm1998, %v942, 0.0
  %v2031 = vsel %vm1999, %v943, 0.0
  %v2032 = vsel %vm2000, %v944, 0.0
  %v2033 = vsel %vm2001, %v945, 0.0
  %v2034 = vsel %vm2002, %v946, 0.0
  %v2035 = vsel %vm2003, %v947, 0.0
  %v2036 = vsel %vm2004, %v948, 0.0
  %v2037 = vsel %vm2005, %v949, 0.0
  %v2038 = vsel %vm2006, %v950, 0.0
  %v2039 = vsel %vm2007, %v951, 0.0
  %v2040 = vsel %vm2008, %v952, 0.0
  %v2041 = vsel %vm2009, %v953, 0.0
  %v2042 = vsel %vm2010, %v954, 0.0
  %v2043 = vsel %vm2011, %v955, 0.0
  %v2044 = vsel %vm2012, %v956, 0.0
  %v2045 = vsel %vm2013, %v957, 0.0
  %v2046 = vsel %vm2014, %v958, 0.0
  %v2047 = vsel %vm2015, %v959, 0.0
  %v2048 = vsel %vm2016, %v960, 0.0
  %v2049 = vsel %vm2017, %v961, 0.0
  %v2050 = vsel %vm2018, %v962, 0.0
  %v2051 = vsel %vm2019, %v963, 0.0
  %v2052 = vsel %vm2020, %v964, 0.0
  %v2053 = vsel %vm2021, %v965, 0.0
  %v2054 = vsel %vm2022, %v966, 0.0
  %v2055 = vsel %vm2023, %v967, 0.0
  %v2056 = vsel %vm2024, %v968, 0.0
  %v2057 = vsel %vm2025, %v969, 0.0
  %v2058 = vsel %vm2026, %v970, 0.0
  %v2059 = vadd.f32 %v1963, %v2027
  %v2060 = vadd.f32 %v1964, %v2028
  %v2061 = vadd.f32 %v1965, %v2029
  %v2062 = vadd.f32 %v1966, %v2030
  %v2063 = vadd.f32 %v1967, %v2031
  %v2064 = vadd.f32 %v1968, %v2032
  %v2065 = vadd.f32 %v1969, %v2033
  %v2066 = vadd.f32 %v1970, %v2034
  %v2067 = vadd.f32 %v1971, %v2035
  %v2068 = vadd.f32 %v1972, %v2036
  %v2069 = vadd.f32 %v1973, %v2037
  %v2070 = vadd.f32 %v1974, %v2038
  %v2071 = vadd.f32 %v1975, %v2039
  %v2072 = vadd.f32 %v1976, %v2040
  %v2073 = vadd.f32 %v1977, %v2041
  %v2074 = vadd.f32 %v1978, %v2042
  %v2075 = vadd.f32 %v1979, %v2043
  %v2076 = vadd.f32 %v1980, %v2044
  %v2077 = vadd.f32 %v1981, %v2045
  %v2078 = vadd.f32 %v1982, %v2046
  %v2079 = vadd.f32 %v1983, %v2047
  %v2080 = vadd.f32 %v1984, %v2048
  %v2081 = vadd.f32 %v1985, %v2049
  %v2082 = vadd.f32 %v1986, %v2050
  %v2083 = vadd.f32 %v1987, %v2051
  %v2084 = vadd.f32 %v1988, %v2052
  %v2085 = vadd.f32 %v1989, %v2053
  %v2086 = vadd.f32 %v1990, %v2054
  %v2087 = vadd.f32 %v1991, %v2055
  %v2088 = vadd.f32 %v1992, %v2056
  %v2089 = vadd.f32 %v1993, %v2057
  %v2090 = vadd.f32 %v1994, %v2058
  %v2091 = vsel %vm1483, %v427, 0.0
  %v2092 = vsel %vm1484, %v428, 0.0
  %v2093 = vsel %vm1485, %v429, 0.0
  %v2094 = vsel %vm1486, %v430, 0.0
  %v2095 = vsel %vm1487, %v431, 0.0
  %v2096 = vsel %vm1488, %v432, 0.0
  %v2097 = vsel %vm1489, %v433, 0.0
  %v2098 = vsel %vm1490, %v434, 0.0
  %v2099 = vsel %vm1491, %v435, 0.0
  %v2100 = vsel %vm1492, %v436, 0.0
  %v2101 = vsel %vm1493, %v437, 0.0
  %v2102 = vsel %vm1494, %v438, 0.0
  %v2103 = vsel %vm1495, %v439, 0.0
  %v2104 = vsel %vm1496, %v440, 0.0
  %v2105 = vsel %vm1497, %v441, 0.0
  %v2106 = vsel %vm1498, %v442, 0.0
  %v2107 = vsel %vm1499, %v443, 0.0
  %v2108 = vsel %vm1500, %v444, 0.0
  %v2109 = vsel %vm1501, %v445, 0.0
  %v2110 = vsel %vm1502, %v446, 0.0
  %v2111 = vsel %vm1503, %v447, 0.0
  %v2112 = vsel %vm1504, %v448, 0.0
  %v2113 = vsel %vm1505, %v449, 0.0
  %v2114 = vsel %vm1506, %v450, 0.0
  %v2115 = vsel %vm1507, %v451, 0.0
  %v2116 = vsel %vm1508, %v452, 0.0
  %v2117 = vsel %vm1509, %v453, 0.0
  %v2118 = vsel %vm1510, %v454, 0.0
  %v2119 = vsel %vm1511, %v455, 0.0
  %v2120 = vsel %vm1512, %v456, 0.0
  %v2121 = vsel %vm1513, %v457, 0.0
  %v2122 = vsel %vm1514, %v458, 0.0
  %v2123 = vsel %vm1739, %v651, 0.0
  %v2124 = vsel %vm1740, %v652, 0.0
  %v2125 = vsel %vm1741, %v653, 0.0
  %v2126 = vsel %vm1742, %v654, 0.0
  %v2127 = vsel %vm1743, %v655, 0.0
  %v2128 = vsel %vm1744, %v656, 0.0
  %v2129 = vsel %vm1745, %v657, 0.0
  %v2130 = vsel %vm1746, %v658, 0.0
  %v2131 = vsel %vm1747, %v659, 0.0
  %v2132 = vsel %vm1748, %v660, 0.0
  %v2133 = vsel %vm1749, %v661, 0.0
  %v2134 = vsel %vm1750, %v662, 0.0
  %v2135 = vsel %vm1751, %v663, 0.0
  %v2136 = vsel %vm1752, %v664, 0.0
  %v2137 = vsel %vm1753, %v665, 0.0
  %v2138 = vsel %vm1754, %v666, 0.0
  %v2139 = vsel %vm1755, %v667, 0.0
  %v2140 = vsel %vm1756, %v668, 0.0
  %v2141 = vsel %vm1757, %v669, 0.0
  %v2142 = vsel %vm1758, %v670, 0.0
  %v2143 = vsel %vm1759, %v671, 0.0
  %v2144 = vsel %vm1760, %v672, 0.0
  %v2145 = vsel %vm1761, %v673, 0.0
  %v2146 = vsel %vm1762, %v674, 0.0
  %v2147 = vsel %vm1763, %v675, 0.0
  %v2148 = vsel %vm1764, %v676, 0.0
  %v2149 = vsel %vm1765, %v677, 0.0
  %v2150 = vsel %vm1766, %v678, 0.0
  %v2151 = vsel %vm1767, %v679, 0.0
  %v2152 = vsel %vm1768, %v680, 0.0
  %v2153 = vsel %vm1769, %v681, 0.0
  %v2154 = vsel %vm1770, %v682, 0.0
  %v2155 = vadd.f32 %v2091, %v2123
  %v2156 = vadd.f32 %v2092, %v2124
  %v2157 = vadd.f32 %v2093, %v2125
  %v2158 = vadd.f32 %v2094, %v2126
  %v2159 = vadd.f32 %v2095, %v2127
  %v2160 = vadd.f32 %v2096, %v2128
  %v2161 = vadd.f32 %v2097, %v2129
  %v2162 = vadd.f32 %v2098, %v2130
  %v2163 = vadd.f32 %v2099, %v2131
  %v2164 = vadd.f32 %v2100, %v2132
  %v2165 = vadd.f32 %v2101, %v2133
  %v2166 = vadd.f32 %v2102, %v2134
  %v2167 = vadd.f32 %v2103, %v2135
  %v2168 = vadd.f32 %v2104, %v2136
  %v2169 = vadd.f32 %v2105, %v2137
  %v2170 = vadd.f32 %v2106, %v2138
  %v2171 = vadd.f32 %v2107, %v2139
  %v2172 = vadd.f32 %v2108, %v2140
  %v2173 = vadd.f32 %v2109, %v2141
  %v2174 = vadd.f32 %v2110, %v2142
  %v2175 = vadd.f32 %v2111, %v2143
  %v2176 = vadd.f32 %v2112, %v2144
  %v2177 = vadd.f32 %v2113, %v2145
  %v2178 = vadd.f32 %v2114, %v2146
  %v2179 = vadd.f32 %v2115, %v2147
  %v2180 = vadd.f32 %v2116, %v2148
  %v2181 = vadd.f32 %v2117, %v2149
  %v2182 = vadd.f32 %v2118, %v2150
  %v2183 = vadd.f32 %v2119, %v2151
  %v2184 = vadd.f32 %v2120, %v2152
  %v2185 = vadd.f32 %v2121, %v2153
  %v2186 = vadd.f32 %v2122, %v2154
  %v2187 = vsel %vm1995, %v811, 0.0
  %v2188 = vsel %vm1996, %v812, 0.0
  %v2189 = vsel %vm1997, %v813, 0.0
  %v2190 = vsel %vm1998, %v814, 0.0
  %v2191 = vsel %vm1999, %v815, 0.0
  %v2192 = vsel %vm2000, %v816, 0.0
  %v2193 = vsel %vm2001, %v817, 0.0
  %v2194 = vsel %vm2002, %v818, 0.0
  %v2195 = vsel %vm2003, %v819, 0.0
  %v2196 = vsel %vm2004, %v820, 0.0
  %v2197 = vsel %vm2005, %v821, 0.0
  %v2198 = vsel %vm2006, %v822, 0.0
  %v2199 = vsel %vm2007, %v823, 0.0
  %v2200 = vsel %vm2008, %v824, 0.0
  %v2201 = vsel %vm2009, %v825, 0.0
  %v2202 = vsel %vm2010, %v826, 0.0
  %v2203 = vsel %vm2011, %v827, 0.0
  %v2204 = vsel %vm2012, %v828, 0.0
  %v2205 = vsel %vm2013, %v829, 0.0
  %v2206 = vsel %vm2014, %v830, 0.0
  %v2207 = vsel %vm2015, %v831, 0.0
  %v2208 = vsel %vm2016, %v832, 0.0
  %v2209 = vsel %vm2017, %v833, 0.0
  %v2210 = vsel %vm2018, %v834, 0.0
  %v2211 = vsel %vm2019, %v835, 0.0
  %v2212 = vsel %vm2020, %v836, 0.0
  %v2213 = vsel %vm2021, %v837, 0.0
  %v2214 = vsel %vm2022, %v838, 0.0
  %v2215 = vsel %vm2023, %v839, 0.0
  %v2216 = vsel %vm2024, %v840, 0.0
  %v2217 = vsel %vm2025, %v841, 0.0
  %v2218 = vsel %vm2026, %v842, 0.0
  %v2219 = vadd.f32 %v2155, %v2187
  %v2220 = vadd.f32 %v2156, %v2188
  %v2221 = vadd.f32 %v2157, %v2189
  %v2222 = vadd.f32 %v2158, %v2190
  %v2223 = vadd.f32 %v2159, %v2191
  %v2224 = vadd.f32 %v2160, %v2192
  %v2225 = vadd.f32 %v2161, %v2193
  %v2226 = vadd.f32 %v2162, %v2194
  %v2227 = vadd.f32 %v2163, %v2195
  %v2228 = vadd.f32 %v2164, %v2196
  %v2229 = vadd.f32 %v2165, %v2197
  %v2230 = vadd.f32 %v2166, %v2198
  %v2231 = vadd.f32 %v2167, %v2199
  %v2232 = vadd.f32 %v2168, %v2200
  %v2233 = vadd.f32 %v2169, %v2201
  %v2234 = vadd.f32 %v2170, %v2202
  %v2235 = vadd.f32 %v2171, %v2203
  %v2236 = vadd.f32 %v2172, %v2204
  %v2237 = vadd.f32 %v2173, %v2205
  %v2238 = vadd.f32 %v2174, %v2206
  %v2239 = vadd.f32 %v2175, %v2207
  %v2240 = vadd.f32 %v2176, %v2208
  %v2241 = vadd.f32 %v2177, %v2209
  %v2242 = vadd.f32 %v2178, %v2210
  %v2243 = vadd.f32 %v2179, %v2211
  %v2244 = vadd.f32 %v2180, %v2212
  %v2245 = vadd.f32 %v2181, %v2213
  %v2246 = vadd.f32 %v2182, %v2214
  %v2247 = vadd.f32 %v2183, %v2215
  %v2248 = vadd.f32 %v2184, %v2216
  %v2249 = vadd.f32 %v2185, %v2217
  %v2250 = vadd.f32 %v2186, %v2218
  %vm2251 = vcmp.eq.f32.partialorder %v299, 7.0
  %vm2252 = vcmp.eq.f32.partialorder %v300, 7.0
  %vm2253 = vcmp.eq.f32.partialorder %v301, 7.0
  %vm2254 = vcmp.eq.f32.partialorder %v302, 7.0
  %vm2255 = vcmp.eq.f32.partialorder %v303, 7.0
  %vm2256 = vcmp.eq.f32.partialorder %v304, 7.0
  %vm2257 = vcmp.eq.f32.partialorder %v305, 7.0
  %vm2258 = vcmp.eq.f32.partialorder %v306, 7.0
  %vm2259 = vcmp.eq.f32.partialorder %v307, 7.0
  %vm2260 = vcmp.eq.f32.partialorder %v308, 7.0
  %vm2261 = vcmp.eq.f32.partialorder %v309, 7.0
  %vm2262 = vcmp.eq.f32.partialorder %v310, 7.0
  %vm2263 = vcmp.eq.f32.partialorder %v311, 7.0
  %vm2264 = vcmp.eq.f32.partialorder %v312, 7.0
  %vm2265 = vcmp.eq.f32.partialorder %v313, 7.0
  %vm2266 = vcmp.eq.f32.partialorder %v314, 7.0
  %vm2267 = vcmp.eq.f32.partialorder %v315, 7.0
  %vm2268 = vcmp.eq.f32.partialorder %v316, 7.0
  %vm2269 = vcmp.eq.f32.partialorder %v317, 7.0
  %vm2270 = vcmp.eq.f32.partialorder %v318, 7.0
  %vm2271 = vcmp.eq.f32.partialorder %v319, 7.0
  %vm2272 = vcmp.eq.f32.partialorder %v320, 7.0
  %vm2273 = vcmp.eq.f32.partialorder %v321, 7.0
  %vm2274 = vcmp.eq.f32.partialorder %v322, 7.0
  %vm2275 = vcmp.eq.f32.partialorder %v323, 7.0
  %vm2276 = vcmp.eq.f32.partialorder %v324, 7.0
  %vm2277 = vcmp.eq.f32.partialorder %v325, 7.0
  %vm2278 = vcmp.eq.f32.partialorder %v326, 7.0
  %vm2279 = vcmp.eq.f32.partialorder %v327, 7.0
  %vm2280 = vcmp.eq.f32.partialorder %v328, 7.0
  %vm2281 = vcmp.eq.f32.partialorder %v329, 7.0
  %vm2282 = vcmp.eq.f32.partialorder %v330, 7.0
  %v2283 = vsel %vm2251, %v939, 0.0
  %v2284 = vsel %vm2252, %v940, 0.0
  %v2285 = vsel %vm2253, %v941, 0.0
  %v2286 = vsel %vm2254, %v942, 0.0
  %v2287 = vsel %vm2255, %v943, 0.0
  %v2288 = vsel %vm2256, %v944, 0.0
  %v2289 = vsel %vm2257, %v945, 0.0
  %v2290 = vsel %vm2258, %v946, 0.0
  %v2291 = vsel %vm2259, %v947, 0.0
  %v2292 = vsel %vm2260, %v948, 0.0
  %v2293 = vsel %vm2261, %v949, 0.0
  %v2294 = vsel %vm2262, %v950, 0.0
  %v2295 = vsel %vm2263, %v951, 0.0
  %v2296 = vsel %vm2264, %v952, 0.0
  %v2297 = vsel %vm2265, %v953, 0.0
  %v2298 = vsel %vm2266, %v954, 0.0
  %v2299 = vsel %vm2267, %v955, 0.0
  %v2300 = vsel %vm2268, %v956, 0.0
  %v2301 = vsel %vm2269, %v957, 0.0
  %v2302 = vsel %vm2270, %v958, 0.0
  %v2303 = vsel %vm2271, %v959, 0.0
  %v2304 = vsel %vm2272, %v960, 0.0
  %v2305 = vsel %vm2273, %v961, 0.0
  %v2306 = vsel %vm2274, %v962, 0.0
  %v2307 = vsel %vm2275, %v963, 0.0
  %v2308 = vsel %vm2276, %v964, 0.0
  %v2309 = vsel %vm2277, %v965, 0.0
  %v2310 = vsel %vm2278, %v966, 0.0
  %v2311 = vsel %vm2279, %v967, 0.0
  %v2312 = vsel %vm2280, %v968, 0.0
  %v2313 = vsel %vm2281, %v969, 0.0
  %v2314 = vsel %vm2282, %v970, 0.0
  %v2315 = vadd.f32 %v2219, %v2283
  %v2316 = vadd.f32 %v2220, %v2284
  %v2317 = vadd.f32 %v2221, %v2285
  %v2318 = vadd.f32 %v2222, %v2286
  %v2319 = vadd.f32 %v2223, %v2287
  %v2320 = vadd.f32 %v2224, %v2288
  %v2321 = vadd.f32 %v2225, %v2289
  %v2322 = vadd.f32 %v2226, %v2290
  %v2323 = vadd.f32 %v2227, %v2291
  %v2324 = vadd.f32 %v2228, %v2292
  %v2325 = vadd.f32 %v2229, %v2293
  %v2326 = vadd.f32 %v2230, %v2294
  %v2327 = vadd.f32 %v2231, %v2295
  %v2328 = vadd.f32 %v2232, %v2296
  %v2329 = vadd.f32 %v2233, %v2297
  %v2330 = vadd.f32 %v2234, %v2298
  %v2331 = vadd.f32 %v2235, %v2299
  %v2332 = vadd.f32 %v2236, %v2300
  %v2333 = vadd.f32 %v2237, %v2301
  %v2334 = vadd.f32 %v2238, %v2302
  %v2335 = vadd.f32 %v2239, %v2303
  %v2336 = vadd.f32 %v2240, %v2304
  %v2337 = vadd.f32 %v2241, %v2305
  %v2338 = vadd.f32 %v2242, %v2306
  %v2339 = vadd.f32 %v2243, %v2307
  %v2340 = vadd.f32 %v2244, %v2308
  %v2341 = vadd.f32 %v2245, %v2309
  %v2342 = vadd.f32 %v2246, %v2310
  %v2343 = vadd.f32 %v2247, %v2311
  %v2344 = vadd.f32 %v2248, %v2312
  %v2345 = vadd.f32 %v2249, %v2313
  %v2346 = vadd.f32 %v2250, %v2314
  %v2347 = vsel %vm1739, %v427, 0.0
  %v2348 = vsel %vm1740, %v428, 0.0
  %v2349 = vsel %vm1741, %v429, 0.0
  %v2350 = vsel %vm1742, %v430, 0.0
  %v2351 = vsel %vm1743, %v431, 0.0
  %v2352 = vsel %vm1744, %v432, 0.0
  %v2353 = vsel %vm1745, %v433, 0.0
  %v2354 = vsel %vm1746, %v434, 0.0
  %v2355 = vsel %vm1747, %v435, 0.0
  %v2356 = vsel %vm1748, %v436, 0.0
  %v2357 = vsel %vm1749, %v437, 0.0
  %v2358 = vsel %vm1750, %v438, 0.0
  %v2359 = vsel %vm1751, %v439, 0.0
  %v2360 = vsel %vm1752, %v440, 0.0
  %v2361 = vsel %vm1753, %v441, 0.0
  %v2362 = vsel %vm1754, %v442, 0.0
  %v2363 = vsel %vm1755, %v443, 0.0
  %v2364 = vsel %vm1756, %v444, 0.0
  %v2365 = vsel %vm1757, %v445, 0.0
  %v2366 = vsel %vm1758, %v446, 0.0
  %v2367 = vsel %vm1759, %v447, 0.0
  %v2368 = vsel %vm1760, %v448, 0.0
  %v2369 = vsel %vm1761, %v449, 0.0
  %v2370 = vsel %vm1762, %v450, 0.0
  %v2371 = vsel %vm1763, %v451, 0.0
  %v2372 = vsel %vm1764, %v452, 0.0
  %v2373 = vsel %vm1765, %v453, 0.0
  %v2374 = vsel %vm1766, %v454, 0.0
  %v2375 = vsel %vm1767, %v455, 0.0
  %v2376 = vsel %vm1768, %v456, 0.0
  %v2377 = vsel %vm1769, %v457, 0.0
  %v2378 = vsel %vm1770, %v458, 0.0
  %v2379 = vsel %vm1995, %v651, 0.0
  %v2380 = vsel %vm1996, %v652, 0.0
  %v2381 = vsel %vm1997, %v653, 0.0
  %v2382 = vsel %vm1998, %v654, 0.0
  %v2383 = vsel %vm1999, %v655, 0.0
  %v2384 = vsel %vm2000, %v656, 0.0
  %v2385 = vsel %vm2001, %v657, 0.0
  %v2386 = vsel %vm2002, %v658, 0.0
  %v2387 = vsel %vm2003, %v659, 0.0
  %v2388 = vsel %vm2004, %v660, 0.0
  %v2389 = vsel %vm2005, %v661, 0.0
  %v2390 = vsel %vm2006, %v662, 0.0
  %v2391 = vsel %vm2007, %v663, 0.0
  %v2392 = vsel %vm2008, %v664, 0.0
  %v2393 = vsel %vm2009, %v665, 0.0
  %v2394 = vsel %vm2010, %v666, 0.0
  %v2395 = vsel %vm2011, %v667, 0.0
  %v2396 = vsel %vm2012, %v668, 0.0
  %v2397 = vsel %vm2013, %v669, 0.0
  %v2398 = vsel %vm2014, %v670, 0.0
  %v2399 = vsel %vm2015, %v671, 0.0
  %v2400 = vsel %vm2016, %v672, 0.0
  %v2401 = vsel %vm2017, %v673, 0.0
  %v2402 = vsel %vm2018, %v674, 0.0
  %v2403 = vsel %vm2019, %v675, 0.0
  %v2404 = vsel %vm2020, %v676, 0.0
  %v2405 = vsel %vm2021, %v677, 0.0
  %v2406 = vsel %vm2022, %v678, 0.0
  %v2407 = vsel %vm2023, %v679, 0.0
  %v2408 = vsel %vm2024, %v680, 0.0
  %v2409 = vsel %vm2025, %v681, 0.0
  %v2410 = vsel %vm2026, %v682, 0.0
  %v2411 = vadd.f32 %v2347, %v2379
  %v2412 = vadd.f32 %v2348, %v2380
  %v2413 = vadd.f32 %v2349, %v2381
  %v2414 = vadd.f32 %v2350, %v2382
  %v2415 = vadd.f32 %v2351, %v2383
  %v2416 = vadd.f32 %v2352, %v2384
  %v2417 = vadd.f32 %v2353, %v2385
  %v2418 = vadd.f32 %v2354, %v2386
  %v2419 = vadd.f32 %v2355, %v2387
  %v2420 = vadd.f32 %v2356, %v2388
  %v2421 = vadd.f32 %v2357, %v2389
  %v2422 = vadd.f32 %v2358, %v2390
  %v2423 = vadd.f32 %v2359, %v2391
  %v2424 = vadd.f32 %v2360, %v2392
  %v2425 = vadd.f32 %v2361, %v2393
  %v2426 = vadd.f32 %v2362, %v2394
  %v2427 = vadd.f32 %v2363, %v2395
  %v2428 = vadd.f32 %v2364, %v2396
  %v2429 = vadd.f32 %v2365, %v2397
  %v2430 = vadd.f32 %v2366, %v2398
  %v2431 = vadd.f32 %v2367, %v2399
  %v2432 = vadd.f32 %v2368, %v2400
  %v2433 = vadd.f32 %v2369, %v2401
  %v2434 = vadd.f32 %v2370, %v2402
  %v2435 = vadd.f32 %v2371, %v2403
  %v2436 = vadd.f32 %v2372, %v2404
  %v2437 = vadd.f32 %v2373, %v2405
  %v2438 = vadd.f32 %v2374, %v2406
  %v2439 = vadd.f32 %v2375, %v2407
  %v2440 = vadd.f32 %v2376, %v2408
  %v2441 = vadd.f32 %v2377, %v2409
  %v2442 = vadd.f32 %v2378, %v2410
  %v2443 = vsel %vm2251, %v811, 0.0
  %v2444 = vsel %vm2252, %v812, 0.0
  %v2445 = vsel %vm2253, %v813, 0.0
  %v2446 = vsel %vm2254, %v814, 0.0
  %v2447 = vsel %vm2255, %v815, 0.0
  %v2448 = vsel %vm2256, %v816, 0.0
  %v2449 = vsel %vm2257, %v817, 0.0
  %v2450 = vsel %vm2258, %v818, 0.0
  %v2451 = vsel %vm2259, %v819, 0.0
  %v2452 = vsel %vm2260, %v820, 0.0
  %v2453 = vsel %vm2261, %v821, 0.0
  %v2454 = vsel %vm2262, %v822, 0.0
  %v2455 = vsel %vm2263, %v823, 0.0
  %v2456 = vsel %vm2264, %v824, 0.0
  %v2457 = vsel %vm2265, %v825, 0.0
  %v2458 = vsel %vm2266, %v826, 0.0
  %v2459 = vsel %vm2267, %v827, 0.0
  %v2460 = vsel %vm2268, %v828, 0.0
  %v2461 = vsel %vm2269, %v829, 0.0
  %v2462 = vsel %vm2270, %v830, 0.0
  %v2463 = vsel %vm2271, %v831, 0.0
  %v2464 = vsel %vm2272, %v832, 0.0
  %v2465 = vsel %vm2273, %v833, 0.0
  %v2466 = vsel %vm2274, %v834, 0.0
  %v2467 = vsel %vm2275, %v835, 0.0
  %v2468 = vsel %vm2276, %v836, 0.0
  %v2469 = vsel %vm2277, %v837, 0.0
  %v2470 = vsel %vm2278, %v838, 0.0
  %v2471 = vsel %vm2279, %v839, 0.0
  %v2472 = vsel %vm2280, %v840, 0.0
  %v2473 = vsel %vm2281, %v841, 0.0
  %v2474 = vsel %vm2282, %v842, 0.0
  %v2475 = vadd.f32 %v2411, %v2443
  %v2476 = vadd.f32 %v2412, %v2444
  %v2477 = vadd.f32 %v2413, %v2445
  %v2478 = vadd.f32 %v2414, %v2446
  %v2479 = vadd.f32 %v2415, %v2447
  %v2480 = vadd.f32 %v2416, %v2448
  %v2481 = vadd.f32 %v2417, %v2449
  %v2482 = vadd.f32 %v2418, %v2450
  %v2483 = vadd.f32 %v2419, %v2451
  %v2484 = vadd.f32 %v2420, %v2452
  %v2485 = vadd.f32 %v2421, %v2453
  %v2486 = vadd.f32 %v2422, %v2454
  %v2487 = vadd.f32 %v2423, %v2455
  %v2488 = vadd.f32 %v2424, %v2456
  %v2489 = vadd.f32 %v2425, %v2457
  %v2490 = vadd.f32 %v2426, %v2458
  %v2491 = vadd.f32 %v2427, %v2459
  %v2492 = vadd.f32 %v2428, %v2460
  %v2493 = vadd.f32 %v2429, %v2461
  %v2494 = vadd.f32 %v2430, %v2462
  %v2495 = vadd.f32 %v2431, %v2463
  %v2496 = vadd.f32 %v2432, %v2464
  %v2497 = vadd.f32 %v2433, %v2465
  %v2498 = vadd.f32 %v2434, %v2466
  %v2499 = vadd.f32 %v2435, %v2467
  %v2500 = vadd.f32 %v2436, %v2468
  %v2501 = vadd.f32 %v2437, %v2469
  %v2502 = vadd.f32 %v2438, %v2470
  %v2503 = vadd.f32 %v2439, %v2471
  %v2504 = vadd.f32 %v2440, %v2472
  %v2505 = vadd.f32 %v2441, %v2473
  %v2506 = vadd.f32 %v2442, %v2474
  %vm2507 = vcmp.eq.f32.partialorder %v299, 8.0
  %vm2508 = vcmp.eq.f32.partialorder %v300, 8.0
  %vm2509 = vcmp.eq.f32.partialorder %v301, 8.0
  %vm2510 = vcmp.eq.f32.partialorder %v302, 8.0
  %vm2511 = vcmp.eq.f32.partialorder %v303, 8.0
  %vm2512 = vcmp.eq.f32.partialorder %v304, 8.0
  %vm2513 = vcmp.eq.f32.partialorder %v305, 8.0
  %vm2514 = vcmp.eq.f32.partialorder %v306, 8.0
  %vm2515 = vcmp.eq.f32.partialorder %v307, 8.0
  %vm2516 = vcmp.eq.f32.partialorder %v308, 8.0
  %vm2517 = vcmp.eq.f32.partialorder %v309, 8.0
  %vm2518 = vcmp.eq.f32.partialorder %v310, 8.0
  %vm2519 = vcmp.eq.f32.partialorder %v311, 8.0
  %vm2520 = vcmp.eq.f32.partialorder %v312, 8.0
  %vm2521 = vcmp.eq.f32.partialorder %v313, 8.0
  %vm2522 = vcmp.eq.f32.partialorder %v314, 8.0
  %vm2523 = vcmp.eq.f32.partialorder %v315, 8.0
  %vm2524 = vcmp.eq.f32.partialorder %v316, 8.0
  %vm2525 = vcmp.eq.f32.partialorder %v317, 8.0
  %vm2526 = vcmp.eq.f32.partialorder %v318, 8.0
  %vm2527 = vcmp.eq.f32.partialorder %v319, 8.0
  %vm2528 = vcmp.eq.f32.partialorder %v320, 8.0
  %vm2529 = vcmp.eq.f32.partialorder %v321, 8.0
  %vm2530 = vcmp.eq.f32.partialorder %v322, 8.0
  %vm2531 = vcmp.eq.f32.partialorder %v323, 8.0
  %vm2532 = vcmp.eq.f32.partialorder %v324, 8.0
  %vm2533 = vcmp.eq.f32.partialorder %v325, 8.0
  %vm2534 = vcmp.eq.f32.partialorder %v326, 8.0
  %vm2535 = vcmp.eq.f32.partialorder %v327, 8.0
  %vm2536 = vcmp.eq.f32.partialorder %v328, 8.0
  %vm2537 = vcmp.eq.f32.partialorder %v329, 8.0
  %vm2538 = vcmp.eq.f32.partialorder %v330, 8.0
  %v2539 = vsel %vm2507, %v939, 0.0
  %v2540 = vsel %vm2508, %v940, 0.0
  %v2541 = vsel %vm2509, %v941, 0.0
  %v2542 = vsel %vm2510, %v942, 0.0
  %v2543 = vsel %vm2511, %v943, 0.0
  %v2544 = vsel %vm2512, %v944, 0.0
  %v2545 = vsel %vm2513, %v945, 0.0
  %v2546 = vsel %vm2514, %v946, 0.0
  %v2547 = vsel %vm2515, %v947, 0.0
  %v2548 = vsel %vm2516, %v948, 0.0
  %v2549 = vsel %vm2517, %v949, 0.0
  %v2550 = vsel %vm2518, %v950, 0.0
  %v2551 = vsel %vm2519, %v951, 0.0
  %v2552 = vsel %vm2520, %v952, 0.0
  %v2553 = vsel %vm2521, %v953, 0.0
  %v2554 = vsel %vm2522, %v954, 0.0
  %v2555 = vsel %vm2523, %v955, 0.0
  %v2556 = vsel %vm2524, %v956, 0.0
  %v2557 = vsel %vm2525, %v957, 0.0
  %v2558 = vsel %vm2526, %v958, 0.0
  %v2559 = vsel %vm2527, %v959, 0.0
  %v2560 = vsel %vm2528, %v960, 0.0
  %v2561 = vsel %vm2529, %v961, 0.0
  %v2562 = vsel %vm2530, %v962, 0.0
  %v2563 = vsel %vm2531, %v963, 0.0
  %v2564 = vsel %vm2532, %v964, 0.0
  %v2565 = vsel %vm2533, %v965, 0.0
  %v2566 = vsel %vm2534, %v966, 0.0
  %v2567 = vsel %vm2535, %v967, 0.0
  %v2568 = vsel %vm2536, %v968, 0.0
  %v2569 = vsel %vm2537, %v969, 0.0
  %v2570 = vsel %vm2538, %v970, 0.0
  %v2571 = vadd.f32 %v2475, %v2539
  %v2572 = vadd.f32 %v2476, %v2540
  %v2573 = vadd.f32 %v2477, %v2541
  %v2574 = vadd.f32 %v2478, %v2542
  %v2575 = vadd.f32 %v2479, %v2543
  %v2576 = vadd.f32 %v2480, %v2544
  %v2577 = vadd.f32 %v2481, %v2545
  %v2578 = vadd.f32 %v2482, %v2546
  %v2579 = vadd.f32 %v2483, %v2547
  %v2580 = vadd.f32 %v2484, %v2548
  %v2581 = vadd.f32 %v2485, %v2549
  %v2582 = vadd.f32 %v2486, %v2550
  %v2583 = vadd.f32 %v2487, %v2551
  %v2584 = vadd.f32 %v2488, %v2552
  %v2585 = vadd.f32 %v2489, %v2553
  %v2586 = vadd.f32 %v2490, %v2554
  %v2587 = vadd.f32 %v2491, %v2555
  %v2588 = vadd.f32 %v2492, %v2556
  %v2589 = vadd.f32 %v2493, %v2557
  %v2590 = vadd.f32 %v2494, %v2558
  %v2591 = vadd.f32 %v2495, %v2559
  %v2592 = vadd.f32 %v2496, %v2560
  %v2593 = vadd.f32 %v2497, %v2561
  %v2594 = vadd.f32 %v2498, %v2562
  %v2595 = vadd.f32 %v2499, %v2563
  %v2596 = vadd.f32 %v2500, %v2564
  %v2597 = vadd.f32 %v2501, %v2565
  %v2598 = vadd.f32 %v2502, %v2566
  %v2599 = vadd.f32 %v2503, %v2567
  %v2600 = vadd.f32 %v2504, %v2568
  %v2601 = vadd.f32 %v2505, %v2569
  %v2602 = vadd.f32 %v2506, %v2570
  %v2603 = vsel %vm1995, %v427, 0.0
  %v2604 = vsel %vm1996, %v428, 0.0
  %v2605 = vsel %vm1997, %v429, 0.0
  %v2606 = vsel %vm1998, %v430, 0.0
  %v2607 = vsel %vm1999, %v431, 0.0
  %v2608 = vsel %vm2000, %v432, 0.0
  %v2609 = vsel %vm2001, %v433, 0.0
  %v2610 = vsel %vm2002, %v434, 0.0
  %v2611 = vsel %vm2003, %v435, 0.0
  %v2612 = vsel %vm2004, %v436, 0.0
  %v2613 = vsel %vm2005, %v437, 0.0
  %v2614 = vsel %vm2006, %v438, 0.0
  %v2615 = vsel %vm2007, %v439, 0.0
  %v2616 = vsel %vm2008, %v440, 0.0
  %v2617 = vsel %vm2009, %v441, 0.0
  %v2618 = vsel %vm2010, %v442, 0.0
  %v2619 = vsel %vm2011, %v443, 0.0
  %v2620 = vsel %vm2012, %v444, 0.0
  %v2621 = vsel %vm2013, %v445, 0.0
  %v2622 = vsel %vm2014, %v446, 0.0
  %v2623 = vsel %vm2015, %v447, 0.0
  %v2624 = vsel %vm2016, %v448, 0.0
  %v2625 = vsel %vm2017, %v449, 0.0
  %v2626 = vsel %vm2018, %v450, 0.0
  %v2627 = vsel %vm2019, %v451, 0.0
  %v2628 = vsel %vm2020, %v452, 0.0
  %v2629 = vsel %vm2021, %v453, 0.0
  %v2630 = vsel %vm2022, %v454, 0.0
  %v2631 = vsel %vm2023, %v455, 0.0
  %v2632 = vsel %vm2024, %v456, 0.0
  %v2633 = vsel %vm2025, %v457, 0.0
  %v2634 = vsel %vm2026, %v458, 0.0
  %v2635 = vsel %vm2251, %v651, 0.0
  %v2636 = vsel %vm2252, %v652, 0.0
  %v2637 = vsel %vm2253, %v653, 0.0
  %v2638 = vsel %vm2254, %v654, 0.0
  %v2639 = vsel %vm2255, %v655, 0.0
  %v2640 = vsel %vm2256, %v656, 0.0
  %v2641 = vsel %vm2257, %v657, 0.0
  %v2642 = vsel %vm2258, %v658, 0.0
  %v2643 = vsel %vm2259, %v659, 0.0
  %v2644 = vsel %vm2260, %v660, 0.0
  %v2645 = vsel %vm2261, %v661, 0.0
  %v2646 = vsel %vm2262, %v662, 0.0
  %v2647 = vsel %vm2263, %v663, 0.0
  %v2648 = vsel %vm2264, %v664, 0.0
  %v2649 = vsel %vm2265, %v665, 0.0
  %v2650 = vsel %vm2266, %v666, 0.0
  %v2651 = vsel %vm2267, %v667, 0.0
  %v2652 = vsel %vm2268, %v668, 0.0
  %v2653 = vsel %vm2269, %v669, 0.0
  %v2654 = vsel %vm2270, %v670, 0.0
  %v2655 = vsel %vm2271, %v671, 0.0
  %v2656 = vsel %vm2272, %v672, 0.0
  %v2657 = vsel %vm2273, %v673, 0.0
  %v2658 = vsel %vm2274, %v674, 0.0
  %v2659 = vsel %vm2275, %v675, 0.0
  %v2660 = vsel %vm2276, %v676, 0.0
  %v2661 = vsel %vm2277, %v677, 0.0
  %v2662 = vsel %vm2278, %v678, 0.0
  %v2663 = vsel %vm2279, %v679, 0.0
  %v2664 = vsel %vm2280, %v680, 0.0
  %v2665 = vsel %vm2281, %v681, 0.0
  %v2666 = vsel %vm2282, %v682, 0.0
  %v2667 = vadd.f32 %v2603, %v2635
  %v2668 = vadd.f32 %v2604, %v2636
  %v2669 = vadd.f32 %v2605, %v2637
  %v2670 = vadd.f32 %v2606, %v2638
  %v2671 = vadd.f32 %v2607, %v2639
  %v2672 = vadd.f32 %v2608, %v2640
  %v2673 = vadd.f32 %v2609, %v2641
  %v2674 = vadd.f32 %v2610, %v2642
  %v2675 = vadd.f32 %v2611, %v2643
  %v2676 = vadd.f32 %v2612, %v2644
  %v2677 = vadd.f32 %v2613, %v2645
  %v2678 = vadd.f32 %v2614, %v2646
  %v2679 = vadd.f32 %v2615, %v2647
  %v2680 = vadd.f32 %v2616, %v2648
  %v2681 = vadd.f32 %v2617, %v2649
  %v2682 = vadd.f32 %v2618, %v2650
  %v2683 = vadd.f32 %v2619, %v2651
  %v2684 = vadd.f32 %v2620, %v2652
  %v2685 = vadd.f32 %v2621, %v2653
  %v2686 = vadd.f32 %v2622, %v2654
  %v2687 = vadd.f32 %v2623, %v2655
  %v2688 = vadd.f32 %v2624, %v2656
  %v2689 = vadd.f32 %v2625, %v2657
  %v2690 = vadd.f32 %v2626, %v2658
  %v2691 = vadd.f32 %v2627, %v2659
  %v2692 = vadd.f32 %v2628, %v2660
  %v2693 = vadd.f32 %v2629, %v2661
  %v2694 = vadd.f32 %v2630, %v2662
  %v2695 = vadd.f32 %v2631, %v2663
  %v2696 = vadd.f32 %v2632, %v2664
  %v2697 = vadd.f32 %v2633, %v2665
  %v2698 = vadd.f32 %v2634, %v2666
  %v2699 = vsel %vm2507, %v811, 0.0
  %v2700 = vsel %vm2508, %v812, 0.0
  %v2701 = vsel %vm2509, %v813, 0.0
  %v2702 = vsel %vm2510, %v814, 0.0
  %v2703 = vsel %vm2511, %v815, 0.0
  %v2704 = vsel %vm2512, %v816, 0.0
  %v2705 = vsel %vm2513, %v817, 0.0
  %v2706 = vsel %vm2514, %v818, 0.0
  %v2707 = vsel %vm2515, %v819, 0.0
  %v2708 = vsel %vm2516, %v820, 0.0
  %v2709 = vsel %vm2517, %v821, 0.0
  %v2710 = vsel %vm2518, %v822, 0.0
  %v2711 = vsel %vm2519, %v823, 0.0
  %v2712 = vsel %vm2520, %v824, 0.0
  %v2713 = vsel %vm2521, %v825, 0.0
  %v2714 = vsel %vm2522, %v826, 0.0
  %v2715 = vsel %vm2523, %v827, 0.0
  %v2716 = vsel %vm2524, %v828, 0.0
  %v2717 = vsel %vm2525, %v829, 0.0
  %v2718 = vsel %vm2526, %v830, 0.0
  %v2719 = vsel %vm2527, %v831, 0.0
  %v2720 = vsel %vm2528, %v832, 0.0
  %v2721 = vsel %vm2529, %v833, 0.0
  %v2722 = vsel %vm2530, %v834, 0.0
  %v2723 = vsel %vm2531, %v835, 0.0
  %v2724 = vsel %vm2532, %v836, 0.0
  %v2725 = vsel %vm2533, %v837, 0.0
  %v2726 = vsel %vm2534, %v838, 0.0
  %v2727 = vsel %vm2535, %v839, 0.0
  %v2728 = vsel %vm2536, %v840, 0.0
  %v2729 = vsel %vm2537, %v841, 0.0
  %v2730 = vsel %vm2538, %v842, 0.0
  %v2731 = vadd.f32 %v2667, %v2699
  %v2732 = vadd.f32 %v2668, %v2700
  %v2733 = vadd.f32 %v2669, %v2701
  %v2734 = vadd.f32 %v2670, %v2702
  %v2735 = vadd.f32 %v2671, %v2703
  %v2736 = vadd.f32 %v2672, %v2704
  %v2737 = vadd.f32 %v2673, %v2705
  %v2738 = vadd.f32 %v2674, %v2706
  %v2739 = vadd.f32 %v2675, %v2707
  %v2740 = vadd.f32 %v2676, %v2708
  %v2741 = vadd.f32 %v2677, %v2709
  %v2742 = vadd.f32 %v2678, %v2710
  %v2743 = vadd.f32 %v2679, %v2711
  %v2744 = vadd.f32 %v2680, %v2712
  %v2745 = vadd.f32 %v2681, %v2713
  %v2746 = vadd.f32 %v2682, %v2714
  %v2747 = vadd.f32 %v2683, %v2715
  %v2748 = vadd.f32 %v2684, %v2716
  %v2749 = vadd.f32 %v2685, %v2717
  %v2750 = vadd.f32 %v2686, %v2718
  %v2751 = vadd.f32 %v2687, %v2719
  %v2752 = vadd.f32 %v2688, %v2720
  %v2753 = vadd.f32 %v2689, %v2721
  %v2754 = vadd.f32 %v2690, %v2722
  %v2755 = vadd.f32 %v2691, %v2723
  %v2756 = vadd.f32 %v2692, %v2724
  %v2757 = vadd.f32 %v2693, %v2725
  %v2758 = vadd.f32 %v2694, %v2726
  %v2759 = vadd.f32 %v2695, %v2727
  %v2760 = vadd.f32 %v2696, %v2728
  %v2761 = vadd.f32 %v2697, %v2729
  %v2762 = vadd.f32 %v2698, %v2730
  %vm2763 = vcmp.eq.f32.partialorder %v299, 9.0
  %vm2764 = vcmp.eq.f32.partialorder %v300, 9.0
  %vm2765 = vcmp.eq.f32.partialorder %v301, 9.0
  %vm2766 = vcmp.eq.f32.partialorder %v302, 9.0
  %vm2767 = vcmp.eq.f32.partialorder %v303, 9.0
  %vm2768 = vcmp.eq.f32.partialorder %v304, 9.0
  %vm2769 = vcmp.eq.f32.partialorder %v305, 9.0
  %vm2770 = vcmp.eq.f32.partialorder %v306, 9.0
  %vm2771 = vcmp.eq.f32.partialorder %v307, 9.0
  %vm2772 = vcmp.eq.f32.partialorder %v308, 9.0
  %vm2773 = vcmp.eq.f32.partialorder %v309, 9.0
  %vm2774 = vcmp.eq.f32.partialorder %v310, 9.0
  %vm2775 = vcmp.eq.f32.partialorder %v311, 9.0
  %vm2776 = vcmp.eq.f32.partialorder %v312, 9.0
  %vm2777 = vcmp.eq.f32.partialorder %v313, 9.0
  %vm2778 = vcmp.eq.f32.partialorder %v314, 9.0
  %vm2779 = vcmp.eq.f32.partialorder %v315, 9.0
  %vm2780 = vcmp.eq.f32.partialorder %v316, 9.0
  %vm2781 = vcmp.eq.f32.partialorder %v317, 9.0
  %vm2782 = vcmp.eq.f32.partialorder %v318, 9.0
  %vm2783 = vcmp.eq.f32.partialorder %v319, 9.0
  %vm2784 = vcmp.eq.f32.partialorder %v320, 9.0
  %vm2785 = vcmp.eq.f32.partialorder %v321, 9.0
  %vm2786 = vcmp.eq.f32.partialorder %v322, 9.0
  %vm2787 = vcmp.eq.f32.partialorder %v323, 9.0
  %vm2788 = vcmp.eq.f32.partialorder %v324, 9.0
  %vm2789 = vcmp.eq.f32.partialorder %v325, 9.0
  %vm2790 = vcmp.eq.f32.partialorder %v326, 9.0
  %vm2791 = vcmp.eq.f32.partialorder %v327, 9.0
  %vm2792 = vcmp.eq.f32.partialorder %v328, 9.0
  %vm2793 = vcmp.eq.f32.partialorder %v329, 9.0
  %vm2794 = vcmp.eq.f32.partialorder %v330, 9.0
  %v2795 = vsel %vm2763, %v939, 0.0
  %v2796 = vsel %vm2764, %v940, 0.0
  %v2797 = vsel %vm2765, %v941, 0.0
  %v2798 = vsel %vm2766, %v942, 0.0
  %v2799 = vsel %vm2767, %v943, 0.0
  %v2800 = vsel %vm2768, %v944, 0.0
  %v2801 = vsel %vm2769, %v945, 0.0
  %v2802 = vsel %vm2770, %v946, 0.0
  %v2803 = vsel %vm2771, %v947, 0.0
  %v2804 = vsel %vm2772, %v948, 0.0
  %v2805 = vsel %vm2773, %v949, 0.0
  %v2806 = vsel %vm2774, %v950, 0.0
  %v2807 = vsel %vm2775, %v951, 0.0
  %v2808 = vsel %vm2776, %v952, 0.0
  %v2809 = vsel %vm2777, %v953, 0.0
  %v2810 = vsel %vm2778, %v954, 0.0
  %v2811 = vsel %vm2779, %v955, 0.0
  %v2812 = vsel %vm2780, %v956, 0.0
  %v2813 = vsel %vm2781, %v957, 0.0
  %v2814 = vsel %vm2782, %v958, 0.0
  %v2815 = vsel %vm2783, %v959, 0.0
  %v2816 = vsel %vm2784, %v960, 0.0
  %v2817 = vsel %vm2785, %v961, 0.0
  %v2818 = vsel %vm2786, %v962, 0.0
  %v2819 = vsel %vm2787, %v963, 0.0
  %v2820 = vsel %vm2788, %v964, 0.0
  %v2821 = vsel %vm2789, %v965, 0.0
  %v2822 = vsel %vm2790, %v966, 0.0
  %v2823 = vsel %vm2791, %v967, 0.0
  %v2824 = vsel %vm2792, %v968, 0.0
  %v2825 = vsel %vm2793, %v969, 0.0
  %v2826 = vsel %vm2794, %v970, 0.0
  %v2827 = vadd.f32 %v2731, %v2795
  %v2828 = vadd.f32 %v2732, %v2796
  %v2829 = vadd.f32 %v2733, %v2797
  %v2830 = vadd.f32 %v2734, %v2798
  %v2831 = vadd.f32 %v2735, %v2799
  %v2832 = vadd.f32 %v2736, %v2800
  %v2833 = vadd.f32 %v2737, %v2801
  %v2834 = vadd.f32 %v2738, %v2802
  %v2835 = vadd.f32 %v2739, %v2803
  %v2836 = vadd.f32 %v2740, %v2804
  %v2837 = vadd.f32 %v2741, %v2805
  %v2838 = vadd.f32 %v2742, %v2806
  %v2839 = vadd.f32 %v2743, %v2807
  %v2840 = vadd.f32 %v2744, %v2808
  %v2841 = vadd.f32 %v2745, %v2809
  %v2842 = vadd.f32 %v2746, %v2810
  %v2843 = vadd.f32 %v2747, %v2811
  %v2844 = vadd.f32 %v2748, %v2812
  %v2845 = vadd.f32 %v2749, %v2813
  %v2846 = vadd.f32 %v2750, %v2814
  %v2847 = vadd.f32 %v2751, %v2815
  %v2848 = vadd.f32 %v2752, %v2816
  %v2849 = vadd.f32 %v2753, %v2817
  %v2850 = vadd.f32 %v2754, %v2818
  %v2851 = vadd.f32 %v2755, %v2819
  %v2852 = vadd.f32 %v2756, %v2820
  %v2853 = vadd.f32 %v2757, %v2821
  %v2854 = vadd.f32 %v2758, %v2822
  %v2855 = vadd.f32 %v2759, %v2823
  %v2856 = vadd.f32 %v2760, %v2824
  %v2857 = vadd.f32 %v2761, %v2825
  %v2858 = vadd.f32 %v2762, %v2826
  %v2859 = vsel %vm2251, %v427, 0.0
  %v2860 = vsel %vm2252, %v428, 0.0
  %v2861 = vsel %vm2253, %v429, 0.0
  %v2862 = vsel %vm2254, %v430, 0.0
  %v2863 = vsel %vm2255, %v431, 0.0
  %v2864 = vsel %vm2256, %v432, 0.0
  %v2865 = vsel %vm2257, %v433, 0.0
  %v2866 = vsel %vm2258, %v434, 0.0
  %v2867 = vsel %vm2259, %v435, 0.0
  %v2868 = vsel %vm2260, %v436, 0.0
  %v2869 = vsel %vm2261, %v437, 0.0
  %v2870 = vsel %vm2262, %v438, 0.0
  %v2871 = vsel %vm2263, %v439, 0.0
  %v2872 = vsel %vm2264, %v440, 0.0
  %v2873 = vsel %vm2265, %v441, 0.0
  %v2874 = vsel %vm2266, %v442, 0.0
  %v2875 = vsel %vm2267, %v443, 0.0
  %v2876 = vsel %vm2268, %v444, 0.0
  %v2877 = vsel %vm2269, %v445, 0.0
  %v2878 = vsel %vm2270, %v446, 0.0
  %v2879 = vsel %vm2271, %v447, 0.0
  %v2880 = vsel %vm2272, %v448, 0.0
  %v2881 = vsel %vm2273, %v449, 0.0
  %v2882 = vsel %vm2274, %v450, 0.0
  %v2883 = vsel %vm2275, %v451, 0.0
  %v2884 = vsel %vm2276, %v452, 0.0
  %v2885 = vsel %vm2277, %v453, 0.0
  %v2886 = vsel %vm2278, %v454, 0.0
  %v2887 = vsel %vm2279, %v455, 0.0
  %v2888 = vsel %vm2280, %v456, 0.0
  %v2889 = vsel %vm2281, %v457, 0.0
  %v2890 = vsel %vm2282, %v458, 0.0
  %v2891 = vsel %vm2507, %v651, 0.0
  %v2892 = vsel %vm2508, %v652, 0.0
  %v2893 = vsel %vm2509, %v653, 0.0
  %v2894 = vsel %vm2510, %v654, 0.0
  %v2895 = vsel %vm2511, %v655, 0.0
  %v2896 = vsel %vm2512, %v656, 0.0
  %v2897 = vsel %vm2513, %v657, 0.0
  %v2898 = vsel %vm2514, %v658, 0.0
  %v2899 = vsel %vm2515, %v659, 0.0
  %v2900 = vsel %vm2516, %v660, 0.0
  %v2901 = vsel %vm2517, %v661, 0.0
  %v2902 = vsel %vm2518, %v662, 0.0
  %v2903 = vsel %vm2519, %v663, 0.0
  %v2904 = vsel %vm2520, %v664, 0.0
  %v2905 = vsel %vm2521, %v665, 0.0
  %v2906 = vsel %vm2522, %v666, 0.0
  %v2907 = vsel %vm2523, %v667, 0.0
  %v2908 = vsel %vm2524, %v668, 0.0
  %v2909 = vsel %vm2525, %v669, 0.0
  %v2910 = vsel %vm2526, %v670, 0.0
  %v2911 = vsel %vm2527, %v671, 0.0
  %v2912 = vsel %vm2528, %v672, 0.0
  %v2913 = vsel %vm2529, %v673, 0.0
  %v2914 = vsel %vm2530, %v674, 0.0
  %v2915 = vsel %vm2531, %v675, 0.0
  %v2916 = vsel %vm2532, %v676, 0.0
  %v2917 = vsel %vm2533, %v677, 0.0
  %v2918 = vsel %vm2534, %v678, 0.0
  %v2919 = vsel %vm2535, %v679, 0.0
  %v2920 = vsel %vm2536, %v680, 0.0
  %v2921 = vsel %vm2537, %v681, 0.0
  %v2922 = vsel %vm2538, %v682, 0.0
  %v2923 = vadd.f32 %v2859, %v2891
  %v2924 = vadd.f32 %v2860, %v2892
  %v2925 = vadd.f32 %v2861, %v2893
  %v2926 = vadd.f32 %v2862, %v2894
  %v2927 = vadd.f32 %v2863, %v2895
  %v2928 = vadd.f32 %v2864, %v2896
  %v2929 = vadd.f32 %v2865, %v2897
  %v2930 = vadd.f32 %v2866, %v2898
  %v2931 = vadd.f32 %v2867, %v2899
  %v2932 = vadd.f32 %v2868, %v2900
  %v2933 = vadd.f32 %v2869, %v2901
  %v2934 = vadd.f32 %v2870, %v2902
  %v2935 = vadd.f32 %v2871, %v2903
  %v2936 = vadd.f32 %v2872, %v2904
  %v2937 = vadd.f32 %v2873, %v2905
  %v2938 = vadd.f32 %v2874, %v2906
  %v2939 = vadd.f32 %v2875, %v2907
  %v2940 = vadd.f32 %v2876, %v2908
  %v2941 = vadd.f32 %v2877, %v2909
  %v2942 = vadd.f32 %v2878, %v2910
  %v2943 = vadd.f32 %v2879, %v2911
  %v2944 = vadd.f32 %v2880, %v2912
  %v2945 = vadd.f32 %v2881, %v2913
  %v2946 = vadd.f32 %v2882, %v2914
  %v2947 = vadd.f32 %v2883, %v2915
  %v2948 = vadd.f32 %v2884, %v2916
  %v2949 = vadd.f32 %v2885, %v2917
  %v2950 = vadd.f32 %v2886, %v2918
  %v2951 = vadd.f32 %v2887, %v2919
  %v2952 = vadd.f32 %v2888, %v2920
  %v2953 = vadd.f32 %v2889, %v2921
  %v2954 = vadd.f32 %v2890, %v2922
  %v2955 = vsel %vm2763, %v811, 0.0
  %v2956 = vsel %vm2764, %v812, 0.0
  %v2957 = vsel %vm2765, %v813, 0.0
  %v2958 = vsel %vm2766, %v814, 0.0
  %v2959 = vsel %vm2767, %v815, 0.0
  %v2960 = vsel %vm2768, %v816, 0.0
  %v2961 = vsel %vm2769, %v817, 0.0
  %v2962 = vsel %vm2770, %v818, 0.0
  %v2963 = vsel %vm2771, %v819, 0.0
  %v2964 = vsel %vm2772, %v820, 0.0
  %v2965 = vsel %vm2773, %v821, 0.0
  %v2966 = vsel %vm2774, %v822, 0.0
  %v2967 = vsel %vm2775, %v823, 0.0
  %v2968 = vsel %vm2776, %v824, 0.0
  %v2969 = vsel %vm2777, %v825, 0.0
  %v2970 = vsel %vm2778, %v826, 0.0
  %v2971 = vsel %vm2779, %v827, 0.0
  %v2972 = vsel %vm2780, %v828, 0.0
  %v2973 = vsel %vm2781, %v829, 0.0
  %v2974 = vsel %vm2782, %v830, 0.0
  %v2975 = vsel %vm2783, %v831, 0.0
  %v2976 = vsel %vm2784, %v832, 0.0
  %v2977 = vsel %vm2785, %v833, 0.0
  %v2978 = vsel %vm2786, %v834, 0.0
  %v2979 = vsel %vm2787, %v835, 0.0
  %v2980 = vsel %vm2788, %v836, 0.0
  %v2981 = vsel %vm2789, %v837, 0.0
  %v2982 = vsel %vm2790, %v838, 0.0
  %v2983 = vsel %vm2791, %v839, 0.0
  %v2984 = vsel %vm2792, %v840, 0.0
  %v2985 = vsel %vm2793, %v841, 0.0
  %v2986 = vsel %vm2794, %v842, 0.0
  %v2987 = vadd.f32 %v2923, %v2955
  %v2988 = vadd.f32 %v2924, %v2956
  %v2989 = vadd.f32 %v2925, %v2957
  %v2990 = vadd.f32 %v2926, %v2958
  %v2991 = vadd.f32 %v2927, %v2959
  %v2992 = vadd.f32 %v2928, %v2960
  %v2993 = vadd.f32 %v2929, %v2961
  %v2994 = vadd.f32 %v2930, %v2962
  %v2995 = vadd.f32 %v2931, %v2963
  %v2996 = vadd.f32 %v2932, %v2964
  %v2997 = vadd.f32 %v2933, %v2965
  %v2998 = vadd.f32 %v2934, %v2966
  %v2999 = vadd.f32 %v2935, %v2967
  %v3000 = vadd.f32 %v2936, %v2968
  %v3001 = vadd.f32 %v2937, %v2969
  %v3002 = vadd.f32 %v2938, %v2970
  %v3003 = vadd.f32 %v2939, %v2971
  %v3004 = vadd.f32 %v2940, %v2972
  %v3005 = vadd.f32 %v2941, %v2973
  %v3006 = vadd.f32 %v2942, %v2974
  %v3007 = vadd.f32 %v2943, %v2975
  %v3008 = vadd.f32 %v2944, %v2976
  %v3009 = vadd.f32 %v2945, %v2977
  %v3010 = vadd.f32 %v2946, %v2978
  %v3011 = vadd.f32 %v2947, %v2979
  %v3012 = vadd.f32 %v2948, %v2980
  %v3013 = vadd.f32 %v2949, %v2981
  %v3014 = vadd.f32 %v2950, %v2982
  %v3015 = vadd.f32 %v2951, %v2983
  %v3016 = vadd.f32 %v2952, %v2984
  %v3017 = vadd.f32 %v2953, %v2985
  %v3018 = vadd.f32 %v2954, %v2986
  %vm3019 = vcmp.eq.f32.partialorder %v299, 10.0
  %vm3020 = vcmp.eq.f32.partialorder %v300, 10.0
  %vm3021 = vcmp.eq.f32.partialorder %v301, 10.0
  %vm3022 = vcmp.eq.f32.partialorder %v302, 10.0
  %vm3023 = vcmp.eq.f32.partialorder %v303, 10.0
  %vm3024 = vcmp.eq.f32.partialorder %v304, 10.0
  %vm3025 = vcmp.eq.f32.partialorder %v305, 10.0
  %vm3026 = vcmp.eq.f32.partialorder %v306, 10.0
  %vm3027 = vcmp.eq.f32.partialorder %v307, 10.0
  %vm3028 = vcmp.eq.f32.partialorder %v308, 10.0
  %vm3029 = vcmp.eq.f32.partialorder %v309, 10.0
  %vm3030 = vcmp.eq.f32.partialorder %v310, 10.0
  %vm3031 = vcmp.eq.f32.partialorder %v311, 10.0
  %vm3032 = vcmp.eq.f32.partialorder %v312, 10.0
  %vm3033 = vcmp.eq.f32.partialorder %v313, 10.0
  %vm3034 = vcmp.eq.f32.partialorder %v314, 10.0
  %vm3035 = vcmp.eq.f32.partialorder %v315, 10.0
  %vm3036 = vcmp.eq.f32.partialorder %v316, 10.0
  %vm3037 = vcmp.eq.f32.partialorder %v317, 10.0
  %vm3038 = vcmp.eq.f32.partialorder %v318, 10.0
  %vm3039 = vcmp.eq.f32.partialorder %v319, 10.0
  %vm3040 = vcmp.eq.f32.partialorder %v320, 10.0
  %vm3041 = vcmp.eq.f32.partialorder %v321, 10.0
  %vm3042 = vcmp.eq.f32.partialorder %v322, 10.0
  %vm3043 = vcmp.eq.f32.partialorder %v323, 10.0
  %vm3044 = vcmp.eq.f32.partialorder %v324, 10.0
  %vm3045 = vcmp.eq.f32.partialorder %v325, 10.0
  %vm3046 = vcmp.eq.f32.partialorder %v326, 10.0
  %vm3047 = vcmp.eq.f32.partialorder %v327, 10.0
  %vm3048 = vcmp.eq.f32.partialorder %v328, 10.0
  %vm3049 = vcmp.eq.f32.partialorder %v329, 10.0
  %vm3050 = vcmp.eq.f32.partialorder %v330, 10.0
  %v3051 = vsel %vm3019, %v939, 0.0
  %v3052 = vsel %vm3020, %v940, 0.0
  %v3053 = vsel %vm3021, %v941, 0.0
  %v3054 = vsel %vm3022, %v942, 0.0
  %v3055 = vsel %vm3023, %v943, 0.0
  %v3056 = vsel %vm3024, %v944, 0.0
  %v3057 = vsel %vm3025, %v945, 0.0
  %v3058 = vsel %vm3026, %v946, 0.0
  %v3059 = vsel %vm3027, %v947, 0.0
  %v3060 = vsel %vm3028, %v948, 0.0
  %v3061 = vsel %vm3029, %v949, 0.0
  %v3062 = vsel %vm3030, %v950, 0.0
  %v3063 = vsel %vm3031, %v951, 0.0
  %v3064 = vsel %vm3032, %v952, 0.0
  %v3065 = vsel %vm3033, %v953, 0.0
  %v3066 = vsel %vm3034, %v954, 0.0
  %v3067 = vsel %vm3035, %v955, 0.0
  %v3068 = vsel %vm3036, %v956, 0.0
  %v3069 = vsel %vm3037, %v957, 0.0
  %v3070 = vsel %vm3038, %v958, 0.0
  %v3071 = vsel %vm3039, %v959, 0.0
  %v3072 = vsel %vm3040, %v960, 0.0
  %v3073 = vsel %vm3041, %v961, 0.0
  %v3074 = vsel %vm3042, %v962, 0.0
  %v3075 = vsel %vm3043, %v963, 0.0
  %v3076 = vsel %vm3044, %v964, 0.0
  %v3077 = vsel %vm3045, %v965, 0.0
  %v3078 = vsel %vm3046, %v966, 0.0
  %v3079 = vsel %vm3047, %v967, 0.0
  %v3080 = vsel %vm3048, %v968, 0.0
  %v3081 = vsel %vm3049, %v969, 0.0
  %v3082 = vsel %vm3050, %v970, 0.0
  %v3083 = vadd.f32 %v2987, %v3051
  %v3084 = vadd.f32 %v2988, %v3052
  %v3085 = vadd.f32 %v2989, %v3053
  %v3086 = vadd.f32 %v2990, %v3054
  %v3087 = vadd.f32 %v2991, %v3055
  %v3088 = vadd.f32 %v2992, %v3056
  %v3089 = vadd.f32 %v2993, %v3057
  %v3090 = vadd.f32 %v2994, %v3058
  %v3091 = vadd.f32 %v2995, %v3059
  %v3092 = vadd.f32 %v2996, %v3060
  %v3093 = vadd.f32 %v2997, %v3061
  %v3094 = vadd.f32 %v2998, %v3062
  %v3095 = vadd.f32 %v2999, %v3063
  %v3096 = vadd.f32 %v3000, %v3064
  %v3097 = vadd.f32 %v3001, %v3065
  %v3098 = vadd.f32 %v3002, %v3066
  %v3099 = vadd.f32 %v3003, %v3067
  %v3100 = vadd.f32 %v3004, %v3068
  %v3101 = vadd.f32 %v3005, %v3069
  %v3102 = vadd.f32 %v3006, %v3070
  %v3103 = vadd.f32 %v3007, %v3071
  %v3104 = vadd.f32 %v3008, %v3072
  %v3105 = vadd.f32 %v3009, %v3073
  %v3106 = vadd.f32 %v3010, %v3074
  %v3107 = vadd.f32 %v3011, %v3075
  %v3108 = vadd.f32 %v3012, %v3076
  %v3109 = vadd.f32 %v3013, %v3077
  %v3110 = vadd.f32 %v3014, %v3078
  %v3111 = vadd.f32 %v3015, %v3079
  %v3112 = vadd.f32 %v3016, %v3080
  %v3113 = vadd.f32 %v3017, %v3081
  %v3114 = vadd.f32 %v3018, %v3082
  %v3115 = vld [vmem:[%s1] sm:$0x1f]
  %v3116 = vld [vmem:[%s1 + $0x8] sm:$0x1f]
  %v3117 = vld [vmem:[%s1 + $0x10] sm:$0x1f]
  %v3118 = vld [vmem:[%s1 + $0x18] sm:$0x1f]
  %v3119 = vld [vmem:[%s1 + $0x20] sm:$0x1f]
  %v3120 = vld [vmem:[%s1 + $0x28] sm:$0x1f]
  %v3121 = vld [vmem:[%s1 + $0x30] sm:$0x1f]
  %v3122 = vld [vmem:[%s1 + $0x38] sm:$0x1f]
  %v3123 = vld [vmem:[%s1 + $0x40] sm:$0x1f]
  %3124 = vmatprep.subr.mxu0 %v204
  %3125 = vmatpush1.msra.mxu0 %v203
  %3126 = vmatprep.subr.mxu0 %v206
  %3127 = vmatpush1.msra.mxu0 %v205
  %3128 = vmatprep.subr.mxu0 %v208
  %3129 = vmatpush1.msra.mxu0 %v207
  %3130 = vmatprep.subr.mxu0 %v210
  %3131 = vmatpush1.msra.mxu0 %v209
  %3132 = vmatprep.subr.mxu0 %v212
  %3133 = vmatpush1.msra.mxu0 %v211
  %3134 = vmatprep.subr.mxu0 %v214
  %3135 = vmatpush1.msra.mxu0 %v213
  %3136 = vmatprep.subr.mxu0 %v216
  %3137 = vmatpush1.msra.mxu0 %v215
  %3138 = vmatprep.subr.mxu0 %v218
  %3139 = vmatpush1.msra.mxu0 %v217
  %3140 = vmatprep.subr.mxu0 %v220
  %3141 = vmatpush1.msra.mxu0 %v219
  %3142 = vmatprep.subr.mxu0 %v222
  %3143 = vmatpush1.msra.mxu0 %v221
  %3144 = vmatprep.subr.mxu0 %v224
  %3145 = vmatpush1.msra.mxu0 %v223
  %3146 = vmatprep.subr.mxu0 %v226
  %3147 = vmatpush1.msra.mxu0 %v225
  %3148 = vmatprep.subr.mxu0 %v228
  %3149 = vmatpush1.msra.mxu0 %v227
  %3150 = vmatprep.subr.mxu0 %v230
  %3151 = vmatpush1.msra.mxu0 %v229
  %3152 = vmatprep.subr.mxu0 %v232
  %3153 = vmatpush1.msra.mxu0 %v231
  %3154 = vmatprep.subr.mxu0 %v234
  %3155 = vmatpush1.msra.mxu0 %v233
  %3156 = vmatprep.subr.mxu0 %v1292
  %3157 = vmatpush1.msra.mxu0 %v1291
  %3158 = vmatprep.subr.mxu0 %v1294
  %3159 = vmatpush1.msra.mxu0 %v1293
  %3160 = vmatprep.subr.mxu0 %v1296
  %3161 = vmatpush1.msra.mxu0 %v1295
  %3162 = vmatprep.subr.mxu0 %v1298
  %3163 = vmatpush1.msra.mxu0 %v1297
  %3164 = vmatprep.subr.mxu0 %v1300
  %3165 = vmatpush1.msra.mxu0 %v1299
  %3166 = vmatprep.subr.mxu0 %v1302
  %3167 = vmatpush1.msra.mxu0 %v1301
  %3168 = vmatprep.subr.mxu0 %v1304
  %3169 = vmatpush1.msra.mxu0 %v1303
  %3170 = vmatprep.subr.mxu0 %v1306
  %3171 = vmatpush1.msra.mxu0 %v1305
  %3172 = vmatprep.subr.mxu0 %v1308
  %3173 = vmatpush1.msra.mxu0 %v1307
  %3174 = vmatprep.subr.mxu0 %v1310
  %3175 = vmatpush1.msra.mxu0 %v1309
  %3176 = vmatprep.subr.mxu0 %v1312
  %3177 = vmatpush1.msra.mxu0 %v1311
  %3178 = vmatprep.subr.mxu0 %v1314
  %3179 = vmatpush1.msra.mxu0 %v1313
  %3180 = vmatprep.subr.mxu0 %v1316
  %3181 = vmatpush1.msra.mxu0 %v1315
  %3182 = vmatprep.subr.mxu0 %v1318
  %3183 = vmatpush1.msra.mxu0 %v1317
  %3184 = vmatprep.subr.mxu0 %v1320
  %3185 = vmatpush1.msra.mxu0 %v1319
  %3186 = vmatprep.subr.mxu0 %v1322
  %3187 = vmatpush1.msra.mxu0 %v1321
  %3188 = vmatprep.mubr.f32.mxu0 %v3116
  %3189 = vmatmul.mubr.f32.gmra.mrb[0].mxu0 %v3115
  %v3190 = vpop.f32.mrb[0].mxu0
  %v3191 = vadd.f32 0.0, %v3190
  %v3192 = vpop.f32.mrb[0].mxu0
  %v3193 = vadd.f32 0.0, %v3192
  %3194 = vdwg.mxu0
  %3195 = vmatprep.subr.mxu0 %v1548
  %3196 = vmatpush1.msra.mxu0 %v1547
  %3197 = vmatprep.subr.mxu0 %v1550
  %3198 = vmatpush1.msra.mxu0 %v1549
  %3199 = vmatprep.subr.mxu0 %v1552
  %3200 = vmatpush1.msra.mxu0 %v1551
  %3201 = vmatprep.subr.mxu0 %v1554
  %3202 = vmatpush1.msra.mxu0 %v1553
  %3203 = vmatprep.subr.mxu0 %v1556
  %3204 = vmatpush1.msra.mxu0 %v1555
  %3205 = vmatprep.subr.mxu0 %v1558
  %3206 = vmatpush1.msra.mxu0 %v1557
  %3207 = vmatprep.subr.mxu0 %v1560
  %3208 = vmatpush1.msra.mxu0 %v1559
  %3209 = vmatprep.subr.mxu0 %v1562
  %3210 = vmatpush1.msra.mxu0 %v1561
  %3211 = vmatprep.subr.mxu0 %v1564
  %3212 = vmatpush1.msra.mxu0 %v1563
  %3213 = vmatprep.subr.mxu0 %v1566
  %3214 = vmatpush1.msra.mxu0 %v1565
  %3215 = vmatprep.subr.mxu0 %v1568
  %3216 = vmatpush1.msra.mxu0 %v1567
  %3217 = vmatprep.subr.mxu0 %v1570
  %3218 = vmatpush1.msra.mxu0 %v1569
  %3219 = vmatprep.subr.mxu0 %v1572
  %3220 = vmatpush1.msra.mxu0 %v1571
  %3221 = vmatprep.subr.mxu0 %v1574
  %3222 = vmatpush1.msra.mxu0 %v1573
  %3223 = vmatprep.subr.mxu0 %v1576
  %3224 = vmatpush1.msra.mxu0 %v1575
  %3225 = vmatprep.subr.mxu0 %v1578
  %3226 = vmatpush1.msra.mxu0 %v1577
  %3227 = vmatprep.subr.mxu0 %v1804
  %3228 = vmatpush1.msra.mxu0 %v1803
  %3229 = vmatprep.subr.mxu0 %v1806
  %3230 = vmatpush1.msra.mxu0 %v1805
  %3231 = vmatprep.subr.mxu0 %v1808
  %3232 = vmatpush1.msra.mxu0 %v1807
  %3233 = vmatprep.subr.mxu0 %v1810
  %3234 = vmatpush1.msra.mxu0 %v1809
  %3235 = vmatprep.subr.mxu0 %v1812
  %3236 = vmatpush1.msra.mxu0 %v1811
  %3237 = vmatprep.subr.mxu0 %v1814
  %3238 = vmatpush1.msra.mxu0 %v1813
  %3239 = vmatprep.subr.mxu0 %v1816
  %3240 = vmatpush1.msra.mxu0 %v1815
  %3241 = vmatprep.subr.mxu0 %v1818
  %3242 = vmatpush1.msra.mxu0 %v1817
  %3243 = vmatprep.subr.mxu0 %v1820
  %3244 = vmatpush1.msra.mxu0 %v1819
  %3245 = vmatprep.subr.mxu0 %v1822
  %3246 = vmatpush1.msra.mxu0 %v1821
  %3247 = vmatprep.subr.mxu0 %v1824
  %3248 = vmatpush1.msra.mxu0 %v1823
  %3249 = vmatprep.subr.mxu0 %v1826
  %3250 = vmatpush1.msra.mxu0 %v1825
  %3251 = vmatprep.subr.mxu0 %v1828
  %3252 = vmatpush1.msra.mxu0 %v1827
  %3253 = vmatprep.subr.mxu0 %v1830
  %3254 = vmatpush1.msra.mxu0 %v1829
  %3255 = vmatprep.subr.mxu0 %v1832
  %3256 = vmatpush1.msra.mxu0 %v1831
  %3257 = vmatprep.subr.mxu0 %v1834
  %3258 = vmatpush1.msra.mxu0 %v1833
  %3259 = vmatprep.mubr.f32.mxu0 %v3118
  %3260 = vmatmul.mubr.f32.gmra.mrb[0].mxu0 %v3117
  %v3261 = vpop.f32.mrb[0].mxu0
  %v3262 = vadd.f32 %v3191, %v3261
  %v3263 = vpop.f32.mrb[0].mxu0
  %v3264 = vadd.f32 %v3193, %v3263
  %3265 = vdwg.mxu0
  %3266 = vmatprep.subr.mxu0 %v2060
  %3267 = vmatpush1.msra.mxu0 %v2059
  %3268 = vmatprep.subr.mxu0 %v2062
  %3269 = vmatpush1.msra.mxu0 %v2061
  %3270 = vmatprep.subr.mxu0 %v2064
  %3271 = vmatpush1.msra.mxu0 %v2063
  %3272 = vmatprep.subr.mxu0 %v2066
  %3273 = vmatpush1.msra.mxu0 %v2065
  %3274 = vmatprep.subr.mxu0 %v2068
  %3275 = vmatpush1.msra.mxu0 %v2067
  %3276 = vmatprep.subr.mxu0 %v2070
  %3277 = vmatpush1.msra.mxu0 %v2069
  %3278 = vmatprep.subr.mxu0 %v2072
  %3279 = vmatpush1.msra.mxu0 %v2071
  %3280 = vmatprep.subr.mxu0 %v2074
  %3281 = vmatpush1.msra.mxu0 %v2073
  %3282 = vmatprep.subr.mxu0 %v2076
  %3283 = vmatpush1.msra.mxu0 %v2075
  %3284 = vmatprep.subr.mxu0 %v2078
  %3285 = vmatpush1.msra.mxu0 %v2077
  %3286 = vmatprep.subr.mxu0 %v2080
  %3287 = vmatpush1.msra.mxu0 %v2079
  %3288 = vmatprep.subr.mxu0 %v2082
  %3289 = vmatpush1.msra.mxu0 %v2081
  %3290 = vmatprep.subr.mxu0 %v2084
  %3291 = vmatpush1.msra.mxu0 %v2083
  %3292 = vmatprep.subr.mxu0 %v2086
  %3293 = vmatpush1.msra.mxu0 %v2085
  %3294 = vmatprep.subr.mxu0 %v2088
  %3295 = vmatpush1.msra.mxu0 %v2087
  %3296 = vmatprep.subr.mxu0 %v2090
  %3297 = vmatpush1.msra.mxu0 %v2089
  %3298 = vmatprep.subr.mxu0 %v2316
  %3299 = vmatpush1.msra.mxu0 %v2315
  %3300 = vmatprep.subr.mxu0 %v2318
  %3301 = vmatpush1.msra.mxu0 %v2317
  %3302 = vmatprep.subr.mxu0 %v2320
  %3303 = vmatpush1.msra.mxu0 %v2319
  %3304 = vmatprep.subr.mxu0 %v2322
  %3305 = vmatpush1.msra.mxu0 %v2321
  %3306 = vmatprep.subr.mxu0 %v2324
  %3307 = vmatpush1.msra.mxu0 %v2323
  %3308 = vmatprep.subr.mxu0 %v2326
  %3309 = vmatpush1.msra.mxu0 %v2325
  %3310 = vmatprep.subr.mxu0 %v2328
  %3311 = vmatpush1.msra.mxu0 %v2327
  %3312 = vmatprep.subr.mxu0 %v2330
  %3313 = vmatpush1.msra.mxu0 %v2329
  %3314 = vmatprep.subr.mxu0 %v2332
  %3315 = vmatpush1.msra.mxu0 %v2331
  %3316 = vmatprep.subr.mxu0 %v2334
  %3317 = vmatpush1.msra.mxu0 %v2333
  %3318 = vmatprep.subr.mxu0 %v2336
  %3319 = vmatpush1.msra.mxu0 %v2335
  %3320 = vmatprep.subr.mxu0 %v2338
  %3321 = vmatpush1.msra.mxu0 %v2337
  %3322 = vmatprep.subr.mxu0 %v2340
  %3323 = vmatpush1.msra.mxu0 %v2339
  %3324 = vmatprep.subr.mxu0 %v2342
  %3325 = vmatpush1.msra.mxu0 %v2341
  %3326 = vmatprep.subr.mxu0 %v2344
  %3327 = vmatpush1.msra.mxu0 %v2343
  %3328 = vmatprep.subr.mxu0 %v2346
  %3329 = vmatpush1.msra.mxu0 %v2345
  %3330 = vmatprep.mubr.f32.mxu0 %v3120
  %3331 = vmatmul.mubr.f32.gmra.mrb[0].mxu0 %v3119
  %v3332 = vpop.f32.mrb[0].mxu0
  %v3333 = vadd.f32 %v3262, %v3332
  %v3334 = vpop.f32.mrb[0].mxu0
  %v3335 = vadd.f32 %v3264, %v3334
  %3336 = vdwg.mxu0
  %3337 = vmatprep.subr.mxu0 %v2572
  %3338 = vmatpush1.msra.mxu0 %v2571
  %3339 = vmatprep.subr.mxu0 %v2574
  %3340 = vmatpush1.msra.mxu0 %v2573
  %3341 = vmatprep.subr.mxu0 %v2576
  %3342 = vmatpush1.msra.mxu0 %v2575
  %3343 = vmatprep.subr.mxu0 %v2578
  %3344 = vmatpush1.msra.mxu0 %v2577
  %3345 = vmatprep.subr.mxu0 %v2580
  %3346 = vmatpush1.msra.mxu0 %v2579
  %3347 = vmatprep.subr.mxu0 %v2582
  %3348 = vmatpush1.msra.mxu0 %v2581
  %3349 = vmatprep.subr.mxu0 %v2584
  %3350 = vmatpush1.msra.mxu0 %v2583
  %3351 = vmatprep.subr.mxu0 %v2586
  %3352 = vmatpush1.msra.mxu0 %v2585
  %3353 = vmatprep.subr.mxu0 %v2588
  %3354 = vmatpush1.msra.mxu0 %v2587
  %3355 = vmatprep.subr.mxu0 %v2590
  %3356 = vmatpush1.msra.mxu0 %v2589
  %3357 = vmatprep.subr.mxu0 %v2592
  %3358 = vmatpush1.msra.mxu0 %v2591
  %3359 = vmatprep.subr.mxu0 %v2594
  %3360 = vmatpush1.msra.mxu0 %v2593
  %3361 = vmatprep.subr.mxu0 %v2596
  %3362 = vmatpush1.msra.mxu0 %v2595
  %3363 = vmatprep.subr.mxu0 %v2598
  %3364 = vmatpush1.msra.mxu0 %v2597
  %3365 = vmatprep.subr.mxu0 %v2600
  %3366 = vmatpush1.msra.mxu0 %v2599
  %3367 = vmatprep.subr.mxu0 %v2602
  %3368 = vmatpush1.msra.mxu0 %v2601
  %3369 = vmatprep.subr.mxu0 %v2828
  %3370 = vmatpush1.msra.mxu0 %v2827
  %3371 = vmatprep.subr.mxu0 %v2830
  %3372 = vmatpush1.msra.mxu0 %v2829
  %3373 = vmatprep.subr.mxu0 %v2832
  %3374 = vmatpush1.msra.mxu0 %v2831
  %3375 = vmatprep.subr.mxu0 %v2834
  %3376 = vmatpush1.msra.mxu0 %v2833
  %3377 = vmatprep.subr.mxu0 %v2836
  %3378 = vmatpush1.msra.mxu0 %v2835
  %3379 = vmatprep.subr.mxu0 %v2838
  %3380 = vmatpush1.msra.mxu0 %v2837
  %3381 = vmatprep.subr.mxu0 %v2840
  %3382 = vmatpush1.msra.mxu0 %v2839
  %3383 = vmatprep.subr.mxu0 %v2842
  %3384 = vmatpush1.msra.mxu0 %v2841
  %3385 = vmatprep.subr.mxu0 %v2844
  %3386 = vmatpush1.msra.mxu0 %v2843
  %3387 = vmatprep.subr.mxu0 %v2846
  %3388 = vmatpush1.msra.mxu0 %v2845
  %3389 = vmatprep.subr.mxu0 %v2848
  %3390 = vmatpush1.msra.mxu0 %v2847
  %3391 = vmatprep.subr.mxu0 %v2850
  %3392 = vmatpush1.msra.mxu0 %v2849
  %3393 = vmatprep.subr.mxu0 %v2852
  %3394 = vmatpush1.msra.mxu0 %v2851
  %3395 = vmatprep.subr.mxu0 %v2854
  %3396 = vmatpush1.msra.mxu0 %v2853
  %3397 = vmatprep.subr.mxu0 %v2856
  %3398 = vmatpush1.msra.mxu0 %v2855
  %3399 = vmatprep.subr.mxu0 %v2858
  %3400 = vmatpush1.msra.mxu0 %v2857
  %3401 = vmatprep.mubr.f32.mxu0 %v3122
  %3402 = vmatmul.mubr.f32.gmra.mrb[0].mxu0 %v3121
  %v3403 = vpop.f32.mrb[0].mxu0
  %v3404 = vadd.f32 %v3333, %v3403
  %v3405 = vpop.f32.mrb[0].mxu0
  %v3406 = vadd.f32 %v3335, %v3405
  %3407 = vdwg.mxu0
  %3408 = vmatprep.subr.mxu0 %v3084
  %3409 = vmatpush1.msra.mxu0 %v3083
  %3410 = vmatprep.subr.mxu0 %v3086
  %3411 = vmatpush1.msra.mxu0 %v3085
  %3412 = vmatprep.subr.mxu0 %v3088
  %3413 = vmatpush1.msra.mxu0 %v3087
  %3414 = vmatprep.subr.mxu0 %v3090
  %3415 = vmatpush1.msra.mxu0 %v3089
  %3416 = vmatprep.subr.mxu0 %v3092
  %3417 = vmatpush1.msra.mxu0 %v3091
  %3418 = vmatprep.subr.mxu0 %v3094
  %3419 = vmatpush1.msra.mxu0 %v3093
  %3420 = vmatprep.subr.mxu0 %v3096
  %3421 = vmatpush1.msra.mxu0 %v3095
  %3422 = vmatprep.subr.mxu0 %v3098
  %3423 = vmatpush1.msra.mxu0 %v3097
  %3424 = vmatprep.subr.mxu0 %v3100
  %3425 = vmatpush1.msra.mxu0 %v3099
  %3426 = vmatprep.subr.mxu0 %v3102
  %3427 = vmatpush1.msra.mxu0 %v3101
  %3428 = vmatprep.subr.mxu0 %v3104
  %3429 = vmatpush1.msra.mxu0 %v3103
  %3430 = vmatprep.subr.mxu0 %v3106
  %3431 = vmatpush1.msra.mxu0 %v3105
  %3432 = vmatprep.subr.mxu0 %v3108
  %3433 = vmatpush1.msra.mxu0 %v3107
  %3434 = vmatprep.subr.mxu0 %v3110
  %3435 = vmatpush1.msra.mxu0 %v3109
  %3436 = vmatprep.subr.mxu0 %v3112
  %3437 = vmatpush1.msra.mxu0 %v3111
  %3438 = vmatprep.subr.mxu0 %v3114
  %3439 = vmatpush1.msra.mxu0 %v3113
  %3440 = vmatprep.subr.mxu0 0.0
  %3441 = vmatpush1.msra.mxu0 0.0
  %3442 = vmatprep.subr.mxu0 0.0
  %3443 = vmatpush1.msra.mxu0 0.0
  %3444 = vmatprep.subr.mxu0 0.0
  %3445 = vmatpush1.msra.mxu0 0.0
  %3446 = vmatprep.subr.mxu0 0.0
  %3447 = vmatpush1.msra.mxu0 0.0
  %3448 = vmatprep.subr.mxu0 0.0
  %3449 = vmatpush1.msra.mxu0 0.0
  %3450 = vmatprep.subr.mxu0 0.0
  %3451 = vmatpush1.msra.mxu0 0.0
  %3452 = vmatprep.subr.mxu0 0.0
  %3453 = vmatpush1.msra.mxu0 0.0
  %3454 = vmatprep.subr.mxu0 0.0
  %3455 = vmatpush1.msra.mxu0 0.0
  %3456 = vmatprep.subr.mxu0 0.0
  %3457 = vmatpush1.msra.mxu0 0.0
  %3458 = vmatprep.subr.mxu0 0.0
  %3459 = vmatpush1.msra.mxu0 0.0
  %3460 = vmatprep.subr.mxu0 0.0
  %3461 = vmatpush1.msra.mxu0 0.0
  %3462 = vmatprep.subr.mxu0 0.0
  %3463 = vmatpush1.msra.mxu0 0.0
  %3464 = vmatprep.subr.mxu0 0.0
  %3465 = vmatpush1.msra.mxu0 0.0
  %3466 = vmatprep.subr.mxu0 0.0
  %3467 = vmatpush1.msra.mxu0 0.0
  %3468 = vmatprep.subr.mxu0 0.0
  %3469 = vmatpush1.msra.mxu0 0.0
  %3470 = vmatprep.subr.mxu0 0.0
  %3471 = vmatpush1.msra.mxu0 0.0
  %3472 = vmatprep.mubr.f32.mxu0 0.0
  %3473 = vmatmul.mubr.f32.gmra.mrb[0].mxu0 %v3123
  %v3474 = vpop.f32.mrb[0].mxu0
  %v3475 = vadd.f32 %v3404, %v3474
  %v3476 = vpop.f32.mrb[0].mxu0
  %v3477 = vadd.f32 %v3406, %v3476
  %3478 = vdwg.mxu0
  %3479 = vst [vmem:[%s2] sm:$0x1f] %v3475
  %vm3480 = vcmask 274432
  %3481 = vst.msk [vmem:[%s2 + $0x8] sm:$0x1f] %vm3480, %v3477
  // Predicated region
  $region10: #{kanc_hdc_forward.4} parent=0 // pred_check
    _
  $region11: #{kanc_hdc_forward.4} parent=0 // pred_check_branch
    %3483 = sbr.rel (0) target = $region13
  $region12: #{kanc_hdc_forward.4} parent=0 // pred_region
    _
  $region13: #{kanc_hdc_forward.4} parent=0 // pred_fallthru
    _
  // Predicated region
  $region14: #{kanc_hdc_forward.4} parent=0 // pred_check
    _
  $region15: #{kanc_hdc_forward.4} parent=0 // pred_check_branch
    %3485 = sbr.rel (0) target = $region17
  $region16: #{kanc_hdc_forward.4} parent=0 // pred_region
    _
  $region17: #{kanc_hdc_forward.4} parent=0 // pred_fallthru
    _

// kernel: kanc_hdc_forward.5
$region0: #{kanc_hdc_forward.5}
  #allocation0 [shape = 'u32[]', space=smem, size = 0x4, offset = 0x4, fixed_abs, tag = 'smem constant byte address 0x4 - core index']
  #allocation1 [shape = 'u32[144,128]{1,0:T(1,128)}', space=vmem, size = 0x12000, scoped, tag = 'internal scratch']
  %s0 = inlined_call_operand.vmem [shape: f32[2,48,49], index: 0, kind: input, shape index: {}]
  %s1 = inlined_call_operand.vmem [shape: f32[2,432], index: 1, kind: input, shape index: {}]
  %s2 = inlined_call_operand.vmem [shape: f32[2,49,200], index: 2, kind: input, shape index: {}]
  %s3 = inlined_call_operand.vmem [shape: f32[1,200], index: 3, kind: input, shape index: {}]
  %s4 = inlined_call_operand.hbm [shape: f32[2,200], index: 4, kind: output, shape index: {}]
  %s5 = sld [smem:[#allocation0]]
  $region26: #{kanc_hdc_forward.5} parent=0
    _
  %s7 = ssub.s32 1, %s5
  %s8 = scalar_select 0, %s7, %s5
  $region1: #{kanc_hdc_forward.5} parent=0
    #allocation2 [shape = 'u8[2048]{0}', space=vmem, size = 0x800, scoped, tag = 'output window, operand 0, single buffered']
    #allocation3 [shape = 's32[1]{0}', space=sflag, size = 0x4, scoped, tag = 'scoped memory for kanc_hdc_forward.5']
    %9 = vsyncpa [#allocation3], 0
    // Predicated region
    $region2: #{kanc_hdc_forward.5} parent=1 // pred_check
      _
    $region3: #{kanc_hdc_forward.5} parent=1 // pred_check_branch
      %11 = sbr.rel (0) target = $region5
    $region4: #{kanc_hdc_forward.5} parent=1 // pred_region
      _
    $region5: #{kanc_hdc_forward.5} parent=1 // pred_fallthru
      _
    // Predicated region
    $region6: #{kanc_hdc_forward.5} parent=1 // pred_check
      _
    $region7: #{kanc_hdc_forward.5} parent=1 // pred_check_branch
      %13 = sbr.rel (0) target = $region9
    $region8: #{kanc_hdc_forward.5} parent=1 // pred_region
      _
    $region9: #{kanc_hdc_forward.5} parent=1 // pred_fallthru
      _
    // Predicated region
    $region10: #{kanc_hdc_forward.5} parent=1 // pred_check
      _
    $region11: #{kanc_hdc_forward.5} parent=1 // pred_check_branch
      %15 = sbr.rel (0) target = $region13
    $region12: #{kanc_hdc_forward.5} parent=1 // pred_region
      _
    $region13: #{kanc_hdc_forward.5} parent=1 // pred_fallthru
      _
    // Predicated region
    $region14: #{kanc_hdc_forward.5} parent=1 // pred_check
      _
    $region15: #{kanc_hdc_forward.5} parent=1 // pred_check_branch
      %17 = sbr.rel (0) target = $region17
    $region16: #{kanc_hdc_forward.5} parent=1 // pred_region
      _
    $region17: #{kanc_hdc_forward.5} parent=1 // pred_fallthru
      _
    %v18 = vld [vmem:[%s1] sm:$0xff]
    %v19 = vld [vmem:[%s0] sm:$0xff]
    %v20 = vld [vmem:[%s0 + $0x8] sm:$0xff]
    %v21 = vld [vmem:[%s0 + $0x10] sm:$0xff]
    %v22 = vld [vmem:[%s0 + $0x18] sm:$0xff]
    %v23 = vld [vmem:[%s0 + $0x20] sm:$0xff]
    %v24 = vld [vmem:[%s0 + $0x28] sm:$0xff]
    %v25 = vsub.f32 0.0, %v19
    %v26 = vsub.f32 0.0, %v20
    %v27 = vsub.f32 0.0, %v21
    %v28 = vsub.f32 0.0, %v22
    %v29 = vsub.f32 0.0, %v23
    %v30 = vsub.f32 0.0, %v24
    %v31 = vmul.f32 %v25, 1.442695
    %v32 = vpow.pop %v31
    %v33 = vmul.f32 %v26, 1.442695
    %v34 = vpow.pop %v33
    %v35 = vmul.f32 %v27, 1.442695
    %v36 = vpow.pop %v35
    %v37 = vmul.f32 %v28, 1.442695
    %v38 = vpow.pop %v37
    %v39 = vmul.f32 %v29, 1.442695
    %v40 = vpow.pop %v39
    %v41 = vmul.f32 %v30, 1.442695
    %v42 = vpow.pop %v41
    %v43 = vadd.f32 %v32, 1.0
    %v44 = vadd.f32 %v34, 1.0
    %v45 = vadd.f32 %v36, 1.0
    %v46 = vadd.f32 %v38, 1.0
    %v47 = vadd.f32 %v40, 1.0
    %v48 = vadd.f32 %v42, 1.0
    %v49 = vrcp.pop %v43
    %v50 = vrcp.pop %v44
    %v51 = vrcp.pop %v45
    %v52 = vrcp.pop %v46
    %v53 = vrcp.pop %v47
    %v54 = vrcp.pop %v48
    %v55 = vmul.f32 %v19, %v49
    %v56 = vmul.f32 %v20, %v50
    %v57 = vmul.f32 %v21, %v51
    %v58 = vmul.f32 %v22, %v52
    %v59 = vmul.f32 %v23, %v53
    %v60 = vmul.f32 %v24, %v54
    %v61 = vsub.f32 %v19, -2.2
    %v62 = vsub.f32 %v20, -2.2
    %v63 = vsub.f32 %v21, -2.2
    %v64 = vsub.f32 %v22, -2.2
    %v65 = vsub.f32 %v23, -2.2
    %v66 = vsub.f32 %v24, -2.2
    %v67 = vmul.f32 %v61, 2.5
    %v68 = vmul.f32 %v62, 2.5
    %v69 = vmul.f32 %v63, 2.5
    %v70 = vmul.f32 %v64, 2.5
    %v71 = vmul.f32 %v65, 2.5
    %v72 = vmul.f32 %v66, 2.5
    %v73 = vfloor.f32 %v67
    %v74 = vfloor.f32 %v68
    %v75 = vfloor.f32 %v69
    %v76 = vfloor.f32 %v70
    %v77 = vfloor.f32 %v71
    %v78 = vfloor.f32 %v72
    %v79 = vsub.f32 %v67, %v73
    %v80 = vsub.f32 %v68, %v74
    %v81 = vsub.f32 %v69, %v75
    %v82 = vsub.f32 %v70, %v76
    %v83 = vsub.f32 %v71, %v77
    %v84 = vsub.f32 %v72, %v78
    %v85 = vmul.f32 %v79, %v79
    %v86 = vmul.f32 %v80, %v80
    %v87 = vmul.f32 %v81, %v81
    %v88 = vmul.f32 %v82, %v82
    %v89 = vmul.f32 %v83, %v83
    %v90 = vmul.f32 %v84, %v84
    %v91 = vmul.f32 %v85, %v79
    %v92 = vmul.f32 %v86, %v80
    %v93 = vmul.f32 %v87, %v81
    %v94 = vmul.f32 %v88, %v82
    %v95 = vmul.f32 %v89, %v83
    %v96 = vmul.f32 %v90, %v84
    %v97 = vmul.f32 %v91, 0.16666667
    %v98 = vmul.f32 %v92, 0.16666667
    %v99 = vmul.f32 %v93, 0.16666667
    %v100 = vmul.f32 %v94, 0.16666667
    %v101 = vmul.f32 %v95, 0.16666667
    %v102 = vmul.f32 %v96, 0.16666667
    %v103 = vmul.f32 %v79, -3.0
    %v104 = vmul.f32 %v80, -3.0
    %v105 = vmul.f32 %v81, -3.0
    %v106 = vmul.f32 %v82, -3.0
    %v107 = vmul.f32 %v83, -3.0
    %v108 = vmul.f32 %v84, -3.0
    %v109 = vadd.f32 %v103, 3.0
    %v110 = vadd.f32 %v104, 3.0
    %v111 = vadd.f32 %v105, 3.0
    %v112 = vadd.f32 %v106, 3.0
    %v113 = vadd.f32 %v107, 3.0
    %v114 = vadd.f32 %v108, 3.0
    %v115 = vmul.f32 %v109, %v79
    %v116 = vmul.f32 %v110, %v80
    %v117 = vmul.f32 %v111, %v81
    %v118 = vmul.f32 %v112, %v82
    %v119 = vmul.f32 %v113, %v83
    %v120 = vmul.f32 %v114, %v84
    %v121 = vadd.f32 %v115, 3.0
    %v122 = vadd.f32 %v116, 3.0
    %v123 = vadd.f32 %v117, 3.0
    %v124 = vadd.f32 %v118, 3.0
    %v125 = vadd.f32 %v119, 3.0
    %v126 = vadd.f32 %v120, 3.0
    %v127 = vmul.f32 %v121, %v79
    %v128 = vmul.f32 %v122, %v80
    %v129 = vmul.f32 %v123, %v81
    %v130 = vmul.f32 %v124, %v82
    %v131 = vmul.f32 %v125, %v83
    %v132 = vmul.f32 %v126, %v84
    %v133 = vadd.f32 %v127, 1.0
    %v134 = vadd.f32 %v128, 1.0
    %v135 = vadd.f32 %v129, 1.0
    %v136 = vadd.f32 %v130, 1.0
    %v137 = vadd.f32 %v131, 1.0
    %v138 = vadd.f32 %v132, 1.0
    %v139 = vmul.f32 %v133, 0.16666667
    %v140 = vmul.f32 %v134, 0.16666667
    %v141 = vmul.f32 %v135, 0.16666667
    %v142 = vmul.f32 %v136, 0.16666667
    %v143 = vmul.f32 %v137, 0.16666667
    %v144 = vmul.f32 %v138, 0.16666667
    %v145 = vmul.f32 %v79, 3.0
    %v146 = vmul.f32 %v80, 3.0
    %v147 = vmul.f32 %v81, 3.0
    %v148 = vmul.f32 %v82, 3.0
    %v149 = vmul.f32 %v83, 3.0
    %v150 = vmul.f32 %v84, 3.0
    %v151 = vsub.f32 %v145, 6.0
    %v152 = vsub.f32 %v146, 6.0
    %v153 = vsub.f32 %v147, 6.0
    %v154 = vsub.f32 %v148, 6.0
    %v155 = vsub.f32 %v149, 6.0
    %v156 = vsub.f32 %v150, 6.0
    %v157 = vmul.f32 %v151, %v85
    %v158 = vmul.f32 %v152, %v86
    %v159 = vmul.f32 %v153, %v87
    %v160 = vmul.f32 %v154, %v88
    %v161 = vmul.f32 %v155, %v89
    %v162 = vmul.f32 %v156, %v90
    %v163 = vadd.f32 %v157, 4.0
    %v164 = vadd.f32 %v158, 4.0
    %v165 = vadd.f32 %v159, 4.0
    %v166 = vadd.f32 %v160, 4.0
    %v167 = vadd.f32 %v161, 4.0
    %v168 = vadd.f32 %v162, 4.0
    %v169 = vmul.f32 %v163, 0.16666667
    %v170 = vmul.f32 %v164, 0.16666667
    %v171 = vmul.f32 %v165, 0.16666667
    %v172 = vmul.f32 %v166, 0.16666667
    %v173 = vmul.f32 %v167, 0.16666667
    %v174 = vmul.f32 %v168, 0.16666667
    %v175 = vsub.f32 1.0, %v79
    %v176 = vsub.f32 1.0, %v80
    %v177 = vsub.f32 1.0, %v81
    %v178 = vsub.f32 1.0, %v82
    %v179 = vsub.f32 1.0, %v83
    %v180 = vsub.f32 1.0, %v84
    %v181 = vmul.f32 %v175, %v175
    %v182 = vmul.f32 %v176, %v176
    %v183 = vmul.f32 %v177, %v177
    %v184 = vmul.f32 %v178, %v178
    %v185 = vmul.f32 %v179, %v179
    %v186 = vmul.f32 %v180, %v180
    %v187 = vmul.f32 %v181, %v175
    %v188 = vmul.f32 %v182, %v176
    %v189 = vmul.f32 %v183, %v177
    %v190 = vmul.f32 %v184, %v178
    %v191 = vmul.f32 %v185, %v179
    %v192 = vmul.f32 %v186, %v180
    %v193 = vmul.f32 %v187, 0.16666667
    %v194 = vmul.f32 %v188, 0.16666667
    %v195 = vmul.f32 %v189, 0.16666667
    %v196 = vmul.f32 %v190, 0.16666667
    %v197 = vmul.f32 %v191, 0.16666667
    %v198 = vmul.f32 %v192, 0.16666667
    %vm199 = vcmp.eq.f32.partialorder %v73, 0.0
    %vm200 = vcmp.eq.f32.partialorder %v74, 0.0
    %vm201 = vcmp.eq.f32.partialorder %v75, 0.0
    %vm202 = vcmp.eq.f32.partialorder %v76, 0.0
    %vm203 = vcmp.eq.f32.partialorder %v77, 0.0
    %vm204 = vcmp.eq.f32.partialorder %v78, 0.0
    %v205 = vsel %vm199, %v97, 0.0
    %v206 = vsel %vm200, %v98, 0.0
    %v207 = vsel %vm201, %v99, 0.0
    %v208 = vsel %vm202, %v100, 0.0
    %v209 = vsel %vm203, %v101, 0.0
    %v210 = vsel %vm204, %v102, 0.0
    %vm211 = vcmp.eq.f32.partialorder %v73, 1.0
    %vm212 = vcmp.eq.f32.partialorder %v74, 1.0
    %vm213 = vcmp.eq.f32.partialorder %v75, 1.0
    %vm214 = vcmp.eq.f32.partialorder %v76, 1.0
    %vm215 = vcmp.eq.f32.partialorder %v77, 1.0
    %vm216 = vcmp.eq.f32.partialorder %v78, 1.0
    %v217 = vsel %vm211, %v139, 0.0
    %v218 = vsel %vm212, %v140, 0.0
    %v219 = vsel %vm213, %v141, 0.0
    %v220 = vsel %vm214, %v142, 0.0
    %v221 = vsel %vm215, %v143, 0.0
    %v222 = vsel %vm216, %v144, 0.0
    %v223 = vadd.f32 %v205, %v217
    %v224 = vadd.f32 %v206, %v218
    %v225 = vadd.f32 %v207, %v219
    %v226 = vadd.f32 %v208, %v220
    %v227 = vadd.f32 %v209, %v221
    %v228 = vadd.f32 %v210, %v222
    %vm229 = vcmp.eq.f32.partialorder %v73, 2.0
    %vm230 = vcmp.eq.f32.partialorder %v74, 2.0
    %vm231 = vcmp.eq.f32.partialorder %v75, 2.0
    %vm232 = vcmp.eq.f32.partialorder %v76, 2.0
    %vm233 = vcmp.eq.f32.partialorder %v77, 2.0
    %vm234 = vcmp.eq.f32.partialorder %v78, 2.0
    %v235 = vsel %vm229, %v169, 0.0
    %v236 = vsel %vm230, %v170, 0.0
    %v237 = vsel %vm231, %v171, 0.0
    %v238 = vsel %vm232, %v172, 0.0
    %v239 = vsel %vm233, %v173, 0.0
    %v240 = vsel %vm234, %v174, 0.0
    %v241 = vadd.f32 %v223, %v235
    %v242 = vadd.f32 %v224, %v236
    %v243 = vadd.f32 %v225, %v237
    %v244 = vadd.f32 %v226, %v238
    %v245 = vadd.f32 %v227, %v239
    %v246 = vadd.f32 %v228, %v240
    %vm247 = vcmp.eq.f32.partialorder %v73, 3.0
    %vm248 = vcmp.eq.f32.partialorder %v74, 3.0
    %vm249 = vcmp.eq.f32.partialorder %v75, 3.0
    %vm250 = vcmp.eq.f32.partialorder %v76, 3.0
    %vm251 = vcmp.eq.f32.partialorder %v77, 3.0
    %vm252 = vcmp.eq.f32.partialorder %v78, 3.0
    %v253 = vsel %vm247, %v193, 0.0
    %v254 = vsel %vm248, %v194, 0.0
    %v255 = vsel %vm249, %v195, 0.0
    %v256 = vsel %vm250, %v196, 0.0
    %v257 = vsel %vm251, %v197, 0.0
    %v258 = vsel %vm252, %v198, 0.0
    %v259 = vadd.f32 %v241, %v253
    %v260 = vadd.f32 %v242, %v254
    %v261 = vadd.f32 %v243, %v255
    %v262 = vadd.f32 %v244, %v256
    %v263 = vadd.f32 %v245, %v257
    %v264 = vadd.f32 %v246, %v258
    %v265 = vsel %vm211, %v97, 0.0
    %v266 = vsel %vm212, %v98, 0.0
    %v267 = vsel %vm213, %v99, 0.0
    %v268 = vsel %vm214, %v100, 0.0
    %v269 = vsel %vm215, %v101, 0.0
    %v270 = vsel %vm216, %v102, 0.0
    %v271 = vsel %vm229, %v139, 0.0
    %v272 = vsel %vm230, %v140, 0.0
    %v273 = vsel %vm231, %v141, 0.0
    %v274 = vsel %vm232, %v142, 0.0
    %v275 = vsel %vm233, %v143, 0.0
    %v276 = vsel %vm234, %v144, 0.0
    %v277 = vadd.f32 %v265, %v271
    %v278 = vadd.f32 %v266, %v272
    %v279 = vadd.f32 %v267, %v273
    %v280 = vadd.f32 %v268, %v274
    %v281 = vadd.f32 %v269, %v275
    %v282 = vadd.f32 %v270, %v276
    %v283 = vsel %vm247, %v169, 0.0
    %v284 = vsel %vm248, %v170, 0.0
    %v285 = vsel %vm249, %v171, 0.0
    %v286 = vsel %vm250, %v172, 0.0
    %v287 = vsel %vm251, %v173, 0.0
    %v288 = vsel %vm252, %v174, 0.0
    %v289 = vadd.f32 %v277, %v283
    %v290 = vadd.f32 %v278, %v284
    %v291 = vadd.f32 %v279, %v285
    %v292 = vadd.f32 %v280, %v286
    %v293 = vadd.f32 %v281, %v287
    %v294 = vadd.f32 %v282, %v288
    %vm295 = vcmp.eq.f32.partialorder %v73, 4.0
    %vm296 = vcmp.eq.f32.partialorder %v74, 4.0
    %vm297 = vcmp.eq.f32.partialorder %v75, 4.0
    %vm298 = vcmp.eq.f32.partialorder %v76, 4.0
    %vm299 = vcmp.eq.f32.partialorder %v77, 4.0
    %vm300 = vcmp.eq.f32.partialorder %v78, 4.0
    %v301 = vsel %vm295, %v193, 0.0
    %v302 = vsel %vm296, %v194, 0.0
    %v303 = vsel %vm297, %v195, 0.0
    %v304 = vsel %vm298, %v196, 0.0
    %v305 = vsel %vm299, %v197, 0.0
    %v306 = vsel %vm300, %v198, 0.0
    %v307 = vadd.f32 %v289, %v301
    %v308 = vadd.f32 %v290, %v302
    %v309 = vadd.f32 %v291, %v303
    %v310 = vadd.f32 %v292, %v304
    %v311 = vadd.f32 %v293, %v305
    %v312 = vadd.f32 %v294, %v306
    %v313 = vsel %vm229, %v97, 0.0
    %v314 = vsel %vm230, %v98, 0.0
    %v315 = vsel %vm231, %v99, 0.0
    %v316 = vsel %vm232, %v100, 0.0
    %v317 = vsel %vm233, %v101, 0.0
    %v318 = vsel %vm234, %v102, 0.0
    %v319 = vsel %vm247, %v139, 0.0
    %v320 = vsel %vm248, %v140, 0.0
    %v321 = vsel %vm249, %v141, 0.0
    %v322 = vsel %vm250, %v142, 0.0
    %v323 = vsel %vm251, %v143, 0.0
    %v324 = vsel %vm252, %v144, 0.0
    %v325 = vadd.f32 %v313, %v319
    %v326 = vadd.f32 %v314, %v320
    %v327 = vadd.f32 %v315, %v321
    %v328 = vadd.f32 %v316, %v322
    %v329 = vadd.f32 %v317, %v323
    %v330 = vadd.f32 %v318, %v324
    %v331 = vsel %vm295, %v169, 0.0
    %v332 = vsel %vm296, %v170, 0.0
    %v333 = vsel %vm297, %v171, 0.0
    %v334 = vsel %vm298, %v172, 0.0
    %v335 = vsel %vm299, %v173, 0.0
    %v336 = vsel %vm300, %v174, 0.0
    %v337 = vadd.f32 %v325, %v331
    %v338 = vadd.f32 %v326, %v332
    %v339 = vadd.f32 %v327, %v333
    %v340 = vadd.f32 %v328, %v334
    %v341 = vadd.f32 %v329, %v335
    %v342 = vadd.f32 %v330, %v336
    %vm343 = vcmp.eq.f32.partialorder %v73, 5.0
    %vm344 = vcmp.eq.f32.partialorder %v74, 5.0
    %vm345 = vcmp.eq.f32.partialorder %v75, 5.0
    %vm346 = vcmp.eq.f32.partialorder %v76, 5.0
    %vm347 = vcmp.eq.f32.partialorder %v77, 5.0
    %vm348 = vcmp.eq.f32.partialorder %v78, 5.0
    %v349 = vsel %vm343, %v193, 0.0
    %v350 = vsel %vm344, %v194, 0.0
    %v351 = vsel %vm345, %v195, 0.0
    %v352 = vsel %vm346, %v196, 0.0
    %v353 = vsel %vm347, %v197, 0.0
    %v354 = vsel %vm348, %v198, 0.0
    %v355 = vadd.f32 %v337, %v349
    %v356 = vadd.f32 %v338, %v350
    %v357 = vadd.f32 %v339, %v351
    %v358 = vadd.f32 %v340, %v352
    %v359 = vadd.f32 %v341, %v353
    %v360 = vadd.f32 %v342, %v354
    %v361 = vsel %vm247, %v97, 0.0
    %v362 = vsel %vm248, %v98, 0.0
    %v363 = vsel %vm249, %v99, 0.0
    %v364 = vsel %vm250, %v100, 0.0
    %v365 = vsel %vm251, %v101, 0.0
    %v366 = vsel %vm252, %v102, 0.0
    %v367 = vsel %vm295, %v139, 0.0
    %v368 = vsel %vm296, %v140, 0.0
    %v369 = vsel %vm297, %v141, 0.0
    %v370 = vsel %vm298, %v142, 0.0
    %v371 = vsel %vm299, %v143, 0.0
    %v372 = vsel %vm300, %v144, 0.0
    %v373 = vadd.f32 %v361, %v367
    %v374 = vadd.f32 %v362, %v368
    %v375 = vadd.f32 %v363, %v369
    %v376 = vadd.f32 %v364, %v370
    %v377 = vadd.f32 %v365, %v371
    %v378 = vadd.f32 %v366, %v372
    %v379 = vsel %vm343, %v169, 0.0
    %v380 = vsel %vm344, %v170, 0.0
    %v381 = vsel %vm345, %v171, 0.0
    %v382 = vsel %vm346, %v172, 0.0
    %v383 = vsel %vm347, %v173, 0.0
    %v384 = vsel %vm348, %v174, 0.0
    %v385 = vadd.f32 %v373, %v379
    %v386 = vadd.f32 %v374, %v380
    %v387 = vadd.f32 %v375, %v381
    %v388 = vadd.f32 %v376, %v382
    %v389 = vadd.f32 %v377, %v383
    %v390 = vadd.f32 %v378, %v384
    %vm391 = vcmp.eq.f32.partialorder %v73, 6.0
    %vm392 = vcmp.eq.f32.partialorder %v74, 6.0
    %vm393 = vcmp.eq.f32.partialorder %v75, 6.0
    %vm394 = vcmp.eq.f32.partialorder %v76, 6.0
    %vm395 = vcmp.eq.f32.partialorder %v77, 6.0
    %vm396 = vcmp.eq.f32.partialorder %v78, 6.0
    %v397 = vsel %vm391, %v193, 0.0
    %v398 = vsel %vm392, %v194, 0.0
    %v399 = vsel %vm393, %v195, 0.0
    %v400 = vsel %vm394, %v196, 0.0
    %v401 = vsel %vm395, %v197, 0.0
    %v402 = vsel %vm396, %v198, 0.0
    %v403 = vadd.f32 %v385, %v397
    %v404 = vadd.f32 %v386, %v398
    %v405 = vadd.f32 %v387, %v399
    %v406 = vadd.f32 %v388, %v400
    %v407 = vadd.f32 %v389, %v401
    %v408 = vadd.f32 %v390, %v402
    %v409 = vsel %vm295, %v97, 0.0
    %v410 = vsel %vm296, %v98, 0.0
    %v411 = vsel %vm297, %v99, 0.0
    %v412 = vsel %vm298, %v100, 0.0
    %v413 = vsel %vm299, %v101, 0.0
    %v414 = vsel %vm300, %v102, 0.0
    %v415 = vsel %vm343, %v139, 0.0
    %v416 = vsel %vm344, %v140, 0.0
    %v417 = vsel %vm345, %v141, 0.0
    %v418 = vsel %vm346, %v142, 0.0
    %v419 = vsel %vm347, %v143, 0.0
    %v420 = vsel %vm348, %v144, 0.0
    %v421 = vadd.f32 %v409, %v415
    %v422 = vadd.f32 %v410, %v416
    %v423 = vadd.f32 %v411, %v417
    %v424 = vadd.f32 %v412, %v418
    %v425 = vadd.f32 %v413, %v419
    %v426 = vadd.f32 %v414, %v420
    %v427 = vsel %vm391, %v169, 0.0
    %v428 = vsel %vm392, %v170, 0.0
    %v429 = vsel %vm393, %v171, 0.0
    %v430 = vsel %vm394, %v172, 0.0
    %v431 = vsel %vm395, %v173, 0.0
    %v432 = vsel %vm396, %v174, 0.0
    %v433 = vadd.f32 %v421, %v427
    %v434 = vadd.f32 %v422, %v428
    %v435 = vadd.f32 %v423, %v429
    %v436 = vadd.f32 %v424, %v430
    %v437 = vadd.f32 %v425, %v431
    %v438 = vadd.f32 %v426, %v432
    %vm439 = vcmp.eq.f32.partialorder %v73, 7.0
    %vm440 = vcmp.eq.f32.partialorder %v74, 7.0
    %vm441 = vcmp.eq.f32.partialorder %v75, 7.0
    %vm442 = vcmp.eq.f32.partialorder %v76, 7.0
    %vm443 = vcmp.eq.f32.partialorder %v77, 7.0
    %vm444 = vcmp.eq.f32.partialorder %v78, 7.0
    %v445 = vsel %vm439, %v193, 0.0
    %v446 = vsel %vm440, %v194, 0.0
    %v447 = vsel %vm441, %v195, 0.0
    %v448 = vsel %vm442, %v196, 0.0
    %v449 = vsel %vm443, %v197, 0.0
    %v450 = vsel %vm444, %v198, 0.0
    %v451 = vadd.f32 %v433, %v445
    %v452 = vadd.f32 %v434, %v446
    %v453 = vadd.f32 %v435, %v447
    %v454 = vadd.f32 %v436, %v448
    %v455 = vadd.f32 %v437, %v449
    %v456 = vadd.f32 %v438, %v450
    %v457 = vsel %vm343, %v97, 0.0
    %v458 = vsel %vm344, %v98, 0.0
    %v459 = vsel %vm345, %v99, 0.0
    %v460 = vsel %vm346, %v100, 0.0
    %v461 = vsel %vm347, %v101, 0.0
    %v462 = vsel %vm348, %v102, 0.0
    %v463 = vsel %vm391, %v139, 0.0
    %v464 = vsel %vm392, %v140, 0.0
    %v465 = vsel %vm393, %v141, 0.0
    %v466 = vsel %vm394, %v142, 0.0
    %v467 = vsel %vm395, %v143, 0.0
    %v468 = vsel %vm396, %v144, 0.0
    %v469 = vadd.f32 %v457, %v463
    %v470 = vadd.f32 %v458, %v464
    %v471 = vadd.f32 %v459, %v465
    %v472 = vadd.f32 %v460, %v466
    %v473 = vadd.f32 %v461, %v467
    %v474 = vadd.f32 %v462, %v468
    %v475 = vsel %vm439, %v169, 0.0
    %v476 = vsel %vm440, %v170, 0.0
    %v477 = vsel %vm441, %v171, 0.0
    %v478 = vsel %vm442, %v172, 0.0
    %v479 = vsel %vm443, %v173, 0.0
    %v480 = vsel %vm444, %v174, 0.0
    %v481 = vadd.f32 %v469, %v475
    %v482 = vadd.f32 %v470, %v476
    %v483 = vadd.f32 %v471, %v477
    %v484 = vadd.f32 %v472, %v478
    %v485 = vadd.f32 %v473, %v479
    %v486 = vadd.f32 %v474, %v480
    %vm487 = vcmp.eq.f32.partialorder %v73, 8.0
    %vm488 = vcmp.eq.f32.partialorder %v74, 8.0
    %vm489 = vcmp.eq.f32.partialorder %v75, 8.0
    %vm490 = vcmp.eq.f32.partialorder %v76, 8.0
    %vm491 = vcmp.eq.f32.partialorder %v77, 8.0
    %vm492 = vcmp.eq.f32.partialorder %v78, 8.0
    %v493 = vsel %vm487, %v193, 0.0
    %v494 = vsel %vm488, %v194, 0.0
    %v495 = vsel %vm489, %v195, 0.0
    %v496 = vsel %vm490, %v196, 0.0
    %v497 = vsel %vm491, %v197, 0.0
    %v498 = vsel %vm492, %v198, 0.0
    %v499 = vadd.f32 %v481, %v493
    %v500 = vadd.f32 %v482, %v494
    %v501 = vadd.f32 %v483, %v495
    %v502 = vadd.f32 %v484, %v496
    %v503 = vadd.f32 %v485, %v497
    %v504 = vadd.f32 %v486, %v498
    %v505 = vsel %vm391, %v97, 0.0
    %v506 = vsel %vm392, %v98, 0.0
    %v507 = vsel %vm393, %v99, 0.0
    %v508 = vsel %vm394, %v100, 0.0
    %v509 = vsel %vm395, %v101, 0.0
    %v510 = vsel %vm396, %v102, 0.0
    %v511 = vsel %vm439, %v139, 0.0
    %v512 = vsel %vm440, %v140, 0.0
    %v513 = vsel %vm441, %v141, 0.0
    %v514 = vsel %vm442, %v142, 0.0
    %v515 = vsel %vm443, %v143, 0.0
    %v516 = vsel %vm444, %v144, 0.0
    %v517 = vadd.f32 %v505, %v511
    %v518 = vadd.f32 %v506, %v512
    %v519 = vadd.f32 %v507, %v513
    %v520 = vadd.f32 %v508, %v514
    %v521 = vadd.f32 %v509, %v515
    %v522 = vadd.f32 %v510, %v516
    %v523 = vsel %vm487, %v169, 0.0
    %v524 = vsel %vm488, %v170, 0.0
    %v525 = vsel %vm489, %v171, 0.0
    %v526 = vsel %vm490, %v172, 0.0
    %v527 = vsel %vm491, %v173, 0.0
    %v528 = vsel %vm492, %v174, 0.0
    %v529 = vadd.f32 %v517, %v523
    %v530 = vadd.f32 %v518, %v524
    %v531 = vadd.f32 %v519, %v525
    %v532 = vadd.f32 %v520, %v526
    %v533 = vadd.f32 %v521, %v527
    %v534 = vadd.f32 %v522, %v528
    %vm535 = vcmp.eq.f32.partialorder %v73, 9.0
    %vm536 = vcmp.eq.f32.partialorder %v74, 9.0
    %vm537 = vcmp.eq.f32.partialorder %v75, 9.0
    %vm538 = vcmp.eq.f32.partialorder %v76, 9.0
    %vm539 = vcmp.eq.f32.partialorder %v77, 9.0
    %vm540 = vcmp.eq.f32.partialorder %v78, 9.0
    %v541 = vsel %vm535, %v193, 0.0
    %v542 = vsel %vm536, %v194, 0.0
    %v543 = vsel %vm537, %v195, 0.0
    %v544 = vsel %vm538, %v196, 0.0
    %v545 = vsel %vm539, %v197, 0.0
    %v546 = vsel %vm540, %v198, 0.0
    %v547 = vadd.f32 %v529, %v541
    %v548 = vadd.f32 %v530, %v542
    %v549 = vadd.f32 %v531, %v543
    %v550 = vadd.f32 %v532, %v544
    %v551 = vadd.f32 %v533, %v545
    %v552 = vadd.f32 %v534, %v546
    %v553 = vsel %vm439, %v97, 0.0
    %v554 = vsel %vm440, %v98, 0.0
    %v555 = vsel %vm441, %v99, 0.0
    %v556 = vsel %vm442, %v100, 0.0
    %v557 = vsel %vm443, %v101, 0.0
    %v558 = vsel %vm444, %v102, 0.0
    %v559 = vsel %vm487, %v139, 0.0
    %v560 = vsel %vm488, %v140, 0.0
    %v561 = vsel %vm489, %v141, 0.0
    %v562 = vsel %vm490, %v142, 0.0
    %v563 = vsel %vm491, %v143, 0.0
    %v564 = vsel %vm492, %v144, 0.0
    %v565 = vadd.f32 %v553, %v559
    %v566 = vadd.f32 %v554, %v560
    %v567 = vadd.f32 %v555, %v561
    %v568 = vadd.f32 %v556, %v562
    %v569 = vadd.f32 %v557, %v563
    %v570 = vadd.f32 %v558, %v564
    %v571 = vsel %vm535, %v169, 0.0
    %v572 = vsel %vm536, %v170, 0.0
    %v573 = vsel %vm537, %v171, 0.0
    %v574 = vsel %vm538, %v172, 0.0
    %v575 = vsel %vm539, %v173, 0.0
    %v576 = vsel %vm540, %v174, 0.0
    %v577 = vadd.f32 %v565, %v571
    %v578 = vadd.f32 %v566, %v572
    %v579 = vadd.f32 %v567, %v573
    %v580 = vadd.f32 %v568, %v574
    %v581 = vadd.f32 %v569, %v575
    %v582 = vadd.f32 %v570, %v576
    %vm583 = vcmp.eq.f32.partialorder %v73, 10.0
    %vm584 = vcmp.eq.f32.partialorder %v74, 10.0
    %vm585 = vcmp.eq.f32.partialorder %v75, 10.0
    %vm586 = vcmp.eq.f32.partialorder %v76, 10.0
    %vm587 = vcmp.eq.f32.partialorder %v77, 10.0
    %vm588 = vcmp.eq.f32.partialorder %v78, 10.0
    %v589 = vsel %vm583, %v193, 0.0
    %v590 = vsel %vm584, %v194, 0.0
    %v591 = vsel %vm585, %v195, 0.0
    %v592 = vsel %vm586, %v196, 0.0
    %v593 = vsel %vm587, %v197, 0.0
    %v594 = vsel %vm588, %v198, 0.0
    %v595 = vadd.f32 %v577, %v589
    %v596 = vadd.f32 %v578, %v590
    %v597 = vadd.f32 %v579, %v591
    %v598 = vadd.f32 %v580, %v592
    %v599 = vadd.f32 %v581, %v593
    %v600 = vadd.f32 %v582, %v594
    %v602 = vcombine.high %v18, %v18
    %v604 = vunpack.c.l.s4 1983009808
    %v605 = vunpack.c.0.s8 %v604
    %v606 = vlaneseq
    %v607 = vshrl.u32 %v606, 7
    %v608 = vsub.s32 %v605, %v607
    %v609 = vrot.slane %v18, %v608
    %v611 = vunpack.c.l.s4 1983009808
    %v612 = vunpack.c.0.s8 %v611
    %v613 = vlaneseq
    %v614 = vshrl.u32 %v613, 7
    %v615 = vsub.s32 %v612, %v614
    %v616 = vrot.slane %v602, %v615
    %v617 = vcombine.high %v609, %v609
    %v618 = vcombine.high %v616, %v616
    %vm622 = vcmask 392192
    %v623 = vsel %vm622, %v618, 0
    %625 = vmatprep.subr.mxu0 0.0
    %626 = vmatpush1.msra.mxu0 %v55
    %627 = vmatprep.subr.mxu0 0.0
    %628 = vmatpush1.msra.mxu0 %v56
    %629 = vmatprep.subr.mxu0 0.0
    %630 = vmatpush1.msra.mxu0 %v57
    %631 = vmatprep.subr.mxu0 0.0
    %632 = vmatpush1.msra.mxu0 %v58
    %633 = vmatprep.subr.mxu0 0.0
    %634 = vmatpush1.msra.mxu0 %v59
    %635 = vmatprep.subr.mxu0 0.0
    %636 = vmatpush1.msra.mxu0 %v60
    %637 = vmatprep.subr.mxu0 0.0
    %638 = vmatpush1.msra.mxu0 %v259
    %639 = vmatprep.subr.mxu0 0.0
    %640 = vmatpush1.msra.mxu0 %v260
    %641 = vmatprep.subr.mxu0 0.0
    %642 = vmatpush1.msra.mxu0 %v261
    %643 = vmatprep.subr.mxu0 0.0
    %644 = vmatpush1.msra.mxu0 %v262
    %645 = vmatprep.subr.mxu0 0.0
    %646 = vmatpush1.msra.mxu0 %v263
    %647 = vmatprep.subr.mxu0 0.0
    %648 = vmatpush1.msra.mxu0 %v264
    %649 = vmatprep.subr.mxu0 0.0
    %650 = vmatpush1.msra.mxu0 %v307
    %651 = vmatprep.subr.mxu0 0.0
    %652 = vmatpush1.msra.mxu0 %v308
    %653 = vmatprep.subr.mxu0 0.0
    %654 = vmatpush1.msra.mxu0 %v309
    %655 = vmatprep.subr.mxu0 0.0
    %656 = vmatpush1.msra.mxu0 %v310
    %657 = vmatprep.subr.mxu0 0.0
    %658 = vmatpush1.msra.mxu0 %v311
    %659 = vmatprep.subr.mxu0 0.0
    %660 = vmatpush1.msra.mxu0 %v312
    %661 = vmatprep.subr.mxu0 0.0
    %662 = vmatpush1.msra.mxu0 %v355
    %663 = vmatprep.subr.mxu0 0.0
    %664 = vmatpush1.msra.mxu0 %v356
    %665 = vmatprep.subr.mxu0 0.0
    %666 = vmatpush1.msra.mxu0 %v357
    %667 = vmatprep.subr.mxu0 0.0
    %668 = vmatpush1.msra.mxu0 %v358
    %669 = vmatprep.subr.mxu0 0.0
    %670 = vmatpush1.msra.mxu0 %v359
    %671 = vmatprep.subr.mxu0 0.0
    %672 = vmatpush1.msra.mxu0 %v360
    %673 = vmatprep.subr.mxu0 0.0
    %674 = vmatpush1.msra.mxu0 %v403
    %675 = vmatprep.subr.mxu0 0.0
    %676 = vmatpush1.msra.mxu0 %v404
    %677 = vmatprep.subr.mxu0 0.0
    %678 = vmatpush1.msra.mxu0 %v405
    %679 = vmatprep.subr.mxu0 0.0
    %680 = vmatpush1.msra.mxu0 %v406
    %681 = vmatprep.subr.mxu0 0.0
    %682 = vmatpush1.msra.mxu0 %v407
    %683 = vmatprep.subr.mxu0 0.0
    %684 = vmatpush1.msra.mxu0 %v408
    %685 = vmatprep.subr.mxu0 0.0
    %686 = vmatpush1.msra.mxu0 %v451
    %687 = vmatprep.subr.mxu0 0.0
    %688 = vmatpush1.msra.mxu0 %v452
    %689 = vmatprep.mubr.f32.mxu0 %v617
    %690 = vmatmul.mubr.f32.gmra.mrb[0].mxu0 %v609
    %v691 = vpop.f32.mrb[0].mxu0
    %v692 = vadd.f32 0.0, %v691
    %v693 = vpop.f32.mrb[0].mxu0
    %694 = vdwg.mxu0
    %695 = vmatprep.subr.mxu0 0.0
    %696 = vmatpush1.msra.mxu0 %v453
    %697 = vmatprep.subr.mxu0 0.0
    %698 = vmatpush1.msra.mxu0 %v454
    %699 = vmatprep.subr.mxu0 0.0
    %700 = vmatpush1.msra.mxu0 %v455
    %701 = vmatprep.subr.mxu0 0.0
    %702 = vmatpush1.msra.mxu0 %v456
    %703 = vmatprep.subr.mxu0 0.0
    %704 = vmatpush1.msra.mxu0 %v499
    %705 = vmatprep.subr.mxu0 0.0
    %706 = vmatpush1.msra.mxu0 %v500
    %707 = vmatprep.subr.mxu0 0.0
    %708 = vmatpush1.msra.mxu0 %v501
    %709 = vmatprep.subr.mxu0 0.0
    %710 = vmatpush1.msra.mxu0 %v502
    %711 = vmatprep.subr.mxu0 0.0
    %712 = vmatpush1.msra.mxu0 %v503
    %713 = vmatprep.subr.mxu0 0.0
    %714 = vmatpush1.msra.mxu0 %v504
    %715 = vmatprep.subr.mxu0 0.0
    %716 = vmatpush1.msra.mxu0 %v547
    %717 = vmatprep.subr.mxu0 0.0
    %718 = vmatpush1.msra.mxu0 %v548
    %719 = vmatprep.subr.mxu0 0.0
    %720 = vmatpush1.msra.mxu0 %v549
    %721 = vmatprep.subr.mxu0 0.0
    %722 = vmatpush1.msra.mxu0 %v550
    %723 = vmatprep.subr.mxu0 0.0
    %724 = vmatpush1.msra.mxu0 %v551
    %725 = vmatprep.subr.mxu0 0.0
    %726 = vmatpush1.msra.mxu0 %v552
    %727 = vmatprep.subr.mxu0 0.0
    %728 = vmatpush1.msra.mxu0 %v595
    %729 = vmatprep.subr.mxu0 0.0
    %730 = vmatpush1.msra.mxu0 %v596
    %731 = vmatprep.subr.mxu0 0.0
    %732 = vmatpush1.msra.mxu0 %v597
    %733 = vmatprep.subr.mxu0 0.0
    %734 = vmatpush1.msra.mxu0 %v598
    %735 = vmatprep.subr.mxu0 0.0
    %736 = vmatpush1.msra.mxu0 %v599
    %737 = vmatprep.subr.mxu0 0.0
    %738 = vmatpush1.msra.mxu0 %v600
    %739 = vmatprep.subr.mxu0 0.0
    %740 = vmatpush1.msra.mxu0 0.0
    %741 = vmatprep.subr.mxu0 0.0
    %742 = vmatpush1.msra.mxu0 0.0
    %743 = vmatprep.subr.mxu0 0.0
    %744 = vmatpush1.msra.mxu0 0.0
    %745 = vmatprep.subr.mxu0 0.0
    %746 = vmatpush1.msra.mxu0 0.0
    %747 = vmatprep.subr.mxu0 0.0
    %748 = vmatpush1.msra.mxu0 0.0
    %749 = vmatprep.subr.mxu0 0.0
    %750 = vmatpush1.msra.mxu0 0.0
    %751 = vmatprep.subr.mxu0 0.0
    %752 = vmatpush1.msra.mxu0 0.0
    %753 = vmatprep.subr.mxu0 0.0
    %754 = vmatpush1.msra.mxu0 0.0
    %755 = vmatprep.subr.mxu0 0.0
    %756 = vmatpush1.msra.mxu0 0.0
    %757 = vmatprep.subr.mxu0 0.0
    %758 = vmatpush1.msra.mxu0 0.0
    %759 = vmatprep.mubr.f32.mxu0 %v623
    %760 = vmatmul.mubr.f32.gmra.mrb[0].mxu0 %v616
    %v761 = vpop.f32.mrb[0].mxu0
    %v762 = vadd.f32 %v692, %v761
    %v763 = vpop.f32.mrb[0].mxu0
    %764 = vdwg.mxu0
    %v765 = vld [vmem:[%s3] sm:$0x3]
    %v766 = vld [vmem:[%s2] sm:$0xff]
    %v767 = vld [vmem:[%s2 + $0x8] sm:$0xff]
    %v768 = vld [vmem:[%s2 + $0x10] sm:$0xff]
    %v769 = vld [vmem:[%s2 + $0x18] sm:$0xff]
    %v770 = vld [vmem:[%s2 + $0x20] sm:$0xff]
    %v771 = vld [vmem:[%s2 + $0x28] sm:$0xff]
    %v772 = vld [vmem:[%s2 + $0x30] sm:$0xff]
    %v773 = vld [vmem:[%s2 + $0x38] sm:$0xff]
    %v774 = vld [vmem:[%s2 + $0x40] sm:$0xff]
    %v775 = vld [vmem:[%s2 + $0x48] sm:$0xff]
    %v776 = vld [vmem:[%s2 + $0x50] sm:$0xff]
    %v777 = vld [vmem:[%s2 + $0x58] sm:$0xff]
    %v778 = vld [vmem:[%s2 + $0x60] sm:$0x1]
    %v779 = vld [vmem:[%s2 + $0x68] sm:$0x1]
    %vm780 = vcmask 400384
    %v782 = vsel %vm780, %v762, 0
    %vm784 = vcmask 1040384
    %v786 = vsel %vm784, %v778, 0
    %v789 = vsel %vm784, %v779, 0
    %791 = vmatprep.subr.mxu0 %v767
    %792 = vmatpush1.msra.mxu0 %v766
    %793 = vmatprep.subr.mxu0 %v769
    %794 = vmatpush1.msra.mxu0 %v768
    %795 = vmatprep.subr.mxu0 %v771
    %796 = vmatpush1.msra.mxu0 %v770
    %797 = vmatprep.subr.mxu0 %v773
    %798 = vmatpush1.msra.mxu0 %v772
    %799 = vmatprep.subr.mxu0 %v775
    %800 = vmatpush1.msra.mxu0 %v774
    %801 = vmatprep.subr.mxu0 %v777
    %802 = vmatpush1.msra.mxu0 %v776
    %803 = vmatprep.subr.mxu0 %v789
    %804 = vmatpush1.msra.mxu0 %v786
    %805 = vmatprep.subr.mxu0 0.0
    %806 = vmatpush1.msra.mxu0 0.0
    %807 = vmatprep.subr.mxu0 0.0
    %808 = vmatpush1.msra.mxu0 0.0
    %809 = vmatprep.subr.mxu0 0.0
    %810 = vmatpush1.msra.mxu0 0.0
    %811 = vmatprep.subr.mxu0 0.0
    %812 = vmatpush1.msra.mxu0 0.0
    %813 = vmatprep.subr.mxu0 0.0
    %814 = vmatpush1.msra.mxu0 0.0
    %815 = vmatprep.subr.mxu0 0.0
    %816 = vmatpush1.msra.mxu0 0.0
    %817 = vmatprep.subr.mxu0 0.0
    %818 = vmatpush1.msra.mxu0 0.0
    %819 = vmatprep.subr.mxu0 0.0
    %820 = vmatpush1.msra.mxu0 0.0
    %821 = vmatprep.subr.mxu0 0.0
    %822 = vmatpush1.msra.mxu0 0.0
    %823 = vmatprep.subr.mxu0 0.0
    %824 = vmatpush1.msra.mxu0 0.0
    %825 = vmatprep.subr.mxu0 0.0
    %826 = vmatpush1.msra.mxu0 0.0
    %827 = vmatprep.subr.mxu0 0.0
    %828 = vmatpush1.msra.mxu0 0.0
    %829 = vmatprep.subr.mxu0 0.0
    %830 = vmatpush1.msra.mxu0 0.0
    %831 = vmatprep.subr.mxu0 0.0
    %832 = vmatpush1.msra.mxu0 0.0
    %833 = vmatprep.subr.mxu0 0.0
    %834 = vmatpush1.msra.mxu0 0.0
    %835 = vmatprep.subr.mxu0 0.0
    %836 = vmatpush1.msra.mxu0 0.0
    %837 = vmatprep.subr.mxu0 0.0
    %838 = vmatpush1.msra.mxu0 0.0
    %839 = vmatprep.subr.mxu0 0.0
    %840 = vmatpush1.msra.mxu0 0.0
    %841 = vmatprep.subr.mxu0 0.0
    %842 = vmatpush1.msra.mxu0 0.0
    %843 = vmatprep.subr.mxu0 0.0
    %844 = vmatpush1.msra.mxu0 0.0
    %845 = vmatprep.subr.mxu0 0.0
    %846 = vmatpush1.msra.mxu0 0.0
    %847 = vmatprep.subr.mxu0 0.0
    %848 = vmatpush1.msra.mxu0 0.0
    %849 = vmatprep.subr.mxu0 0.0
    %850 = vmatpush1.msra.mxu0 0.0
    %851 = vmatprep.subr.mxu0 0.0
    %852 = vmatpush1.msra.mxu0 0.0
    %853 = vmatprep.subr.mxu0 0.0
    %854 = vmatpush1.msra.mxu0 0.0
    %855 = vmatprep.mubr.f32.mxu0 0.0
    %856 = vmatmul.mubr.f32.gmra.mrb[0].mxu0 %v782
    %v857 = vpop.f32.mrb[0].mxu0
    %v858 = vadd.f32 0.0, %v857
    %v859 = vpop.f32.mrb[0].mxu0
    %v860 = vadd.f32 0.0, %v859
    %861 = vdwg.mxu0
    %v864 = vcombine.low %v858, %v860
    %v866 = vunpack.c.l.s4 1966171168
    %v867 = vunpack.c.0.s8 %v866
    %v868 = vlaneseq
    %v869 = vshrl.u32 %v868, 7
    %v870 = vsub.s32 %v867, %v869
    %v871 = vrot.slane %v864, %v870
    %v873 = vunpack.c.l.s4 1966171168
    %v874 = vunpack.c.0.s8 %v873
    %v875 = vlaneseq
    %v876 = vshrl.u32 %v875, 7
    %v877 = vsub.s32 %v874, %v876
    %v878 = vrot.slane %v871, %v877
    %v880 = vadd.f32 %v765, %v878
    %s881 = scalar_lea.vmem %s2, 112
    %v882 = vld [vmem:[%s881] sm:$0xff]
    %v883 = vld [vmem:[%s881 + $0x8] sm:$0xff]
    %v884 = vld [vmem:[%s881 + $0x10] sm:$0xff]
    %v885 = vld [vmem:[%s881 + $0x18] sm:$0xff]
    %v886 = vld [vmem:[%s881 + $0x20] sm:$0xff]
    %v887 = vld [vmem:[%s881 + $0x28] sm:$0xff]
    %v888 = vld [vmem:[%s881 + $0x30] sm:$0xff]
    %v889 = vld [vmem:[%s881 + $0x38] sm:$0xff]
    %v890 = vld [vmem:[%s881 + $0x40] sm:$0xff]
    %v891 = vld [vmem:[%s881 + $0x48] sm:$0xff]
    %v892 = vld [vmem:[%s881 + $0x50] sm:$0xff]
    %v893 = vld [vmem:[%s881 + $0x58] sm:$0xff]
    %v894 = vld [vmem:[%s881 + $0x60] sm:$0x1]
    %v895 = vld [vmem:[%s881 + $0x68] sm:$0x1]
    %v896 = vrot.slane %v762, 1
    %v897 = vsel %vm780, %v896, 0
    %v900 = vsel %vm784, %v894, 0
    %v903 = vsel %vm784, %v895, 0
    %905 = vmatprep.subr.mxu0 %v883
    %906 = vmatpush1.msra.mxu0 %v882
    %907 = vmatprep.subr.mxu0 %v885
    %908 = vmatpush1.msra.mxu0 %v884
    %909 = vmatprep.subr.mxu0 %v887
    %910 = vmatpush1.msra.mxu0 %v886
    %911 = vmatprep.subr.mxu0 %v889
    %912 = vmatpush1.msra.mxu0 %v888
    %913 = vmatprep.subr.mxu0 %v891
    %914 = vmatpush1.msra.mxu0 %v890
    %915 = vmatprep.subr.mxu0 %v893
    %916 = vmatpush1.msra.mxu0 %v892
    %917 = vmatprep.subr.mxu0 %v903
    %918 = vmatpush1.msra.mxu0 %v900
    %919 = vmatprep.subr.mxu0 0.0
    %920 = vmatpush1.msra.mxu0 0.0
    %921 = vmatprep.subr.mxu0 0.0
    %922 = vmatpush1.msra.mxu0 0.0
    %923 = vmatprep.subr.mxu0 0.0
    %924 = vmatpush1.msra.mxu0 0.0
    %925 = vmatprep.subr.mxu0 0.0
    %926 = vmatpush1.msra.mxu0 0.0
    %927 = vmatprep.subr.mxu0 0.0
    %928 = vmatpush1.msra.mxu0 0.0
    %929 = vmatprep.subr.mxu0 0.0
    %930 = vmatpush1.msra.mxu0 0.0
    %931 = vmatprep.subr.mxu0 0.0
    %932 = vmatpush1.msra.mxu0 0.0
    %933 = vmatprep.subr.mxu0 0.0
    %934 = vmatpush1.msra.mxu0 0.0
    %935 = vmatprep.subr.mxu0 0.0
    %936 = vmatpush1.msra.mxu0 0.0
    %937 = vmatprep.subr.mxu0 0.0
    %938 = vmatpush1.msra.mxu0 0.0
    %939 = vmatprep.subr.mxu0 0.0
    %940 = vmatpush1.msra.mxu0 0.0
    %941 = vmatprep.subr.mxu0 0.0
    %942 = vmatpush1.msra.mxu0 0.0
    %943 = vmatprep.subr.mxu0 0.0
    %944 = vmatpush1.msra.mxu0 0.0
    %945 = vmatprep.subr.mxu0 0.0
    %946 = vmatpush1.msra.mxu0 0.0
    %947 = vmatprep.subr.mxu0 0.0
    %948 = vmatpush1.msra.mxu0 0.0
    %949 = vmatprep.subr.mxu0 0.0
    %950 = vmatpush1.msra.mxu0 0.0
    %951 = vmatprep.subr.mxu0 0.0
    %952 = vmatpush1.msra.mxu0 0.0
    %953 = vmatprep.subr.mxu0 0.0
    %954 = vmatpush1.msra.mxu0 0.0
    %955 = vmatprep.subr.mxu0 0.0
    %956 = vmatpush1.msra.mxu0 0.0
    %957 = vmatprep.subr.mxu0 0.0
    %958 = vmatpush1.msra.mxu0 0.0
    %959 = vmatprep.subr.mxu0 0.0
    %960 = vmatpush1.msra.mxu0 0.0
    %961 = vmatprep.subr.mxu0 0.0
    %962 = vmatpush1.msra.mxu0 0.0
    %963 = vmatprep.subr.mxu0 0.0
    %964 = vmatpush1.msra.mxu0 0.0
    %965 = vmatprep.subr.mxu0 0.0
    %966 = vmatpush1.msra.mxu0 0.0
    %967 = vmatprep.subr.mxu0 0.0
    %968 = vmatpush1.msra.mxu0 0.0
    %969 = vmatprep.mubr.f32.mxu0 0.0
    %970 = vmatmul.mubr.f32.gmra.mrb[0].mxu0 %v897
    %v971 = vpop.f32.mrb[0].mxu0
    %v972 = vadd.f32 0.0, %v971
    %v973 = vpop.f32.mrb[0].mxu0
    %v974 = vadd.f32 0.0, %v973
    %975 = vdwg.mxu0
    %v978 = vcombine.low %v972, %v974
    %v980 = vunpack.c.l.s4 1966171168
    %v981 = vunpack.c.0.s8 %v980
    %v982 = vlaneseq
    %v983 = vshrl.u32 %v982, 7
    %v984 = vsub.s32 %v981, %v983
    %v985 = vrot.slane %v978, %v984
    %v987 = vunpack.c.l.s4 1966171168
    %v988 = vunpack.c.0.s8 %v987
    %v989 = vlaneseq
    %v990 = vshrl.u32 %v989, 7
    %v991 = vsub.s32 %v988, %v990
    %v992 = vrot.slane %v985, %v991
    %v994 = vadd.f32 %v880, %v992
    %v995 = vmax.f32 %v994, 0.0
    %v996 = vlaneseq
    %vm997 = vcmp.ge.s32.totalorder %v996, 0
    %vm998 = vcmp.lt.s32.totalorder %v996, 200
    %vm999 = vmand %vm997, %vm998
    %1000 = vst.msk [vmem:[#allocation2] ss:$2 sm:$0x3] %vm999, %v995
    %s1001 = scalar_lea.vmem %s0, 48
    %v1002 = vld [vmem:[%s1001] sm:$0xff]
    %v1003 = vld [vmem:[%s1001 + $0x8] sm:$0xff]
    %v1004 = vld [vmem:[%s1001 + $0x10] sm:$0xff]
    %v1005 = vld [vmem:[%s1001 + $0x18] sm:$0xff]
    %v1006 = vld [vmem:[%s1001 + $0x20] sm:$0xff]
    %v1007 = vld [vmem:[%s1001 + $0x28] sm:$0xff]
    %v1008 = vsub.f32 0.0, %v1002
    %v1009 = vsub.f32 0.0, %v1003
    %v1010 = vsub.f32 0.0, %v1004
    %v1011 = vsub.f32 0.0, %v1005
    %v1012 = vsub.f32 0.0, %v1006
    %v1013 = vsub.f32 0.0, %v1007
    %v1014 = vmul.f32 %v1008, 1.442695
    %v1015 = vpow.pop %v1014
    %v1016 = vmul.f32 %v1009, 1.442695
    %v1017 = vpow.pop %v1016
    %v1018 = vmul.f32 %v1010, 1.442695
    %v1019 = vpow.pop %v1018
    %v1020 = vmul.f32 %v1011, 1.442695
    %v1021 = vpow.pop %v1020
    %v1022 = vmul.f32 %v1012, 1.442695
    %v1023 = vpow.pop %v1022
    %v1024 = vmul.f32 %v1013, 1.442695
    %v1025 = vpow.pop %v1024
    %v1026 = vadd.f32 %v1015, 1.0
    %v1027 = vadd.f32 %v1017, 1.0
    %v1028 = vadd.f32 %v1019, 1.0
    %v1029 = vadd.f32 %v1021, 1.0
    %v1030 = vadd.f32 %v1023, 1.0
    %v1031 = vadd.f32 %v1025, 1.0
    %v1032 = vrcp.pop %v1026
    %v1033 = vrcp.pop %v1027
    %v1034 = vrcp.pop %v1028
    %v1035 = vrcp.pop %v1029
    %v1036 = vrcp.pop %v1030
    %v1037 = vrcp.pop %v1031
    %v1038 = vmul.f32 %v1002, %v1032
    %v1039 = vmul.f32 %v1003, %v1033
    %v1040 = vmul.f32 %v1004, %v1034
    %v1041 = vmul.f32 %v1005, %v1035
    %v1042 = vmul.f32 %v1006, %v1036
    %v1043 = vmul.f32 %v1007, %v1037
    %v1044 = vsub.f32 %v1002, -2.2
    %v1045 = vsub.f32 %v1003, -2.2
    %v1046 = vsub.f32 %v1004, -2.2
    %v1047 = vsub.f32 %v1005, -2.2
    %v1048 = vsub.f32 %v1006, -2.2
    %v1049 = vsub.f32 %v1007, -2.2
    %v1050 = vmul.f32 %v1044, 2.5
    %v1051 = vmul.f32 %v1045, 2.5
    %v1052 = vmul.f32 %v1046, 2.5
    %v1053 = vmul.f32 %v1047, 2.5
    %v1054 = vmul.f32 %v1048, 2.5
    %v1055 = vmul.f32 %v1049, 2.5
    %v1056 = vfloor.f32 %v1050
    %v1057 = vfloor.f32 %v1051
    %v1058 = vfloor.f32 %v1052
    %v1059 = vfloor.f32 %v1053
    %v1060 = vfloor.f32 %v1054
    %v1061 = vfloor.f32 %v1055
    %v1062 = vsub.f32 %v1050, %v1056
    %v1063 = vsub.f32 %v1051, %v1057
    %v1064 = vsub.f32 %v1052, %v1058
    %v1065 = vsub.f32 %v1053, %v1059
    %v1066 = vsub.f32 %v1054, %v1060
    %v1067 = vsub.f32 %v1055, %v1061
    %v1068 = vmul.f32 %v1062, %v1062
    %v1069 = vmul.f32 %v1063, %v1063
    %v1070 = vmul.f32 %v1064, %v1064
    %v1071 = vmul.f32 %v1065, %v1065
    %v1072 = vmul.f32 %v1066, %v1066
    %v1073 = vmul.f32 %v1067, %v1067
    %v1074 = vmul.f32 %v1068, %v1062
    %v1075 = vmul.f32 %v1069, %v1063
    %v1076 = vmul.f32 %v1070, %v1064
    %v1077 = vmul.f32 %v1071, %v1065
    %v1078 = vmul.f32 %v1072, %v1066
    %v1079 = vmul.f32 %v1073, %v1067
    %v1080 = vmul.f32 %v1074, 0.16666667
    %v1081 = vmul.f32 %v1075, 0.16666667
    %v1082 = vmul.f32 %v1076, 0.16666667
    %v1083 = vmul.f32 %v1077, 0.16666667
    %v1084 = vmul.f32 %v1078, 0.16666667
    %v1085 = vmul.f32 %v1079, 0.16666667
    %v1086 = vmul.f32 %v1062, -3.0
    %v1087 = vmul.f32 %v1063, -3.0
    %v1088 = vmul.f32 %v1064, -3.0
    %v1089 = vmul.f32 %v1065, -3.0
    %v1090 = vmul.f32 %v1066, -3.0
    %v1091 = vmul.f32 %v1067, -3.0
    %v1092 = vadd.f32 %v1086, 3.0
    %v1093 = vadd.f32 %v1087, 3.0
    %v1094 = vadd.f32 %v1088, 3.0
    %v1095 = vadd.f32 %v1089, 3.0
    %v1096 = vadd.f32 %v1090, 3.0
    %v1097 = vadd.f32 %v1091, 3.0
    %v1098 = vmul.f32 %v1092, %v1062
    %v1099 = vmul.f32 %v1093, %v1063
    %v1100 = vmul.f32 %v1094, %v1064
    %v1101 = vmul.f32 %v1095, %v1065
    %v1102 = vmul.f32 %v1096, %v1066
    %v1103 = vmul.f32 %v1097, %v1067
    %v1104 = vadd.f32 %v1098, 3.0
    %v1105 = vadd.f32 %v1099, 3.0
    %v1106 = vadd.f32 %v1100, 3.0
    %v1107 = vadd.f32 %v1101, 3.0
    %v1108 = vadd.f32 %v1102, 3.0
    %v1109 = vadd.f32 %v1103, 3.0
    %v1110 = vmul.f32 %v1104, %v1062
    %v1111 = vmul.f32 %v1105, %v1063
    %v1112 = vmul.f32 %v1106, %v1064
    %v1113 = vmul.f32 %v1107, %v1065
    %v1114 = vmul.f32 %v1108, %v1066
    %v1115 = vmul.f32 %v1109, %v1067
    %v1116 = vadd.f32 %v1110, 1.0
    %v1117 = vadd.f32 %v1111, 1.0
    %v1118 = vadd.f32 %v1112, 1.0
    %v1119 = vadd.f32 %v1113, 1.0
    %v1120 = vadd.f32 %v1114, 1.0
    %v1121 = vadd.f32 %v1115, 1.0
    %v1122 = vmul.f32 %v1116, 0.16666667
    %v1123 = vmul.f32 %v1117, 0.16666667
    %v1124 = vmul.f32 %v1118, 0.16666667
    %v1125 = vmul.f32 %v1119, 0.16666667
    %v1126 = vmul.f32 %v1120, 0.16666667
    %v1127 = vmul.f32 %v1121, 0.16666667
    %v1128 = vmul.f32 %v1062, 3.0
    %v1129 = vmul.f32 %v1063, 3.0
    %v1130 = vmul.f32 %v1064, 3.0
    %v1131 = vmul.f32 %v1065, 3.0
    %v1132 = vmul.f32 %v1066, 3.0
    %v1133 = vmul.f32 %v1067, 3.0
    %v1134 = vsub.f32 %v1128, 6.0
    %v1135 = vsub.f32 %v1129, 6.0
    %v1136 = vsub.f32 %v1130, 6.0
    %v1137 = vsub.f32 %v1131, 6.0
    %v1138 = vsub.f32 %v1132, 6.0
    %v1139 = vsub.f32 %v1133, 6.0
    %v1140 = vmul.f32 %v1134, %v1068
    %v1141 = vmul.f32 %v1135, %v1069
    %v1142 = vmul.f32 %v1136, %v1070
    %v1143 = vmul.f32 %v1137, %v1071
    %v1144 = vmul.f32 %v1138, %v1072
    %v1145 = vmul.f32 %v1139, %v1073
    %v1146 = vadd.f32 %v1140, 4.0
    %v1147 = vadd.f32 %v1141, 4.0
    %v1148 = vadd.f32 %v1142, 4.0
    %v1149 = vadd.f32 %v1143, 4.0
    %v1150 = vadd.f32 %v1144, 4.0
    %v1151 = vadd.f32 %v1145, 4.0
    %v1152 = vmul.f32 %v1146, 0.16666667
    %v1153 = vmul.f32 %v1147, 0.16666667
    %v1154 = vmul.f32 %v1148, 0.16666667
    %v1155 = vmul.f32 %v1149, 0.16666667
    %v1156 = vmul.f32 %v1150, 0.16666667
    %v1157 = vmul.f32 %v1151, 0.16666667
    %v1158 = vsub.f32 1.0, %v1062
    %v1159 = vsub.f32 1.0, %v1063
    %v1160 = vsub.f32 1.0, %v1064
    %v1161 = vsub.f32 1.0, %v1065
    %v1162 = vsub.f32 1.0, %v1066
    %v1163 = vsub.f32 1.0, %v1067
    %v1164 = vmul.f32 %v1158, %v1158
    %v1165 = vmul.f32 %v1159, %v1159
    %v1166 = vmul.f32 %v1160, %v1160
    %v1167 = vmul.f32 %v1161, %v1161
    %v1168 = vmul.f32 %v1162, %v1162
    %v1169 = vmul.f32 %v1163, %v1163
    %v1170 = vmul.f32 %v1164, %v1158
    %v1171 = vmul.f32 %v1165, %v1159
    %v1172 = vmul.f32 %v1166, %v1160
    %v1173 = vmul.f32 %v1167, %v1161
    %v1174 = vmul.f32 %v1168, %v1162
    %v1175 = vmul.f32 %v1169, %v1163
    %v1176 = vmul.f32 %v1170, 0.16666667
    %v1177 = vmul.f32 %v1171, 0.16666667
    %v1178 = vmul.f32 %v1172, 0.16666667
    %v1179 = vmul.f32 %v1173, 0.16666667
    %v1180 = vmul.f32 %v1174, 0.16666667
    %v1181 = vmul.f32 %v1175, 0.16666667
    %vm1182 = vcmp.eq.f32.partialorder %v1056, 0.0
    %vm1183 = vcmp.eq.f32.partialorder %v1057, 0.0
    %vm1184 = vcmp.eq.f32.partialorder %v1058, 0.0
    %vm1185 = vcmp.eq.f32.partialorder %v1059, 0.0
    %vm1186 = vcmp.eq.f32.partialorder %v1060, 0.0
    %vm1187 = vcmp.eq.f32.partialorder %v1061, 0.0
    %v1188 = vsel %vm1182, %v1080, 0.0
    %v1189 = vsel %vm1183, %v1081, 0.0
    %v1190 = vsel %vm1184, %v1082, 0.0
    %v1191 = vsel %vm1185, %v1083, 0.0
    %v1192 = vsel %vm1186, %v1084, 0.0
    %v1193 = vsel %vm1187, %v1085, 0.0
    %vm1194 = vcmp.eq.f32.partialorder %v1056, 1.0
    %vm1195 = vcmp.eq.f32.partialorder %v1057, 1.0
    %vm1196 = vcmp.eq.f32.partialorder %v1058, 1.0
    %vm1197 = vcmp.eq.f32.partialorder %v1059, 1.0
    %vm1198 = vcmp.eq.f32.partialorder %v1060, 1.0
    %vm1199 = vcmp.eq.f32.partialorder %v1061, 1.0
    %v1200 = vsel %vm1194, %v1122, 0.0
    %v1201 = vsel %vm1195, %v1123, 0.0
    %v1202 = vsel %vm1196, %v1124, 0.0
    %v1203 = vsel %vm1197, %v1125, 0.0
    %v1204 = vsel %vm1198, %v1126, 0.0
    %v1205 = vsel %vm1199, %v1127, 0.0
    %v1206 = vadd.f32 %v1188, %v1200
    %v1207 = vadd.f32 %v1189, %v1201
    %v1208 = vadd.f32 %v1190, %v1202
    %v1209 = vadd.f32 %v1191, %v1203
    %v1210 = vadd.f32 %v1192, %v1204
    %v1211 = vadd.f32 %v1193, %v1205
    %vm1212 = vcmp.eq.f32.partialorder %v1056, 2.0
    %vm1213 = vcmp.eq.f32.partialorder %v1057, 2.0
    %vm1214 = vcmp.eq.f32.partialorder %v1058, 2.0
    %vm1215 = vcmp.eq.f32.partialorder %v1059, 2.0
    %vm1216 = vcmp.eq.f32.partialorder %v1060, 2.0
    %vm1217 = vcmp.eq.f32.partialorder %v1061, 2.0
    %v1218 = vsel %vm1212, %v1152, 0.0
    %v1219 = vsel %vm1213, %v1153, 0.0
    %v1220 = vsel %vm1214, %v1154, 0.0
    %v1221 = vsel %vm1215, %v1155, 0.0
    %v1222 = vsel %vm1216, %v1156, 0.0
    %v1223 = vsel %vm1217, %v1157, 0.0
    %v1224 = vadd.f32 %v1206, %v1218
    %v1225 = vadd.f32 %v1207, %v1219
    %v1226 = vadd.f32 %v1208, %v1220
    %v1227 = vadd.f32 %v1209, %v1221
    %v1228 = vadd.f32 %v1210, %v1222
    %v1229 = vadd.f32 %v1211, %v1223
    %vm1230 = vcmp.eq.f32.partialorder %v1056, 3.0
    %vm1231 = vcmp.eq.f32.partialorder %v1057, 3.0
    %vm1232 = vcmp.eq.f32.partialorder %v1058, 3.0
    %vm1233 = vcmp.eq.f32.partialorder %v1059, 3.0
    %vm1234 = vcmp.eq.f32.partialorder %v1060, 3.0
    %vm1235 = vcmp.eq.f32.partialorder %v1061, 3.0
    %v1236 = vsel %vm1230, %v1176, 0.0
    %v1237 = vsel %vm1231, %v1177, 0.0
    %v1238 = vsel %vm1232, %v1178, 0.0
    %v1239 = vsel %vm1233, %v1179, 0.0
    %v1240 = vsel %vm1234, %v1180, 0.0
    %v1241 = vsel %vm1235, %v1181, 0.0
    %v1242 = vadd.f32 %v1224, %v1236
    %v1243 = vadd.f32 %v1225, %v1237
    %v1244 = vadd.f32 %v1226, %v1238
    %v1245 = vadd.f32 %v1227, %v1239
    %v1246 = vadd.f32 %v1228, %v1240
    %v1247 = vadd.f32 %v1229, %v1241
    %v1248 = vsel %vm1194, %v1080, 0.0
    %v1249 = vsel %vm1195, %v1081, 0.0
    %v1250 = vsel %vm1196, %v1082, 0.0
    %v1251 = vsel %vm1197, %v1083, 0.0
    %v1252 = vsel %vm1198, %v1084, 0.0
    %v1253 = vsel %vm1199, %v1085, 0.0
    %v1254 = vsel %vm1212, %v1122, 0.0
    %v1255 = vsel %vm1213, %v1123, 0.0
    %v1256 = vsel %vm1214, %v1124, 0.0
    %v1257 = vsel %vm1215, %v1125, 0.0
    %v1258 = vsel %vm1216, %v1126, 0.0
    %v1259 = vsel %vm1217, %v1127, 0.0
    %v1260 = vadd.f32 %v1248, %v1254
    %v1261 = vadd.f32 %v1249, %v1255
    %v1262 = vadd.f32 %v1250, %v1256
    %v1263 = vadd.f32 %v1251, %v1257
    %v1264 = vadd.f32 %v1252, %v1258
    %v1265 = vadd.f32 %v1253, %v1259
    %v1266 = vsel %vm1230, %v1152, 0.0
    %v1267 = vsel %vm1231, %v1153, 0.0
    %v1268 = vsel %vm1232, %v1154, 0.0
    %v1269 = vsel %vm1233, %v1155, 0.0
    %v1270 = vsel %vm1234, %v1156, 0.0
    %v1271 = vsel %vm1235, %v1157, 0.0
    %v1272 = vadd.f32 %v1260, %v1266
    %v1273 = vadd.f32 %v1261, %v1267
    %v1274 = vadd.f32 %v1262, %v1268
    %v1275 = vadd.f32 %v1263, %v1269
    %v1276 = vadd.f32 %v1264, %v1270
    %v1277 = vadd.f32 %v1265, %v1271
    %vm1278 = vcmp.eq.f32.partialorder %v1056, 4.0
    %vm1279 = vcmp.eq.f32.partialorder %v1057, 4.0
    %vm1280 = vcmp.eq.f32.partialorder %v1058, 4.0
    %vm1281 = vcmp.eq.f32.partialorder %v1059, 4.0
    %vm1282 = vcmp.eq.f32.partialorder %v1060, 4.0
    %vm1283 = vcmp.eq.f32.partialorder %v1061, 4.0
    %v1284 = vsel %vm1278, %v1176, 0.0
    %v1285 = vsel %vm1279, %v1177, 0.0
    %v1286 = vsel %vm1280, %v1178, 0.0
    %v1287 = vsel %vm1281, %v1179, 0.0
    %v1288 = vsel %vm1282, %v1180, 0.0
    %v1289 = vsel %vm1283, %v1181, 0.0
    %v1290 = vadd.f32 %v1272, %v1284
    %v1291 = vadd.f32 %v1273, %v1285
    %v1292 = vadd.f32 %v1274, %v1286
    %v1293 = vadd.f32 %v1275, %v1287
    %v1294 = vadd.f32 %v1276, %v1288
    %v1295 = vadd.f32 %v1277, %v1289
    %v1296 = vsel %vm1212, %v1080, 0.0
    %v1297 = vsel %vm1213, %v1081, 0.0
    %v1298 = vsel %vm1214, %v1082, 0.0
    %v1299 = vsel %vm1215, %v1083, 0.0
    %v1300 = vsel %vm1216, %v1084, 0.0
    %v1301 = vsel %vm1217, %v1085, 0.0
    %v1302 = vsel %vm1230, %v1122, 0.0
    %v1303 = vsel %vm1231, %v1123, 0.0
    %v1304 = vsel %vm1232, %v1124, 0.0
    %v1305 = vsel %vm1233, %v1125, 0.0
    %v1306 = vsel %vm1234, %v1126, 0.0
    %v1307 = vsel %vm1235, %v1127, 0.0
    %v1308 = vadd.f32 %v1296, %v1302
    %v1309 = vadd.f32 %v1297, %v1303
    %v1310 = vadd.f32 %v1298, %v1304
    %v1311 = vadd.f32 %v1299, %v1305
    %v1312 = vadd.f32 %v1300, %v1306
    %v1313 = vadd.f32 %v1301, %v1307
    %v1314 = vsel %vm1278, %v1152, 0.0
    %v1315 = vsel %vm1279, %v1153, 0.0
    %v1316 = vsel %vm1280, %v1154, 0.0
    %v1317 = vsel %vm1281, %v1155, 0.0
    %v1318 = vsel %vm1282, %v1156, 0.0
    %v1319 = vsel %vm1283, %v1157, 0.0
    %v1320 = vadd.f32 %v1308, %v1314
    %v1321 = vadd.f32 %v1309, %v1315
    %v1322 = vadd.f32 %v1310, %v1316
    %v1323 = vadd.f32 %v1311, %v1317
    %v1324 = vadd.f32 %v1312, %v1318
    %v1325 = vadd.f32 %v1313, %v1319
    %vm1326 = vcmp.eq.f32.partialorder %v1056, 5.0
    %vm1327 = vcmp.eq.f32.partialorder %v1057, 5.0
    %vm1328 = vcmp.eq.f32.partialorder %v1058, 5.0
    %vm1329 = vcmp.eq.f32.partialorder %v1059, 5.0
    %vm1330 = vcmp.eq.f32.partialorder %v1060, 5.0
    %vm1331 = vcmp.eq.f32.partialorder %v1061, 5.0
    %v1332 = vsel %vm1326, %v1176, 0.0
    %v1333 = vsel %vm1327, %v1177, 0.0
    %v1334 = vsel %vm1328, %v1178, 0.0
    %v1335 = vsel %vm1329, %v1179, 0.0
    %v1336 = vsel %vm1330, %v1180, 0.0
    %v1337 = vsel %vm1331, %v1181, 0.0
    %v1338 = vadd.f32 %v1320, %v1332
    %v1339 = vadd.f32 %v1321, %v1333
    %v1340 = vadd.f32 %v1322, %v1334
    %v1341 = vadd.f32 %v1323, %v1335
    %v1342 = vadd.f32 %v1324, %v1336
    %v1343 = vadd.f32 %v1325, %v1337
    %v1344 = vsel %vm1230, %v1080, 0.0
    %v1345 = vsel %vm1231, %v1081, 0.0
    %v1346 = vsel %vm1232, %v1082, 0.0
    %v1347 = vsel %vm1233, %v1083, 0.0
    %v1348 = vsel %vm1234, %v1084, 0.0
    %v1349 = vsel %vm1235, %v1085, 0.0
    %v1350 = vsel %vm1278, %v1122, 0.0
    %v1351 = vsel %vm1279, %v1123, 0.0
    %v1352 = vsel %vm1280, %v1124, 0.0
    %v1353 = vsel %vm1281, %v1125, 0.0
    %v1354 = vsel %vm1282, %v1126, 0.0
    %v1355 = vsel %vm1283, %v1127, 0.0
    %v1356 = vadd.f32 %v1344, %v1350
    %v1357 = vadd.f32 %v1345, %v1351
    %v1358 = vadd.f32 %v1346, %v1352
    %v1359 = vadd.f32 %v1347, %v1353
    %v1360 = vadd.f32 %v1348, %v1354
    %v1361 = vadd.f32 %v1349, %v1355
    %v1362 = vsel %vm1326, %v1152, 0.0
    %v1363 = vsel %vm1327, %v1153, 0.0
    %v1364 = vsel %vm1328, %v1154, 0.0
    %v1365 = vsel %vm1329, %v1155, 0.0
    %v1366 = vsel %vm1330, %v1156, 0.0
    %v1367 = vsel %vm1331, %v1157, 0.0
    %v1368 = vadd.f32 %v1356, %v1362
    %v1369 = vadd.f32 %v1357, %v1363
    %v1370 = vadd.f32 %v1358, %v1364
    %v1371 = vadd.f32 %v1359, %v1365
    %v1372 = vadd.f32 %v1360, %v1366
    %v1373 = vadd.f32 %v1361, %v1367
    %vm1374 = vcmp.eq.f32.partialorder %v1056, 6.0
    %vm1375 = vcmp.eq.f32.partialorder %v1057, 6.0
    %vm1376 = vcmp.eq.f32.partialorder %v1058, 6.0
    %vm1377 = vcmp.eq.f32.partialorder %v1059, 6.0
    %vm1378 = vcmp.eq.f32.partialorder %v1060, 6.0
    %vm1379 = vcmp.eq.f32.partialorder %v1061, 6.0
    %v1380 = vsel %vm1374, %v1176, 0.0
    %v1381 = vsel %vm1375, %v1177, 0.0
    %v1382 = vsel %vm1376, %v1178, 0.0
    %v1383 = vsel %vm1377, %v1179, 0.0
    %v1384 = vsel %vm1378, %v1180, 0.0
    %v1385 = vsel %vm1379, %v1181, 0.0
    %v1386 = vadd.f32 %v1368, %v1380
    %v1387 = vadd.f32 %v1369, %v1381
    %v1388 = vadd.f32 %v1370, %v1382
    %v1389 = vadd.f32 %v1371, %v1383
    %v1390 = vadd.f32 %v1372, %v1384
    %v1391 = vadd.f32 %v1373, %v1385
    %v1392 = vsel %vm1278, %v1080, 0.0
    %v1393 = vsel %vm1279, %v1081, 0.0
    %v1394 = vsel %vm1280, %v1082, 0.0
    %v1395 = vsel %vm1281, %v1083, 0.0
    %v1396 = vsel %vm1282, %v1084, 0.0
    %v1397 = vsel %vm1283, %v1085, 0.0
    %v1398 = vsel %vm1326, %v1122, 0.0
    %v1399 = vsel %vm1327, %v1123, 0.0
    %v1400 = vsel %vm1328, %v1124, 0.0
    %v1401 = vsel %vm1329, %v1125, 0.0
    %v1402 = vsel %vm1330, %v1126, 0.0
    %v1403 = vsel %vm1331, %v1127, 0.0
    %v1404 = vadd.f32 %v1392, %v1398
    %v1405 = vadd.f32 %v1393, %v1399
    %v1406 = vadd.f32 %v1394, %v1400
    %v1407 = vadd.f32 %v1395, %v1401
    %v1408 = vadd.f32 %v1396, %v1402
    %v1409 = vadd.f32 %v1397, %v1403
    %v1410 = vsel %vm1374, %v1152, 0.0
    %v1411 = vsel %vm1375, %v1153, 0.0
    %v1412 = vsel %vm1376, %v1154, 0.0
    %v1413 = vsel %vm1377, %v1155, 0.0
    %v1414 = vsel %vm1378, %v1156, 0.0
    %v1415 = vsel %vm1379, %v1157, 0.0
    %v1416 = vadd.f32 %v1404, %v1410
    %v1417 = vadd.f32 %v1405, %v1411
    %v1418 = vadd.f32 %v1406, %v1412
    %v1419 = vadd.f32 %v1407, %v1413
    %v1420 = vadd.f32 %v1408, %v1414
    %v1421 = vadd.f32 %v1409, %v1415
    %vm1422 = vcmp.eq.f32.partialorder %v1056, 7.0
    %vm1423 = vcmp.eq.f32.partialorder %v1057, 7.0
    %vm1424 = vcmp.eq.f32.partialorder %v1058, 7.0
    %vm1425 = vcmp.eq.f32.partialorder %v1059, 7.0
    %vm1426 = vcmp.eq.f32.partialorder %v1060, 7.0
    %vm1427 = vcmp.eq.f32.partialorder %v1061, 7.0
    %v1428 = vsel %vm1422, %v1176, 0.0
    %v1429 = vsel %vm1423, %v1177, 0.0
    %v1430 = vsel %vm1424, %v1178, 0.0
    %v1431 = vsel %vm1425, %v1179, 0.0
    %v1432 = vsel %vm1426, %v1180, 0.0
    %v1433 = vsel %vm1427, %v1181, 0.0
    %v1434 = vadd.f32 %v1416, %v1428
    %v1435 = vadd.f32 %v1417, %v1429
    %v1436 = vadd.f32 %v1418, %v1430
    %v1437 = vadd.f32 %v1419, %v1431
    %v1438 = vadd.f32 %v1420, %v1432
    %v1439 = vadd.f32 %v1421, %v1433
    %v1440 = vsel %vm1326, %v1080, 0.0
    %v1441 = vsel %vm1327, %v1081, 0.0
    %v1442 = vsel %vm1328, %v1082, 0.0
    %v1443 = vsel %vm1329, %v1083, 0.0
    %v1444 = vsel %vm1330, %v1084, 0.0
    %v1445 = vsel %vm1331, %v1085, 0.0
    %v1446 = vsel %vm1374, %v1122, 0.0
    %v1447 = vsel %vm1375, %v1123, 0.0
    %v1448 = vsel %vm1376, %v1124, 0.0
    %v1449 = vsel %vm1377, %v1125, 0.0
    %v1450 = vsel %vm1378, %v1126, 0.0
    %v1451 = vsel %vm1379, %v1127, 0.0
    %v1452 = vadd.f32 %v1440, %v1446
    %v1453 = vadd.f32 %v1441, %v1447
    %v1454 = vadd.f32 %v1442, %v1448
    %v1455 = vadd.f32 %v1443, %v1449
    %v1456 = vadd.f32 %v1444, %v1450
    %v1457 = vadd.f32 %v1445, %v1451
    %v1458 = vsel %vm1422, %v1152, 0.0
    %v1459 = vsel %vm1423, %v1153, 0.0
    %v1460 = vsel %vm1424, %v1154, 0.0
    %v1461 = vsel %vm1425, %v1155, 0.0
    %v1462 = vsel %vm1426, %v1156, 0.0
    %v1463 = vsel %vm1427, %v1157, 0.0
    %v1464 = vadd.f32 %v1452, %v1458
    %v1465 = vadd.f32 %v1453, %v1459
    %v1466 = vadd.f32 %v1454, %v1460
    %v1467 = vadd.f32 %v1455, %v1461
    %v1468 = vadd.f32 %v1456, %v1462
    %v1469 = vadd.f32 %v1457, %v1463
    %vm1470 = vcmp.eq.f32.partialorder %v1056, 8.0
    %vm1471 = vcmp.eq.f32.partialorder %v1057, 8.0
    %vm1472 = vcmp.eq.f32.partialorder %v1058, 8.0
    %vm1473 = vcmp.eq.f32.partialorder %v1059, 8.0
    %vm1474 = vcmp.eq.f32.partialorder %v1060, 8.0
    %vm1475 = vcmp.eq.f32.partialorder %v1061, 8.0
    %v1476 = vsel %vm1470, %v1176, 0.0
    %v1477 = vsel %vm1471, %v1177, 0.0
    %v1478 = vsel %vm1472, %v1178, 0.0
    %v1479 = vsel %vm1473, %v1179, 0.0
    %v1480 = vsel %vm1474, %v1180, 0.0
    %v1481 = vsel %vm1475, %v1181, 0.0
    %v1482 = vadd.f32 %v1464, %v1476
    %v1483 = vadd.f32 %v1465, %v1477
    %v1484 = vadd.f32 %v1466, %v1478
    %v1485 = vadd.f32 %v1467, %v1479
    %v1486 = vadd.f32 %v1468, %v1480
    %v1487 = vadd.f32 %v1469, %v1481
    %v1488 = vsel %vm1374, %v1080, 0.0
    %v1489 = vsel %vm1375, %v1081, 0.0
    %v1490 = vsel %vm1376, %v1082, 0.0
    %v1491 = vsel %vm1377, %v1083, 0.0
    %v1492 = vsel %vm1378, %v1084, 0.0
    %v1493 = vsel %vm1379, %v1085, 0.0
    %v1494 = vsel %vm1422, %v1122, 0.0
    %v1495 = vsel %vm1423, %v1123, 0.0
    %v1496 = vsel %vm1424, %v1124, 0.0
    %v1497 = vsel %vm1425, %v1125, 0.0
    %v1498 = vsel %vm1426, %v1126, 0.0
    %v1499 = vsel %vm1427, %v1127, 0.0
    %v1500 = vadd.f32 %v1488, %v1494
    %v1501 = vadd.f32 %v1489, %v1495
    %v1502 = vadd.f32 %v1490, %v1496
    %v1503 = vadd.f32 %v1491, %v1497
    %v1504 = vadd.f32 %v1492, %v1498
    %v1505 = vadd.f32 %v1493, %v1499
    %v1506 = vsel %vm1470, %v1152, 0.0
    %v1507 = vsel %vm1471, %v1153, 0.0
    %v1508 = vsel %vm1472, %v1154, 0.0
    %v1509 = vsel %vm1473, %v1155, 0.0
    %v1510 = vsel %vm1474, %v1156, 0.0
    %v1511 = vsel %vm1475, %v1157, 0.0
    %v1512 = vadd.f32 %v1500, %v1506
    %v1513 = vadd.f32 %v1501, %v1507
    %v1514 = vadd.f32 %v1502, %v1508
    %v1515 = vadd.f32 %v1503, %v1509
    %v1516 = vadd.f32 %v1504, %v1510
    %v1517 = vadd.f32 %v1505, %v1511
    %vm1518 = vcmp.eq.f32.partialorder %v1056, 9.0
    %vm1519 = vcmp.eq.f32.partialorder %v1057, 9.0
    %vm1520 = vcmp.eq.f32.partialorder %v1058, 9.0
    %vm1521 = vcmp.eq.f32.partialorder %v1059, 9.0
    %vm1522 = vcmp.eq.f32.partialorder %v1060, 9.0
    %vm1523 = vcmp.eq.f32.partialorder %v1061, 9.0
    %v1524 = vsel %vm1518, %v1176, 0.0
    %v1525 = vsel %vm1519, %v1177, 0.0
    %v1526 = vsel %vm1520, %v1178, 0.0
    %v1527 = vsel %vm1521, %v1179, 0.0
    %v1528 = vsel %vm1522, %v1180, 0.0
    %v1529 = vsel %vm1523, %v1181, 0.0
    %v1530 = vadd.f32 %v1512, %v1524
    %v1531 = vadd.f32 %v1513, %v1525
    %v1532 = vadd.f32 %v1514, %v1526
    %v1533 = vadd.f32 %v1515, %v1527
    %v1534 = vadd.f32 %v1516, %v1528
    %v1535 = vadd.f32 %v1517, %v1529
    %v1536 = vsel %vm1422, %v1080, 0.0
    %v1537 = vsel %vm1423, %v1081, 0.0
    %v1538 = vsel %vm1424, %v1082, 0.0
    %v1539 = vsel %vm1425, %v1083, 0.0
    %v1540 = vsel %vm1426, %v1084, 0.0
    %v1541 = vsel %vm1427, %v1085, 0.0
    %v1542 = vsel %vm1470, %v1122, 0.0
    %v1543 = vsel %vm1471, %v1123, 0.0
    %v1544 = vsel %vm1472, %v1124, 0.0
    %v1545 = vsel %vm1473, %v1125, 0.0
    %v1546 = vsel %vm1474, %v1126, 0.0
    %v1547 = vsel %vm1475, %v1127, 0.0
    %v1548 = vadd.f32 %v1536, %v1542
    %v1549 = vadd.f32 %v1537, %v1543
    %v1550 = vadd.f32 %v1538, %v1544
    %v1551 = vadd.f32 %v1539, %v1545
    %v1552 = vadd.f32 %v1540, %v1546
    %v1553 = vadd.f32 %v1541, %v1547
    %v1554 = vsel %vm1518, %v1152, 0.0
    %v1555 = vsel %vm1519, %v1153, 0.0
    %v1556 = vsel %vm1520, %v1154, 0.0
    %v1557 = vsel %vm1521, %v1155, 0.0
    %v1558 = vsel %vm1522, %v1156, 0.0
    %v1559 = vsel %vm1523, %v1157, 0.0
    %v1560 = vadd.f32 %v1548, %v1554
    %v1561 = vadd.f32 %v1549, %v1555
    %v1562 = vadd.f32 %v1550, %v1556
    %v1563 = vadd.f32 %v1551, %v1557
    %v1564 = vadd.f32 %v1552, %v1558
    %v1565 = vadd.f32 %v1553, %v1559
    %vm1566 = vcmp.eq.f32.partialorder %v1056, 10.0
    %vm1567 = vcmp.eq.f32.partialorder %v1057, 10.0
    %vm1568 = vcmp.eq.f32.partialorder %v1058, 10.0
    %vm1569 = vcmp.eq.f32.partialorder %v1059, 10.0
    %vm1570 = vcmp.eq.f32.partialorder %v1060, 10.0
    %vm1571 = vcmp.eq.f32.partialorder %v1061, 10.0
    %v1572 = vsel %vm1566, %v1176, 0.0
    %v1573 = vsel %vm1567, %v1177, 0.0
    %v1574 = vsel %vm1568, %v1178, 0.0
    %v1575 = vsel %vm1569, %v1179, 0.0
    %v1576 = vsel %vm1570, %v1180, 0.0
    %v1577 = vsel %vm1571, %v1181, 0.0
    %v1578 = vadd.f32 %v1560, %v1572
    %v1579 = vadd.f32 %v1561, %v1573
    %v1580 = vadd.f32 %v1562, %v1574
    %v1581 = vadd.f32 %v1563, %v1575
    %v1582 = vadd.f32 %v1564, %v1576
    %v1583 = vadd.f32 %v1565, %v1577
    %1584 = vmatprep.subr.mxu0 0.0
    %1585 = vmatpush1.msra.mxu0 %v1038
    %1586 = vmatprep.subr.mxu0 0.0
    %1587 = vmatpush1.msra.mxu0 %v1039
    %1588 = vmatprep.subr.mxu0 0.0
    %1589 = vmatpush1.msra.mxu0 %v1040
    %1590 = vmatprep.subr.mxu0 0.0
    %1591 = vmatpush1.msra.mxu0 %v1041
    %1592 = vmatprep.subr.mxu0 0.0
    %1593 = vmatpush1.msra.mxu0 %v1042
    %1594 = vmatprep.subr.mxu0 0.0
    %1595 = vmatpush1.msra.mxu0 %v1043
    %1596 = vmatprep.subr.mxu0 0.0
    %1597 = vmatpush1.msra.mxu0 %v1242
    %1598 = vmatprep.subr.mxu0 0.0
    %1599 = vmatpush1.msra.mxu0 %v1243
    %1600 = vmatprep.subr.mxu0 0.0
    %1601 = vmatpush1.msra.mxu0 %v1244
    %1602 = vmatprep.subr.mxu0 0.0
    %1603 = vmatpush1.msra.mxu0 %v1245
    %1604 = vmatprep.subr.mxu0 0.0
    %1605 = vmatpush1.msra.mxu0 %v1246
    %1606 = vmatprep.subr.mxu0 0.0
    %1607 = vmatpush1.msra.mxu0 %v1247
    %1608 = vmatprep.subr.mxu0 0.0
    %1609 = vmatpush1.msra.mxu0 %v1290
    %1610 = vmatprep.subr.mxu0 0.0
    %1611 = vmatpush1.msra.mxu0 %v1291
    %1612 = vmatprep.subr.mxu0 0.0
    %1613 = vmatpush1.msra.mxu0 %v1292
    %1614 = vmatprep.subr.mxu0 0.0
    %1615 = vmatpush1.msra.mxu0 %v1293
    %1616 = vmatprep.subr.mxu0 0.0
    %1617 = vmatpush1.msra.mxu0 %v1294
    %1618 = vmatprep.subr.mxu0 0.0
    %1619 = vmatpush1.msra.mxu0 %v1295
    %1620 = vmatprep.subr.mxu0 0.0
    %1621 = vmatpush1.msra.mxu0 %v1338
    %1622 = vmatprep.subr.mxu0 0.0
    %1623 = vmatpush1.msra.mxu0 %v1339
    %1624 = vmatprep.subr.mxu0 0.0
    %1625 = vmatpush1.msra.mxu0 %v1340
    %1626 = vmatprep.subr.mxu0 0.0
    %1627 = vmatpush1.msra.mxu0 %v1341
    %1628 = vmatprep.subr.mxu0 0.0
    %1629 = vmatpush1.msra.mxu0 %v1342
    %1630 = vmatprep.subr.mxu0 0.0
    %1631 = vmatpush1.msra.mxu0 %v1343
    %1632 = vmatprep.subr.mxu0 0.0
    %1633 = vmatpush1.msra.mxu0 %v1386
    %1634 = vmatprep.subr.mxu0 0.0
    %1635 = vmatpush1.msra.mxu0 %v1387
    %1636 = vmatprep.subr.mxu0 0.0
    %1637 = vmatpush1.msra.mxu0 %v1388
    %1638 = vmatprep.subr.mxu0 0.0
    %1639 = vmatpush1.msra.mxu0 %v1389
    %1640 = vmatprep.subr.mxu0 0.0
    %1641 = vmatpush1.msra.mxu0 %v1390
    %1642 = vmatprep.subr.mxu0 0.0
    %1643 = vmatpush1.msra.mxu0 %v1391
    %1644 = vmatprep.subr.mxu0 0.0
    %1645 = vmatpush1.msra.mxu0 %v1434
    %1646 = vmatprep.subr.mxu0 0.0
    %1647 = vmatpush1.msra.mxu0 %v1435
    %1648 = vmatprep.mubr.f32.mxu0 %v617
    %1649 = vmatmul.mubr.f32.gmra.mrb[0].mxu0 %v609
    %v1650 = vpop.f32.mrb[0].mxu0
    %v1651 = vadd.f32 0.0, %v1650
    %v1652 = vpop.f32.mrb[0].mxu0
    %1653 = vdwg.mxu0
    %1654 = vmatprep.subr.mxu0 0.0
    %1655 = vmatpush1.msra.mxu0 %v1436
    %1656 = vmatprep.subr.mxu0 0.0
    %1657 = vmatpush1.msra.mxu0 %v1437
    %1658 = vmatprep.subr.mxu0 0.0
    %1659 = vmatpush1.msra.mxu0 %v1438
    %1660 = vmatprep.subr.mxu0 0.0
    %1661 = vmatpush1.msra.mxu0 %v1439
    %1662 = vmatprep.subr.mxu0 0.0
    %1663 = vmatpush1.msra.mxu0 %v1482
    %1664 = vmatprep.subr.mxu0 0.0
    %1665 = vmatpush1.msra.mxu0 %v1483
    %1666 = vmatprep.subr.mxu0 0.0
    %1667 = vmatpush1.msra.mxu0 %v1484
    %1668 = vmatprep.subr.mxu0 0.0
    %1669 = vmatpush1.msra.mxu0 %v1485
    %1670 = vmatprep.subr.mxu0 0.0
    %1671 = vmatpush1.msra.mxu0 %v1486
    %1672 = vmatprep.subr.mxu0 0.0
    %1673 = vmatpush1.msra.mxu0 %v1487
    %1674 = vmatprep.subr.mxu0 0.0
    %1675 = vmatpush1.msra.mxu0 %v1530
    %1676 = vmatprep.subr.mxu0 0.0
    %1677 = vmatpush1.msra.mxu0 %v1531
    %1678 = vmatprep.subr.mxu0 0.0
    %1679 = vmatpush1.msra.mxu0 %v1532
    %1680 = vmatprep.subr.mxu0 0.0
    %1681 = vmatpush1.msra.mxu0 %v1533
    %1682 = vmatprep.subr.mxu0 0.0
    %1683 = vmatpush1.msra.mxu0 %v1534
    %1684 = vmatprep.subr.mxu0 0.0
    %1685 = vmatpush1.msra.mxu0 %v1535
    %1686 = vmatprep.subr.mxu0 0.0
    %1687 = vmatpush1.msra.mxu0 %v1578
    %1688 = vmatprep.subr.mxu0 0.0
    %1689 = vmatpush1.msra.mxu0 %v1579
    %1690 = vmatprep.subr.mxu0 0.0
    %1691 = vmatpush1.msra.mxu0 %v1580
    %1692 = vmatprep.subr.mxu0 0.0
    %1693 = vmatpush1.msra.mxu0 %v1581
    %1694 = vmatprep.subr.mxu0 0.0
    %1695 = vmatpush1.msra.mxu0 %v1582
    %1696 = vmatprep.subr.mxu0 0.0
    %1697 = vmatpush1.msra.mxu0 %v1583
    %1698 = vmatprep.subr.mxu0 0.0
    %1699 = vmatpush1.msra.mxu0 0.0
    %1700 = vmatprep.subr.mxu0 0.0
    %1701 = vmatpush1.msra.mxu0 0.0
    %1702 = vmatprep.subr.mxu0 0.0
    %1703 = vmatpush1.msra.mxu0 0.0
    %1704 = vmatprep.subr.mxu0 0.0
    %1705 = vmatpush1.msra.mxu0 0.0
    %1706 = vmatprep.subr.mxu0 0.0
    %1707 = vmatpush1.msra.mxu0 0.0
    %1708 = vmatprep.subr.mxu0 0.0
    %1709 = vmatpush1.msra.mxu0 0.0
    %1710 = vmatprep.subr.mxu0 0.0
    %1711 = vmatpush1.msra.mxu0 0.0
    %1712 = vmatprep.subr.mxu0 0.0
    %1713 = vmatpush1.msra.mxu0 0.0
    %1714 = vmatprep.subr.mxu0 0.0
    %1715 = vmatpush1.msra.mxu0 0.0
    %1716 = vmatprep.subr.mxu0 0.0
    %1717 = vmatpush1.msra.mxu0 0.0
    %1718 = vmatprep.mubr.f32.mxu0 %v623
    %1719 = vmatmul.mubr.f32.gmra.mrb[0].mxu0 %v616
    %v1720 = vpop.f32.mrb[0].mxu0
    %v1721 = vadd.f32 %v1651, %v1720
    %v1722 = vpop.f32.mrb[0].mxu0
    %1723 = vdwg.mxu0
    %v1724 = vld [vmem:[%s3] sm:$0x3]
    %v1725 = vld [vmem:[%s2] sm:$0xff]
    %v1726 = vld [vmem:[%s2 + $0x8] sm:$0xff]
    %v1727 = vld [vmem:[%s2 + $0x10] sm:$0xff]
    %v1728 = vld [vmem:[%s2 + $0x18] sm:$0xff]
    %v1729 = vld [vmem:[%s2 + $0x20] sm:$0xff]
    %v1730 = vld [vmem:[%s2 + $0x28] sm:$0xff]
    %v1731 = vld [vmem:[%s2 + $0x30] sm:$0xff]
    %v1732 = vld [vmem:[%s2 + $0x38] sm:$0xff]
    %v1733 = vld [vmem:[%s2 + $0x40] sm:$0xff]
    %v1734 = vld [vmem:[%s2 + $0x48] sm:$0xff]
    %v1735 = vld [vmem:[%s2 + $0x50] sm:$0xff]
    %v1736 = vld [vmem:[%s2 + $0x58] sm:$0xff]
    %v1737 = vld [vmem:[%s2 + $0x60] sm:$0x1]
    %v1738 = vld [vmem:[%s2 + $0x68] sm:$0x1]
    %v1740 = vsel %vm780, %v1721, 0
    %v1743 = vsel %vm784, %v1737, 0
    %v1746 = vsel %vm784, %v1738, 0
    %1748 = vmatprep.subr.mxu0 %v1726
    %1749 = vmatpush1.msra.mxu0 %v1725
    %1750 = vmatprep.subr.mxu0 %v1728
    %1751 = vmatpush1.msra.mxu0 %v1727
    %1752 = vmatprep.subr.mxu0 %v1730
    %1753 = vmatpush1.msra.mxu0 %v1729
    %1754 = vmatprep.subr.mxu0 %v1732
    %1755 = vmatpush1.msra.mxu0 %v1731
    %1756 = vmatprep.subr.mxu0 %v1734
    %1757 = vmatpush1.msra.mxu0 %v1733
    %1758 = vmatprep.subr.mxu0 %v1736
    %1759 = vmatpush1.msra.mxu0 %v1735
    %1760 = vmatprep.subr.mxu0 %v1746
    %1761 = vmatpush1.msra.mxu0 %v1743
    %1762 = vmatprep.subr.mxu0 0.0
    %1763 = vmatpush1.msra.mxu0 0.0
    %1764 = vmatprep.subr.mxu0 0.0
    %1765 = vmatpush1.msra.mxu0 0.0
    %1766 = vmatprep.subr.mxu0 0.0
    %1767 = vmatpush1.msra.mxu0 0.0
    %1768 = vmatprep.subr.mxu0 0.0
    %1769 = vmatpush1.msra.mxu0 0.0
    %1770 = vmatprep.subr.mxu0 0.0
    %1771 = vmatpush1.msra.mxu0 0.0
    %1772 = vmatprep.subr.mxu0 0.0
    %1773 = vmatpush1.msra.mxu0 0.0
    %1774 = vmatprep.subr.mxu0 0.0
    %1775 = vmatpush1.msra.mxu0 0.0
    %1776 = vmatprep.subr.mxu0 0.0
    %1777 = vmatpush1.msra.mxu0 0.0
    %1778 = vmatprep.subr.mxu0 0.0
    %1779 = vmatpush1.msra.mxu0 0.0
    %1780 = vmatprep.subr.mxu0 0.0
    %1781 = vmatpush1.msra.mxu0 0.0
    %1782 = vmatprep.subr.mxu0 0.0
    %1783 = vmatpush1.msra.mxu0 0.0
    %1784 = vmatprep.subr.mxu0 0.0
    %1785 = vmatpush1.msra.mxu0 0.0
    %1786 = vmatprep.subr.mxu0 0.0
    %1787 = vmatpush1.msra.mxu0 0.0
    %1788 = vmatprep.subr.mxu0 0.0
    %1789 = vmatpush1.msra.mxu0 0.0
    %1790 = vmatprep.subr.mxu0 0.0
    %1791 = vmatpush1.msra.mxu0 0.0
    %1792 = vmatprep.subr.mxu0 0.0
    %1793 = vmatpush1.msra.mxu0 0.0
    %1794 = vmatprep.subr.mxu0 0.0
    %1795 = vmatpush1.msra.mxu0 0.0
    %1796 = vmatprep.subr.mxu0 0.0
    %1797 = vmatpush1.msra.mxu0 0.0
    %1798 = vmatprep.subr.mxu0 0.0
    %1799 = vmatpush1.msra.mxu0 0.0
    %1800 = vmatprep.subr.mxu0 0.0
    %1801 = vmatpush1.msra.mxu0 0.0
    %1802 = vmatprep.subr.mxu0 0.0
    %1803 = vmatpush1.msra.mxu0 0.0
    %1804 = vmatprep.subr.mxu0 0.0
    %1805 = vmatpush1.msra.mxu0 0.0
    %1806 = vmatprep.subr.mxu0 0.0
    %1807 = vmatpush1.msra.mxu0 0.0
    %1808 = vmatprep.subr.mxu0 0.0
    %1809 = vmatpush1.msra.mxu0 0.0
    %1810 = vmatprep.subr.mxu0 0.0
    %1811 = vmatpush1.msra.mxu0 0.0
    %1812 = vmatprep.mubr.f32.mxu0 0.0
    %1813 = vmatmul.mubr.f32.gmra.mrb[0].mxu0 %v1740
    %v1814 = vpop.f32.mrb[0].mxu0
    %v1815 = vadd.f32 0.0, %v1814
    %v1816 = vpop.f32.mrb[0].mxu0
    %v1817 = vadd.f32 0.0, %v1816
    %1818 = vdwg.mxu0
    %v1821 = vcombine.low %v1815, %v1817
    %v1823 = vunpack.c.l.s4 1966171168
    %v1824 = vunpack.c.0.s8 %v1823
    %v1825 = vlaneseq
    %v1826 = vshrl.u32 %v1825, 7
    %v1827 = vsub.s32 %v1824, %v1826
    %v1828 = vrot.slane %v1821, %v1827
    %v1830 = vunpack.c.l.s4 1966171168
    %v1831 = vunpack.c.0.s8 %v1830
    %v1832 = vlaneseq
    %v1833 = vshrl.u32 %v1832, 7
    %v1834 = vsub.s32 %v1831, %v1833
    %v1835 = vrot.slane %v1828, %v1834
    %v1837 = vadd.f32 %v1724, %v1835
    %v1838 = vld [vmem:[%s881] sm:$0xff]
    %v1839 = vld [vmem:[%s881 + $0x8] sm:$0xff]
    %v1840 = vld [vmem:[%s881 + $0x10] sm:$0xff]
    %v1841 = vld [vmem:[%s881 + $0x18] sm:$0xff]
    %v1842 = vld [vmem:[%s881 + $0x20] sm:$0xff]
    %v1843 = vld [vmem:[%s881 + $0x28] sm:$0xff]
    %v1844 = vld [vmem:[%s881 + $0x30] sm:$0xff]
    %v1845 = vld [vmem:[%s881 + $0x38] sm:$0xff]
    %v1846 = vld [vmem:[%s881 + $0x40] sm:$0xff]
    %v1847 = vld [vmem:[%s881 + $0x48] sm:$0xff]
    %v1848 = vld [vmem:[%s881 + $0x50] sm:$0xff]
    %v1849 = vld [vmem:[%s881 + $0x58] sm:$0xff]
    %v1850 = vld [vmem:[%s881 + $0x60] sm:$0x1]
    %v1851 = vld [vmem:[%s881 + $0x68] sm:$0x1]
    %v1852 = vrot.slane %v1721, 1
    %v1853 = vsel %vm780, %v1852, 0
    %v1856 = vsel %vm784, %v1850, 0
    %v1859 = vsel %vm784, %v1851, 0
    %1861 = vmatprep.subr.mxu0 %v1839
    %1862 = vmatpush1.msra.mxu0 %v1838
    %1863 = vmatprep.subr.mxu0 %v1841
    %1864 = vmatpush1.msra.mxu0 %v1840
    %1865 = vmatprep.subr.mxu0 %v1843
    %1866 = vmatpush1.msra.mxu0 %v1842
    %1867 = vmatprep.subr.mxu0 %v1845
    %1868 = vmatpush1.msra.mxu0 %v1844
    %1869 = vmatprep.subr.mxu0 %v1847
    %1870 = vmatpush1.msra.mxu0 %v1846
    %1871 = vmatprep.subr.mxu0 %v1849
    %1872 = vmatpush1.msra.mxu0 %v1848
    %1873 = vmatprep.subr.mxu0 %v1859
    %1874 = vmatpush1.msra.mxu0 %v1856
    %1875 = vmatprep.subr.mxu0 0.0
    %1876 = vmatpush1.msra.mxu0 0.0
    %1877 = vmatprep.subr.mxu0 0.0
    %1878 = vmatpush1.msra.mxu0 0.0
    %1879 = vmatprep.subr.mxu0 0.0
    %1880 = vmatpush1.msra.mxu0 0.0
    %1881 = vmatprep.subr.mxu0 0.0
    %1882 = vmatpush1.msra.mxu0 0.0
    %1883 = vmatprep.subr.mxu0 0.0
    %1884 = vmatpush1.msra.mxu0 0.0
    %1885 = vmatprep.subr.mxu0 0.0
    %1886 = vmatpush1.msra.mxu0 0.0
    %1887 = vmatprep.subr.mxu0 0.0
    %1888 = vmatpush1.msra.mxu0 0.0
    %1889 = vmatprep.subr.mxu0 0.0
    %1890 = vmatpush1.msra.mxu0 0.0
    %1891 = vmatprep.subr.mxu0 0.0
    %1892 = vmatpush1.msra.mxu0 0.0
    %1893 = vmatprep.subr.mxu0 0.0
    %1894 = vmatpush1.msra.mxu0 0.0
    %1895 = vmatprep.subr.mxu0 0.0
    %1896 = vmatpush1.msra.mxu0 0.0
    %1897 = vmatprep.subr.mxu0 0.0
    %1898 = vmatpush1.msra.mxu0 0.0
    %1899 = vmatprep.subr.mxu0 0.0
    %1900 = vmatpush1.msra.mxu0 0.0
    %1901 = vmatprep.subr.mxu0 0.0
    %1902 = vmatpush1.msra.mxu0 0.0
    %1903 = vmatprep.subr.mxu0 0.0
    %1904 = vmatpush1.msra.mxu0 0.0
    %1905 = vmatprep.subr.mxu0 0.0
    %1906 = vmatpush1.msra.mxu0 0.0
    %1907 = vmatprep.subr.mxu0 0.0
    %1908 = vmatpush1.msra.mxu0 0.0
    %1909 = vmatprep.subr.mxu0 0.0
    %1910 = vmatpush1.msra.mxu0 0.0
    %1911 = vmatprep.subr.mxu0 0.0
    %1912 = vmatpush1.msra.mxu0 0.0
    %1913 = vmatprep.subr.mxu0 0.0
    %1914 = vmatpush1.msra.mxu0 0.0
    %1915 = vmatprep.subr.mxu0 0.0
    %1916 = vmatpush1.msra.mxu0 0.0
    %1917 = vmatprep.subr.mxu0 0.0
    %1918 = vmatpush1.msra.mxu0 0.0
    %1919 = vmatprep.subr.mxu0 0.0
    %1920 = vmatpush1.msra.mxu0 0.0
    %1921 = vmatprep.subr.mxu0 0.0
    %1922 = vmatpush1.msra.mxu0 0.0
    %1923 = vmatprep.subr.mxu0 0.0
    %1924 = vmatpush1.msra.mxu0 0.0
    %1925 = vmatprep.mubr.f32.mxu0 0.0
    %1926 = vmatmul.mubr.f32.gmra.mrb[0].mxu0 %v1853
    %v1927 = vpop.f32.mrb[0].mxu0
    %v1928 = vadd.f32 0.0, %v1927
    %v1929 = vpop.f32.mrb[0].mxu0
    %v1930 = vadd.f32 0.0, %v1929
    %1931 = vdwg.mxu0
    %v1934 = vcombine.low %v1928, %v1930
    %v1936 = vunpack.c.l.s4 1966171168
    %v1937 = vunpack.c.0.s8 %v1936
    %v1938 = vlaneseq
    %v1939 = vshrl.u32 %v1938, 7
    %v1940 = vsub.s32 %v1937, %v1939
    %v1941 = vrot.slane %v1934, %v1940
    %v1943 = vunpack.c.l.s4 1966171168
    %v1944 = vunpack.c.0.s8 %v1943
    %v1945 = vlaneseq
    %v1946 = vshrl.u32 %v1945, 7
    %v1947 = vsub.s32 %v1944, %v1946
    %v1948 = vrot.slane %v1941, %v1947
    %v1950 = vadd.f32 %v1837, %v1948
    %v1951 = vmax.f32 %v1950, 0.0
    %s1952 = scalar_lea.vmem [#allocation2], 1
    %1953 = vst.msk [vmem:[%s1952] ss:$2 sm:$0x3] %vm999, %v1951
    // Predicated region
    $region18: #{kanc_hdc_forward.5} parent=1 // pred_check
      _
    $region19: #{kanc_hdc_forward.5} parent=1 // pred_check_branch
      %1955 = sbr.rel (0) target = $region21
    $region20: #{kanc_hdc_forward.5} parent=1 // pred_region
      %s1957 = ssub.s32 64, 64
      %1958 = vsyncadd [#allocation3], %s1957
      %s1960 = sshll.u32 [#allocation2], 4
      %s1961 = int_to_ptr.vmem [resolvable:$true] %s1960
      %1963 = dma.vmem_to_hbm [thread:$0]  %s1961, 64, %s4, [#allocation3]
    $region21: #{kanc_hdc_forward.5} parent=1 // pred_fallthru
      _
    // Predicated region
    $region22: #{kanc_hdc_forward.5} parent=1 // pred_check
      _
    $region23: #{kanc_hdc_forward.5} parent=1 // pred_check_branch
      %1965 = sbr.rel (0) target = $region25
    $region24: #{kanc_hdc_forward.5} parent=1 // pred_region
      %1966 = dma.done [#allocation3], 64
    $region25: #{kanc_hdc_forward.5} parent=1 // pred_fallthru
      _
    %1967 = vsyncpa [#allocation3], 1

</llo_original>
